<compile_context>
chip_gen: v5e
topology: v5e:2x2
jax: 0.10.0
libtpu: 0.0.40
codegen_flags: <defaults>
</compile_context>

<pallas_src>
import functools
import math

import numpy as np
import jax
import jax.numpy as jnp
from jax.experimental import pallas as pl
from jax.experimental.pallas import tpu as pltpu


# -----------------------------------------------------------------------------
# Fused forward kernel (single pallas_call; enc, dec and one weight slab in VMEM)
# -----------------------------------------------------------------------------

def fused_transformer_kernel(enc_ref, dec_ref, w_ref, o_ref, *,
                             layout, B, Se, Sd, D, H, F, Le, Ld,
                             n_out, n_pad, apply_softmax):
    f32 = jnp.float32
    Dh = D // H
    scale = 1.0 / math.sqrt(Dh)

    def blk(name):
        # static slice of the packed weight slab (row offsets are 8-aligned)
        ro, r, c = layout[name]
        return w_ref[ro:ro + r, 0:c]

    def linear(x, w, b, relu=False):
        y = jnp.dot(x, w, preferred_element_type=f32) + b
        return jnp.maximum(y, 0.0) if relu else y

    def layernorm(x, g, b, eps=1e-5):
        mean = jnp.mean(x, axis=-1, keepdims=True)
        xc = x - mean
        var = jnp.mean(xc * xc, axis=-1, keepdims=True)
        return xc * jax.lax.rsqrt(var + eps) * g + b

    def split_heads(x2, S):
        # [B*S, D] -> [H*B, S, Dh] (head-major batch order; rank-3 only, no 4-D transpose)
        return jnp.concatenate(
            [x2[:, h * Dh:(h + 1) * Dh].reshape(B, S, Dh) for h in range(H)], axis=0)

    def merge_heads(o3, S):
        # [H*B, S, Dh] -> [B*S, D] with heads as contiguous lane slices (PyTorch layout)
        return jnp.concatenate(
            [o3[h * B:(h + 1) * B].reshape(B * S, Dh) for h in range(H)], axis=-1)

    def attention(q2, k2, v2, Sq, Sk, mask):
        qh = split_heads(q2, Sq)
        kh = split_heads(k2, Sk)
        vh = split_heads(v2, Sk)
        s = jax.lax.dot_general(qh, kh, (((2,), (2,)), ((0,), (0,))),
                                preferred_element_type=f32) * scale       # [HB, Sq, Sk]
        if mask is not None:
            s = s + mask                                                  # broadcast [Sq,Sk]
        m = jnp.max(s, axis=-1, keepdims=True)
        p = jnp.exp(s - m)                                                # unnormalized
        denom = jnp.sum(p, axis=-1, keepdims=True)
        o = jax.lax.dot_general(p, vh, (((2,), (1,)), ((0,), (0,))),
                                preferred_element_type=f32)               # [HB, Sq, Dh]
        o = o * pl.reciprocal(denom, approx=True)                         # deferred denom
        return merge_heads(o, Sq)

    # ------------------------------- encoder ---------------------------------
    x = enc_ref[...].astype(f32).reshape(B * Se, D)
    for l in range(Le):                                                   # static unroll
        # e_vec rows: 0 bqkv, 1 bo, 2 b1, 3 b2, 4 ng0, 5 nb0, 6 ng1, 7 nb1
        ev = blk(f"e_vec{l}")
        qkv = linear(x, blk(f"e_wqkv{l}"), ev[0:1, 0:3 * D])
        a = attention(qkv[:, 0:D], qkv[:, D:2 * D], qkv[:, 2 * D:3 * D], Se, Se, None)
        a = linear(a, blk(f"e_wo{l}"), ev[1:2, 0:D])
        x = layernorm(x + a, ev[4:5, 0:D], ev[5:6, 0:D])
        hdn = linear(x, blk(f"e_w1{l}"), ev[2:3, 0:F], relu=True)
        hdn = linear(hdn, blk(f"e_w2{l}"), ev[3:4, 0:D])
        x = layernorm(x + hdn, ev[6:7, 0:D], ev[7:8, 0:D])

    # g_vec rows: 0 efn_g, 1 efn_b, 2 dfn_g, 3 dfn_b, 4 bkvc_all, 5 out_b
    gv = blk("g_vec")
    mem = layernorm(x, gv[0:1, 0:D], gv[1:2, 0:D])                        # [B*Se, D]

    # loop-invariant cross-attention K/V projection for ALL decoder layers at once
    kv_all = linear(mem, blk("d_wkvc_all"), gv[4:5, 0:Ld * 2 * D])        # [B*Se, Ld*2D]

    # causal decoder self-attention mask, built in-kernel (safe with max-sub softmax)
    row = jax.lax.broadcasted_iota(jnp.int32, (Sd, Sd), 0)
    col = jax.lax.broadcasted_iota(jnp.int32, (Sd, Sd), 1)
    causal = jnp.where(col <= row, 0.0, -1e30).astype(f32)

    # ------------------------------- decoder ---------------------------------
    y = dec_ref[...].astype(f32).reshape(B * Sd, D)
    for l in range(Ld):                                                   # static unroll
        # d_vec rows: 0 bqkv, 1 bos, 2 bqc, 3 boc, 4 b1, 5 b2,
        #             6 ng0, 7 nb0, 8 ng1, 9 nb1, 10 ng2, 11 nb2
        dv = blk(f"d_vec{l}")

        qkv = linear(y, blk(f"d_wqkv{l}"), dv[0:1, 0:3 * D])
        a = attention(qkv[:, 0:D], qkv[:, D:2 * D], qkv[:, 2 * D:3 * D], Sd, Sd, causal)
        a = linear(a, blk(f"d_wos{l}"), dv[1:2, 0:D])
        y = layernorm(y + a, dv[6:7, 0:D], dv[7:8, 0:D])

        qc = linear(y, blk(f"d_wqc{l}"), dv[2:3, 0:D])
        kc = kv_all[:, l * 2 * D: l * 2 * D + D]
        vc = kv_all[:, l * 2 * D + D: (l + 1) * 2 * D]
        c = attention(qc, kc, vc, Sd, Se, None)
        c = linear(c, blk(f"d_woc{l}"), dv[3:4, 0:D])
        y = layernorm(y + c, dv[8:9, 0:D], dv[9:10, 0:D])

        hdn = linear(y, blk(f"d_w1{l}"), dv[4:5, 0:F], relu=True)
        hdn = linear(hdn, blk(f"d_w2{l}"), dv[5:6, 0:D])
        y = layernorm(y + hdn, dv[10:11, 0:D], dv[11:12, 0:D])
    y = layernorm(y, gv[2:3, 0:D], gv[3:4, 0:D])

    # output head on all B*Sd rows (lane-dense, 128 wide); last position dropped in wrapper
    logits = jnp.dot(y, blk("out_w"), preferred_element_type=f32) + gv[5:6, 0:n_pad]
    if apply_softmax:
        lane_id = jax.lax.broadcasted_iota(jnp.int32, logits.shape, 1)
        logits = jnp.where(lane_id < n_out, logits, -1e30)
        m = jnp.max(logits, axis=-1, keepdims=True)
        e = jnp.exp(logits - m)
        logits = e * pl.reciprocal(jnp.sum(e, axis=-1, keepdims=True), approx=True)
    o_ref[...] = logits.astype(o_ref.dtype)


# -----------------------------------------------------------------------------
# Host-side weight packing: everything into ONE [rows, 128] f32 slab
# -----------------------------------------------------------------------------

def pack_params(params):
    D = int(params["e_wo"].shape[1])
    Le = int(params["e_wqkv"].shape[0])
    Ld = int(params["d_wqkv"].shape[0])
    F = int(params["e_w1"].shape[2])
    H = int(params["nhead"])
    n_out = int(params["n_out"])
    n_pad = int(params["out_w"].shape[1])

    lane = max(128, 3 * D, F, n_pad, Ld * 2 * D)
    lane = ((lane + 127) // 128) * 128

    p = {k: np.asarray(v, np.float32) for k, v in params.items()
         if k not in ("nhead", "n_out")}

    def rows_block(rows):
        buf = np.zeros((len(rows), lane), np.float32)
        for i, r in enumerate(rows):
            r = np.asarray(r, np.float32).reshape(-1)
            buf[i, :r.shape[0]] = r
        return buf

    entries = []
    for l in range(Le):
        entries += [
            (f"e_wqkv{l}", p["e_wqkv"][l]),
            (f"e_wo{l}", p["e_wo"][l]),
            (f"e_w1{l}", p["e_w1"][l]),
            (f"e_w2{l}", p["e_w2"][l]),
            # rows: 0 bqkv, 1 bo, 2 b1, 3 b2, 4 ng0, 5 nb0, 6 ng1, 7 nb1
            (f"e_vec{l}", rows_block([
                p["e_bqkv"][l, 0], p["e_bo"][l, 0], p["e_b1"][l, 0], p["e_b2"][l, 0],
                p["e_ng"][l, 0], p["e_nb"][l, 0], p["e_ng"][l, 1], p["e_nb"][l, 1]])),
        ]
    for l in range(Ld):
        entries += [
            (f"d_wqkv{l}", p["d_wqkv"][l]),
            (f"d_wos{l}", p["d_wos"][l]),
            (f"d_wqc{l}", p["d_wqc"][l]),
            (f"d_woc{l}", p["d_woc"][l]),
            (f"d_w1{l}", p["d_w1"][l]),
            (f"d_w2{l}", p["d_w2"][l]),
            # rows: 0 bqkv, 1 bos, 2 bqc, 3 boc, 4 b1, 5 b2,
            #       6 ng0, 7 nb0, 8 ng1, 9 nb1, 10 ng2, 11 nb2
            (f"d_vec{l}", rows_block([
                p["d_bqkv"][l, 0], p["d_bos"][l, 0], p["d_bqc"][l, 0], p["d_boc"][l, 0],
                p["d_b1"][l, 0], p["d_b2"][l, 0],
                p["d_ng"][l, 0], p["d_nb"][l, 0], p["d_ng"][l, 1], p["d_nb"][l, 1],
                p["d_ng"][l, 2], p["d_nb"][l, 2]])),
        ]
    # hoisted cross-attention K/V projection, concatenated over decoder layers
    entries.append(("d_wkvc_all",
                    np.concatenate([p["d_wkvc"][l] for l in range(Ld)], axis=1)))
    entries.append(("out_w", p["out_w"]))
    bkvc_all = np.concatenate([p["d_bkvc"][l, 0] for l in range(Ld)], axis=0)
    # rows: 0 efn_g, 1 efn_b, 2 dfn_g, 3 dfn_b, 4 bkvc_all, 5 out_b
    entries.append(("g_vec", rows_block([
        p["efn_g"][0], p["efn_b"][0], p["dfn_g"][0], p["dfn_b"][0],
        bkvc_all, p["out_b"][0]])))

    layout, chunks, cursor = {}, [], 0
    for name, arr in entries:
        arr = np.asarray(arr, np.float32)
        if arr.ndim == 1:
            arr = arr[None, :]
        r, c = arr.shape
        rpad = ((r + 7) // 8) * 8                 # keep every section 8-row aligned
        buf = np.zeros((rpad, lane), np.float32)
        buf[:r, :c] = arr
        layout[name] = (cursor, r, c)
        chunks.append(buf)
        cursor += rpad
    slab = jnp.asarray(np.concatenate(chunks, axis=0))
    meta = dict(D=D, H=H, F=F, Le=Le, Ld=Ld, n_out=n_out, n_pad=n_pad)
    return slab, layout, meta


# -----------------------------------------------------------------------------
# Wrapper: builds/caches one jitted fused pallas_call per (shape, softmax) config
# -----------------------------------------------------------------------------

class SAPAIReorderTPU:
    def __init__(self, params):
        self.slab, self.layout, self.meta = pack_params(params)
        self._fns = {}

    def _build(self, B, Se, Sd, softmax):
        m = self.meta
        n_out, n_pad = m["n_out"], m["n_pad"]
        kernel = functools.partial(
            fused_transformer_kernel, layout=self.layout,
            B=B, Se=Se, Sd=Sd, D=m["D"], H=m["H"], F=m["F"],
            Le=m["Le"], Ld=m["Ld"], n_out=n_out, n_pad=n_pad,
            apply_softmax=softmax)
        call = pl.pallas_call(
            kernel,
            out_shape=jax.ShapeDtypeStruct((B * Sd, n_pad), jnp.float32),
            # tiny footprint (<1 MiB): fits every generation incl. v7x's 64 MiB VMEM
            compiler_params=pltpu.CompilerParams(vmem_limit_bytes=32 * 1024 * 1024),
        )

        @jax.jit
        def fwd(slab, enc, dec):
            out = call(enc.astype(jnp.float32), dec.astype(jnp.float32), slab)
            # drop last decoder position + the zero-weight padded lanes
            return out.reshape(B, Sd, n_pad)[:, :Sd - 1, :n_out]

        return fwd

    def __call__(self, encoder_encodings, decoder_encodings, softmax=False):
        if encoder_encodings.ndim == 2:
            encoder_encodings = encoder_encodings[None]
        if decoder_encodings.ndim == 2:
            decoder_encodings = decoder_encodings[None]
        B, Se, _ = encoder_encodings.shape
        Sd = decoder_encodings.shape[1]
        key = (B, Se, Sd, bool(softmax))
        if key not in self._fns:
            self._fns[key] = self._build(B, Se, Sd, bool(softmax))
        return self._fns[key](self.slab, encoder_encodings, decoder_encodings)


# -----------------------------------------------------------------------------
# Pure-JAX reference (same unpacked weights) for a numerical sanity check
# -----------------------------------------------------------------------------

def reference_forward(params, enc, dec, softmax=False):
    if enc.ndim == 2:
        enc = enc[None]
    if dec.ndim == 2:
        dec = dec[None]
    B, Se, D = enc.shape
    Sd = dec.shape[1]
    H = params["nhead"]
    Dh = D // H
    n_out = params["n_out"]
    scale = 1.0 / math.sqrt(Dh)

    def ln(x, g, b):
        mean = jnp.mean(x, -1, keepdims=True)
        var = jnp.mean((x - mean) ** 2, -1, keepdims=True)
        return (x - mean) * jax.lax.rsqrt(var + 1e-5) * g + b

    def attn(q, k, v, mask):
        qh = q.reshape(B, -1, H, Dh).transpose(0, 2, 1, 3)
        kh = k.reshape(B, -1, H, Dh).transpose(0, 2, 1, 3)
        vh = v.reshape(B, -1, H, Dh).transpose(0, 2, 1, 3)
        s = jnp.einsum("bhqd,bhkd->bhqk", qh, kh) * scale
        if mask is not None:
            s = s + mask
        p = jax.nn.softmax(s, axis=-1)
        o = jnp.einsum("bhqk,bhkd->bhqd", p, vh)
        return o.transpose(0, 2, 1, 3).reshape(B, -1, D)

    x = enc.astype(jnp.float32)
    for l in range(params["e_wqkv"].shape[0]):
        qkv = x @ params["e_wqkv"][l] + params["e_bqkv"][l]
        q, k, v = qkv[..., :D], qkv[..., D:2 * D], qkv[..., 2 * D:]
        a = attn(q, k, v, None) @ params["e_wo"][l] + params["e_bo"][l]
        x = ln(x + a, params["e_ng"][l, 0], params["e_nb"][l, 0])
        f = jax.nn.relu(x @ params["e_w1"][l] + params["e_b1"][l])
        f = f @ params["e_w2"][l] + params["e_b2"][l]
        x = ln(x + f, params["e_ng"][l, 1], params["e_nb"][l, 1])
    mem = ln(x, params["efn_g"][0], params["efn_b"][0])

    row = jnp.arange(Sd)[:, None]
    col = jnp.arange(Sd)[None, :]
    causal = jnp.where(col <= row, 0.0, -1e30).astype(jnp.float32)

    y = dec.astype(jnp.float32)
    for l in range(params["d_wqkv"].shape[0]):
        qkv = y @ params["d_wqkv"][l] + params["d_bqkv"][l]
        q, k, v = qkv[..., :D], qkv[..., D:2 * D], qkv[..., 2 * D:]
        a = attn(q, k, v, causal) @ params["d_wos"][l] + params["d_bos"][l]
        y = ln(y + a, params["d_ng"][l, 0], params["d_nb"][l, 0])
        qc = y @ params["d_wqc"][l] + params["d_bqc"][l]
        kv = mem @ params["d_wkvc"][l] + params["d_bkvc"][l]
        kc, vc = kv[..., :D], kv[..., D:]
        c = attn(qc, kc, vc, None) @ params["d_woc"][l] + params["d_boc"][l]
        y = ln(y + c, params["d_ng"][l, 1], params["d_nb"][l, 1])
        f = jax.nn.relu(y @ params["d_w1"][l] + params["d_b1"][l])
        f = f @ params["d_w2"][l] + params["d_b2"][l]
        y = ln(y + f, params["d_ng"][l, 2], params["d_nb"][l, 2])
    y = ln(y, params["dfn_g"][0], params["dfn_b"][0])

    y = y[:, :-1]
    logits = y @ params["out_w"][:, :n_out] + params["out_b"][:, :n_out]
    if softmax:
        logits = jax.nn.softmax(logits, axis=2)
    return logits


# -----------------------------------------------------------------------------
# Deterministic synthetic parameters (stacked per layer, weights stored [in, out])
# -----------------------------------------------------------------------------

def init_params(key, d_model, nhead, num_encoder_layers, num_decoder_layers,
                dim_feedforward, n_tokens=5, n_pad=128):
    D, F, Le, Ld = d_model, dim_feedforward, num_encoder_layers, num_decoder_layers
    keys = iter(jax.random.split(key, 64))

    def w(shape, scale=0.05):
        return scale * jax.random.normal(next(keys), shape, jnp.float32)

    # output head zero-padded to a lane-dense width (sliced back in the wrapper)
    out_w = jnp.zeros((D, n_pad), jnp.float32).at[:, :n_tokens].set(w((D, n_tokens)))
    out_b = jnp.zeros((1, n_pad), jnp.float32).at[:, :n_tokens].set(w((1, n_tokens)))

    return dict(
        nhead=nhead, n_out=n_tokens,
        e_wqkv=w((Le, D, 3 * D)), e_bqkv=w((Le, 1, 3 * D)),
        e_wo=w((Le, D, D)), e_bo=w((Le, 1, D)),
        e_w1=w((Le, D, F)), e_b1=w((Le, 1, F)),
        e_w2=w((Le, F, D)), e_b2=w((Le, 1, D)),
        e_ng=jnp.ones((Le, 2, D), jnp.float32), e_nb=jnp.zeros((Le, 2, D), jnp.float32),
        d_wqkv=w((Ld, D, 3 * D)), d_bqkv=w((Ld, 1, 3 * D)),
        d_wos=w((Ld, D, D)), d_bos=w((Ld, 1, D)),
        d_wqc=w((Ld, D, D)), d_bqc=w((Ld, 1, D)),
        d_wkvc=w((Ld, D, 2 * D)), d_bkvc=w((Ld, 1, 2 * D)),
        d_woc=w((Ld, D, D)), d_boc=w((Ld, 1, D)),
        d_w1=w((Ld, D, F)), d_b1=w((Ld, 1, F)),
        d_w2=w((Ld, F, D)), d_b2=w((Ld, 1, D)),
        d_ng=jnp.ones((Ld, 3, D), jnp.float32), d_nb=jnp.zeros((Ld, 3, D), jnp.float32),
        efn_g=jnp.ones((1, D), jnp.float32), efn_b=jnp.zeros((1, D), jnp.float32),
        dfn_g=jnp.ones((1, D), jnp.float32), dfn_b=jnp.zeros((1, D), jnp.float32),
        out_w=out_w, out_b=out_b,
    )


# -----------------------------------------------------------------------------
# Main
# -----------------------------------------------------------------------------

if __name__ == "__main__":
    config = dict(d_model=32, nhead=4, num_encoder_layers=2,
                  num_decoder_layers=2, dim_feedforward=64)
    n_tokens = 5
    batch = 2

    key = jax.random.PRNGKey(0)
    k_params, k_enc, k_dec = jax.random.split(key, 3)

    params = init_params(k_params, config["d_model"], config["nhead"],
                         config["num_encoder_layers"], config["num_decoder_layers"],
                         config["dim_feedforward"], n_tokens)

    # encoder: (B, n_tokens, d_model); decoder: (B, n_tokens+1, d_model)
    encoder_encodings = jax.random.normal(k_enc, (batch, n_tokens, config["d_model"]), jnp.float32)
    decoder_encodings = jax.random.normal(k_dec, (batch, n_tokens + 1, config["d_model"]), jnp.float32)

    model = SAPAIReorderTPU(params)

    out = jax.block_until_ready(model(encoder_encodings, decoder_encodings, softmax=False))
    assert out.shape == (batch, n_tokens, n_tokens), out.shape

    out_sm = jax.block_until_ready(model(encoder_encodings, decoder_encodings, softmax=True))
    assert out_sm.shape == (batch, n_tokens, n_tokens)

    # sanity check against a pure-JAX reference (loose tol: MXU bf16 passes + approx vrcp)
    ref = jax.block_until_ready(
        reference_forward(params, encoder_encodings, decoder_encodings, softmax=False))
    ref_sm = jax.block_until_ready(
        reference_forward(params, encoder_encodings, decoder_encodings, softmax=True))
    assert float(jnp.max(jnp.abs(out - ref))) < 2e-2
    assert float(jnp.max(jnp.abs(out_sm - ref_sm))) < 2e-2
    assert bool(jnp.all(jnp.isfinite(out_sm)))

    print("KERNEL_OK")
</pallas_src>

<mosaic_0001>
module attributes {stable_mosaic.version = 11 : i64} {
  func.func @fused_transformer_kernel(%arg0: memref<2x5x32xf32, #tpu.memory_space<vmem>>, %arg1: memref<2x6x32xf32, #tpu.memory_space<vmem>>, %arg2: memref<888x128xf32, #tpu.memory_space<vmem>>, %arg3: memref<12x128xf32, #tpu.memory_space<vmem>>) attributes {dimension_semantics = [], scalar_prefetch = 0 : i64, scratch_operands = 0 : i64, tpu.core_type = #tpu.core_type<tc>} {
    %c0 = arith.constant 0 : index
    %c0_0 = arith.constant 0 : index
    %c0_1 = arith.constant 0 : index
    %0 = vector.load %arg0[%c0, %c0_0, %c0_1] : memref<2x5x32xf32, #tpu.memory_space<vmem>>, vector<2x5x32xf32>
    %1 = vector.shape_cast %0 : vector<2x5x32xf32> to vector<10x32xf32>
    %c160 = arith.constant 160 : index
    %c0_2 = arith.constant 0 : index
    %2 = vector.load %arg2[%c160, %c0_2] : memref<888x128xf32, #tpu.memory_space<vmem>>, vector<8x128xf32>
    %c0_3 = arith.constant 0 : index
    %c0_4 = arith.constant 0 : index
    %3 = vector.load %arg2[%c0_3, %c0_4] : memref<888x128xf32, #tpu.memory_space<vmem>>, vector<32x96xf32>
    %4 = vector.extract_strided_slice %2 {offsets = [0, 0], sizes = [1, 96], strides = [1, 1]} : vector<8x128xf32> to vector<1x96xf32>
    %cst = arith.constant dense<0.000000e+00> : vector<10x96xf32>
    %5 = tpu.matmul %1, %3, %cst {dimension_numbers = #tpu.dot_dimension_numbers<[1], [0], [0], [1], [0, 0, 1, 1], [], []>} : vector<10x32xf32>, vector<32x96xf32>, vector<10x96xf32> -> vector<10x96xf32>
    %6 = vector.broadcast %4 : vector<1x96xf32> to vector<10x96xf32>
    %7 = arith.addf %5, %6 : vector<10x96xf32>
    %8 = vector.extract_strided_slice %7 {offsets = [0, 0], sizes = [10, 32], strides = [1, 1]} : vector<10x96xf32> to vector<10x32xf32>
    %9 = vector.extract_strided_slice %7 {offsets = [0, 32], sizes = [10, 32], strides = [1, 1]} : vector<10x96xf32> to vector<10x32xf32>
    %10 = vector.extract_strided_slice %7 {offsets = [0, 64], sizes = [10, 32], strides = [1, 1]} : vector<10x96xf32> to vector<10x32xf32>
    %11 = vector.extract_strided_slice %8 {offsets = [0, 0], sizes = [10, 8], strides = [1, 1]} : vector<10x32xf32> to vector<10x8xf32>
    %12 = vector.shape_cast %11 : vector<10x8xf32> to vector<2x5x8xf32>
    %13 = vector.extract_strided_slice %8 {offsets = [0, 8], sizes = [10, 8], strides = [1, 1]} : vector<10x32xf32> to vector<10x8xf32>
    %14 = vector.shape_cast %13 : vector<10x8xf32> to vector<2x5x8xf32>
    %15 = vector.extract_strided_slice %8 {offsets = [0, 16], sizes = [10, 8], strides = [1, 1]} : vector<10x32xf32> to vector<10x8xf32>
    %16 = vector.shape_cast %15 : vector<10x8xf32> to vector<2x5x8xf32>
    %17 = vector.extract_strided_slice %8 {offsets = [0, 24], sizes = [10, 8], strides = [1, 1]} : vector<10x32xf32> to vector<10x8xf32>
    %18 = vector.shape_cast %17 : vector<10x8xf32> to vector<2x5x8xf32>
    %19 = tpu.concatenate %12, %14, %16, %18 in 0 : vector<2x5x8xf32>, vector<2x5x8xf32>, vector<2x5x8xf32>, vector<2x5x8xf32> -> vector<8x5x8xf32>
    %20 = vector.extract_strided_slice %9 {offsets = [0, 0], sizes = [10, 8], strides = [1, 1]} : vector<10x32xf32> to vector<10x8xf32>
    %21 = vector.shape_cast %20 : vector<10x8xf32> to vector<2x5x8xf32>
    %22 = vector.extract_strided_slice %9 {offsets = [0, 8], sizes = [10, 8], strides = [1, 1]} : vector<10x32xf32> to vector<10x8xf32>
    %23 = vector.shape_cast %22 : vector<10x8xf32> to vector<2x5x8xf32>
    %24 = vector.extract_strided_slice %9 {offsets = [0, 16], sizes = [10, 8], strides = [1, 1]} : vector<10x32xf32> to vector<10x8xf32>
    %25 = vector.shape_cast %24 : vector<10x8xf32> to vector<2x5x8xf32>
    %26 = vector.extract_strided_slice %9 {offsets = [0, 24], sizes = [10, 8], strides = [1, 1]} : vector<10x32xf32> to vector<10x8xf32>
    %27 = vector.shape_cast %26 : vector<10x8xf32> to vector<2x5x8xf32>
    %28 = tpu.concatenate %21, %23, %25, %27 in 0 : vector<2x5x8xf32>, vector<2x5x8xf32>, vector<2x5x8xf32>, vector<2x5x8xf32> -> vector<8x5x8xf32>
    %29 = vector.extract_strided_slice %10 {offsets = [0, 0], sizes = [10, 8], strides = [1, 1]} : vector<10x32xf32> to vector<10x8xf32>
    %30 = vector.shape_cast %29 : vector<10x8xf32> to vector<2x5x8xf32>
    %31 = vector.extract_strided_slice %10 {offsets = [0, 8], sizes = [10, 8], strides = [1, 1]} : vector<10x32xf32> to vector<10x8xf32>
    %32 = vector.shape_cast %31 : vector<10x8xf32> to vector<2x5x8xf32>
    %33 = vector.extract_strided_slice %10 {offsets = [0, 16], sizes = [10, 8], strides = [1, 1]} : vector<10x32xf32> to vector<10x8xf32>
    %34 = vector.shape_cast %33 : vector<10x8xf32> to vector<2x5x8xf32>
    %35 = vector.extract_strided_slice %10 {offsets = [0, 24], sizes = [10, 8], strides = [1, 1]} : vector<10x32xf32> to vector<10x8xf32>
    %36 = vector.shape_cast %35 : vector<10x8xf32> to vector<2x5x8xf32>
    %37 = tpu.concatenate %30, %32, %34, %36 in 0 : vector<2x5x8xf32>, vector<2x5x8xf32>, vector<2x5x8xf32>, vector<2x5x8xf32> -> vector<8x5x8xf32>
    %cst_5 = arith.constant dense<0.000000e+00> : vector<8x5x5xf32>
    %38 = tpu.matmul %19, %28, %cst_5 {dimension_numbers = #tpu.dot_dimension_numbers<[2], [2], [1], [1], [0, 0, 0, 1, 1, 1], [0], [0]>} : vector<8x5x8xf32>, vector<8x5x8xf32>, vector<8x5x5xf32> -> vector<8x5x5xf32>
    %cst_6 = arith.constant 0.353553385 : f32
    %39 = vector.broadcast %cst_6 : f32 to vector<8x5x5xf32>
    %40 = arith.mulf %38, %39 : vector<8x5x5xf32>
    %cst_7 = arith.constant dense<0xFF800000> : vector<8x5xf32>
    %41 = vector.multi_reduction <maximumf>, %40, %cst_7 [2] : vector<8x5x5xf32> to vector<8x5xf32>
    %42 = vector.shape_cast %41 : vector<8x5xf32> to vector<8x5x1xf32>
    %43 = vector.broadcast %42 : vector<8x5x1xf32> to vector<8x5x5xf32>
    %44 = arith.subf %40, %43 : vector<8x5x5xf32>
    %45 = math.exp %44 : vector<8x5x5xf32>
    %cst_8 = arith.constant dense<0.000000e+00> : vector<8x5xf32>
    %46 = vector.multi_reduction <add>, %45, %cst_8 [2] : vector<8x5x5xf32> to vector<8x5xf32>
    %47 = vector.shape_cast %46 : vector<8x5xf32> to vector<8x5x1xf32>
    %cst_9 = arith.constant dense<0.000000e+00> : vector<8x5x8xf32>
    %48 = tpu.matmul %45, %37, %cst_9 {dimension_numbers = #tpu.dot_dimension_numbers<[2], [1], [1], [2], [0, 0, 0, 1, 1, 2], [0], [0]>} : vector<8x5x5xf32>, vector<8x5x8xf32>, vector<8x5x8xf32> -> vector<8x5x8xf32>
    %49 = tpu.reciprocal %47 {approx = true} : vector<8x5x1xf32> -> vector<8x5x1xf32>
    %50 = vector.broadcast %49 : vector<8x5x1xf32> to vector<8x5x8xf32>
    %51 = arith.mulf %48, %50 : vector<8x5x8xf32>
    %52 = vector.extract_strided_slice %51 {offsets = [0, 0, 0], sizes = [2, 5, 8], strides = [1, 1, 1]} : vector<8x5x8xf32> to vector<2x5x8xf32>
    %53 = vector.shape_cast %52 : vector<2x5x8xf32> to vector<10x8xf32>
    %54 = vector.extract_strided_slice %51 {offsets = [2, 0, 0], sizes = [2, 5, 8], strides = [1, 1, 1]} : vector<8x5x8xf32> to vector<2x5x8xf32>
    %55 = vector.shape_cast %54 : vector<2x5x8xf32> to vector<10x8xf32>
    %56 = vector.extract_strided_slice %51 {offsets = [4, 0, 0], sizes = [2, 5, 8], strides = [1, 1, 1]} : vector<8x5x8xf32> to vector<2x5x8xf32>
    %57 = vector.shape_cast %56 : vector<2x5x8xf32> to vector<10x8xf32>
    %58 = vector.extract_strided_slice %51 {offsets = [6, 0, 0], sizes = [2, 5, 8], strides = [1, 1, 1]} : vector<8x5x8xf32> to vector<2x5x8xf32>
    %59 = vector.shape_cast %58 : vector<2x5x8xf32> to vector<10x8xf32>
    %60 = tpu.concatenate %53, %55, %57, %59 in 1 : vector<10x8xf32>, vector<10x8xf32>, vector<10x8xf32>, vector<10x8xf32> -> vector<10x32xf32>
    %c32 = arith.constant 32 : index
    %c0_10 = arith.constant 0 : index
    %61 = vector.load %arg2[%c32, %c0_10] : memref<888x128xf32, #tpu.memory_space<vmem>>, vector<32x32xf32>
    %62 = vector.extract_strided_slice %2 {offsets = [1, 0], sizes = [1, 32], strides = [1, 1]} : vector<8x128xf32> to vector<1x32xf32>
    %cst_11 = arith.constant dense<0.000000e+00> : vector<10x32xf32>
    %63 = tpu.matmul %60, %61, %cst_11 {dimension_numbers = #tpu.dot_dimension_numbers<[1], [0], [0], [1], [0, 0, 1, 1], [], []>} : vector<10x32xf32>, vector<32x32xf32>, vector<10x32xf32> -> vector<10x32xf32>
    %64 = vector.broadcast %62 : vector<1x32xf32> to vector<10x32xf32>
    %65 = arith.addf %63, %64 : vector<10x32xf32>
    %66 = arith.addf %1, %65 : vector<10x32xf32>
    %67 = vector.extract_strided_slice %2 {offsets = [4, 0], sizes = [1, 32], strides = [1, 1]} : vector<8x128xf32> to vector<1x32xf32>
    %68 = vector.extract_strided_slice %2 {offsets = [5, 0], sizes = [1, 32], strides = [1, 1]} : vector<8x128xf32> to vector<1x32xf32>
    %cst_12 = arith.constant dense<0.000000e+00> : vector<10xf32>
    %69 = vector.multi_reduction <add>, %66, %cst_12 [1] : vector<10x32xf32> to vector<10xf32>
    %70 = vector.shape_cast %69 : vector<10xf32> to vector<10x1xf32>
    %cst_13 = arith.constant 3.200000e+01 : f32
    %71 = vector.broadcast %cst_13 : f32 to vector<10x1xf32>
    %72 = arith.divf %70, %71 : vector<10x1xf32>
    %73 = vector.broadcast %72 : vector<10x1xf32> to vector<10x32xf32>
    %74 = arith.subf %66, %73 : vector<10x32xf32>
    %75 = arith.mulf %74, %74 : vector<10x32xf32>
    %cst_14 = arith.constant dense<0.000000e+00> : vector<10xf32>
    %76 = vector.multi_reduction <add>, %75, %cst_14 [1] : vector<10x32xf32> to vector<10xf32>
    %77 = vector.shape_cast %76 : vector<10xf32> to vector<10x1xf32>
    %cst_15 = arith.constant 3.200000e+01 : f32
    %78 = vector.broadcast %cst_15 : f32 to vector<10x1xf32>
    %79 = arith.divf %77, %78 : vector<10x1xf32>
    %cst_16 = arith.constant 9.99999974E-6 : f32
    %80 = vector.broadcast %cst_16 : f32 to vector<10x1xf32>
    %81 = arith.addf %79, %80 : vector<10x1xf32>
    %82 = math.rsqrt %81 : vector<10x1xf32>
    %83 = vector.broadcast %82 : vector<10x1xf32> to vector<10x32xf32>
    %84 = arith.mulf %74, %83 : vector<10x32xf32>
    %85 = vector.broadcast %67 : vector<1x32xf32> to vector<10x32xf32>
    %86 = arith.mulf %84, %85 : vector<10x32xf32>
    %87 = vector.broadcast %68 : vector<1x32xf32> to vector<10x32xf32>
    %88 = arith.addf %86, %87 : vector<10x32xf32>
    %c64 = arith.constant 64 : index
    %c0_17 = arith.constant 0 : index
    %89 = vector.load %arg2[%c64, %c0_17] : memref<888x128xf32, #tpu.memory_space<vmem>>, vector<32x64xf32>
    %90 = vector.extract_strided_slice %2 {offsets = [2, 0], sizes = [1, 64], strides = [1, 1]} : vector<8x128xf32> to vector<1x64xf32>
    %cst_18 = arith.constant dense<0.000000e+00> : vector<10x64xf32>
    %91 = tpu.matmul %88, %89, %cst_18 {dimension_numbers = #tpu.dot_dimension_numbers<[1], [0], [0], [1], [0, 0, 1, 1], [], []>} : vector<10x32xf32>, vector<32x64xf32>, vector<10x64xf32> -> vector<10x64xf32>
    %92 = vector.broadcast %90 : vector<1x64xf32> to vector<10x64xf32>
    %93 = arith.addf %91, %92 : vector<10x64xf32>
    %cst_19 = arith.constant 0.000000e+00 : f32
    %94 = vector.broadcast %cst_19 : f32 to vector<10x64xf32>
    %95 = arith.maximumf %93, %94 : vector<10x64xf32>
    %c96 = arith.constant 96 : index
    %c0_20 = arith.constant 0 : index
    %96 = vector.load %arg2[%c96, %c0_20] : memref<888x128xf32, #tpu.memory_space<vmem>>, vector<64x32xf32>
    %97 = vector.extract_strided_slice %2 {offsets = [3, 0], sizes = [1, 32], strides = [1, 1]} : vector<8x128xf32> to vector<1x32xf32>
    %cst_21 = arith.constant dense<0.000000e+00> : vector<10x32xf32>
    %98 = tpu.matmul %95, %96, %cst_21 {dimension_numbers = #tpu.dot_dimension_numbers<[1], [0], [0], [1], [0, 0, 1, 1], [], []>} : vector<10x64xf32>, vector<64x32xf32>, vector<10x32xf32> -> vector<10x32xf32>
    %99 = vector.broadcast %97 : vector<1x32xf32> to vector<10x32xf32>
    %100 = arith.addf %98, %99 : vector<10x32xf32>
    %101 = arith.addf %88, %100 : vector<10x32xf32>
    %102 = vector.extract_strided_slice %2 {offsets = [6, 0], sizes = [1, 32], strides = [1, 1]} : vector<8x128xf32> to vector<1x32xf32>
    %103 = vector.extract_strided_slice %2 {offsets = [7, 0], sizes = [1, 32], strides = [1, 1]} : vector<8x128xf32> to vector<1x32xf32>
    %cst_22 = arith.constant dense<0.000000e+00> : vector<10xf32>
    %104 = vector.multi_reduction <add>, %101, %cst_22 [1] : vector<10x32xf32> to vector<10xf32>
    %105 = vector.shape_cast %104 : vector<10xf32> to vector<10x1xf32>
    %cst_23 = arith.constant 3.200000e+01 : f32
    %106 = vector.broadcast %cst_23 : f32 to vector<10x1xf32>
    %107 = arith.divf %105, %106 : vector<10x1xf32>
    %108 = vector.broadcast %107 : vector<10x1xf32> to vector<10x32xf32>
    %109 = arith.subf %101, %108 : vector<10x32xf32>
    %110 = arith.mulf %109, %109 : vector<10x32xf32>
    %cst_24 = arith.constant dense<0.000000e+00> : vector<10xf32>
    %111 = vector.multi_reduction <add>, %110, %cst_24 [1] : vector<10x32xf32> to vector<10xf32>
    %112 = vector.shape_cast %111 : vector<10xf32> to vector<10x1xf32>
    %cst_25 = arith.constant 3.200000e+01 : f32
    %113 = vector.broadcast %cst_25 : f32 to vector<10x1xf32>
    %114 = arith.divf %112, %113 : vector<10x1xf32>
    %cst_26 = arith.constant 9.99999974E-6 : f32
    %115 = vector.broadcast %cst_26 : f32 to vector<10x1xf32>
    %116 = arith.addf %114, %115 : vector<10x1xf32>
    %117 = math.rsqrt %116 : vector<10x1xf32>
    %118 = vector.broadcast %117 : vector<10x1xf32> to vector<10x32xf32>
    %119 = arith.mulf %109, %118 : vector<10x32xf32>
    %120 = vector.broadcast %102 : vector<1x32xf32> to vector<10x32xf32>
    %121 = arith.mulf %119, %120 : vector<10x32xf32>
    %122 = vector.broadcast %103 : vector<1x32xf32> to vector<10x32xf32>
    %123 = arith.addf %121, %122 : vector<10x32xf32>
    %c328 = arith.constant 328 : index
    %c0_27 = arith.constant 0 : index
    %124 = vector.load %arg2[%c328, %c0_27] : memref<888x128xf32, #tpu.memory_space<vmem>>, vector<8x128xf32>
    %c168 = arith.constant 168 : index
    %c0_28 = arith.constant 0 : index
    %125 = vector.load %arg2[%c168, %c0_28] : memref<888x128xf32, #tpu.memory_space<vmem>>, vector<32x96xf32>
    %126 = vector.extract_strided_slice %124 {offsets = [0, 0], sizes = [1, 96], strides = [1, 1]} : vector<8x128xf32> to vector<1x96xf32>
    %cst_29 = arith.constant dense<0.000000e+00> : vector<10x96xf32>
    %127 = tpu.matmul %123, %125, %cst_29 {dimension_numbers = #tpu.dot_dimension_numbers<[1], [0], [0], [1], [0, 0, 1, 1], [], []>} : vector<10x32xf32>, vector<32x96xf32>, vector<10x96xf32> -> vector<10x96xf32>
    %128 = vector.broadcast %126 : vector<1x96xf32> to vector<10x96xf32>
    %129 = arith.addf %127, %128 : vector<10x96xf32>
    %130 = vector.extract_strided_slice %129 {offsets = [0, 0], sizes = [10, 32], strides = [1, 1]} : vector<10x96xf32> to vector<10x32xf32>
    %131 = vector.extract_strided_slice %129 {offsets = [0, 32], sizes = [10, 32], strides = [1, 1]} : vector<10x96xf32> to vector<10x32xf32>
    %132 = vector.extract_strided_slice %129 {offsets = [0, 64], sizes = [10, 32], strides = [1, 1]} : vector<10x96xf32> to vector<10x32xf32>
    %133 = vector.extract_strided_slice %130 {offsets = [0, 0], sizes = [10, 8], strides = [1, 1]} : vector<10x32xf32> to vector<10x8xf32>
    %134 = vector.shape_cast %133 : vector<10x8xf32> to vector<2x5x8xf32>
    %135 = vector.extract_strided_slice %130 {offsets = [0, 8], sizes = [10, 8], strides = [1, 1]} : vector<10x32xf32> to vector<10x8xf32>
    %136 = vector.shape_cast %135 : vector<10x8xf32> to vector<2x5x8xf32>
    %137 = vector.extract_strided_slice %130 {offsets = [0, 16], sizes = [10, 8], strides = [1, 1]} : vector<10x32xf32> to vector<10x8xf32>
    %138 = vector.shape_cast %137 : vector<10x8xf32> to vector<2x5x8xf32>
    %139 = vector.extract_strided_slice %130 {offsets = [0, 24], sizes = [10, 8], strides = [1, 1]} : vector<10x32xf32> to vector<10x8xf32>
    %140 = vector.shape_cast %139 : vector<10x8xf32> to vector<2x5x8xf32>
    %141 = tpu.concatenate %134, %136, %138, %140 in 0 : vector<2x5x8xf32>, vector<2x5x8xf32>, vector<2x5x8xf32>, vector<2x5x8xf32> -> vector<8x5x8xf32>
    %142 = vector.extract_strided_slice %131 {offsets = [0, 0], sizes = [10, 8], strides = [1, 1]} : vector<10x32xf32> to vector<10x8xf32>
    %143 = vector.shape_cast %142 : vector<10x8xf32> to vector<2x5x8xf32>
    %144 = vector.extract_strided_slice %131 {offsets = [0, 8], sizes = [10, 8], strides = [1, 1]} : vector<10x32xf32> to vector<10x8xf32>
    %145 = vector.shape_cast %144 : vector<10x8xf32> to vector<2x5x8xf32>
    %146 = vector.extract_strided_slice %131 {offsets = [0, 16], sizes = [10, 8], strides = [1, 1]} : vector<10x32xf32> to vector<10x8xf32>
    %147 = vector.shape_cast %146 : vector<10x8xf32> to vector<2x5x8xf32>
    %148 = vector.extract_strided_slice %131 {offsets = [0, 24], sizes = [10, 8], strides = [1, 1]} : vector<10x32xf32> to vector<10x8xf32>
    %149 = vector.shape_cast %148 : vector<10x8xf32> to vector<2x5x8xf32>
    %150 = tpu.concatenate %143, %145, %147, %149 in 0 : vector<2x5x8xf32>, vector<2x5x8xf32>, vector<2x5x8xf32>, vector<2x5x8xf32> -> vector<8x5x8xf32>
    %151 = vector.extract_strided_slice %132 {offsets = [0, 0], sizes = [10, 8], strides = [1, 1]} : vector<10x32xf32> to vector<10x8xf32>
    %152 = vector.shape_cast %151 : vector<10x8xf32> to vector<2x5x8xf32>
    %153 = vector.extract_strided_slice %132 {offsets = [0, 8], sizes = [10, 8], strides = [1, 1]} : vector<10x32xf32> to vector<10x8xf32>
    %154 = vector.shape_cast %153 : vector<10x8xf32> to vector<2x5x8xf32>
    %155 = vector.extract_strided_slice %132 {offsets = [0, 16], sizes = [10, 8], strides = [1, 1]} : vector<10x32xf32> to vector<10x8xf32>
    %156 = vector.shape_cast %155 : vector<10x8xf32> to vector<2x5x8xf32>
    %157 = vector.extract_strided_slice %132 {offsets = [0, 24], sizes = [10, 8], strides = [1, 1]} : vector<10x32xf32> to vector<10x8xf32>
    %158 = vector.shape_cast %157 : vector<10x8xf32> to vector<2x5x8xf32>
    %159 = tpu.concatenate %152, %154, %156, %158 in 0 : vector<2x5x8xf32>, vector<2x5x8xf32>, vector<2x5x8xf32>, vector<2x5x8xf32> -> vector<8x5x8xf32>
    %cst_30 = arith.constant dense<0.000000e+00> : vector<8x5x5xf32>
    %160 = tpu.matmul %141, %150, %cst_30 {dimension_numbers = #tpu.dot_dimension_numbers<[2], [2], [1], [1], [0, 0, 0, 1, 1, 1], [0], [0]>} : vector<8x5x8xf32>, vector<8x5x8xf32>, vector<8x5x5xf32> -> vector<8x5x5xf32>
    %cst_31 = arith.constant 0.353553385 : f32
    %161 = vector.broadcast %cst_31 : f32 to vector<8x5x5xf32>
    %162 = arith.mulf %160, %161 : vector<8x5x5xf32>
    %cst_32 = arith.constant dense<0xFF800000> : vector<8x5xf32>
    %163 = vector.multi_reduction <maximumf>, %162, %cst_32 [2] : vector<8x5x5xf32> to vector<8x5xf32>
    %164 = vector.shape_cast %163 : vector<8x5xf32> to vector<8x5x1xf32>
    %165 = vector.broadcast %164 : vector<8x5x1xf32> to vector<8x5x5xf32>
    %166 = arith.subf %162, %165 : vector<8x5x5xf32>
    %167 = math.exp %166 : vector<8x5x5xf32>
    %cst_33 = arith.constant dense<0.000000e+00> : vector<8x5xf32>
    %168 = vector.multi_reduction <add>, %167, %cst_33 [2] : vector<8x5x5xf32> to vector<8x5xf32>
    %169 = vector.shape_cast %168 : vector<8x5xf32> to vector<8x5x1xf32>
    %cst_34 = arith.constant dense<0.000000e+00> : vector<8x5x8xf32>
    %170 = tpu.matmul %167, %159, %cst_34 {dimension_numbers = #tpu.dot_dimension_numbers<[2], [1], [1], [2], [0, 0, 0, 1, 1, 2], [0], [0]>} : vector<8x5x5xf32>, vector<8x5x8xf32>, vector<8x5x8xf32> -> vector<8x5x8xf32>
    %171 = tpu.reciprocal %169 {approx = true} : vector<8x5x1xf32> -> vector<8x5x1xf32>
    %172 = vector.broadcast %171 : vector<8x5x1xf32> to vector<8x5x8xf32>
    %173 = arith.mulf %170, %172 : vector<8x5x8xf32>
    %174 = vector.extract_strided_slice %173 {offsets = [0, 0, 0], sizes = [2, 5, 8], strides = [1, 1, 1]} : vector<8x5x8xf32> to vector<2x5x8xf32>
    %175 = vector.shape_cast %174 : vector<2x5x8xf32> to vector<10x8xf32>
    %176 = vector.extract_strided_slice %173 {offsets = [2, 0, 0], sizes = [2, 5, 8], strides = [1, 1, 1]} : vector<8x5x8xf32> to vector<2x5x8xf32>
    %177 = vector.shape_cast %176 : vector<2x5x8xf32> to vector<10x8xf32>
    %178 = vector.extract_strided_slice %173 {offsets = [4, 0, 0], sizes = [2, 5, 8], strides = [1, 1, 1]} : vector<8x5x8xf32> to vector<2x5x8xf32>
    %179 = vector.shape_cast %178 : vector<2x5x8xf32> to vector<10x8xf32>
    %180 = vector.extract_strided_slice %173 {offsets = [6, 0, 0], sizes = [2, 5, 8], strides = [1, 1, 1]} : vector<8x5x8xf32> to vector<2x5x8xf32>
    %181 = vector.shape_cast %180 : vector<2x5x8xf32> to vector<10x8xf32>
    %182 = tpu.concatenate %175, %177, %179, %181 in 1 : vector<10x8xf32>, vector<10x8xf32>, vector<10x8xf32>, vector<10x8xf32> -> vector<10x32xf32>
    %c200 = arith.constant 200 : index
    %c0_35 = arith.constant 0 : index
    %183 = vector.load %arg2[%c200, %c0_35] : memref<888x128xf32, #tpu.memory_space<vmem>>, vector<32x32xf32>
    %184 = vector.extract_strided_slice %124 {offsets = [1, 0], sizes = [1, 32], strides = [1, 1]} : vector<8x128xf32> to vector<1x32xf32>
    %cst_36 = arith.constant dense<0.000000e+00> : vector<10x32xf32>
    %185 = tpu.matmul %182, %183, %cst_36 {dimension_numbers = #tpu.dot_dimension_numbers<[1], [0], [0], [1], [0, 0, 1, 1], [], []>} : vector<10x32xf32>, vector<32x32xf32>, vector<10x32xf32> -> vector<10x32xf32>
    %186 = vector.broadcast %184 : vector<1x32xf32> to vector<10x32xf32>
    %187 = arith.addf %185, %186 : vector<10x32xf32>
    %188 = arith.addf %123, %187 : vector<10x32xf32>
    %189 = vector.extract_strided_slice %124 {offsets = [4, 0], sizes = [1, 32], strides = [1, 1]} : vector<8x128xf32> to vector<1x32xf32>
    %190 = vector.extract_strided_slice %124 {offsets = [5, 0], sizes = [1, 32], strides = [1, 1]} : vector<8x128xf32> to vector<1x32xf32>
    %cst_37 = arith.constant dense<0.000000e+00> : vector<10xf32>
    %191 = vector.multi_reduction <add>, %188, %cst_37 [1] : vector<10x32xf32> to vector<10xf32>
    %192 = vector.shape_cast %191 : vector<10xf32> to vector<10x1xf32>
    %cst_38 = arith.constant 3.200000e+01 : f32
    %193 = vector.broadcast %cst_38 : f32 to vector<10x1xf32>
    %194 = arith.divf %192, %193 : vector<10x1xf32>
    %195 = vector.broadcast %194 : vector<10x1xf32> to vector<10x32xf32>
    %196 = arith.subf %188, %195 : vector<10x32xf32>
    %197 = arith.mulf %196, %196 : vector<10x32xf32>
    %cst_39 = arith.constant dense<0.000000e+00> : vector<10xf32>
    %198 = vector.multi_reduction <add>, %197, %cst_39 [1] : vector<10x32xf32> to vector<10xf32>
    %199 = vector.shape_cast %198 : vector<10xf32> to vector<10x1xf32>
    %cst_40 = arith.constant 3.200000e+01 : f32
    %200 = vector.broadcast %cst_40 : f32 to vector<10x1xf32>
    %201 = arith.divf %199, %200 : vector<10x1xf32>
    %cst_41 = arith.constant 9.99999974E-6 : f32
    %202 = vector.broadcast %cst_41 : f32 to vector<10x1xf32>
    %203 = arith.addf %201, %202 : vector<10x1xf32>
    %204 = math.rsqrt %203 : vector<10x1xf32>
    %205 = vector.broadcast %204 : vector<10x1xf32> to vector<10x32xf32>
    %206 = arith.mulf %196, %205 : vector<10x32xf32>
    %207 = vector.broadcast %189 : vector<1x32xf32> to vector<10x32xf32>
    %208 = arith.mulf %206, %207 : vector<10x32xf32>
    %209 = vector.broadcast %190 : vector<1x32xf32> to vector<10x32xf32>
    %210 = arith.addf %208, %209 : vector<10x32xf32>
    %c232 = arith.constant 232 : index
    %c0_42 = arith.constant 0 : index
    %211 = vector.load %arg2[%c232, %c0_42] : memref<888x128xf32, #tpu.memory_space<vmem>>, vector<32x64xf32>
    %212 = vector.extract_strided_slice %124 {offsets = [2, 0], sizes = [1, 64], strides = [1, 1]} : vector<8x128xf32> to vector<1x64xf32>
    %cst_43 = arith.constant dense<0.000000e+00> : vector<10x64xf32>
    %213 = tpu.matmul %210, %211, %cst_43 {dimension_numbers = #tpu.dot_dimension_numbers<[1], [0], [0], [1], [0, 0, 1, 1], [], []>} : vector<10x32xf32>, vector<32x64xf32>, vector<10x64xf32> -> vector<10x64xf32>
    %214 = vector.broadcast %212 : vector<1x64xf32> to vector<10x64xf32>
    %215 = arith.addf %213, %214 : vector<10x64xf32>
    %cst_44 = arith.constant 0.000000e+00 : f32
    %216 = vector.broadcast %cst_44 : f32 to vector<10x64xf32>
    %217 = arith.maximumf %215, %216 : vector<10x64xf32>
    %c264 = arith.constant 264 : index
    %c0_45 = arith.constant 0 : index
    %218 = vector.load %arg2[%c264, %c0_45] : memref<888x128xf32, #tpu.memory_space<vmem>>, vector<64x32xf32>
    %219 = vector.extract_strided_slice %124 {offsets = [3, 0], sizes = [1, 32], strides = [1, 1]} : vector<8x128xf32> to vector<1x32xf32>
    %cst_46 = arith.constant dense<0.000000e+00> : vector<10x32xf32>
    %220 = tpu.matmul %217, %218, %cst_46 {dimension_numbers = #tpu.dot_dimension_numbers<[1], [0], [0], [1], [0, 0, 1, 1], [], []>} : vector<10x64xf32>, vector<64x32xf32>, vector<10x32xf32> -> vector<10x32xf32>
    %221 = vector.broadcast %219 : vector<1x32xf32> to vector<10x32xf32>
    %222 = arith.addf %220, %221 : vector<10x32xf32>
    %223 = arith.addf %210, %222 : vector<10x32xf32>
    %224 = vector.extract_strided_slice %124 {offsets = [6, 0], sizes = [1, 32], strides = [1, 1]} : vector<8x128xf32> to vector<1x32xf32>
    %225 = vector.extract_strided_slice %124 {offsets = [7, 0], sizes = [1, 32], strides = [1, 1]} : vector<8x128xf32> to vector<1x32xf32>
    %cst_47 = arith.constant dense<0.000000e+00> : vector<10xf32>
    %226 = vector.multi_reduction <add>, %223, %cst_47 [1] : vector<10x32xf32> to vector<10xf32>
    %227 = vector.shape_cast %226 : vector<10xf32> to vector<10x1xf32>
    %cst_48 = arith.constant 3.200000e+01 : f32
    %228 = vector.broadcast %cst_48 : f32 to vector<10x1xf32>
    %229 = arith.divf %227, %228 : vector<10x1xf32>
    %230 = vector.broadcast %229 : vector<10x1xf32> to vector<10x32xf32>
    %231 = arith.subf %223, %230 : vector<10x32xf32>
    %232 = arith.mulf %231, %231 : vector<10x32xf32>
    %cst_49 = arith.constant dense<0.000000e+00> : vector<10xf32>
    %233 = vector.multi_reduction <add>, %232, %cst_49 [1] : vector<10x32xf32> to vector<10xf32>
    %234 = vector.shape_cast %233 : vector<10xf32> to vector<10x1xf32>
    %cst_50 = arith.constant 3.200000e+01 : f32
    %235 = vector.broadcast %cst_50 : f32 to vector<10x1xf32>
    %236 = arith.divf %234, %235 : vector<10x1xf32>
    %cst_51 = arith.constant 9.99999974E-6 : f32
    %237 = vector.broadcast %cst_51 : f32 to vector<10x1xf32>
    %238 = arith.addf %236, %237 : vector<10x1xf32>
    %239 = math.rsqrt %238 : vector<10x1xf32>
    %240 = vector.broadcast %239 : vector<10x1xf32> to vector<10x32xf32>
    %241 = arith.mulf %231, %240 : vector<10x32xf32>
    %242 = vector.broadcast %224 : vector<1x32xf32> to vector<10x32xf32>
    %243 = arith.mulf %241, %242 : vector<10x32xf32>
    %244 = vector.broadcast %225 : vector<1x32xf32> to vector<10x32xf32>
    %245 = arith.addf %243, %244 : vector<10x32xf32>
    %c880 = arith.constant 880 : index
    %c0_52 = arith.constant 0 : index
    %246 = vector.load %arg2[%c880, %c0_52] : memref<888x128xf32, #tpu.memory_space<vmem>>, vector<6x128xf32>
    %247 = vector.extract_strided_slice %246 {offsets = [0, 0], sizes = [1, 32], strides = [1, 1]} : vector<6x128xf32> to vector<1x32xf32>
    %248 = vector.extract_strided_slice %246 {offsets = [1, 0], sizes = [1, 32], strides = [1, 1]} : vector<6x128xf32> to vector<1x32xf32>
    %cst_53 = arith.constant dense<0.000000e+00> : vector<10xf32>
    %249 = vector.multi_reduction <add>, %245, %cst_53 [1] : vector<10x32xf32> to vector<10xf32>
    %250 = vector.shape_cast %249 : vector<10xf32> to vector<10x1xf32>
    %cst_54 = arith.constant 3.200000e+01 : f32
    %251 = vector.broadcast %cst_54 : f32 to vector<10x1xf32>
    %252 = arith.divf %250, %251 : vector<10x1xf32>
    %253 = vector.broadcast %252 : vector<10x1xf32> to vector<10x32xf32>
    %254 = arith.subf %245, %253 : vector<10x32xf32>
    %255 = arith.mulf %254, %254 : vector<10x32xf32>
    %cst_55 = arith.constant dense<0.000000e+00> : vector<10xf32>
    %256 = vector.multi_reduction <add>, %255, %cst_55 [1] : vector<10x32xf32> to vector<10xf32>
    %257 = vector.shape_cast %256 : vector<10xf32> to vector<10x1xf32>
    %cst_56 = arith.constant 3.200000e+01 : f32
    %258 = vector.broadcast %cst_56 : f32 to vector<10x1xf32>
    %259 = arith.divf %257, %258 : vector<10x1xf32>
    %cst_57 = arith.constant 9.99999974E-6 : f32
    %260 = vector.broadcast %cst_57 : f32 to vector<10x1xf32>
    %261 = arith.addf %259, %260 : vector<10x1xf32>
    %262 = math.rsqrt %261 : vector<10x1xf32>
    %263 = vector.broadcast %262 : vector<10x1xf32> to vector<10x32xf32>
    %264 = arith.mulf %254, %263 : vector<10x32xf32>
    %265 = vector.broadcast %247 : vector<1x32xf32> to vector<10x32xf32>
    %266 = arith.mulf %264, %265 : vector<10x32xf32>
    %267 = vector.broadcast %248 : vector<1x32xf32> to vector<10x32xf32>
    %268 = arith.addf %266, %267 : vector<10x32xf32>
    %c816 = arith.constant 816 : index
    %c0_58 = arith.constant 0 : index
    %269 = vector.load %arg2[%c816, %c0_58] : memref<888x128xf32, #tpu.memory_space<vmem>>, vector<32x128xf32>
    %270 = vector.extract_strided_slice %246 {offsets = [4, 0], sizes = [1, 128], strides = [1, 1]} : vector<6x128xf32> to vector<1x128xf32>
    %cst_59 = arith.constant dense<0.000000e+00> : vector<10x128xf32>
    %271 = tpu.matmul %268, %269, %cst_59 {dimension_numbers = #tpu.dot_dimension_numbers<[1], [0], [0], [1], [0, 0, 1, 1], [], []>} : vector<10x32xf32>, vector<32x128xf32>, vector<10x128xf32> -> vector<10x128xf32>
    %272 = vector.broadcast %270 : vector<1x128xf32> to vector<10x128xf32>
    %273 = arith.addf %271, %272 : vector<10x128xf32>
    %274 = tpu.iota {dimensions = array<i32: 0>} : vector<6x6xi32>
    %275 = tpu.iota {dimensions = array<i32: 1>} : vector<6x6xi32>
    %276 = arith.cmpi sle, %275, %274 : vector<6x6xi32>
    %cst_60 = arith.constant 0.000000e+00 : f32
    %cst_61 = arith.constant -1.000000e+30 : f32
    %277 = vector.broadcast %cst_60 : f32 to vector<6x6xf32>
    %278 = vector.broadcast %cst_61 : f32 to vector<6x6xf32>
    %279 = arith.select %276, %277, %278 : vector<6x6xi1>, vector<6x6xf32>
    %c0_62 = arith.constant 0 : index
    %c0_63 = arith.constant 0 : index
    %c0_64 = arith.constant 0 : index
    %280 = vector.load %arg1[%c0_62, %c0_63, %c0_64] : memref<2x6x32xf32, #tpu.memory_space<vmem>>, vector<2x6x32xf32>
    %281 = vector.shape_cast %280 : vector<2x6x32xf32> to vector<12x32xf32>
    %c560 = arith.constant 560 : index
    %c0_65 = arith.constant 0 : index
    %282 = vector.load %arg2[%c560, %c0_65] : memref<888x128xf32, #tpu.memory_space<vmem>>, vector<12x128xf32>
    %c336 = arith.constant 336 : index
    %c0_66 = arith.constant 0 : index
    %283 = vector.load %arg2[%c336, %c0_66] : memref<888x128xf32, #tpu.memory_space<vmem>>, vector<32x96xf32>
    %284 = vector.extract_strided_slice %282 {offsets = [0, 0], sizes = [1, 96], strides = [1, 1]} : vector<12x128xf32> to vector<1x96xf32>
    %cst_67 = arith.constant dense<0.000000e+00> : vector<12x96xf32>
    %285 = tpu.matmul %281, %283, %cst_67 {dimension_numbers = #tpu.dot_dimension_numbers<[1], [0], [0], [1], [0, 0, 1, 1], [], []>} : vector<12x32xf32>, vector<32x96xf32>, vector<12x96xf32> -> vector<12x96xf32>
    %286 = vector.broadcast %284 : vector<1x96xf32> to vector<12x96xf32>
    %287 = arith.addf %285, %286 : vector<12x96xf32>
    %288 = vector.extract_strided_slice %287 {offsets = [0, 0], sizes = [12, 32], strides = [1, 1]} : vector<12x96xf32> to vector<12x32xf32>
    %289 = vector.extract_strided_slice %287 {offsets = [0, 32], sizes = [12, 32], strides = [1, 1]} : vector<12x96xf32> to vector<12x32xf32>
    %290 = vector.extract_strided_slice %287 {offsets = [0, 64], sizes = [12, 32], strides = [1, 1]} : vector<12x96xf32> to vector<12x32xf32>
    %291 = vector.extract_strided_slice %288 {offsets = [0, 0], sizes = [12, 8], strides = [1, 1]} : vector<12x32xf32> to vector<12x8xf32>
    %292 = vector.shape_cast %291 : vector<12x8xf32> to vector<2x6x8xf32>
    %293 = vector.extract_strided_slice %288 {offsets = [0, 8], sizes = [12, 8], strides = [1, 1]} : vector<12x32xf32> to vector<12x8xf32>
    %294 = vector.shape_cast %293 : vector<12x8xf32> to vector<2x6x8xf32>
    %295 = vector.extract_strided_slice %288 {offsets = [0, 16], sizes = [12, 8], strides = [1, 1]} : vector<12x32xf32> to vector<12x8xf32>
    %296 = vector.shape_cast %295 : vector<12x8xf32> to vector<2x6x8xf32>
    %297 = vector.extract_strided_slice %288 {offsets = [0, 24], sizes = [12, 8], strides = [1, 1]} : vector<12x32xf32> to vector<12x8xf32>
    %298 = vector.shape_cast %297 : vector<12x8xf32> to vector<2x6x8xf32>
    %299 = tpu.concatenate %292, %294, %296, %298 in 0 : vector<2x6x8xf32>, vector<2x6x8xf32>, vector<2x6x8xf32>, vector<2x6x8xf32> -> vector<8x6x8xf32>
    %300 = vector.extract_strided_slice %289 {offsets = [0, 0], sizes = [12, 8], strides = [1, 1]} : vector<12x32xf32> to vector<12x8xf32>
    %301 = vector.shape_cast %300 : vector<12x8xf32> to vector<2x6x8xf32>
    %302 = vector.extract_strided_slice %289 {offsets = [0, 8], sizes = [12, 8], strides = [1, 1]} : vector<12x32xf32> to vector<12x8xf32>
    %303 = vector.shape_cast %302 : vector<12x8xf32> to vector<2x6x8xf32>
    %304 = vector.extract_strided_slice %289 {offsets = [0, 16], sizes = [12, 8], strides = [1, 1]} : vector<12x32xf32> to vector<12x8xf32>
    %305 = vector.shape_cast %304 : vector<12x8xf32> to vector<2x6x8xf32>
    %306 = vector.extract_strided_slice %289 {offsets = [0, 24], sizes = [12, 8], strides = [1, 1]} : vector<12x32xf32> to vector<12x8xf32>
    %307 = vector.shape_cast %306 : vector<12x8xf32> to vector<2x6x8xf32>
    %308 = tpu.concatenate %301, %303, %305, %307 in 0 : vector<2x6x8xf32>, vector<2x6x8xf32>, vector<2x6x8xf32>, vector<2x6x8xf32> -> vector<8x6x8xf32>
    %309 = vector.extract_strided_slice %290 {offsets = [0, 0], sizes = [12, 8], strides = [1, 1]} : vector<12x32xf32> to vector<12x8xf32>
    %310 = vector.shape_cast %309 : vector<12x8xf32> to vector<2x6x8xf32>
    %311 = vector.extract_strided_slice %290 {offsets = [0, 8], sizes = [12, 8], strides = [1, 1]} : vector<12x32xf32> to vector<12x8xf32>
    %312 = vector.shape_cast %311 : vector<12x8xf32> to vector<2x6x8xf32>
    %313 = vector.extract_strided_slice %290 {offsets = [0, 16], sizes = [12, 8], strides = [1, 1]} : vector<12x32xf32> to vector<12x8xf32>
    %314 = vector.shape_cast %313 : vector<12x8xf32> to vector<2x6x8xf32>
    %315 = vector.extract_strided_slice %290 {offsets = [0, 24], sizes = [12, 8], strides = [1, 1]} : vector<12x32xf32> to vector<12x8xf32>
    %316 = vector.shape_cast %315 : vector<12x8xf32> to vector<2x6x8xf32>
    %317 = tpu.concatenate %310, %312, %314, %316 in 0 : vector<2x6x8xf32>, vector<2x6x8xf32>, vector<2x6x8xf32>, vector<2x6x8xf32> -> vector<8x6x8xf32>
    %cst_68 = arith.constant dense<0.000000e+00> : vector<8x6x6xf32>
    %318 = tpu.matmul %299, %308, %cst_68 {dimension_numbers = #tpu.dot_dimension_numbers<[2], [2], [1], [1], [0, 0, 0, 1, 1, 1], [0], [0]>} : vector<8x6x8xf32>, vector<8x6x8xf32>, vector<8x6x6xf32> -> vector<8x6x6xf32>
    %cst_69 = arith.constant 0.353553385 : f32
    %319 = vector.broadcast %cst_69 : f32 to vector<8x6x6xf32>
    %320 = arith.mulf %318, %319 : vector<8x6x6xf32>
    %321 = vector.shape_cast %279 : vector<6x6xf32> to vector<1x6x6xf32>
    %322 = vector.broadcast %321 : vector<1x6x6xf32> to vector<8x6x6xf32>
    %323 = arith.addf %320, %322 : vector<8x6x6xf32>
    %cst_70 = arith.constant dense<0xFF800000> : vector<8x6xf32>
    %324 = vector.multi_reduction <maximumf>, %323, %cst_70 [2] : vector<8x6x6xf32> to vector<8x6xf32>
    %325 = vector.shape_cast %324 : vector<8x6xf32> to vector<8x6x1xf32>
    %326 = vector.broadcast %325 : vector<8x6x1xf32> to vector<8x6x6xf32>
    %327 = arith.subf %323, %326 : vector<8x6x6xf32>
    %328 = math.exp %327 : vector<8x6x6xf32>
    %cst_71 = arith.constant dense<0.000000e+00> : vector<8x6xf32>
    %329 = vector.multi_reduction <add>, %328, %cst_71 [2] : vector<8x6x6xf32> to vector<8x6xf32>
    %330 = vector.shape_cast %329 : vector<8x6xf32> to vector<8x6x1xf32>
    %cst_72 = arith.constant dense<0.000000e+00> : vector<8x6x8xf32>
    %331 = tpu.matmul %328, %317, %cst_72 {dimension_numbers = #tpu.dot_dimension_numbers<[2], [1], [1], [2], [0, 0, 0, 1, 1, 2], [0], [0]>} : vector<8x6x6xf32>, vector<8x6x8xf32>, vector<8x6x8xf32> -> vector<8x6x8xf32>
    %332 = tpu.reciprocal %330 {approx = true} : vector<8x6x1xf32> -> vector<8x6x1xf32>
    %333 = vector.broadcast %332 : vector<8x6x1xf32> to vector<8x6x8xf32>
    %334 = arith.mulf %331, %333 : vector<8x6x8xf32>
    %335 = vector.extract_strided_slice %334 {offsets = [0, 0, 0], sizes = [2, 6, 8], strides = [1, 1, 1]} : vector<8x6x8xf32> to vector<2x6x8xf32>
    %336 = vector.shape_cast %335 : vector<2x6x8xf32> to vector<12x8xf32>
    %337 = vector.extract_strided_slice %334 {offsets = [2, 0, 0], sizes = [2, 6, 8], strides = [1, 1, 1]} : vector<8x6x8xf32> to vector<2x6x8xf32>
    %338 = vector.shape_cast %337 : vector<2x6x8xf32> to vector<12x8xf32>
    %339 = vector.extract_strided_slice %334 {offsets = [4, 0, 0], sizes = [2, 6, 8], strides = [1, 1, 1]} : vector<8x6x8xf32> to vector<2x6x8xf32>
    %340 = vector.shape_cast %339 : vector<2x6x8xf32> to vector<12x8xf32>
    %341 = vector.extract_strided_slice %334 {offsets = [6, 0, 0], sizes = [2, 6, 8], strides = [1, 1, 1]} : vector<8x6x8xf32> to vector<2x6x8xf32>
    %342 = vector.shape_cast %341 : vector<2x6x8xf32> to vector<12x8xf32>
    %343 = tpu.concatenate %336, %338, %340, %342 in 1 : vector<12x8xf32>, vector<12x8xf32>, vector<12x8xf32>, vector<12x8xf32> -> vector<12x32xf32>
    %c368 = arith.constant 368 : index
    %c0_73 = arith.constant 0 : index
    %344 = vector.load %arg2[%c368, %c0_73] : memref<888x128xf32, #tpu.memory_space<vmem>>, vector<32x32xf32>
    %345 = vector.extract_strided_slice %282 {offsets = [1, 0], sizes = [1, 32], strides = [1, 1]} : vector<12x128xf32> to vector<1x32xf32>
    %cst_74 = arith.constant dense<0.000000e+00> : vector<12x32xf32>
    %346 = tpu.matmul %343, %344, %cst_74 {dimension_numbers = #tpu.dot_dimension_numbers<[1], [0], [0], [1], [0, 0, 1, 1], [], []>} : vector<12x32xf32>, vector<32x32xf32>, vector<12x32xf32> -> vector<12x32xf32>
    %347 = vector.broadcast %345 : vector<1x32xf32> to vector<12x32xf32>
    %348 = arith.addf %346, %347 : vector<12x32xf32>
    %349 = arith.addf %281, %348 : vector<12x32xf32>
    %350 = vector.extract_strided_slice %282 {offsets = [6, 0], sizes = [1, 32], strides = [1, 1]} : vector<12x128xf32> to vector<1x32xf32>
    %351 = vector.extract_strided_slice %282 {offsets = [7, 0], sizes = [1, 32], strides = [1, 1]} : vector<12x128xf32> to vector<1x32xf32>
    %cst_75 = arith.constant dense<0.000000e+00> : vector<12xf32>
    %352 = vector.multi_reduction <add>, %349, %cst_75 [1] : vector<12x32xf32> to vector<12xf32>
    %353 = vector.shape_cast %352 : vector<12xf32> to vector<12x1xf32>
    %cst_76 = arith.constant 3.200000e+01 : f32
    %354 = vector.broadcast %cst_76 : f32 to vector<12x1xf32>
    %355 = arith.divf %353, %354 : vector<12x1xf32>
    %356 = vector.broadcast %355 : vector<12x1xf32> to vector<12x32xf32>
    %357 = arith.subf %349, %356 : vector<12x32xf32>
    %358 = arith.mulf %357, %357 : vector<12x32xf32>
    %cst_77 = arith.constant dense<0.000000e+00> : vector<12xf32>
    %359 = vector.multi_reduction <add>, %358, %cst_77 [1] : vector<12x32xf32> to vector<12xf32>
    %360 = vector.shape_cast %359 : vector<12xf32> to vector<12x1xf32>
    %cst_78 = arith.constant 3.200000e+01 : f32
    %361 = vector.broadcast %cst_78 : f32 to vector<12x1xf32>
    %362 = arith.divf %360, %361 : vector<12x1xf32>
    %cst_79 = arith.constant 9.99999974E-6 : f32
    %363 = vector.broadcast %cst_79 : f32 to vector<12x1xf32>
    %364 = arith.addf %362, %363 : vector<12x1xf32>
    %365 = math.rsqrt %364 : vector<12x1xf32>
    %366 = vector.broadcast %365 : vector<12x1xf32> to vector<12x32xf32>
    %367 = arith.mulf %357, %366 : vector<12x32xf32>
    %368 = vector.broadcast %350 : vector<1x32xf32> to vector<12x32xf32>
    %369 = arith.mulf %367, %368 : vector<12x32xf32>
    %370 = vector.broadcast %351 : vector<1x32xf32> to vector<12x32xf32>
    %371 = arith.addf %369, %370 : vector<12x32xf32>
    %c400 = arith.constant 400 : index
    %c0_80 = arith.constant 0 : index
    %372 = vector.load %arg2[%c400, %c0_80] : memref<888x128xf32, #tpu.memory_space<vmem>>, vector<32x32xf32>
    %373 = vector.extract_strided_slice %282 {offsets = [2, 0], sizes = [1, 32], strides = [1, 1]} : vector<12x128xf32> to vector<1x32xf32>
    %cst_81 = arith.constant dense<0.000000e+00> : vector<12x32xf32>
    %374 = tpu.matmul %371, %372, %cst_81 {dimension_numbers = #tpu.dot_dimension_numbers<[1], [0], [0], [1], [0, 0, 1, 1], [], []>} : vector<12x32xf32>, vector<32x32xf32>, vector<12x32xf32> -> vector<12x32xf32>
    %375 = vector.broadcast %373 : vector<1x32xf32> to vector<12x32xf32>
    %376 = arith.addf %374, %375 : vector<12x32xf32>
    %377 = vector.extract_strided_slice %273 {offsets = [0, 0], sizes = [10, 32], strides = [1, 1]} : vector<10x128xf32> to vector<10x32xf32>
    %378 = vector.extract_strided_slice %273 {offsets = [0, 32], sizes = [10, 32], strides = [1, 1]} : vector<10x128xf32> to vector<10x32xf32>
    %379 = vector.extract_strided_slice %376 {offsets = [0, 0], sizes = [12, 8], strides = [1, 1]} : vector<12x32xf32> to vector<12x8xf32>
    %380 = vector.shape_cast %379 : vector<12x8xf32> to vector<2x6x8xf32>
    %381 = vector.extract_strided_slice %376 {offsets = [0, 8], sizes = [12, 8], strides = [1, 1]} : vector<12x32xf32> to vector<12x8xf32>
    %382 = vector.shape_cast %381 : vector<12x8xf32> to vector<2x6x8xf32>
    %383 = vector.extract_strided_slice %376 {offsets = [0, 16], sizes = [12, 8], strides = [1, 1]} : vector<12x32xf32> to vector<12x8xf32>
    %384 = vector.shape_cast %383 : vector<12x8xf32> to vector<2x6x8xf32>
    %385 = vector.extract_strided_slice %376 {offsets = [0, 24], sizes = [12, 8], strides = [1, 1]} : vector<12x32xf32> to vector<12x8xf32>
    %386 = vector.shape_cast %385 : vector<12x8xf32> to vector<2x6x8xf32>
    %387 = tpu.concatenate %380, %382, %384, %386 in 0 : vector<2x6x8xf32>, vector<2x6x8xf32>, vector<2x6x8xf32>, vector<2x6x8xf32> -> vector<8x6x8xf32>
    %388 = vector.extract_strided_slice %377 {offsets = [0, 0], sizes = [10, 8], strides = [1, 1]} : vector<10x32xf32> to vector<10x8xf32>
    %389 = vector.shape_cast %388 : vector<10x8xf32> to vector<2x5x8xf32>
    %390 = vector.extract_strided_slice %377 {offsets = [0, 8], sizes = [10, 8], strides = [1, 1]} : vector<10x32xf32> to vector<10x8xf32>
    %391 = vector.shape_cast %390 : vector<10x8xf32> to vector<2x5x8xf32>
    %392 = vector.extract_strided_slice %377 {offsets = [0, 16], sizes = [10, 8], strides = [1, 1]} : vector<10x32xf32> to vector<10x8xf32>
    %393 = vector.shape_cast %392 : vector<10x8xf32> to vector<2x5x8xf32>
    %394 = vector.extract_strided_slice %377 {offsets = [0, 24], sizes = [10, 8], strides = [1, 1]} : vector<10x32xf32> to vector<10x8xf32>
    %395 = vector.shape_cast %394 : vector<10x8xf32> to vector<2x5x8xf32>
    %396 = tpu.concatenate %389, %391, %393, %395 in 0 : vector<2x5x8xf32>, vector<2x5x8xf32>, vector<2x5x8xf32>, vector<2x5x8xf32> -> vector<8x5x8xf32>
    %397 = vector.extract_strided_slice %378 {offsets = [0, 0], sizes = [10, 8], strides = [1, 1]} : vector<10x32xf32> to vector<10x8xf32>
    %398 = vector.shape_cast %397 : vector<10x8xf32> to vector<2x5x8xf32>
    %399 = vector.extract_strided_slice %378 {offsets = [0, 8], sizes = [10, 8], strides = [1, 1]} : vector<10x32xf32> to vector<10x8xf32>
    %400 = vector.shape_cast %399 : vector<10x8xf32> to vector<2x5x8xf32>
    %401 = vector.extract_strided_slice %378 {offsets = [0, 16], sizes = [10, 8], strides = [1, 1]} : vector<10x32xf32> to vector<10x8xf32>
    %402 = vector.shape_cast %401 : vector<10x8xf32> to vector<2x5x8xf32>
    %403 = vector.extract_strided_slice %378 {offsets = [0, 24], sizes = [10, 8], strides = [1, 1]} : vector<10x32xf32> to vector<10x8xf32>
    %404 = vector.shape_cast %403 : vector<10x8xf32> to vector<2x5x8xf32>
    %405 = tpu.concatenate %398, %400, %402, %404 in 0 : vector<2x5x8xf32>, vector<2x5x8xf32>, vector<2x5x8xf32>, vector<2x5x8xf32> -> vector<8x5x8xf32>
    %cst_82 = arith.constant dense<0.000000e+00> : vector<8x6x5xf32>
    %406 = tpu.matmul %387, %396, %cst_82 {dimension_numbers = #tpu.dot_dimension_numbers<[2], [2], [1], [1], [0, 0, 0, 1, 1, 1], [0], [0]>} : vector<8x6x8xf32>, vector<8x5x8xf32>, vector<8x6x5xf32> -> vector<8x6x5xf32>
    %cst_83 = arith.constant 0.353553385 : f32
    %407 = vector.broadcast %cst_83 : f32 to vector<8x6x5xf32>
    %408 = arith.mulf %406, %407 : vector<8x6x5xf32>
    %cst_84 = arith.constant dense<0xFF800000> : vector<8x6xf32>
    %409 = vector.multi_reduction <maximumf>, %408, %cst_84 [2] : vector<8x6x5xf32> to vector<8x6xf32>
    %410 = vector.shape_cast %409 : vector<8x6xf32> to vector<8x6x1xf32>
    %411 = vector.broadcast %410 : vector<8x6x1xf32> to vector<8x6x5xf32>
    %412 = arith.subf %408, %411 : vector<8x6x5xf32>
    %413 = math.exp %412 : vector<8x6x5xf32>
    %cst_85 = arith.constant dense<0.000000e+00> : vector<8x6xf32>
    %414 = vector.multi_reduction <add>, %413, %cst_85 [2] : vector<8x6x5xf32> to vector<8x6xf32>
    %415 = vector.shape_cast %414 : vector<8x6xf32> to vector<8x6x1xf32>
    %cst_86 = arith.constant dense<0.000000e+00> : vector<8x6x8xf32>
    %416 = tpu.matmul %413, %405, %cst_86 {dimension_numbers = #tpu.dot_dimension_numbers<[2], [1], [1], [2], [0, 0, 0, 1, 1, 2], [0], [0]>} : vector<8x6x5xf32>, vector<8x5x8xf32>, vector<8x6x8xf32> -> vector<8x6x8xf32>
    %417 = tpu.reciprocal %415 {approx = true} : vector<8x6x1xf32> -> vector<8x6x1xf32>
    %418 = vector.broadcast %417 : vector<8x6x1xf32> to vector<8x6x8xf32>
    %419 = arith.mulf %416, %418 : vector<8x6x8xf32>
    %420 = vector.extract_strided_slice %419 {offsets = [0, 0, 0], sizes = [2, 6, 8], strides = [1, 1, 1]} : vector<8x6x8xf32> to vector<2x6x8xf32>
    %421 = vector.shape_cast %420 : vector<2x6x8xf32> to vector<12x8xf32>
    %422 = vector.extract_strided_slice %419 {offsets = [2, 0, 0], sizes = [2, 6, 8], strides = [1, 1, 1]} : vector<8x6x8xf32> to vector<2x6x8xf32>
    %423 = vector.shape_cast %422 : vector<2x6x8xf32> to vector<12x8xf32>
    %424 = vector.extract_strided_slice %419 {offsets = [4, 0, 0], sizes = [2, 6, 8], strides = [1, 1, 1]} : vector<8x6x8xf32> to vector<2x6x8xf32>
    %425 = vector.shape_cast %424 : vector<2x6x8xf32> to vector<12x8xf32>
    %426 = vector.extract_strided_slice %419 {offsets = [6, 0, 0], sizes = [2, 6, 8], strides = [1, 1, 1]} : vector<8x6x8xf32> to vector<2x6x8xf32>
    %427 = vector.shape_cast %426 : vector<2x6x8xf32> to vector<12x8xf32>
    %428 = tpu.concatenate %421, %423, %425, %427 in 1 : vector<12x8xf32>, vector<12x8xf32>, vector<12x8xf32>, vector<12x8xf32> -> vector<12x32xf32>
    %c432 = arith.constant 432 : index
    %c0_87 = arith.constant 0 : index
    %429 = vector.load %arg2[%c432, %c0_87] : memref<888x128xf32, #tpu.memory_space<vmem>>, vector<32x32xf32>
    %430 = vector.extract_strided_slice %282 {offsets = [3, 0], sizes = [1, 32], strides = [1, 1]} : vector<12x128xf32> to vector<1x32xf32>
    %cst_88 = arith.constant dense<0.000000e+00> : vector<12x32xf32>
    %431 = tpu.matmul %428, %429, %cst_88 {dimension_numbers = #tpu.dot_dimension_numbers<[1], [0], [0], [1], [0, 0, 1, 1], [], []>} : vector<12x32xf32>, vector<32x32xf32>, vector<12x32xf32> -> vector<12x32xf32>
    %432 = vector.broadcast %430 : vector<1x32xf32> to vector<12x32xf32>
    %433 = arith.addf %431, %432 : vector<12x32xf32>
    %434 = arith.addf %371, %433 : vector<12x32xf32>
    %435 = vector.extract_strided_slice %282 {offsets = [8, 0], sizes = [1, 32], strides = [1, 1]} : vector<12x128xf32> to vector<1x32xf32>
    %436 = vector.extract_strided_slice %282 {offsets = [9, 0], sizes = [1, 32], strides = [1, 1]} : vector<12x128xf32> to vector<1x32xf32>
    %cst_89 = arith.constant dense<0.000000e+00> : vector<12xf32>
    %437 = vector.multi_reduction <add>, %434, %cst_89 [1] : vector<12x32xf32> to vector<12xf32>
    %438 = vector.shape_cast %437 : vector<12xf32> to vector<12x1xf32>
    %cst_90 = arith.constant 3.200000e+01 : f32
    %439 = vector.broadcast %cst_90 : f32 to vector<12x1xf32>
    %440 = arith.divf %438, %439 : vector<12x1xf32>
    %441 = vector.broadcast %440 : vector<12x1xf32> to vector<12x32xf32>
    %442 = arith.subf %434, %441 : vector<12x32xf32>
    %443 = arith.mulf %442, %442 : vector<12x32xf32>
    %cst_91 = arith.constant dense<0.000000e+00> : vector<12xf32>
    %444 = vector.multi_reduction <add>, %443, %cst_91 [1] : vector<12x32xf32> to vector<12xf32>
    %445 = vector.shape_cast %444 : vector<12xf32> to vector<12x1xf32>
    %cst_92 = arith.constant 3.200000e+01 : f32
    %446 = vector.broadcast %cst_92 : f32 to vector<12x1xf32>
    %447 = arith.divf %445, %446 : vector<12x1xf32>
    %cst_93 = arith.constant 9.99999974E-6 : f32
    %448 = vector.broadcast %cst_93 : f32 to vector<12x1xf32>
    %449 = arith.addf %447, %448 : vector<12x1xf32>
    %450 = math.rsqrt %449 : vector<12x1xf32>
    %451 = vector.broadcast %450 : vector<12x1xf32> to vector<12x32xf32>
    %452 = arith.mulf %442, %451 : vector<12x32xf32>
    %453 = vector.broadcast %435 : vector<1x32xf32> to vector<12x32xf32>
    %454 = arith.mulf %452, %453 : vector<12x32xf32>
    %455 = vector.broadcast %436 : vector<1x32xf32> to vector<12x32xf32>
    %456 = arith.addf %454, %455 : vector<12x32xf32>
    %c464 = arith.constant 464 : index
    %c0_94 = arith.constant 0 : index
    %457 = vector.load %arg2[%c464, %c0_94] : memref<888x128xf32, #tpu.memory_space<vmem>>, vector<32x64xf32>
    %458 = vector.extract_strided_slice %282 {offsets = [4, 0], sizes = [1, 64], strides = [1, 1]} : vector<12x128xf32> to vector<1x64xf32>
    %cst_95 = arith.constant dense<0.000000e+00> : vector<12x64xf32>
    %459 = tpu.matmul %456, %457, %cst_95 {dimension_numbers = #tpu.dot_dimension_numbers<[1], [0], [0], [1], [0, 0, 1, 1], [], []>} : vector<12x32xf32>, vector<32x64xf32>, vector<12x64xf32> -> vector<12x64xf32>
    %460 = vector.broadcast %458 : vector<1x64xf32> to vector<12x64xf32>
    %461 = arith.addf %459, %460 : vector<12x64xf32>
    %cst_96 = arith.constant 0.000000e+00 : f32
    %462 = vector.broadcast %cst_96 : f32 to vector<12x64xf32>
    %463 = arith.maximumf %461, %462 : vector<12x64xf32>
    %c496 = arith.constant 496 : index
    %c0_97 = arith.constant 0 : index
    %464 = vector.load %arg2[%c496, %c0_97] : memref<888x128xf32, #tpu.memory_space<vmem>>, vector<64x32xf32>
    %465 = vector.extract_strided_slice %282 {offsets = [5, 0], sizes = [1, 32], strides = [1, 1]} : vector<12x128xf32> to vector<1x32xf32>
    %cst_98 = arith.constant dense<0.000000e+00> : vector<12x32xf32>
    %466 = tpu.matmul %463, %464, %cst_98 {dimension_numbers = #tpu.dot_dimension_numbers<[1], [0], [0], [1], [0, 0, 1, 1], [], []>} : vector<12x64xf32>, vector<64x32xf32>, vector<12x32xf32> -> vector<12x32xf32>
    %467 = vector.broadcast %465 : vector<1x32xf32> to vector<12x32xf32>
    %468 = arith.addf %466, %467 : vector<12x32xf32>
    %469 = arith.addf %456, %468 : vector<12x32xf32>
    %470 = vector.extract_strided_slice %282 {offsets = [10, 0], sizes = [1, 32], strides = [1, 1]} : vector<12x128xf32> to vector<1x32xf32>
    %471 = vector.extract_strided_slice %282 {offsets = [11, 0], sizes = [1, 32], strides = [1, 1]} : vector<12x128xf32> to vector<1x32xf32>
    %cst_99 = arith.constant dense<0.000000e+00> : vector<12xf32>
    %472 = vector.multi_reduction <add>, %469, %cst_99 [1] : vector<12x32xf32> to vector<12xf32>
    %473 = vector.shape_cast %472 : vector<12xf32> to vector<12x1xf32>
    %cst_100 = arith.constant 3.200000e+01 : f32
    %474 = vector.broadcast %cst_100 : f32 to vector<12x1xf32>
    %475 = arith.divf %473, %474 : vector<12x1xf32>
    %476 = vector.broadcast %475 : vector<12x1xf32> to vector<12x32xf32>
    %477 = arith.subf %469, %476 : vector<12x32xf32>
    %478 = arith.mulf %477, %477 : vector<12x32xf32>
    %cst_101 = arith.constant dense<0.000000e+00> : vector<12xf32>
    %479 = vector.multi_reduction <add>, %478, %cst_101 [1] : vector<12x32xf32> to vector<12xf32>
    %480 = vector.shape_cast %479 : vector<12xf32> to vector<12x1xf32>
    %cst_102 = arith.constant 3.200000e+01 : f32
    %481 = vector.broadcast %cst_102 : f32 to vector<12x1xf32>
    %482 = arith.divf %480, %481 : vector<12x1xf32>
    %cst_103 = arith.constant 9.99999974E-6 : f32
    %483 = vector.broadcast %cst_103 : f32 to vector<12x1xf32>
    %484 = arith.addf %482, %483 : vector<12x1xf32>
    %485 = math.rsqrt %484 : vector<12x1xf32>
    %486 = vector.broadcast %485 : vector<12x1xf32> to vector<12x32xf32>
    %487 = arith.mulf %477, %486 : vector<12x32xf32>
    %488 = vector.broadcast %470 : vector<1x32xf32> to vector<12x32xf32>
    %489 = arith.mulf %487, %488 : vector<12x32xf32>
    %490 = vector.broadcast %471 : vector<1x32xf32> to vector<12x32xf32>
    %491 = arith.addf %489, %490 : vector<12x32xf32>
    %c800 = arith.constant 800 : index
    %c0_104 = arith.constant 0 : index
    %492 = vector.load %arg2[%c800, %c0_104] : memref<888x128xf32, #tpu.memory_space<vmem>>, vector<12x128xf32>
    %c576 = arith.constant 576 : index
    %c0_105 = arith.constant 0 : index
    %493 = vector.load %arg2[%c576, %c0_105] : memref<888x128xf32, #tpu.memory_space<vmem>>, vector<32x96xf32>
    %494 = vector.extract_strided_slice %492 {offsets = [0, 0], sizes = [1, 96], strides = [1, 1]} : vector<12x128xf32> to vector<1x96xf32>
    %cst_106 = arith.constant dense<0.000000e+00> : vector<12x96xf32>
    %495 = tpu.matmul %491, %493, %cst_106 {dimension_numbers = #tpu.dot_dimension_numbers<[1], [0], [0], [1], [0, 0, 1, 1], [], []>} : vector<12x32xf32>, vector<32x96xf32>, vector<12x96xf32> -> vector<12x96xf32>
    %496 = vector.broadcast %494 : vector<1x96xf32> to vector<12x96xf32>
    %497 = arith.addf %495, %496 : vector<12x96xf32>
    %498 = vector.extract_strided_slice %497 {offsets = [0, 0], sizes = [12, 32], strides = [1, 1]} : vector<12x96xf32> to vector<12x32xf32>
    %499 = vector.extract_strided_slice %497 {offsets = [0, 32], sizes = [12, 32], strides = [1, 1]} : vector<12x96xf32> to vector<12x32xf32>
    %500 = vector.extract_strided_slice %497 {offsets = [0, 64], sizes = [12, 32], strides = [1, 1]} : vector<12x96xf32> to vector<12x32xf32>
    %501 = vector.extract_strided_slice %498 {offsets = [0, 0], sizes = [12, 8], strides = [1, 1]} : vector<12x32xf32> to vector<12x8xf32>
    %502 = vector.shape_cast %501 : vector<12x8xf32> to vector<2x6x8xf32>
    %503 = vector.extract_strided_slice %498 {offsets = [0, 8], sizes = [12, 8], strides = [1, 1]} : vector<12x32xf32> to vector<12x8xf32>
    %504 = vector.shape_cast %503 : vector<12x8xf32> to vector<2x6x8xf32>
    %505 = vector.extract_strided_slice %498 {offsets = [0, 16], sizes = [12, 8], strides = [1, 1]} : vector<12x32xf32> to vector<12x8xf32>
    %506 = vector.shape_cast %505 : vector<12x8xf32> to vector<2x6x8xf32>
    %507 = vector.extract_strided_slice %498 {offsets = [0, 24], sizes = [12, 8], strides = [1, 1]} : vector<12x32xf32> to vector<12x8xf32>
    %508 = vector.shape_cast %507 : vector<12x8xf32> to vector<2x6x8xf32>
    %509 = tpu.concatenate %502, %504, %506, %508 in 0 : vector<2x6x8xf32>, vector<2x6x8xf32>, vector<2x6x8xf32>, vector<2x6x8xf32> -> vector<8x6x8xf32>
    %510 = vector.extract_strided_slice %499 {offsets = [0, 0], sizes = [12, 8], strides = [1, 1]} : vector<12x32xf32> to vector<12x8xf32>
    %511 = vector.shape_cast %510 : vector<12x8xf32> to vector<2x6x8xf32>
    %512 = vector.extract_strided_slice %499 {offsets = [0, 8], sizes = [12, 8], strides = [1, 1]} : vector<12x32xf32> to vector<12x8xf32>
    %513 = vector.shape_cast %512 : vector<12x8xf32> to vector<2x6x8xf32>
    %514 = vector.extract_strided_slice %499 {offsets = [0, 16], sizes = [12, 8], strides = [1, 1]} : vector<12x32xf32> to vector<12x8xf32>
    %515 = vector.shape_cast %514 : vector<12x8xf32> to vector<2x6x8xf32>
    %516 = vector.extract_strided_slice %499 {offsets = [0, 24], sizes = [12, 8], strides = [1, 1]} : vector<12x32xf32> to vector<12x8xf32>
    %517 = vector.shape_cast %516 : vector<12x8xf32> to vector<2x6x8xf32>
    %518 = tpu.concatenate %511, %513, %515, %517 in 0 : vector<2x6x8xf32>, vector<2x6x8xf32>, vector<2x6x8xf32>, vector<2x6x8xf32> -> vector<8x6x8xf32>
    %519 = vector.extract_strided_slice %500 {offsets = [0, 0], sizes = [12, 8], strides = [1, 1]} : vector<12x32xf32> to vector<12x8xf32>
    %520 = vector.shape_cast %519 : vector<12x8xf32> to vector<2x6x8xf32>
    %521 = vector.extract_strided_slice %500 {offsets = [0, 8], sizes = [12, 8], strides = [1, 1]} : vector<12x32xf32> to vector<12x8xf32>
    %522 = vector.shape_cast %521 : vector<12x8xf32> to vector<2x6x8xf32>
    %523 = vector.extract_strided_slice %500 {offsets = [0, 16], sizes = [12, 8], strides = [1, 1]} : vector<12x32xf32> to vector<12x8xf32>
    %524 = vector.shape_cast %523 : vector<12x8xf32> to vector<2x6x8xf32>
    %525 = vector.extract_strided_slice %500 {offsets = [0, 24], sizes = [12, 8], strides = [1, 1]} : vector<12x32xf32> to vector<12x8xf32>
    %526 = vector.shape_cast %525 : vector<12x8xf32> to vector<2x6x8xf32>
    %527 = tpu.concatenate %520, %522, %524, %526 in 0 : vector<2x6x8xf32>, vector<2x6x8xf32>, vector<2x6x8xf32>, vector<2x6x8xf32> -> vector<8x6x8xf32>
    %cst_107 = arith.constant dense<0.000000e+00> : vector<8x6x6xf32>
    %528 = tpu.matmul %509, %518, %cst_107 {dimension_numbers = #tpu.dot_dimension_numbers<[2], [2], [1], [1], [0, 0, 0, 1, 1, 1], [0], [0]>} : vector<8x6x8xf32>, vector<8x6x8xf32>, vector<8x6x6xf32> -> vector<8x6x6xf32>
    %cst_108 = arith.constant 0.353553385 : f32
    %529 = vector.broadcast %cst_108 : f32 to vector<8x6x6xf32>
    %530 = arith.mulf %528, %529 : vector<8x6x6xf32>
    %531 = vector.shape_cast %279 : vector<6x6xf32> to vector<1x6x6xf32>
    %532 = vector.broadcast %531 : vector<1x6x6xf32> to vector<8x6x6xf32>
    %533 = arith.addf %530, %532 : vector<8x6x6xf32>
    %cst_109 = arith.constant dense<0xFF800000> : vector<8x6xf32>
    %534 = vector.multi_reduction <maximumf>, %533, %cst_109 [2] : vector<8x6x6xf32> to vector<8x6xf32>
    %535 = vector.shape_cast %534 : vector<8x6xf32> to vector<8x6x1xf32>
    %536 = vector.broadcast %535 : vector<8x6x1xf32> to vector<8x6x6xf32>
    %537 = arith.subf %533, %536 : vector<8x6x6xf32>
    %538 = math.exp %537 : vector<8x6x6xf32>
    %cst_110 = arith.constant dense<0.000000e+00> : vector<8x6xf32>
    %539 = vector.multi_reduction <add>, %538, %cst_110 [2] : vector<8x6x6xf32> to vector<8x6xf32>
    %540 = vector.shape_cast %539 : vector<8x6xf32> to vector<8x6x1xf32>
    %cst_111 = arith.constant dense<0.000000e+00> : vector<8x6x8xf32>
    %541 = tpu.matmul %538, %527, %cst_111 {dimension_numbers = #tpu.dot_dimension_numbers<[2], [1], [1], [2], [0, 0, 0, 1, 1, 2], [0], [0]>} : vector<8x6x6xf32>, vector<8x6x8xf32>, vector<8x6x8xf32> -> vector<8x6x8xf32>
    %542 = tpu.reciprocal %540 {approx = true} : vector<8x6x1xf32> -> vector<8x6x1xf32>
    %543 = vector.broadcast %542 : vector<8x6x1xf32> to vector<8x6x8xf32>
    %544 = arith.mulf %541, %543 : vector<8x6x8xf32>
    %545 = vector.extract_strided_slice %544 {offsets = [0, 0, 0], sizes = [2, 6, 8], strides = [1, 1, 1]} : vector<8x6x8xf32> to vector<2x6x8xf32>
    %546 = vector.shape_cast %545 : vector<2x6x8xf32> to vector<12x8xf32>
    %547 = vector.extract_strided_slice %544 {offsets = [2, 0, 0], sizes = [2, 6, 8], strides = [1, 1, 1]} : vector<8x6x8xf32> to vector<2x6x8xf32>
    %548 = vector.shape_cast %547 : vector<2x6x8xf32> to vector<12x8xf32>
    %549 = vector.extract_strided_slice %544 {offsets = [4, 0, 0], sizes = [2, 6, 8], strides = [1, 1, 1]} : vector<8x6x8xf32> to vector<2x6x8xf32>
    %550 = vector.shape_cast %549 : vector<2x6x8xf32> to vector<12x8xf32>
    %551 = vector.extract_strided_slice %544 {offsets = [6, 0, 0], sizes = [2, 6, 8], strides = [1, 1, 1]} : vector<8x6x8xf32> to vector<2x6x8xf32>
    %552 = vector.shape_cast %551 : vector<2x6x8xf32> to vector<12x8xf32>
    %553 = tpu.concatenate %546, %548, %550, %552 in 1 : vector<12x8xf32>, vector<12x8xf32>, vector<12x8xf32>, vector<12x8xf32> -> vector<12x32xf32>
    %c608 = arith.constant 608 : index
    %c0_112 = arith.constant 0 : index
    %554 = vector.load %arg2[%c608, %c0_112] : memref<888x128xf32, #tpu.memory_space<vmem>>, vector<32x32xf32>
    %555 = vector.extract_strided_slice %492 {offsets = [1, 0], sizes = [1, 32], strides = [1, 1]} : vector<12x128xf32> to vector<1x32xf32>
    %cst_113 = arith.constant dense<0.000000e+00> : vector<12x32xf32>
    %556 = tpu.matmul %553, %554, %cst_113 {dimension_numbers = #tpu.dot_dimension_numbers<[1], [0], [0], [1], [0, 0, 1, 1], [], []>} : vector<12x32xf32>, vector<32x32xf32>, vector<12x32xf32> -> vector<12x32xf32>
    %557 = vector.broadcast %555 : vector<1x32xf32> to vector<12x32xf32>
    %558 = arith.addf %556, %557 : vector<12x32xf32>
    %559 = arith.addf %491, %558 : vector<12x32xf32>
    %560 = vector.extract_strided_slice %492 {offsets = [6, 0], sizes = [1, 32], strides = [1, 1]} : vector<12x128xf32> to vector<1x32xf32>
    %561 = vector.extract_strided_slice %492 {offsets = [7, 0], sizes = [1, 32], strides = [1, 1]} : vector<12x128xf32> to vector<1x32xf32>
    %cst_114 = arith.constant dense<0.000000e+00> : vector<12xf32>
    %562 = vector.multi_reduction <add>, %559, %cst_114 [1] : vector<12x32xf32> to vector<12xf32>
    %563 = vector.shape_cast %562 : vector<12xf32> to vector<12x1xf32>
    %cst_115 = arith.constant 3.200000e+01 : f32
    %564 = vector.broadcast %cst_115 : f32 to vector<12x1xf32>
    %565 = arith.divf %563, %564 : vector<12x1xf32>
    %566 = vector.broadcast %565 : vector<12x1xf32> to vector<12x32xf32>
    %567 = arith.subf %559, %566 : vector<12x32xf32>
    %568 = arith.mulf %567, %567 : vector<12x32xf32>
    %cst_116 = arith.constant dense<0.000000e+00> : vector<12xf32>
    %569 = vector.multi_reduction <add>, %568, %cst_116 [1] : vector<12x32xf32> to vector<12xf32>
    %570 = vector.shape_cast %569 : vector<12xf32> to vector<12x1xf32>
    %cst_117 = arith.constant 3.200000e+01 : f32
    %571 = vector.broadcast %cst_117 : f32 to vector<12x1xf32>
    %572 = arith.divf %570, %571 : vector<12x1xf32>
    %cst_118 = arith.constant 9.99999974E-6 : f32
    %573 = vector.broadcast %cst_118 : f32 to vector<12x1xf32>
    %574 = arith.addf %572, %573 : vector<12x1xf32>
    %575 = math.rsqrt %574 : vector<12x1xf32>
    %576 = vector.broadcast %575 : vector<12x1xf32> to vector<12x32xf32>
    %577 = arith.mulf %567, %576 : vector<12x32xf32>
    %578 = vector.broadcast %560 : vector<1x32xf32> to vector<12x32xf32>
    %579 = arith.mulf %577, %578 : vector<12x32xf32>
    %580 = vector.broadcast %561 : vector<1x32xf32> to vector<12x32xf32>
    %581 = arith.addf %579, %580 : vector<12x32xf32>
    %c640 = arith.constant 640 : index
    %c0_119 = arith.constant 0 : index
    %582 = vector.load %arg2[%c640, %c0_119] : memref<888x128xf32, #tpu.memory_space<vmem>>, vector<32x32xf32>
    %583 = vector.extract_strided_slice %492 {offsets = [2, 0], sizes = [1, 32], strides = [1, 1]} : vector<12x128xf32> to vector<1x32xf32>
    %cst_120 = arith.constant dense<0.000000e+00> : vector<12x32xf32>
    %584 = tpu.matmul %581, %582, %cst_120 {dimension_numbers = #tpu.dot_dimension_numbers<[1], [0], [0], [1], [0, 0, 1, 1], [], []>} : vector<12x32xf32>, vector<32x32xf32>, vector<12x32xf32> -> vector<12x32xf32>
    %585 = vector.broadcast %583 : vector<1x32xf32> to vector<12x32xf32>
    %586 = arith.addf %584, %585 : vector<12x32xf32>
    %587 = vector.extract_strided_slice %273 {offsets = [0, 64], sizes = [10, 32], strides = [1, 1]} : vector<10x128xf32> to vector<10x32xf32>
    %588 = vector.extract_strided_slice %273 {offsets = [0, 96], sizes = [10, 32], strides = [1, 1]} : vector<10x128xf32> to vector<10x32xf32>
    %589 = vector.extract_strided_slice %586 {offsets = [0, 0], sizes = [12, 8], strides = [1, 1]} : vector<12x32xf32> to vector<12x8xf32>
    %590 = vector.shape_cast %589 : vector<12x8xf32> to vector<2x6x8xf32>
    %591 = vector.extract_strided_slice %586 {offsets = [0, 8], sizes = [12, 8], strides = [1, 1]} : vector<12x32xf32> to vector<12x8xf32>
    %592 = vector.shape_cast %591 : vector<12x8xf32> to vector<2x6x8xf32>
    %593 = vector.extract_strided_slice %586 {offsets = [0, 16], sizes = [12, 8], strides = [1, 1]} : vector<12x32xf32> to vector<12x8xf32>
    %594 = vector.shape_cast %593 : vector<12x8xf32> to vector<2x6x8xf32>
    %595 = vector.extract_strided_slice %586 {offsets = [0, 24], sizes = [12, 8], strides = [1, 1]} : vector<12x32xf32> to vector<12x8xf32>
    %596 = vector.shape_cast %595 : vector<12x8xf32> to vector<2x6x8xf32>
    %597 = tpu.concatenate %590, %592, %594, %596 in 0 : vector<2x6x8xf32>, vector<2x6x8xf32>, vector<2x6x8xf32>, vector<2x6x8xf32> -> vector<8x6x8xf32>
    %598 = vector.extract_strided_slice %587 {offsets = [0, 0], sizes = [10, 8], strides = [1, 1]} : vector<10x32xf32> to vector<10x8xf32>
    %599 = vector.shape_cast %598 : vector<10x8xf32> to vector<2x5x8xf32>
    %600 = vector.extract_strided_slice %587 {offsets = [0, 8], sizes = [10, 8], strides = [1, 1]} : vector<10x32xf32> to vector<10x8xf32>
    %601 = vector.shape_cast %600 : vector<10x8xf32> to vector<2x5x8xf32>
    %602 = vector.extract_strided_slice %587 {offsets = [0, 16], sizes = [10, 8], strides = [1, 1]} : vector<10x32xf32> to vector<10x8xf32>
    %603 = vector.shape_cast %602 : vector<10x8xf32> to vector<2x5x8xf32>
    %604 = vector.extract_strided_slice %587 {offsets = [0, 24], sizes = [10, 8], strides = [1, 1]} : vector<10x32xf32> to vector<10x8xf32>
    %605 = vector.shape_cast %604 : vector<10x8xf32> to vector<2x5x8xf32>
    %606 = tpu.concatenate %599, %601, %603, %605 in 0 : vector<2x5x8xf32>, vector<2x5x8xf32>, vector<2x5x8xf32>, vector<2x5x8xf32> -> vector<8x5x8xf32>
    %607 = vector.extract_strided_slice %588 {offsets = [0, 0], sizes = [10, 8], strides = [1, 1]} : vector<10x32xf32> to vector<10x8xf32>
    %608 = vector.shape_cast %607 : vector<10x8xf32> to vector<2x5x8xf32>
    %609 = vector.extract_strided_slice %588 {offsets = [0, 8], sizes = [10, 8], strides = [1, 1]} : vector<10x32xf32> to vector<10x8xf32>
    %610 = vector.shape_cast %609 : vector<10x8xf32> to vector<2x5x8xf32>
    %611 = vector.extract_strided_slice %588 {offsets = [0, 16], sizes = [10, 8], strides = [1, 1]} : vector<10x32xf32> to vector<10x8xf32>
    %612 = vector.shape_cast %611 : vector<10x8xf32> to vector<2x5x8xf32>
    %613 = vector.extract_strided_slice %588 {offsets = [0, 24], sizes = [10, 8], strides = [1, 1]} : vector<10x32xf32> to vector<10x8xf32>
    %614 = vector.shape_cast %613 : vector<10x8xf32> to vector<2x5x8xf32>
    %615 = tpu.concatenate %608, %610, %612, %614 in 0 : vector<2x5x8xf32>, vector<2x5x8xf32>, vector<2x5x8xf32>, vector<2x5x8xf32> -> vector<8x5x8xf32>
    %cst_121 = arith.constant dense<0.000000e+00> : vector<8x6x5xf32>
    %616 = tpu.matmul %597, %606, %cst_121 {dimension_numbers = #tpu.dot_dimension_numbers<[2], [2], [1], [1], [0, 0, 0, 1, 1, 1], [0], [0]>} : vector<8x6x8xf32>, vector<8x5x8xf32>, vector<8x6x5xf32> -> vector<8x6x5xf32>
    %cst_122 = arith.constant 0.353553385 : f32
    %617 = vector.broadcast %cst_122 : f32 to vector<8x6x5xf32>
    %618 = arith.mulf %616, %617 : vector<8x6x5xf32>
    %cst_123 = arith.constant dense<0xFF800000> : vector<8x6xf32>
    %619 = vector.multi_reduction <maximumf>, %618, %cst_123 [2] : vector<8x6x5xf32> to vector<8x6xf32>
    %620 = vector.shape_cast %619 : vector<8x6xf32> to vector<8x6x1xf32>
    %621 = vector.broadcast %620 : vector<8x6x1xf32> to vector<8x6x5xf32>
    %622 = arith.subf %618, %621 : vector<8x6x5xf32>
    %623 = math.exp %622 : vector<8x6x5xf32>
    %cst_124 = arith.constant dense<0.000000e+00> : vector<8x6xf32>
    %624 = vector.multi_reduction <add>, %623, %cst_124 [2] : vector<8x6x5xf32> to vector<8x6xf32>
    %625 = vector.shape_cast %624 : vector<8x6xf32> to vector<8x6x1xf32>
    %cst_125 = arith.constant dense<0.000000e+00> : vector<8x6x8xf32>
    %626 = tpu.matmul %623, %615, %cst_125 {dimension_numbers = #tpu.dot_dimension_numbers<[2], [1], [1], [2], [0, 0, 0, 1, 1, 2], [0], [0]>} : vector<8x6x5xf32>, vector<8x5x8xf32>, vector<8x6x8xf32> -> vector<8x6x8xf32>
    %627 = tpu.reciprocal %625 {approx = true} : vector<8x6x1xf32> -> vector<8x6x1xf32>
    %628 = vector.broadcast %627 : vector<8x6x1xf32> to vector<8x6x8xf32>
    %629 = arith.mulf %626, %628 : vector<8x6x8xf32>
    %630 = vector.extract_strided_slice %629 {offsets = [0, 0, 0], sizes = [2, 6, 8], strides = [1, 1, 1]} : vector<8x6x8xf32> to vector<2x6x8xf32>
    %631 = vector.shape_cast %630 : vector<2x6x8xf32> to vector<12x8xf32>
    %632 = vector.extract_strided_slice %629 {offsets = [2, 0, 0], sizes = [2, 6, 8], strides = [1, 1, 1]} : vector<8x6x8xf32> to vector<2x6x8xf32>
    %633 = vector.shape_cast %632 : vector<2x6x8xf32> to vector<12x8xf32>
    %634 = vector.extract_strided_slice %629 {offsets = [4, 0, 0], sizes = [2, 6, 8], strides = [1, 1, 1]} : vector<8x6x8xf32> to vector<2x6x8xf32>
    %635 = vector.shape_cast %634 : vector<2x6x8xf32> to vector<12x8xf32>
    %636 = vector.extract_strided_slice %629 {offsets = [6, 0, 0], sizes = [2, 6, 8], strides = [1, 1, 1]} : vector<8x6x8xf32> to vector<2x6x8xf32>
    %637 = vector.shape_cast %636 : vector<2x6x8xf32> to vector<12x8xf32>
    %638 = tpu.concatenate %631, %633, %635, %637 in 1 : vector<12x8xf32>, vector<12x8xf32>, vector<12x8xf32>, vector<12x8xf32> -> vector<12x32xf32>
    %c672 = arith.constant 672 : index
    %c0_126 = arith.constant 0 : index
    %639 = vector.load %arg2[%c672, %c0_126] : memref<888x128xf32, #tpu.memory_space<vmem>>, vector<32x32xf32>
    %640 = vector.extract_strided_slice %492 {offsets = [3, 0], sizes = [1, 32], strides = [1, 1]} : vector<12x128xf32> to vector<1x32xf32>
    %cst_127 = arith.constant dense<0.000000e+00> : vector<12x32xf32>
    %641 = tpu.matmul %638, %639, %cst_127 {dimension_numbers = #tpu.dot_dimension_numbers<[1], [0], [0], [1], [0, 0, 1, 1], [], []>} : vector<12x32xf32>, vector<32x32xf32>, vector<12x32xf32> -> vector<12x32xf32>
    %642 = vector.broadcast %640 : vector<1x32xf32> to vector<12x32xf32>
    %643 = arith.addf %641, %642 : vector<12x32xf32>
    %644 = arith.addf %581, %643 : vector<12x32xf32>
    %645 = vector.extract_strided_slice %492 {offsets = [8, 0], sizes = [1, 32], strides = [1, 1]} : vector<12x128xf32> to vector<1x32xf32>
    %646 = vector.extract_strided_slice %492 {offsets = [9, 0], sizes = [1, 32], strides = [1, 1]} : vector<12x128xf32> to vector<1x32xf32>
    %cst_128 = arith.constant dense<0.000000e+00> : vector<12xf32>
    %647 = vector.multi_reduction <add>, %644, %cst_128 [1] : vector<12x32xf32> to vector<12xf32>
    %648 = vector.shape_cast %647 : vector<12xf32> to vector<12x1xf32>
    %cst_129 = arith.constant 3.200000e+01 : f32
    %649 = vector.broadcast %cst_129 : f32 to vector<12x1xf32>
    %650 = arith.divf %648, %649 : vector<12x1xf32>
    %651 = vector.broadcast %650 : vector<12x1xf32> to vector<12x32xf32>
    %652 = arith.subf %644, %651 : vector<12x32xf32>
    %653 = arith.mulf %652, %652 : vector<12x32xf32>
    %cst_130 = arith.constant dense<0.000000e+00> : vector<12xf32>
    %654 = vector.multi_reduction <add>, %653, %cst_130 [1] : vector<12x32xf32> to vector<12xf32>
    %655 = vector.shape_cast %654 : vector<12xf32> to vector<12x1xf32>
    %cst_131 = arith.constant 3.200000e+01 : f32
    %656 = vector.broadcast %cst_131 : f32 to vector<12x1xf32>
    %657 = arith.divf %655, %656 : vector<12x1xf32>
    %cst_132 = arith.constant 9.99999974E-6 : f32
    %658 = vector.broadcast %cst_132 : f32 to vector<12x1xf32>
    %659 = arith.addf %657, %658 : vector<12x1xf32>
    %660 = math.rsqrt %659 : vector<12x1xf32>
    %661 = vector.broadcast %660 : vector<12x1xf32> to vector<12x32xf32>
    %662 = arith.mulf %652, %661 : vector<12x32xf32>
    %663 = vector.broadcast %645 : vector<1x32xf32> to vector<12x32xf32>
    %664 = arith.mulf %662, %663 : vector<12x32xf32>
    %665 = vector.broadcast %646 : vector<1x32xf32> to vector<12x32xf32>
    %666 = arith.addf %664, %665 : vector<12x32xf32>
    %c704 = arith.constant 704 : index
    %c0_133 = arith.constant 0 : index
    %667 = vector.load %arg2[%c704, %c0_133] : memref<888x128xf32, #tpu.memory_space<vmem>>, vector<32x64xf32>
    %668 = vector.extract_strided_slice %492 {offsets = [4, 0], sizes = [1, 64], strides = [1, 1]} : vector<12x128xf32> to vector<1x64xf32>
    %cst_134 = arith.constant dense<0.000000e+00> : vector<12x64xf32>
    %669 = tpu.matmul %666, %667, %cst_134 {dimension_numbers = #tpu.dot_dimension_numbers<[1], [0], [0], [1], [0, 0, 1, 1], [], []>} : vector<12x32xf32>, vector<32x64xf32>, vector<12x64xf32> -> vector<12x64xf32>
    %670 = vector.broadcast %668 : vector<1x64xf32> to vector<12x64xf32>
    %671 = arith.addf %669, %670 : vector<12x64xf32>
    %cst_135 = arith.constant 0.000000e+00 : f32
    %672 = vector.broadcast %cst_135 : f32 to vector<12x64xf32>
    %673 = arith.maximumf %671, %672 : vector<12x64xf32>
    %c736 = arith.constant 736 : index
    %c0_136 = arith.constant 0 : index
    %674 = vector.load %arg2[%c736, %c0_136] : memref<888x128xf32, #tpu.memory_space<vmem>>, vector<64x32xf32>
    %675 = vector.extract_strided_slice %492 {offsets = [5, 0], sizes = [1, 32], strides = [1, 1]} : vector<12x128xf32> to vector<1x32xf32>
    %cst_137 = arith.constant dense<0.000000e+00> : vector<12x32xf32>
    %676 = tpu.matmul %673, %674, %cst_137 {dimension_numbers = #tpu.dot_dimension_numbers<[1], [0], [0], [1], [0, 0, 1, 1], [], []>} : vector<12x64xf32>, vector<64x32xf32>, vector<12x32xf32> -> vector<12x32xf32>
    %677 = vector.broadcast %675 : vector<1x32xf32> to vector<12x32xf32>
    %678 = arith.addf %676, %677 : vector<12x32xf32>
    %679 = arith.addf %666, %678 : vector<12x32xf32>
    %680 = vector.extract_strided_slice %492 {offsets = [10, 0], sizes = [1, 32], strides = [1, 1]} : vector<12x128xf32> to vector<1x32xf32>
    %681 = vector.extract_strided_slice %492 {offsets = [11, 0], sizes = [1, 32], strides = [1, 1]} : vector<12x128xf32> to vector<1x32xf32>
    %cst_138 = arith.constant dense<0.000000e+00> : vector<12xf32>
    %682 = vector.multi_reduction <add>, %679, %cst_138 [1] : vector<12x32xf32> to vector<12xf32>
    %683 = vector.shape_cast %682 : vector<12xf32> to vector<12x1xf32>
    %cst_139 = arith.constant 3.200000e+01 : f32
    %684 = vector.broadcast %cst_139 : f32 to vector<12x1xf32>
    %685 = arith.divf %683, %684 : vector<12x1xf32>
    %686 = vector.broadcast %685 : vector<12x1xf32> to vector<12x32xf32>
    %687 = arith.subf %679, %686 : vector<12x32xf32>
    %688 = arith.mulf %687, %687 : vector<12x32xf32>
    %cst_140 = arith.constant dense<0.000000e+00> : vector<12xf32>
    %689 = vector.multi_reduction <add>, %688, %cst_140 [1] : vector<12x32xf32> to vector<12xf32>
    %690 = vector.shape_cast %689 : vector<12xf32> to vector<12x1xf32>
    %cst_141 = arith.constant 3.200000e+01 : f32
    %691 = vector.broadcast %cst_141 : f32 to vector<12x1xf32>
    %692 = arith.divf %690, %691 : vector<12x1xf32>
    %cst_142 = arith.constant 9.99999974E-6 : f32
    %693 = vector.broadcast %cst_142 : f32 to vector<12x1xf32>
    %694 = arith.addf %692, %693 : vector<12x1xf32>
    %695 = math.rsqrt %694 : vector<12x1xf32>
    %696 = vector.broadcast %695 : vector<12x1xf32> to vector<12x32xf32>
    %697 = arith.mulf %687, %696 : vector<12x32xf32>
    %698 = vector.broadcast %680 : vector<1x32xf32> to vector<12x32xf32>
    %699 = arith.mulf %697, %698 : vector<12x32xf32>
    %700 = vector.broadcast %681 : vector<1x32xf32> to vector<12x32xf32>
    %701 = arith.addf %699, %700 : vector<12x32xf32>
    %702 = vector.extract_strided_slice %246 {offsets = [2, 0], sizes = [1, 32], strides = [1, 1]} : vector<6x128xf32> to vector<1x32xf32>
    %703 = vector.extract_strided_slice %246 {offsets = [3, 0], sizes = [1, 32], strides = [1, 1]} : vector<6x128xf32> to vector<1x32xf32>
    %cst_143 = arith.constant dense<0.000000e+00> : vector<12xf32>
    %704 = vector.multi_reduction <add>, %701, %cst_143 [1] : vector<12x32xf32> to vector<12xf32>
    %705 = vector.shape_cast %704 : vector<12xf32> to vector<12x1xf32>
    %cst_144 = arith.constant 3.200000e+01 : f32
    %706 = vector.broadcast %cst_144 : f32 to vector<12x1xf32>
    %707 = arith.divf %705, %706 : vector<12x1xf32>
    %708 = vector.broadcast %707 : vector<12x1xf32> to vector<12x32xf32>
    %709 = arith.subf %701, %708 : vector<12x32xf32>
    %710 = arith.mulf %709, %709 : vector<12x32xf32>
    %cst_145 = arith.constant dense<0.000000e+00> : vector<12xf32>
    %711 = vector.multi_reduction <add>, %710, %cst_145 [1] : vector<12x32xf32> to vector<12xf32>
    %712 = vector.shape_cast %711 : vector<12xf32> to vector<12x1xf32>
    %cst_146 = arith.constant 3.200000e+01 : f32
    %713 = vector.broadcast %cst_146 : f32 to vector<12x1xf32>
    %714 = arith.divf %712, %713 : vector<12x1xf32>
    %cst_147 = arith.constant 9.99999974E-6 : f32
    %715 = vector.broadcast %cst_147 : f32 to vector<12x1xf32>
    %716 = arith.addf %714, %715 : vector<12x1xf32>
    %717 = math.rsqrt %716 : vector<12x1xf32>
    %718 = vector.broadcast %717 : vector<12x1xf32> to vector<12x32xf32>
    %719 = arith.mulf %709, %718 : vector<12x32xf32>
    %720 = vector.broadcast %702 : vector<1x32xf32> to vector<12x32xf32>
    %721 = arith.mulf %719, %720 : vector<12x32xf32>
    %722 = vector.broadcast %703 : vector<1x32xf32> to vector<12x32xf32>
    %723 = arith.addf %721, %722 : vector<12x32xf32>
    %c848 = arith.constant 848 : index
    %c0_148 = arith.constant 0 : index
    %724 = vector.load %arg2[%c848, %c0_148] : memref<888x128xf32, #tpu.memory_space<vmem>>, vector<32x128xf32>
    %cst_149 = arith.constant dense<0.000000e+00> : vector<12x128xf32>
    %725 = tpu.matmul %723, %724, %cst_149 {dimension_numbers = #tpu.dot_dimension_numbers<[1], [0], [0], [1], [0, 0, 1, 1], [], []>} : vector<12x32xf32>, vector<32x128xf32>, vector<12x128xf32> -> vector<12x128xf32>
    %726 = vector.extract_strided_slice %246 {offsets = [5, 0], sizes = [1, 128], strides = [1, 1]} : vector<6x128xf32> to vector<1x128xf32>
    %727 = vector.broadcast %726 : vector<1x128xf32> to vector<12x128xf32>
    %728 = arith.addf %725, %727 : vector<12x128xf32>
    %c0_150 = arith.constant 0 : index
    %c0_151 = arith.constant 0 : index
    %729 = vector.load %arg3[%c0_150, %c0_151] : memref<12x128xf32, #tpu.memory_space<vmem>>, vector<12x128xf32>
    tpu.vector_store %arg3[%c0_150, %c0_151], %728 {strides = array<i32>} : memref<12x128xf32, #tpu.memory_space<vmem>>, vector<12x128xf32>,
    return
  }
}

</mosaic_0001>

<llo_original>
// kernel: fwd.1
$region0: #{fwd.1}
  #allocation0 [shape = 'u32[]', space=smem, size = 0x4, offset = 0x4, fixed_abs, tag = 'smem constant byte address 0x4 - core index']
  #allocation1 [shape = 'u32[72,128]{1,0:T(1,128)}', space=vmem, size = 0x9000, scoped, tag = 'internal scratch']
  %s0 = inlined_call_operand.vmem [shape: f32[2,5,32], index: 0, kind: input, shape index: {}]
  %s1 = inlined_call_operand.vmem [shape: f32[2,6,32], index: 1, kind: input, shape index: {}]
  %s2 = inlined_call_operand.hbm [shape: f32[888,128], index: 2, kind: input, shape index: {}]
  %s3 = inlined_call_operand.vmem [shape: f32[12,128], index: 3, kind: output, shape index: {}]
  %s4 = sld [smem:[#allocation0]]
  $region26: #{fwd.1} parent=0
    _
  %s6 = ssub.s32 1, %s4
  %s7 = scalar_select 0, %s6, %s4
  $region1: #{fwd.1} parent=0
    #allocation2 [shape = 'u8[454656]{0}', space=vmem, size = 0x6f000, scoped, tag = 'input window, operand 2, single buffered']
    #allocation3 [shape = 's32[1]{0}', space=sflag, size = 0x4, scoped, tag = 'scoped memory for fwd.1']
    %8 = vsyncpa [#allocation3], 0
    // Predicated region
    $region2: #{fwd.1} parent=1 // pred_check
      _
    $region3: #{fwd.1} parent=1 // pred_check_branch
      %10 = sbr.rel (0) target = $region5
    $region4: #{fwd.1} parent=1 // pred_region
      _
    $region5: #{fwd.1} parent=1 // pred_fallthru
      _
    // Predicated region
    $region6: #{fwd.1} parent=1 // pred_check
      _
    $region7: #{fwd.1} parent=1 // pred_check_branch
      %12 = sbr.rel (0) target = $region9
    $region8: #{fwd.1} parent=1 // pred_region
      _
    $region9: #{fwd.1} parent=1 // pred_fallthru
      _
    // Predicated region
    $region10: #{fwd.1} parent=1 // pred_check
      _
    $region11: #{fwd.1} parent=1 // pred_check_branch
      %14 = sbr.rel (0) target = $region13
    $region12: #{fwd.1} parent=1 // pred_region
      %16 = vsyncadd [#allocation3], 0
      %s17 = sshll.u32 %s2, 4
      %s18 = int_to_ptr.hbm [resolvable:$true] %s17
      %s19 = sshll.u32 [#allocation2], 4
      %s20 = int_to_ptr.vmem [resolvable:$true] %s19
      %25 = dma.hbm_to_vmem [thread:$0]  %s18, 14208, %s20, [#allocation3], 128, 128, 8
    $region13: #{fwd.1} parent=1 // pred_fallthru
      _
    // Predicated region
    $region14: #{fwd.1} parent=1 // pred_check
      _
    $region15: #{fwd.1} parent=1 // pred_check_branch
      %27 = sbr.rel (0) target = $region17
    $region16: #{fwd.1} parent=1 // pred_region
      %29 = dma.done [#allocation3], 14208
    $region17: #{fwd.1} parent=1 // pred_fallthru
      _
    %v30 = vld [vmem:[%s0] sm:$0x1f]
    %v31 = vld [vmem:[%s0 + $0x8] sm:$0x1f]
    %v34 = vrot.slane %v30, 1
    %v35 = vrot.slane %v30, 2
    %v36 = vrot.slane %v30, 3
    %v37 = vrot.slane %v30, 4
    %v38 = vrot.slane %v31, 1
    %v39 = vrot.slane %v31, 2
    %v40 = vrot.slane %v31, 3
    %v41 = vrot.slane %v31, 4
    %v50 = vld [vmem:[#allocation2 + $0xa0] sm:$0xff]
    %v51 = vld [vmem:[#allocation2] sm:$0xff]
    %v52 = vld [vmem:[#allocation2 + $0x8] sm:$0xff]
    %v53 = vld [vmem:[#allocation2 + $0x10] sm:$0xff]
    %v54 = vld [vmem:[#allocation2 + $0x18] sm:$0xff]
    %v55 = vperm.slane %v50, 0
    %56 = vst [vmem:[#allocation1] ss:$9 sm:$0xff] %v30
    %s57 = scalar_lea.vmem [#allocation1], 1
    %58 = vst [vmem:[%s57] ss:$9 sm:$0xff] %v34
    %s59 = scalar_lea.vmem [#allocation1], 2
    %60 = vst [vmem:[%s59] ss:$9 sm:$0xff] %v35
    %s61 = scalar_lea.vmem [#allocation1], 3
    %62 = vst [vmem:[%s61] ss:$9 sm:$0xff] %v36
    %s63 = scalar_lea.vmem [#allocation1], 4
    %64 = vst [vmem:[%s63] ss:$9 sm:$0xff] %v37
    %s65 = scalar_lea.vmem [#allocation1], 5
    %66 = vst [vmem:[%s65] ss:$9 sm:$0xff] %v31
    %s67 = scalar_lea.vmem [#allocation1], 6
    %68 = vst [vmem:[%s67] ss:$9 sm:$0xff] %v38
    %s69 = scalar_lea.vmem [#allocation1], 7
    %70 = vst [vmem:[%s69] ss:$9 sm:$0xff] %v39
    %v71 = vld [vmem:[#allocation1] sm:$0xff]
    %72 = vst [vmem:[#allocation1] ss:$9 sm:$0xff] %v40
    %73 = vst [vmem:[%s57] ss:$9 sm:$0xff] %v41
    %v74 = vld [vmem:[#allocation1] sm:$0xff]
    %vm75 = vcmask 261120
    %v76 = vsel %vm75, %v71, 0
    %v78 = vsel %vm75, %v74, 0
    %80 = vmatpush.msra.mxu0 0.0
    %81 = vmatpush.msra.mxu0 0.0
    %82 = vmatpush.msra.mxu0 0.0
    %83 = vmatpush.msra.mxu0 0.0
    %84 = vmatpush.msra.mxu0 0.0
    %85 = vmatpush.msra.mxu0 0.0
    %86 = vmatpush.msra.mxu0 0.0
    %87 = vmatpush.msra.mxu0 0.0
    %88 = vmatpush.msra.mxu0 0.0
    %89 = vmatpush.msra.mxu0 0.0
    %90 = vmatpush.msra.mxu0 0.0
    %91 = vmatpush.msra.mxu0 0.0
    %92 = vmatpush.msra.mxu0 %v54
    %93 = vmatpush.msra.mxu0 %v53
    %94 = vmatpush.msra.mxu0 %v52
    %95 = vmatpush.msra.mxu0 %v51
    %96 = vmatmul.f32.gmra.mxu0 %v76
    %v97 = vpop.f32.mrf.mxu0
    %v98 = vadd.f32 %v55, %v97
    %99 = vmatmul.f32.gmra.mxu0 %v78
    %v100 = vpop.f32.mrf.mxu0
    %v101 = vadd.f32 %v55, %v100
    %102 = vdwg.mxu0
    %v105 = vrot.slane %v98, 1
    %v106 = vrot.slane %v98, 2
    %v107 = vrot.slane %v98, 3
    %v108 = vrot.slane %v98, 4
    %v109 = vrot.slane %v98, 5
    %v110 = vrot.slane %v98, 6
    %v111 = vrot.slane %v98, 7
    %v112 = vrot.slane %v101, 1
    %113 = vrot.lane.b32.xlu0 %v98, 120
    %v114 = vpop.permute.xlu0 %113
    %115 = vrot.lane.b32.xlu0 %v105, 120
    %v116 = vpop.permute.xlu0 %115
    %117 = vrot.lane.b32.xlu0 %v106, 120
    %v118 = vpop.permute.xlu0 %117
    %119 = vrot.lane.b32.xlu0 %v107, 120
    %v120 = vpop.permute.xlu0 %119
    %121 = vrot.lane.b32.xlu0 %v108, 120
    %v122 = vpop.permute.xlu0 %121
    %123 = vrot.lane.b32.xlu0 %v109, 120
    %v124 = vpop.permute.xlu0 %123
    %125 = vrot.lane.b32.xlu0 %v110, 120
    %v126 = vpop.permute.xlu0 %125
    %127 = vrot.lane.b32.xlu0 %v111, 120
    %v128 = vpop.permute.xlu0 %127
    %129 = vrot.lane.b32.xlu0 %v101, 120
    %v130 = vpop.permute.xlu0 %129
    %131 = vrot.lane.b32.xlu0 %v112, 120
    %v132 = vpop.permute.xlu0 %131
    %133 = vrot.lane.b32.xlu0 %v98, 112
    %v134 = vpop.permute.xlu0 %133
    %135 = vrot.lane.b32.xlu0 %v105, 112
    %v136 = vpop.permute.xlu0 %135
    %137 = vrot.lane.b32.xlu0 %v106, 112
    %v138 = vpop.permute.xlu0 %137
    %139 = vrot.lane.b32.xlu0 %v107, 112
    %v140 = vpop.permute.xlu0 %139
    %141 = vrot.lane.b32.xlu0 %v108, 112
    %v142 = vpop.permute.xlu0 %141
    %143 = vrot.lane.b32.xlu0 %v109, 112
    %v144 = vpop.permute.xlu0 %143
    %145 = vrot.lane.b32.xlu0 %v110, 112
    %v146 = vpop.permute.xlu0 %145
    %147 = vrot.lane.b32.xlu0 %v111, 112
    %v148 = vpop.permute.xlu0 %147
    %149 = vrot.lane.b32.xlu0 %v101, 112
    %v150 = vpop.permute.xlu0 %149
    %151 = vrot.lane.b32.xlu0 %v112, 112
    %v152 = vpop.permute.xlu0 %151
    %153 = vrot.lane.b32.xlu0 %v98, 104
    %v154 = vpop.permute.xlu0 %153
    %155 = vrot.lane.b32.xlu0 %v105, 104
    %v156 = vpop.permute.xlu0 %155
    %157 = vrot.lane.b32.xlu0 %v106, 104
    %v158 = vpop.permute.xlu0 %157
    %159 = vrot.lane.b32.xlu0 %v107, 104
    %v160 = vpop.permute.xlu0 %159
    %161 = vrot.lane.b32.xlu0 %v108, 104
    %v162 = vpop.permute.xlu0 %161
    %163 = vrot.lane.b32.xlu0 %v109, 104
    %v164 = vpop.permute.xlu0 %163
    %165 = vrot.lane.b32.xlu0 %v110, 104
    %v166 = vpop.permute.xlu0 %165
    %167 = vrot.lane.b32.xlu0 %v111, 104
    %v168 = vpop.permute.xlu0 %167
    %169 = vrot.lane.b32.xlu0 %v101, 104
    %v170 = vpop.permute.xlu0 %169
    %171 = vrot.lane.b32.xlu0 %v112, 104
    %v172 = vpop.permute.xlu0 %171
    %173 = vst [vmem:[#allocation1] ss:$9 sm:$0xff] %v98
    %s174 = scalar_lea.vmem [#allocation1], 1
    %175 = vst [vmem:[%s174] ss:$9 sm:$0xff] %v105
    %s176 = scalar_lea.vmem [#allocation1], 2
    %177 = vst [vmem:[%s176] ss:$9 sm:$0xff] %v106
    %s178 = scalar_lea.vmem [#allocation1], 3
    %179 = vst [vmem:[%s178] ss:$9 sm:$0xff] %v107
    %s180 = scalar_lea.vmem [#allocation1], 4
    %181 = vst [vmem:[%s180] ss:$9 sm:$0xff] %v108
    %v182 = vld [vmem:[#allocation1] sm:$0xff]
    %183 = vst [vmem:[#allocation1] ss:$9 sm:$0xff] %v98
    %s184 = scalar_lea.vmem [#allocation1], 1
    %185 = vst [vmem:[%s184] ss:$9 sm:$0xff] %v105
    %s186 = scalar_lea.vmem [#allocation1], 2
    %187 = vst [vmem:[%s186] ss:$9 sm:$0xff] %v106
    %s188 = scalar_lea.vmem [#allocation1], 3
    %189 = vst [vmem:[%s188] ss:$9 sm:$0xff] %v107
    %s190 = scalar_lea.vmem [#allocation1], 4
    %191 = vst [vmem:[%s190] ss:$9 sm:$0xff] %v108
    %v192 = vld [vmem:[#allocation1] sm:$0xff]
    %193 = vrot.lane.b32.xlu0 %v192, 96
    %v194 = vpop.permute.xlu0 %193
    %vm195 = vcmask 64512
    %v196 = vsel %vm195, %v182, 0
    %v198 = vsel %vm195, %v194, 0
    %200 = vmatpush.xpose.msra.mxu0 0.0
    %201 = vmatpush.xpose.msra.mxu0 0.0
    %202 = vmatpush.xpose.msra.mxu0 0.0
    %203 = vmatpush.xpose.msra.mxu0 0.0
    %204 = vmatpush.xpose.msra.mxu0 0.0
    %205 = vmatpush.xpose.msra.mxu0 0.0
    %206 = vmatpush.xpose.msra.mxu0 0.0
    %207 = vmatpush.xpose.msra.mxu0 0.0
    %208 = vmatpush.xpose.msra.mxu0 0.0
    %209 = vmatpush.xpose.msra.mxu0 0.0
    %210 = vmatpush.xpose.msra.mxu0 0.0
    %211 = vmatpush.xpose.msra.mxu0 0.0
    %212 = vmatpush.xpose.msra.mxu0 0.0
    %213 = vmatpush.xpose.msra.mxu0 0.0
    %214 = vmatpush.xpose.msra.mxu0 0.0
    %215 = vmatpush.xpose.msra.mxu0 %v198
    %216 = vmatmul.f32.gmra.mxu0 %v196
    %v217 = vpop.f32.mrf.mxu0
    %v218 = vadd.f32 0.0, %v217
    %219 = vdwg.mxu0
    %220 = vst [vmem:[#allocation1] ss:$9 sm:$0xff] %v109
    %s221 = scalar_lea.vmem [#allocation1], 1
    %222 = vst [vmem:[%s221] ss:$9 sm:$0xff] %v110
    %s223 = scalar_lea.vmem [#allocation1], 2
    %224 = vst [vmem:[%s223] ss:$9 sm:$0xff] %v111
    %s225 = scalar_lea.vmem [#allocation1], 3
    %226 = vst [vmem:[%s225] ss:$9 sm:$0xff] %v101
    %s227 = scalar_lea.vmem [#allocation1], 4
    %228 = vst [vmem:[%s227] ss:$9 sm:$0xff] %v112
    %v229 = vld [vmem:[#allocation1] sm:$0xff]
    %230 = vst [vmem:[#allocation1] ss:$9 sm:$0xff] %v109
    %s231 = scalar_lea.vmem [#allocation1], 1
    %232 = vst [vmem:[%s231] ss:$9 sm:$0xff] %v110
    %s233 = scalar_lea.vmem [#allocation1], 2
    %234 = vst [vmem:[%s233] ss:$9 sm:$0xff] %v111
    %s235 = scalar_lea.vmem [#allocation1], 3
    %236 = vst [vmem:[%s235] ss:$9 sm:$0xff] %v101
    %s237 = scalar_lea.vmem [#allocation1], 4
    %238 = vst [vmem:[%s237] ss:$9 sm:$0xff] %v112
    %v239 = vld [vmem:[#allocation1] sm:$0xff]
    %240 = vrot.lane.b32.xlu0 %v239, 96
    %v241 = vpop.permute.xlu0 %240
    %v242 = vsel %vm195, %v229, 0
    %v244 = vsel %vm195, %v241, 0
    %246 = vmatpush.xpose.msra.mxu0 0.0
    %247 = vmatpush.xpose.msra.mxu0 0.0
    %248 = vmatpush.xpose.msra.mxu0 0.0
    %249 = vmatpush.xpose.msra.mxu0 0.0
    %250 = vmatpush.xpose.msra.mxu0 0.0
    %251 = vmatpush.xpose.msra.mxu0 0.0
    %252 = vmatpush.xpose.msra.mxu0 0.0
    %253 = vmatpush.xpose.msra.mxu0 0.0
    %254 = vmatpush.xpose.msra.mxu0 0.0
    %255 = vmatpush.xpose.msra.mxu0 0.0
    %256 = vmatpush.xpose.msra.mxu0 0.0
    %257 = vmatpush.xpose.msra.mxu0 0.0
    %258 = vmatpush.xpose.msra.mxu0 0.0
    %259 = vmatpush.xpose.msra.mxu0 0.0
    %260 = vmatpush.xpose.msra.mxu0 0.0
    %261 = vmatpush.xpose.msra.mxu0 %v244
    %262 = vmatmul.f32.gmra.mxu0 %v242
    %v263 = vpop.f32.mrf.mxu0
    %v264 = vadd.f32 0.0, %v263
    %265 = vdwg.mxu0
    %266 = vst [vmem:[#allocation1] ss:$9 sm:$0xff] %v114
    %s267 = scalar_lea.vmem [#allocation1], 1
    %268 = vst [vmem:[%s267] ss:$9 sm:$0xff] %v116
    %s269 = scalar_lea.vmem [#allocation1], 2
    %270 = vst [vmem:[%s269] ss:$9 sm:$0xff] %v118
    %s271 = scalar_lea.vmem [#allocation1], 3
    %272 = vst [vmem:[%s271] ss:$9 sm:$0xff] %v120
    %s273 = scalar_lea.vmem [#allocation1], 4
    %274 = vst [vmem:[%s273] ss:$9 sm:$0xff] %v122
    %v275 = vld [vmem:[#allocation1] sm:$0xff]
    %276 = vst [vmem:[#allocation1] ss:$9 sm:$0xff] %v114
    %s277 = scalar_lea.vmem [#allocation1], 1
    %278 = vst [vmem:[%s277] ss:$9 sm:$0xff] %v116
    %s279 = scalar_lea.vmem [#allocation1], 2
    %280 = vst [vmem:[%s279] ss:$9 sm:$0xff] %v118
    %s281 = scalar_lea.vmem [#allocation1], 3
    %282 = vst [vmem:[%s281] ss:$9 sm:$0xff] %v120
    %s283 = scalar_lea.vmem [#allocation1], 4
    %284 = vst [vmem:[%s283] ss:$9 sm:$0xff] %v122
    %v285 = vld [vmem:[#allocation1] sm:$0xff]
    %286 = vrot.lane.b32.xlu0 %v285, 96
    %v287 = vpop.permute.xlu0 %286
    %v288 = vsel %vm195, %v275, 0
    %v290 = vsel %vm195, %v287, 0
    %292 = vmatpush.xpose.msra.mxu0 0.0
    %293 = vmatpush.xpose.msra.mxu0 0.0
    %294 = vmatpush.xpose.msra.mxu0 0.0
    %295 = vmatpush.xpose.msra.mxu0 0.0
    %296 = vmatpush.xpose.msra.mxu0 0.0
    %297 = vmatpush.xpose.msra.mxu0 0.0
    %298 = vmatpush.xpose.msra.mxu0 0.0
    %299 = vmatpush.xpose.msra.mxu0 0.0
    %300 = vmatpush.xpose.msra.mxu0 0.0
    %301 = vmatpush.xpose.msra.mxu0 0.0
    %302 = vmatpush.xpose.msra.mxu0 0.0
    %303 = vmatpush.xpose.msra.mxu0 0.0
    %304 = vmatpush.xpose.msra.mxu0 0.0
    %305 = vmatpush.xpose.msra.mxu0 0.0
    %306 = vmatpush.xpose.msra.mxu0 0.0
    %307 = vmatpush.xpose.msra.mxu0 %v290
    %308 = vmatmul.f32.gmra.mxu0 %v288
    %v309 = vpop.f32.mrf.mxu0
    %v310 = vadd.f32 0.0, %v309
    %311 = vdwg.mxu0
    %312 = vst [vmem:[#allocation1] ss:$9 sm:$0xff] %v124
    %s313 = scalar_lea.vmem [#allocation1], 1
    %314 = vst [vmem:[%s313] ss:$9 sm:$0xff] %v126
    %s315 = scalar_lea.vmem [#allocation1], 2
    %316 = vst [vmem:[%s315] ss:$9 sm:$0xff] %v128
    %s317 = scalar_lea.vmem [#allocation1], 3
    %318 = vst [vmem:[%s317] ss:$9 sm:$0xff] %v130
    %s319 = scalar_lea.vmem [#allocation1], 4
    %320 = vst [vmem:[%s319] ss:$9 sm:$0xff] %v132
    %v321 = vld [vmem:[#allocation1] sm:$0xff]
    %322 = vst [vmem:[#allocation1] ss:$9 sm:$0xff] %v124
    %s323 = scalar_lea.vmem [#allocation1], 1
    %324 = vst [vmem:[%s323] ss:$9 sm:$0xff] %v126
    %s325 = scalar_lea.vmem [#allocation1], 2
    %326 = vst [vmem:[%s325] ss:$9 sm:$0xff] %v128
    %s327 = scalar_lea.vmem [#allocation1], 3
    %328 = vst [vmem:[%s327] ss:$9 sm:$0xff] %v130
    %s329 = scalar_lea.vmem [#allocation1], 4
    %330 = vst [vmem:[%s329] ss:$9 sm:$0xff] %v132
    %v331 = vld [vmem:[#allocation1] sm:$0xff]
    %332 = vrot.lane.b32.xlu0 %v331, 96
    %v333 = vpop.permute.xlu0 %332
    %v334 = vsel %vm195, %v321, 0
    %v336 = vsel %vm195, %v333, 0
    %338 = vmatpush.xpose.msra.mxu0 0.0
    %339 = vmatpush.xpose.msra.mxu0 0.0
    %340 = vmatpush.xpose.msra.mxu0 0.0
    %341 = vmatpush.xpose.msra.mxu0 0.0
    %342 = vmatpush.xpose.msra.mxu0 0.0
    %343 = vmatpush.xpose.msra.mxu0 0.0
    %344 = vmatpush.xpose.msra.mxu0 0.0
    %345 = vmatpush.xpose.msra.mxu0 0.0
    %346 = vmatpush.xpose.msra.mxu0 0.0
    %347 = vmatpush.xpose.msra.mxu0 0.0
    %348 = vmatpush.xpose.msra.mxu0 0.0
    %349 = vmatpush.xpose.msra.mxu0 0.0
    %350 = vmatpush.xpose.msra.mxu0 0.0
    %351 = vmatpush.xpose.msra.mxu0 0.0
    %352 = vmatpush.xpose.msra.mxu0 0.0
    %353 = vmatpush.xpose.msra.mxu0 %v336
    %354 = vmatmul.f32.gmra.mxu0 %v334
    %v355 = vpop.f32.mrf.mxu0
    %v356 = vadd.f32 0.0, %v355
    %357 = vdwg.mxu0
    %358 = vst [vmem:[#allocation1] ss:$9 sm:$0xff] %v134
    %s359 = scalar_lea.vmem [#allocation1], 1
    %360 = vst [vmem:[%s359] ss:$9 sm:$0xff] %v136
    %s361 = scalar_lea.vmem [#allocation1], 2
    %362 = vst [vmem:[%s361] ss:$9 sm:$0xff] %v138
    %s363 = scalar_lea.vmem [#allocation1], 3
    %364 = vst [vmem:[%s363] ss:$9 sm:$0xff] %v140
    %s365 = scalar_lea.vmem [#allocation1], 4
    %366 = vst [vmem:[%s365] ss:$9 sm:$0xff] %v142
    %v367 = vld [vmem:[#allocation1] sm:$0xff]
    %368 = vst [vmem:[#allocation1] ss:$9 sm:$0xff] %v134
    %s369 = scalar_lea.vmem [#allocation1], 1
    %370 = vst [vmem:[%s369] ss:$9 sm:$0xff] %v136
    %s371 = scalar_lea.vmem [#allocation1], 2
    %372 = vst [vmem:[%s371] ss:$9 sm:$0xff] %v138
    %s373 = scalar_lea.vmem [#allocation1], 3
    %374 = vst [vmem:[%s373] ss:$9 sm:$0xff] %v140
    %s375 = scalar_lea.vmem [#allocation1], 4
    %376 = vst [vmem:[%s375] ss:$9 sm:$0xff] %v142
    %v377 = vld [vmem:[#allocation1] sm:$0xff]
    %378 = vrot.lane.b32.xlu0 %v377, 96
    %v379 = vpop.permute.xlu0 %378
    %v380 = vsel %vm195, %v367, 0
    %v382 = vsel %vm195, %v379, 0
    %384 = vmatpush.xpose.msra.mxu0 0.0
    %385 = vmatpush.xpose.msra.mxu0 0.0
    %386 = vmatpush.xpose.msra.mxu0 0.0
    %387 = vmatpush.xpose.msra.mxu0 0.0
    %388 = vmatpush.xpose.msra.mxu0 0.0
    %389 = vmatpush.xpose.msra.mxu0 0.0
    %390 = vmatpush.xpose.msra.mxu0 0.0
    %391 = vmatpush.xpose.msra.mxu0 0.0
    %392 = vmatpush.xpose.msra.mxu0 0.0
    %393 = vmatpush.xpose.msra.mxu0 0.0
    %394 = vmatpush.xpose.msra.mxu0 0.0
    %395 = vmatpush.xpose.msra.mxu0 0.0
    %396 = vmatpush.xpose.msra.mxu0 0.0
    %397 = vmatpush.xpose.msra.mxu0 0.0
    %398 = vmatpush.xpose.msra.mxu0 0.0
    %399 = vmatpush.xpose.msra.mxu0 %v382
    %400 = vmatmul.f32.gmra.mxu0 %v380
    %v401 = vpop.f32.mrf.mxu0
    %v402 = vadd.f32 0.0, %v401
    %403 = vdwg.mxu0
    %404 = vst [vmem:[#allocation1] ss:$9 sm:$0xff] %v144
    %s405 = scalar_lea.vmem [#allocation1], 1
    %406 = vst [vmem:[%s405] ss:$9 sm:$0xff] %v146
    %s407 = scalar_lea.vmem [#allocation1], 2
    %408 = vst [vmem:[%s407] ss:$9 sm:$0xff] %v148
    %s409 = scalar_lea.vmem [#allocation1], 3
    %410 = vst [vmem:[%s409] ss:$9 sm:$0xff] %v150
    %s411 = scalar_lea.vmem [#allocation1], 4
    %412 = vst [vmem:[%s411] ss:$9 sm:$0xff] %v152
    %v413 = vld [vmem:[#allocation1] sm:$0xff]
    %414 = vst [vmem:[#allocation1] ss:$9 sm:$0xff] %v144
    %s415 = scalar_lea.vmem [#allocation1], 1
    %416 = vst [vmem:[%s415] ss:$9 sm:$0xff] %v146
    %s417 = scalar_lea.vmem [#allocation1], 2
    %418 = vst [vmem:[%s417] ss:$9 sm:$0xff] %v148
    %s419 = scalar_lea.vmem [#allocation1], 3
    %420 = vst [vmem:[%s419] ss:$9 sm:$0xff] %v150
    %s421 = scalar_lea.vmem [#allocation1], 4
    %422 = vst [vmem:[%s421] ss:$9 sm:$0xff] %v152
    %v423 = vld [vmem:[#allocation1] sm:$0xff]
    %424 = vrot.lane.b32.xlu0 %v423, 96
    %v425 = vpop.permute.xlu0 %424
    %v426 = vsel %vm195, %v413, 0
    %v428 = vsel %vm195, %v425, 0
    %430 = vmatpush.xpose.msra.mxu0 0.0
    %431 = vmatpush.xpose.msra.mxu0 0.0
    %432 = vmatpush.xpose.msra.mxu0 0.0
    %433 = vmatpush.xpose.msra.mxu0 0.0
    %434 = vmatpush.xpose.msra.mxu0 0.0
    %435 = vmatpush.xpose.msra.mxu0 0.0
    %436 = vmatpush.xpose.msra.mxu0 0.0
    %437 = vmatpush.xpose.msra.mxu0 0.0
    %438 = vmatpush.xpose.msra.mxu0 0.0
    %439 = vmatpush.xpose.msra.mxu0 0.0
    %440 = vmatpush.xpose.msra.mxu0 0.0
    %441 = vmatpush.xpose.msra.mxu0 0.0
    %442 = vmatpush.xpose.msra.mxu0 0.0
    %443 = vmatpush.xpose.msra.mxu0 0.0
    %444 = vmatpush.xpose.msra.mxu0 0.0
    %445 = vmatpush.xpose.msra.mxu0 %v428
    %446 = vmatmul.f32.gmra.mxu0 %v426
    %v447 = vpop.f32.mrf.mxu0
    %v448 = vadd.f32 0.0, %v447
    %449 = vdwg.mxu0
    %450 = vst [vmem:[#allocation1] ss:$9 sm:$0xff] %v154
    %s451 = scalar_lea.vmem [#allocation1], 1
    %452 = vst [vmem:[%s451] ss:$9 sm:$0xff] %v156
    %s453 = scalar_lea.vmem [#allocation1], 2
    %454 = vst [vmem:[%s453] ss:$9 sm:$0xff] %v158
    %s455 = scalar_lea.vmem [#allocation1], 3
    %456 = vst [vmem:[%s455] ss:$9 sm:$0xff] %v160
    %s457 = scalar_lea.vmem [#allocation1], 4
    %458 = vst [vmem:[%s457] ss:$9 sm:$0xff] %v162
    %v459 = vld [vmem:[#allocation1] sm:$0xff]
    %460 = vst [vmem:[#allocation1] ss:$9 sm:$0xff] %v154
    %s461 = scalar_lea.vmem [#allocation1], 1
    %462 = vst [vmem:[%s461] ss:$9 sm:$0xff] %v156
    %s463 = scalar_lea.vmem [#allocation1], 2
    %464 = vst [vmem:[%s463] ss:$9 sm:$0xff] %v158
    %s465 = scalar_lea.vmem [#allocation1], 3
    %466 = vst [vmem:[%s465] ss:$9 sm:$0xff] %v160
    %s467 = scalar_lea.vmem [#allocation1], 4
    %468 = vst [vmem:[%s467] ss:$9 sm:$0xff] %v162
    %v469 = vld [vmem:[#allocation1] sm:$0xff]
    %470 = vrot.lane.b32.xlu0 %v469, 96
    %v471 = vpop.permute.xlu0 %470
    %v472 = vsel %vm195, %v459, 0
    %v474 = vsel %vm195, %v471, 0
    %476 = vmatpush.xpose.msra.mxu0 0.0
    %477 = vmatpush.xpose.msra.mxu0 0.0
    %478 = vmatpush.xpose.msra.mxu0 0.0
    %479 = vmatpush.xpose.msra.mxu0 0.0
    %480 = vmatpush.xpose.msra.mxu0 0.0
    %481 = vmatpush.xpose.msra.mxu0 0.0
    %482 = vmatpush.xpose.msra.mxu0 0.0
    %483 = vmatpush.xpose.msra.mxu0 0.0
    %484 = vmatpush.xpose.msra.mxu0 0.0
    %485 = vmatpush.xpose.msra.mxu0 0.0
    %486 = vmatpush.xpose.msra.mxu0 0.0
    %487 = vmatpush.xpose.msra.mxu0 0.0
    %488 = vmatpush.xpose.msra.mxu0 0.0
    %489 = vmatpush.xpose.msra.mxu0 0.0
    %490 = vmatpush.xpose.msra.mxu0 0.0
    %491 = vmatpush.xpose.msra.mxu0 %v474
    %492 = vmatmul.f32.gmra.mxu0 %v472
    %v493 = vpop.f32.mrf.mxu0
    %v494 = vadd.f32 0.0, %v493
    %495 = vdwg.mxu0
    %496 = vst [vmem:[#allocation1] ss:$9 sm:$0xff] %v164
    %s497 = scalar_lea.vmem [#allocation1], 1
    %498 = vst [vmem:[%s497] ss:$9 sm:$0xff] %v166
    %s499 = scalar_lea.vmem [#allocation1], 2
    %500 = vst [vmem:[%s499] ss:$9 sm:$0xff] %v168
    %s501 = scalar_lea.vmem [#allocation1], 3
    %502 = vst [vmem:[%s501] ss:$9 sm:$0xff] %v170
    %s503 = scalar_lea.vmem [#allocation1], 4
    %504 = vst [vmem:[%s503] ss:$9 sm:$0xff] %v172
    %v505 = vld [vmem:[#allocation1] sm:$0xff]
    %506 = vst [vmem:[#allocation1] ss:$9 sm:$0xff] %v164
    %s507 = scalar_lea.vmem [#allocation1], 1
    %508 = vst [vmem:[%s507] ss:$9 sm:$0xff] %v166
    %s509 = scalar_lea.vmem [#allocation1], 2
    %510 = vst [vmem:[%s509] ss:$9 sm:$0xff] %v168
    %s511 = scalar_lea.vmem [#allocation1], 3
    %512 = vst [vmem:[%s511] ss:$9 sm:$0xff] %v170
    %s513 = scalar_lea.vmem [#allocation1], 4
    %514 = vst [vmem:[%s513] ss:$9 sm:$0xff] %v172
    %v515 = vld [vmem:[#allocation1] sm:$0xff]
    %516 = vrot.lane.b32.xlu0 %v515, 96
    %v517 = vpop.permute.xlu0 %516
    %v518 = vsel %vm195, %v505, 0
    %v520 = vsel %vm195, %v517, 0
    %522 = vmatpush.xpose.msra.mxu0 0.0
    %523 = vmatpush.xpose.msra.mxu0 0.0
    %524 = vmatpush.xpose.msra.mxu0 0.0
    %525 = vmatpush.xpose.msra.mxu0 0.0
    %526 = vmatpush.xpose.msra.mxu0 0.0
    %527 = vmatpush.xpose.msra.mxu0 0.0
    %528 = vmatpush.xpose.msra.mxu0 0.0
    %529 = vmatpush.xpose.msra.mxu0 0.0
    %530 = vmatpush.xpose.msra.mxu0 0.0
    %531 = vmatpush.xpose.msra.mxu0 0.0
    %532 = vmatpush.xpose.msra.mxu0 0.0
    %533 = vmatpush.xpose.msra.mxu0 0.0
    %534 = vmatpush.xpose.msra.mxu0 0.0
    %535 = vmatpush.xpose.msra.mxu0 0.0
    %536 = vmatpush.xpose.msra.mxu0 0.0
    %537 = vmatpush.xpose.msra.mxu0 %v520
    %538 = vmatmul.f32.gmra.mxu0 %v518
    %v539 = vpop.f32.mrf.mxu0
    %v540 = vadd.f32 0.0, %v539
    %541 = vdwg.mxu0
    %v542 = vmul.f32 %v218, 0.35355338
    %v543 = vmul.f32 %v264, 0.35355338
    %v544 = vmul.f32 %v310, 0.35355338
    %v545 = vmul.f32 %v356, 0.35355338
    %v546 = vmul.f32 %v402, 0.35355338
    %v547 = vmul.f32 %v448, 0.35355338
    %v548 = vmul.f32 %v494, 0.35355338
    %v549 = vmul.f32 %v540, 0.35355338
    %vm550 = vcmask 36864
    %v551 = vsel %vm550, %v542, -inf
    %552 = vmax.xlane.f32.xlu0 %v551
    %v553 = vpop.xlane.xlu0 %552
    %v554 = vsel %vm550, %v543, -inf
    %555 = vmax.xlane.f32.xlu0 %v554
    %v556 = vpop.xlane.xlu0 %555
    %v557 = vsel %vm550, %v544, -inf
    %558 = vmax.xlane.f32.xlu0 %v557
    %v559 = vpop.xlane.xlu0 %558
    %v560 = vsel %vm550, %v545, -inf
    %561 = vmax.xlane.f32.xlu0 %v560
    %v562 = vpop.xlane.xlu0 %561
    %v563 = vsel %vm550, %v546, -inf
    %564 = vmax.xlane.f32.xlu0 %v563
    %v565 = vpop.xlane.xlu0 %564
    %v566 = vsel %vm550, %v547, -inf
    %567 = vmax.xlane.f32.xlu0 %v566
    %v568 = vpop.xlane.xlu0 %567
    %v569 = vsel %vm550, %v548, -inf
    %570 = vmax.xlane.f32.xlu0 %v569
    %v571 = vpop.xlane.xlu0 %570
    %v572 = vsel %vm550, %v549, -inf
    %573 = vmax.xlane.f32.xlu0 %v572
    %v574 = vpop.xlane.xlu0 %573
    %v575 = vsub.f32 %v542, %v553
    %v576 = vsub.f32 %v543, %v556
    %v577 = vsub.f32 %v544, %v559
    %v578 = vsub.f32 %v545, %v562
    %v579 = vsub.f32 %v546, %v565
    %v580 = vsub.f32 %v547, %v568
    %v581 = vsub.f32 %v548, %v571
    %v582 = vsub.f32 %v549, %v574
    %v583 = vmul.f32 %v575, 1.442695
    %v584 = vpow.pop %v583
    %v585 = vmul.f32 %v576, 1.442695
    %v586 = vpow.pop %v585
    %v587 = vmul.f32 %v577, 1.442695
    %v588 = vpow.pop %v587
    %v589 = vmul.f32 %v578, 1.442695
    %v590 = vpow.pop %v589
    %v591 = vmul.f32 %v579, 1.442695
    %v592 = vpow.pop %v591
    %v593 = vmul.f32 %v580, 1.442695
    %v594 = vpow.pop %v593
    %v595 = vmul.f32 %v581, 1.442695
    %v596 = vpow.pop %v595
    %v597 = vmul.f32 %v582, 1.442695
    %v598 = vpow.pop %v597
    %v599 = vsel %vm550, %v584, 0.0
    %600 = vadd.xlane.f32.xlu0 %v599
    %v601 = vpop.xlane.xlu0 %600
    %v602 = vsel %vm550, %v586, 0.0
    %603 = vadd.xlane.f32.xlu0 %v602
    %v604 = vpop.xlane.xlu0 %603
    %v605 = vsel %vm550, %v588, 0.0
    %606 = vadd.xlane.f32.xlu0 %v605
    %v607 = vpop.xlane.xlu0 %606
    %v608 = vsel %vm550, %v590, 0.0
    %609 = vadd.xlane.f32.xlu0 %v608
    %v610 = vpop.xlane.xlu0 %609
    %v611 = vsel %vm550, %v592, 0.0
    %612 = vadd.xlane.f32.xlu0 %v611
    %v613 = vpop.xlane.xlu0 %612
    %v614 = vsel %vm550, %v594, 0.0
    %615 = vadd.xlane.f32.xlu0 %v614
    %v616 = vpop.xlane.xlu0 %615
    %v617 = vsel %vm550, %v596, 0.0
    %618 = vadd.xlane.f32.xlu0 %v617
    %v619 = vpop.xlane.xlu0 %618
    %v620 = vsel %vm550, %v598, 0.0
    %621 = vadd.xlane.f32.xlu0 %v620
    %v622 = vpop.xlane.xlu0 %621
    %623 = vst [vmem:[#allocation1] ss:$9 sm:$0xff] %v98
    %s624 = scalar_lea.vmem [#allocation1], 1
    %625 = vst [vmem:[%s624] ss:$9 sm:$0xff] %v105
    %s626 = scalar_lea.vmem [#allocation1], 2
    %627 = vst [vmem:[%s626] ss:$9 sm:$0xff] %v106
    %s628 = scalar_lea.vmem [#allocation1], 3
    %629 = vst [vmem:[%s628] ss:$9 sm:$0xff] %v107
    %s630 = scalar_lea.vmem [#allocation1], 4
    %631 = vst [vmem:[%s630] ss:$9 sm:$0xff] %v108
    %v632 = vld [vmem:[#allocation1] sm:$0xff]
    %633 = vrot.lane.b32.xlu0 %v632, 64
    %v634 = vpop.permute.xlu0 %633
    %vm635 = vcmask 39936
    %v637 = vsel %vm635, %v584, 0
    %vm639 = vcmask 1044480
    %v640 = vsel %vm639, %v634, 0
    %642 = vmatpush.msra.mxu0 0.0
    %643 = vmatpush.msra.mxu0 0.0
    %644 = vmatpush.msra.mxu0 0.0
    %645 = vmatpush.msra.mxu0 0.0
    %646 = vmatpush.msra.mxu0 0.0
    %647 = vmatpush.msra.mxu0 0.0
    %648 = vmatpush.msra.mxu0 0.0
    %649 = vmatpush.msra.mxu0 0.0
    %650 = vmatpush.msra.mxu0 0.0
    %651 = vmatpush.msra.mxu0 0.0
    %652 = vmatpush.msra.mxu0 0.0
    %653 = vmatpush.msra.mxu0 0.0
    %654 = vmatpush.msra.mxu0 0.0
    %655 = vmatpush.msra.mxu0 0.0
    %656 = vmatpush.msra.mxu0 0.0
    %657 = vmatpush.msra.mxu0 %v640
    %658 = vmatmul.f32.gmra.mxu0 %v637
    %v659 = vpop.f32.mrf.mxu0
    %v660 = vadd.f32 0.0, %v659
    %661 = vdwg.mxu0
    %662 = vst [vmem:[#allocation1] ss:$9 sm:$0xff] %v109
    %s663 = scalar_lea.vmem [#allocation1], 1
    %664 = vst [vmem:[%s663] ss:$9 sm:$0xff] %v110
    %s665 = scalar_lea.vmem [#allocation1], 2
    %666 = vst [vmem:[%s665] ss:$9 sm:$0xff] %v111
    %s667 = scalar_lea.vmem [#allocation1], 3
    %668 = vst [vmem:[%s667] ss:$9 sm:$0xff] %v101
    %s669 = scalar_lea.vmem [#allocation1], 4
    %670 = vst [vmem:[%s669] ss:$9 sm:$0xff] %v112
    %v671 = vld [vmem:[#allocation1] sm:$0xff]
    %672 = vrot.lane.b32.xlu0 %v671, 64
    %v673 = vpop.permute.xlu0 %672
    %v675 = vsel %vm635, %v586, 0
    %v677 = vsel %vm639, %v673, 0
    %679 = vmatpush.msra.mxu0 0.0
    %680 = vmatpush.msra.mxu0 0.0
    %681 = vmatpush.msra.mxu0 0.0
    %682 = vmatpush.msra.mxu0 0.0
    %683 = vmatpush.msra.mxu0 0.0
    %684 = vmatpush.msra.mxu0 0.0
    %685 = vmatpush.msra.mxu0 0.0
    %686 = vmatpush.msra.mxu0 0.0
    %687 = vmatpush.msra.mxu0 0.0
    %688 = vmatpush.msra.mxu0 0.0
    %689 = vmatpush.msra.mxu0 0.0
    %690 = vmatpush.msra.mxu0 0.0
    %691 = vmatpush.msra.mxu0 0.0
    %692 = vmatpush.msra.mxu0 0.0
    %693 = vmatpush.msra.mxu0 0.0
    %694 = vmatpush.msra.mxu0 %v677
    %695 = vmatmul.f32.gmra.mxu0 %v675
    %v696 = vpop.f32.mrf.mxu0
    %v697 = vadd.f32 0.0, %v696
    %698 = vdwg.mxu0
    %699 = vst [vmem:[#allocation1] ss:$9 sm:$0xff] %v114
    %s700 = scalar_lea.vmem [#allocation1], 1
    %701 = vst [vmem:[%s700] ss:$9 sm:$0xff] %v116
    %s702 = scalar_lea.vmem [#allocation1], 2
    %703 = vst [vmem:[%s702] ss:$9 sm:$0xff] %v118
    %s704 = scalar_lea.vmem [#allocation1], 3
    %705 = vst [vmem:[%s704] ss:$9 sm:$0xff] %v120
    %s706 = scalar_lea.vmem [#allocation1], 4
    %707 = vst [vmem:[%s706] ss:$9 sm:$0xff] %v122
    %v708 = vld [vmem:[#allocation1] sm:$0xff]
    %709 = vrot.lane.b32.xlu0 %v708, 64
    %v710 = vpop.permute.xlu0 %709
    %v712 = vsel %vm635, %v588, 0
    %v714 = vsel %vm639, %v710, 0
    %716 = vmatpush.msra.mxu0 0.0
    %717 = vmatpush.msra.mxu0 0.0
    %718 = vmatpush.msra.mxu0 0.0
    %719 = vmatpush.msra.mxu0 0.0
    %720 = vmatpush.msra.mxu0 0.0
    %721 = vmatpush.msra.mxu0 0.0
    %722 = vmatpush.msra.mxu0 0.0
    %723 = vmatpush.msra.mxu0 0.0
    %724 = vmatpush.msra.mxu0 0.0
    %725 = vmatpush.msra.mxu0 0.0
    %726 = vmatpush.msra.mxu0 0.0
    %727 = vmatpush.msra.mxu0 0.0
    %728 = vmatpush.msra.mxu0 0.0
    %729 = vmatpush.msra.mxu0 0.0
    %730 = vmatpush.msra.mxu0 0.0
    %731 = vmatpush.msra.mxu0 %v714
    %732 = vmatmul.f32.gmra.mxu0 %v712
    %v733 = vpop.f32.mrf.mxu0
    %v734 = vadd.f32 0.0, %v733
    %735 = vdwg.mxu0
    %736 = vst [vmem:[#allocation1] ss:$9 sm:$0xff] %v124
    %s737 = scalar_lea.vmem [#allocation1], 1
    %738 = vst [vmem:[%s737] ss:$9 sm:$0xff] %v126
    %s739 = scalar_lea.vmem [#allocation1], 2
    %740 = vst [vmem:[%s739] ss:$9 sm:$0xff] %v128
    %s741 = scalar_lea.vmem [#allocation1], 3
    %742 = vst [vmem:[%s741] ss:$9 sm:$0xff] %v130
    %s743 = scalar_lea.vmem [#allocation1], 4
    %744 = vst [vmem:[%s743] ss:$9 sm:$0xff] %v132
    %v745 = vld [vmem:[#allocation1] sm:$0xff]
    %746 = vrot.lane.b32.xlu0 %v745, 64
    %v747 = vpop.permute.xlu0 %746
    %v749 = vsel %vm635, %v590, 0
    %v751 = vsel %vm639, %v747, 0
    %753 = vmatpush.msra.mxu0 0.0
    %754 = vmatpush.msra.mxu0 0.0
    %755 = vmatpush.msra.mxu0 0.0
    %756 = vmatpush.msra.mxu0 0.0
    %757 = vmatpush.msra.mxu0 0.0
    %758 = vmatpush.msra.mxu0 0.0
    %759 = vmatpush.msra.mxu0 0.0
    %760 = vmatpush.msra.mxu0 0.0
    %761 = vmatpush.msra.mxu0 0.0
    %762 = vmatpush.msra.mxu0 0.0
    %763 = vmatpush.msra.mxu0 0.0
    %764 = vmatpush.msra.mxu0 0.0
    %765 = vmatpush.msra.mxu0 0.0
    %766 = vmatpush.msra.mxu0 0.0
    %767 = vmatpush.msra.mxu0 0.0
    %768 = vmatpush.msra.mxu0 %v751
    %769 = vmatmul.f32.gmra.mxu0 %v749
    %v770 = vpop.f32.mrf.mxu0
    %v771 = vadd.f32 0.0, %v770
    %772 = vdwg.mxu0
    %773 = vst [vmem:[#allocation1] ss:$9 sm:$0xff] %v134
    %s774 = scalar_lea.vmem [#allocation1], 1
    %775 = vst [vmem:[%s774] ss:$9 sm:$0xff] %v136
    %s776 = scalar_lea.vmem [#allocation1], 2
    %777 = vst [vmem:[%s776] ss:$9 sm:$0xff] %v138
    %s778 = scalar_lea.vmem [#allocation1], 3
    %779 = vst [vmem:[%s778] ss:$9 sm:$0xff] %v140
    %s780 = scalar_lea.vmem [#allocation1], 4
    %781 = vst [vmem:[%s780] ss:$9 sm:$0xff] %v142
    %v782 = vld [vmem:[#allocation1] sm:$0xff]
    %783 = vrot.lane.b32.xlu0 %v782, 64
    %v784 = vpop.permute.xlu0 %783
    %v786 = vsel %vm635, %v592, 0
    %v788 = vsel %vm639, %v784, 0
    %790 = vmatpush.msra.mxu0 0.0
    %791 = vmatpush.msra.mxu0 0.0
    %792 = vmatpush.msra.mxu0 0.0
    %793 = vmatpush.msra.mxu0 0.0
    %794 = vmatpush.msra.mxu0 0.0
    %795 = vmatpush.msra.mxu0 0.0
    %796 = vmatpush.msra.mxu0 0.0
    %797 = vmatpush.msra.mxu0 0.0
    %798 = vmatpush.msra.mxu0 0.0
    %799 = vmatpush.msra.mxu0 0.0
    %800 = vmatpush.msra.mxu0 0.0
    %801 = vmatpush.msra.mxu0 0.0
    %802 = vmatpush.msra.mxu0 0.0
    %803 = vmatpush.msra.mxu0 0.0
    %804 = vmatpush.msra.mxu0 0.0
    %805 = vmatpush.msra.mxu0 %v788
    %806 = vmatmul.f32.gmra.mxu0 %v786
    %v807 = vpop.f32.mrf.mxu0
    %v808 = vadd.f32 0.0, %v807
    %809 = vdwg.mxu0
    %810 = vst [vmem:[#allocation1] ss:$9 sm:$0xff] %v144
    %s811 = scalar_lea.vmem [#allocation1], 1
    %812 = vst [vmem:[%s811] ss:$9 sm:$0xff] %v146
    %s813 = scalar_lea.vmem [#allocation1], 2
    %814 = vst [vmem:[%s813] ss:$9 sm:$0xff] %v148
    %s815 = scalar_lea.vmem [#allocation1], 3
    %816 = vst [vmem:[%s815] ss:$9 sm:$0xff] %v150
    %s817 = scalar_lea.vmem [#allocation1], 4
    %818 = vst [vmem:[%s817] ss:$9 sm:$0xff] %v152
    %v819 = vld [vmem:[#allocation1] sm:$0xff]
    %820 = vrot.lane.b32.xlu0 %v819, 64
    %v821 = vpop.permute.xlu0 %820
    %v823 = vsel %vm635, %v594, 0
    %v825 = vsel %vm639, %v821, 0
    %827 = vmatpush.msra.mxu0 0.0
    %828 = vmatpush.msra.mxu0 0.0
    %829 = vmatpush.msra.mxu0 0.0
    %830 = vmatpush.msra.mxu0 0.0
    %831 = vmatpush.msra.mxu0 0.0
    %832 = vmatpush.msra.mxu0 0.0
    %833 = vmatpush.msra.mxu0 0.0
    %834 = vmatpush.msra.mxu0 0.0
    %835 = vmatpush.msra.mxu0 0.0
    %836 = vmatpush.msra.mxu0 0.0
    %837 = vmatpush.msra.mxu0 0.0
    %838 = vmatpush.msra.mxu0 0.0
    %839 = vmatpush.msra.mxu0 0.0
    %840 = vmatpush.msra.mxu0 0.0
    %841 = vmatpush.msra.mxu0 0.0
    %842 = vmatpush.msra.mxu0 %v825
    %843 = vmatmul.f32.gmra.mxu0 %v823
    %v844 = vpop.f32.mrf.mxu0
    %v845 = vadd.f32 0.0, %v844
    %846 = vdwg.mxu0
    %847 = vst [vmem:[#allocation1] ss:$9 sm:$0xff] %v154
    %s848 = scalar_lea.vmem [#allocation1], 1
    %849 = vst [vmem:[%s848] ss:$9 sm:$0xff] %v156
    %s850 = scalar_lea.vmem [#allocation1], 2
    %851 = vst [vmem:[%s850] ss:$9 sm:$0xff] %v158
    %s852 = scalar_lea.vmem [#allocation1], 3
    %853 = vst [vmem:[%s852] ss:$9 sm:$0xff] %v160
    %s854 = scalar_lea.vmem [#allocation1], 4
    %855 = vst [vmem:[%s854] ss:$9 sm:$0xff] %v162
    %v856 = vld [vmem:[#allocation1] sm:$0xff]
    %857 = vrot.lane.b32.xlu0 %v856, 64
    %v858 = vpop.permute.xlu0 %857
    %v860 = vsel %vm635, %v596, 0
    %v862 = vsel %vm639, %v858, 0
    %864 = vmatpush.msra.mxu0 0.0
    %865 = vmatpush.msra.mxu0 0.0
    %866 = vmatpush.msra.mxu0 0.0
    %867 = vmatpush.msra.mxu0 0.0
    %868 = vmatpush.msra.mxu0 0.0
    %869 = vmatpush.msra.mxu0 0.0
    %870 = vmatpush.msra.mxu0 0.0
    %871 = vmatpush.msra.mxu0 0.0
    %872 = vmatpush.msra.mxu0 0.0
    %873 = vmatpush.msra.mxu0 0.0
    %874 = vmatpush.msra.mxu0 0.0
    %875 = vmatpush.msra.mxu0 0.0
    %876 = vmatpush.msra.mxu0 0.0
    %877 = vmatpush.msra.mxu0 0.0
    %878 = vmatpush.msra.mxu0 0.0
    %879 = vmatpush.msra.mxu0 %v862
    %880 = vmatmul.f32.gmra.mxu0 %v860
    %v881 = vpop.f32.mrf.mxu0
    %v882 = vadd.f32 0.0, %v881
    %883 = vdwg.mxu0
    %884 = vst [vmem:[#allocation1] ss:$9 sm:$0xff] %v164
    %s885 = scalar_lea.vmem [#allocation1], 1
    %886 = vst [vmem:[%s885] ss:$9 sm:$0xff] %v166
    %s887 = scalar_lea.vmem [#allocation1], 2
    %888 = vst [vmem:[%s887] ss:$9 sm:$0xff] %v168
    %s889 = scalar_lea.vmem [#allocation1], 3
    %890 = vst [vmem:[%s889] ss:$9 sm:$0xff] %v170
    %s891 = scalar_lea.vmem [#allocation1], 4
    %892 = vst [vmem:[%s891] ss:$9 sm:$0xff] %v172
    %v893 = vld [vmem:[#allocation1] sm:$0xff]
    %894 = vrot.lane.b32.xlu0 %v893, 64
    %v895 = vpop.permute.xlu0 %894
    %v897 = vsel %vm635, %v598, 0
    %v899 = vsel %vm639, %v895, 0
    %901 = vmatpush.msra.mxu0 0.0
    %902 = vmatpush.msra.mxu0 0.0
    %903 = vmatpush.msra.mxu0 0.0
    %904 = vmatpush.msra.mxu0 0.0
    %905 = vmatpush.msra.mxu0 0.0
    %906 = vmatpush.msra.mxu0 0.0
    %907 = vmatpush.msra.mxu0 0.0
    %908 = vmatpush.msra.mxu0 0.0
    %909 = vmatpush.msra.mxu0 0.0
    %910 = vmatpush.msra.mxu0 0.0
    %911 = vmatpush.msra.mxu0 0.0
    %912 = vmatpush.msra.mxu0 0.0
    %913 = vmatpush.msra.mxu0 0.0
    %914 = vmatpush.msra.mxu0 0.0
    %915 = vmatpush.msra.mxu0 0.0
    %916 = vmatpush.msra.mxu0 %v899
    %917 = vmatmul.f32.gmra.mxu0 %v897
    %v918 = vpop.f32.mrf.mxu0
    %v919 = vadd.f32 0.0, %v918
    %920 = vdwg.mxu0
    %v921 = vrcp.pop %v601
    %v922 = vrcp.pop %v604
    %v923 = vrcp.pop %v607
    %v924 = vrcp.pop %v610
    %v925 = vrcp.pop %v613
    %v926 = vrcp.pop %v616
    %v927 = vrcp.pop %v619
    %v928 = vrcp.pop %v622
    %v929 = vmul.f32 %v660, %v921
    %v930 = vmul.f32 %v697, %v922
    %v931 = vmul.f32 %v734, %v923
    %v932 = vmul.f32 %v771, %v924
    %v933 = vmul.f32 %v808, %v925
    %v934 = vmul.f32 %v845, %v926
    %v935 = vmul.f32 %v882, %v927
    %v936 = vmul.f32 %v919, %v928
    %v939 = vrot.slane %v929, 1
    %v940 = vrot.slane %v929, 2
    %v941 = vrot.slane %v929, 3
    %v942 = vrot.slane %v929, 4
    %v943 = vrot.slane %v930, 1
    %v944 = vrot.slane %v930, 2
    %v945 = vrot.slane %v930, 3
    %v946 = vrot.slane %v930, 4
    %v949 = vrot.slane %v931, 1
    %v950 = vrot.slane %v931, 2
    %v951 = vrot.slane %v931, 3
    %v952 = vrot.slane %v931, 4
    %v953 = vrot.slane %v932, 1
    %v954 = vrot.slane %v932, 2
    %v955 = vrot.slane %v932, 3
    %v956 = vrot.slane %v932, 4
    %v959 = vrot.slane %v933, 1
    %v960 = vrot.slane %v933, 2
    %v961 = vrot.slane %v933, 3
    %v962 = vrot.slane %v933, 4
    %v963 = vrot.slane %v934, 1
    %v964 = vrot.slane %v934, 2
    %v965 = vrot.slane %v934, 3
    %v966 = vrot.slane %v934, 4
    %v969 = vrot.slane %v935, 1
    %v970 = vrot.slane %v935, 2
    %v971 = vrot.slane %v935, 3
    %v972 = vrot.slane %v935, 4
    %v973 = vrot.slane %v936, 1
    %v974 = vrot.slane %v936, 2
    %v975 = vrot.slane %v936, 3
    %v976 = vrot.slane %v936, 4
    %977 = vst [vmem:[#allocation1] ss:$9 sm:$0xff] %v929
    %s978 = scalar_lea.vmem [#allocation1], 1
    %979 = vst [vmem:[%s978] ss:$9 sm:$0xff] %v939
    %s980 = scalar_lea.vmem [#allocation1], 2
    %981 = vst [vmem:[%s980] ss:$9 sm:$0xff] %v940
    %s982 = scalar_lea.vmem [#allocation1], 3
    %983 = vst [vmem:[%s982] ss:$9 sm:$0xff] %v941
    %s984 = scalar_lea.vmem [#allocation1], 4
    %985 = vst [vmem:[%s984] ss:$9 sm:$0xff] %v942
    %s986 = scalar_lea.vmem [#allocation1], 5
    %987 = vst [vmem:[%s986] ss:$9 sm:$0xff] %v930
    %s988 = scalar_lea.vmem [#allocation1], 6
    %989 = vst [vmem:[%s988] ss:$9 sm:$0xff] %v943
    %s990 = scalar_lea.vmem [#allocation1], 7
    %991 = vst [vmem:[%s990] ss:$9 sm:$0xff] %v944
    %v992 = vld [vmem:[#allocation1] sm:$0xff]
    %993 = vst [vmem:[#allocation1] ss:$9 sm:$0xff] %v945
    %994 = vst [vmem:[%s978] ss:$9 sm:$0xff] %v946
    %v995 = vld [vmem:[#allocation1] sm:$0xff]
    %998 = vst [vmem:[#allocation1] ss:$9 sm:$0xff] %v931
    %s999 = scalar_lea.vmem [#allocation1], 1
    %1000 = vst [vmem:[%s999] ss:$9 sm:$0xff] %v949
    %s1001 = scalar_lea.vmem [#allocation1], 2
    %1002 = vst [vmem:[%s1001] ss:$9 sm:$0xff] %v950
    %s1003 = scalar_lea.vmem [#allocation1], 3
    %1004 = vst [vmem:[%s1003] ss:$9 sm:$0xff] %v951
    %s1005 = scalar_lea.vmem [#allocation1], 4
    %1006 = vst [vmem:[%s1005] ss:$9 sm:$0xff] %v952
    %s1007 = scalar_lea.vmem [#allocation1], 5
    %1008 = vst [vmem:[%s1007] ss:$9 sm:$0xff] %v932
    %s1009 = scalar_lea.vmem [#allocation1], 6
    %1010 = vst [vmem:[%s1009] ss:$9 sm:$0xff] %v953
    %s1011 = scalar_lea.vmem [#allocation1], 7
    %1012 = vst [vmem:[%s1011] ss:$9 sm:$0xff] %v954
    %v1013 = vld [vmem:[#allocation1] sm:$0xff]
    %1014 = vst [vmem:[#allocation1] ss:$9 sm:$0xff] %v955
    %1015 = vst [vmem:[%s999] ss:$9 sm:$0xff] %v956
    %v1016 = vld [vmem:[#allocation1] sm:$0xff]
    %1017 = vrot.lane.b32.xlu0 %v1013, 8
    %v1018 = vpop.permute.xlu0 %1017
    %1019 = vrot.lane.b32.xlu0 %v1016, 8
    %v1020 = vpop.permute.xlu0 %1019
    %1023 = vst [vmem:[#allocation1] ss:$9 sm:$0xff] %v933
    %s1024 = scalar_lea.vmem [#allocation1], 1
    %1025 = vst [vmem:[%s1024] ss:$9 sm:$0xff] %v959
    %s1026 = scalar_lea.vmem [#allocation1], 2
    %1027 = vst [vmem:[%s1026] ss:$9 sm:$0xff] %v960
    %s1028 = scalar_lea.vmem [#allocation1], 3
    %1029 = vst [vmem:[%s1028] ss:$9 sm:$0xff] %v961
    %s1030 = scalar_lea.vmem [#allocation1], 4
    %1031 = vst [vmem:[%s1030] ss:$9 sm:$0xff] %v962
    %s1032 = scalar_lea.vmem [#allocation1], 5
    %1033 = vst [vmem:[%s1032] ss:$9 sm:$0xff] %v934
    %s1034 = scalar_lea.vmem [#allocation1], 6
    %1035 = vst [vmem:[%s1034] ss:$9 sm:$0xff] %v963
    %s1036 = scalar_lea.vmem [#allocation1], 7
    %1037 = vst [vmem:[%s1036] ss:$9 sm:$0xff] %v964
    %v1038 = vld [vmem:[#allocation1] sm:$0xff]
    %1039 = vst [vmem:[#allocation1] ss:$9 sm:$0xff] %v965
    %1040 = vst [vmem:[%s1024] ss:$9 sm:$0xff] %v966
    %v1041 = vld [vmem:[#allocation1] sm:$0xff]
    %1042 = vrot.lane.b32.xlu0 %v1038, 16
    %v1043 = vpop.permute.xlu0 %1042
    %1044 = vrot.lane.b32.xlu0 %v1041, 16
    %v1045 = vpop.permute.xlu0 %1044
    %1048 = vst [vmem:[#allocation1] ss:$9 sm:$0xff] %v935
    %s1049 = scalar_lea.vmem [#allocation1], 1
    %1050 = vst [vmem:[%s1049] ss:$9 sm:$0xff] %v969
    %s1051 = scalar_lea.vmem [#allocation1], 2
    %1052 = vst [vmem:[%s1051] ss:$9 sm:$0xff] %v970
    %s1053 = scalar_lea.vmem [#allocation1], 3
    %1054 = vst [vmem:[%s1053] ss:$9 sm:$0xff] %v971
    %s1055 = scalar_lea.vmem [#allocation1], 4
    %1056 = vst [vmem:[%s1055] ss:$9 sm:$0xff] %v972
    %s1057 = scalar_lea.vmem [#allocation1], 5
    %1058 = vst [vmem:[%s1057] ss:$9 sm:$0xff] %v936
    %s1059 = scalar_lea.vmem [#allocation1], 6
    %1060 = vst [vmem:[%s1059] ss:$9 sm:$0xff] %v973
    %s1061 = scalar_lea.vmem [#allocation1], 7
    %1062 = vst [vmem:[%s1061] ss:$9 sm:$0xff] %v974
    %v1063 = vld [vmem:[#allocation1] sm:$0xff]
    %1064 = vst [vmem:[#allocation1] ss:$9 sm:$0xff] %v975
    %1065 = vst [vmem:[%s1049] ss:$9 sm:$0xff] %v976
    %v1066 = vld [vmem:[#allocation1] sm:$0xff]
    %1067 = vrot.lane.b32.xlu0 %v1063, 24
    %v1068 = vpop.permute.xlu0 %1067
    %1069 = vrot.lane.b32.xlu0 %v1066, 24
    %v1070 = vpop.permute.xlu0 %1069
    %v1073 = vsel %vm195, %v992, %v1018
    %v1074 = vsel %vm195, %v995, %v1020
    %vm1075 = vcmask 130048
    %v1076 = vsel %vm1075, %v1073, %v1043
    %v1077 = vsel %vm1075, %v1074, %v1045
    %vm1078 = vcmask 195584
    %v1079 = vsel %vm1078, %v1076, %v1068
    %v1080 = vsel %vm1078, %v1077, %v1070
    %v1081 = vld [vmem:[#allocation2 + $0x20] sm:$0xff]
    %v1082 = vld [vmem:[#allocation2 + $0x28] sm:$0xff]
    %v1083 = vld [vmem:[#allocation2 + $0x30] sm:$0xff]
    %v1084 = vld [vmem:[#allocation2 + $0x38] sm:$0xff]
    %v1085 = vperm.slane %v50, 1
    %v1087 = vsel %vm75, %v1079, 0
    %v1090 = vsel %vm75, %v1080, 0
    %1092 = vmatpush.msra.mxu0 0.0
    %1093 = vmatpush.msra.mxu0 0.0
    %1094 = vmatpush.msra.mxu0 0.0
    %1095 = vmatpush.msra.mxu0 0.0
    %1096 = vmatpush.msra.mxu0 0.0
    %1097 = vmatpush.msra.mxu0 0.0
    %1098 = vmatpush.msra.mxu0 0.0
    %1099 = vmatpush.msra.mxu0 0.0
    %1100 = vmatpush.msra.mxu0 0.0
    %1101 = vmatpush.msra.mxu0 0.0
    %1102 = vmatpush.msra.mxu0 0.0
    %1103 = vmatpush.msra.mxu0 0.0
    %1104 = vmatpush.msra.mxu0 %v1084
    %1105 = vmatpush.msra.mxu0 %v1083
    %1106 = vmatpush.msra.mxu0 %v1082
    %1107 = vmatpush.msra.mxu0 %v1081
    %1108 = vmatmul.f32.gmra.mxu0 %v1087
    %v1109 = vpop.f32.mrf.mxu0
    %v1110 = vadd.f32 %v1085, %v1109
    %1111 = vmatmul.f32.gmra.mxu0 %v1090
    %v1112 = vpop.f32.mrf.mxu0
    %v1113 = vadd.f32 %v1085, %v1112
    %1114 = vdwg.mxu0
    %v1117 = vrot.slane %v1110, 1
    %v1118 = vrot.slane %v1110, 2
    %v1119 = vrot.slane %v1110, 3
    %v1120 = vrot.slane %v1110, 4
    %v1121 = vrot.slane %v1110, 5
    %v1122 = vrot.slane %v1110, 6
    %v1123 = vrot.slane %v1110, 7
    %v1124 = vrot.slane %v1113, 1
    %v1133 = vadd.f32 %v30, %v1110
    %v1134 = vadd.f32 %v34, %v1117
    %v1135 = vadd.f32 %v35, %v1118
    %v1136 = vadd.f32 %v36, %v1119
    %v1137 = vadd.f32 %v37, %v1120
    %v1138 = vadd.f32 %v31, %v1121
    %v1139 = vadd.f32 %v38, %v1122
    %v1140 = vadd.f32 %v39, %v1123
    %v1141 = vadd.f32 %v40, %v1113
    %v1142 = vadd.f32 %v41, %v1124
    %1153 = vst [vmem:[#allocation1] ss:$9 sm:$0xff] %v1133
    %s1154 = scalar_lea.vmem [#allocation1], 1
    %1155 = vst [vmem:[%s1154] ss:$9 sm:$0xff] %v1134
    %s1156 = scalar_lea.vmem [#allocation1], 2
    %1157 = vst [vmem:[%s1156] ss:$9 sm:$0xff] %v1135
    %s1158 = scalar_lea.vmem [#allocation1], 3
    %1159 = vst [vmem:[%s1158] ss:$9 sm:$0xff] %v1136
    %s1160 = scalar_lea.vmem [#allocation1], 4
    %1161 = vst [vmem:[%s1160] ss:$9 sm:$0xff] %v1137
    %s1162 = scalar_lea.vmem [#allocation1], 5
    %1163 = vst [vmem:[%s1162] ss:$9 sm:$0xff] %v1138
    %s1164 = scalar_lea.vmem [#allocation1], 6
    %1165 = vst [vmem:[%s1164] ss:$9 sm:$0xff] %v1139
    %s1166 = scalar_lea.vmem [#allocation1], 7
    %1167 = vst [vmem:[%s1166] ss:$9 sm:$0xff] %v1140
    %v1168 = vld [vmem:[#allocation1] sm:$0xff]
    %1169 = vst [vmem:[#allocation1] ss:$9 sm:$0xff] %v1141
    %1170 = vst [vmem:[%s1154] ss:$9 sm:$0xff] %v1142
    %v1171 = vld [vmem:[#allocation1] sm:$0xff]
    %v1174 = vsel %vm75, %v1168, 0.0
    %1175 = vadd.xlane.f32.xlu0 %v1174
    %v1176 = vpop.xlane.xlu0 %1175
    %vm1177 = vcmask 254976
    %v1178 = vsel %vm1177, %v1171, 0.0
    %1179 = vadd.xlane.f32.xlu0 %v1178
    %v1180 = vpop.xlane.xlu0 %1179
    %v1181 = vrcp.pop 32.0
    %v1182 = vmul.f32 32.0, %v1181
    %v1183 = vsub.f32 1.0, %v1182
    %v1184 = vmul.f32 %v1181, %v1183
    %v1185 = vadd.f32 %v1181, %v1184
    %vm1186 = vweird.f32 %v1181
    %v1187 = vsel %vm1186, %v1181, %v1185
    %v1188 = vmul.f32 %v1176, %v1187
    %v1189 = vmul.f32 %v1180, %v1187
    %v1192 = vperm.slane %v1188, 0
    %v1193 = vperm.slane %v1188, 1
    %v1194 = vperm.slane %v1188, 2
    %v1195 = vperm.slane %v1188, 3
    %v1196 = vperm.slane %v1188, 4
    %v1197 = vperm.slane %v1188, 5
    %v1198 = vperm.slane %v1188, 6
    %v1199 = vperm.slane %v1188, 7
    %v1200 = vperm.slane %v1189, 0
    %v1201 = vperm.slane %v1189, 1
    %v1212 = vsub.f32 %v1133, %v1192
    %v1213 = vsub.f32 %v1134, %v1193
    %v1214 = vsub.f32 %v1135, %v1194
    %v1215 = vsub.f32 %v1136, %v1195
    %v1216 = vsub.f32 %v1137, %v1196
    %v1217 = vsub.f32 %v1138, %v1197
    %v1218 = vsub.f32 %v1139, %v1198
    %v1219 = vsub.f32 %v1140, %v1199
    %v1220 = vsub.f32 %v1141, %v1200
    %v1221 = vsub.f32 %v1142, %v1201
    %v1222 = vmul.f32 %v1212, %v1212
    %v1223 = vmul.f32 %v1213, %v1213
    %v1224 = vmul.f32 %v1214, %v1214
    %v1225 = vmul.f32 %v1215, %v1215
    %v1226 = vmul.f32 %v1216, %v1216
    %v1227 = vmul.f32 %v1217, %v1217
    %v1228 = vmul.f32 %v1218, %v1218
    %v1229 = vmul.f32 %v1219, %v1219
    %v1230 = vmul.f32 %v1220, %v1220
    %v1231 = vmul.f32 %v1221, %v1221
    %1242 = vst [vmem:[#allocation1] ss:$9 sm:$0xff] %v1222
    %s1243 = scalar_lea.vmem [#allocation1], 1
    %1244 = vst [vmem:[%s1243] ss:$9 sm:$0xff] %v1223
    %s1245 = scalar_lea.vmem [#allocation1], 2
    %1246 = vst [vmem:[%s1245] ss:$9 sm:$0xff] %v1224
    %s1247 = scalar_lea.vmem [#allocation1], 3
    %1248 = vst [vmem:[%s1247] ss:$9 sm:$0xff] %v1225
    %s1249 = scalar_lea.vmem [#allocation1], 4
    %1250 = vst [vmem:[%s1249] ss:$9 sm:$0xff] %v1226
    %s1251 = scalar_lea.vmem [#allocation1], 5
    %1252 = vst [vmem:[%s1251] ss:$9 sm:$0xff] %v1227
    %s1253 = scalar_lea.vmem [#allocation1], 6
    %1254 = vst [vmem:[%s1253] ss:$9 sm:$0xff] %v1228
    %s1255 = scalar_lea.vmem [#allocation1], 7
    %1256 = vst [vmem:[%s1255] ss:$9 sm:$0xff] %v1229
    %v1257 = vld [vmem:[#allocation1] sm:$0xff]
    %1258 = vst [vmem:[#allocation1] ss:$9 sm:$0xff] %v1230
    %1259 = vst [vmem:[%s1243] ss:$9 sm:$0xff] %v1231
    %v1260 = vld [vmem:[#allocation1] sm:$0xff]
    %v1263 = vsel %vm75, %v1257, 0.0
    %1264 = vadd.xlane.f32.xlu0 %v1263
    %v1265 = vpop.xlane.xlu0 %1264
    %v1266 = vsel %vm1177, %v1260, 0.0
    %1267 = vadd.xlane.f32.xlu0 %v1266
    %v1268 = vpop.xlane.xlu0 %1267
    %v1269 = vmul.f32 %v1265, %v1187
    %v1270 = vmul.f32 %v1268, %v1187
    %v1271 = vadd.f32 %v1269, 1e-05
    %v1272 = vadd.f32 %v1270, 1e-05
    %v1273 = vrsqrt.pop %v1271
    %v1274 = vmul.f32 %v1273, %v1271
    %v1275 = vmul.f32 %v1274, %v1273
    %v1276 = vmul.f32 0.5, %v1275
    %v1277 = vsub.f32 1.5, %v1276
    %v1278 = vmul.f32 %v1273, %v1277
    %vm1279 = vweird.f32 %v1271
    %vm1280 = vweird.f32 %v1273
    %vm1281 = vmor %vm1279, %vm1280
    %v1282 = vsel %vm1281, %v1273, %v1278
    %v1283 = vrsqrt.pop %v1272
    %v1284 = vmul.f32 %v1283, %v1272
    %v1285 = vmul.f32 %v1284, %v1283
    %v1286 = vmul.f32 0.5, %v1285
    %v1287 = vsub.f32 1.5, %v1286
    %v1288 = vmul.f32 %v1283, %v1287
    %vm1289 = vweird.f32 %v1272
    %vm1290 = vweird.f32 %v1283
    %vm1291 = vmor %vm1289, %vm1290
    %v1292 = vsel %vm1291, %v1283, %v1288
    %v1295 = vperm.slane %v1282, 0
    %v1296 = vperm.slane %v1282, 1
    %v1297 = vperm.slane %v1282, 2
    %v1298 = vperm.slane %v1282, 3
    %v1299 = vperm.slane %v1282, 4
    %v1300 = vperm.slane %v1282, 5
    %v1301 = vperm.slane %v1282, 6
    %v1302 = vperm.slane %v1282, 7
    %v1303 = vperm.slane %v1292, 0
    %v1304 = vperm.slane %v1292, 1
    %v1315 = vmul.f32 %v1212, %v1295
    %v1316 = vmul.f32 %v1213, %v1296
    %v1317 = vmul.f32 %v1214, %v1297
    %v1318 = vmul.f32 %v1215, %v1298
    %v1319 = vmul.f32 %v1216, %v1299
    %v1320 = vmul.f32 %v1217, %v1300
    %v1321 = vmul.f32 %v1218, %v1301
    %v1322 = vmul.f32 %v1219, %v1302
    %v1323 = vmul.f32 %v1220, %v1303
    %v1324 = vmul.f32 %v1221, %v1304
    %v1325 = vperm.slane %v50, 4
    %v1327 = vrot.slane %v1325, 1
    %v1328 = vrot.slane %v1325, 2
    %v1329 = vrot.slane %v1325, 3
    %v1330 = vrot.slane %v1325, 4
    %v1331 = vrot.slane %v1325, 5
    %v1332 = vrot.slane %v1325, 6
    %v1333 = vrot.slane %v1325, 7
    %v1341 = vmul.f32 %v1315, %v1325
    %v1342 = vmul.f32 %v1316, %v1327
    %v1343 = vmul.f32 %v1317, %v1328
    %v1344 = vmul.f32 %v1318, %v1329
    %v1345 = vmul.f32 %v1319, %v1330
    %v1346 = vmul.f32 %v1320, %v1331
    %v1347 = vmul.f32 %v1321, %v1332
    %v1348 = vmul.f32 %v1322, %v1333
    %v1349 = vmul.f32 %v1323, %v1325
    %v1350 = vmul.f32 %v1324, %v1327
    %v1351 = vperm.slane %v50, 5
    %v1353 = vrot.slane %v1351, 1
    %v1354 = vrot.slane %v1351, 2
    %v1355 = vrot.slane %v1351, 3
    %v1356 = vrot.slane %v1351, 4
    %v1357 = vrot.slane %v1351, 5
    %v1358 = vrot.slane %v1351, 6
    %v1359 = vrot.slane %v1351, 7
    %v1367 = vadd.f32 %v1341, %v1351
    %v1368 = vadd.f32 %v1342, %v1353
    %v1369 = vadd.f32 %v1343, %v1354
    %v1370 = vadd.f32 %v1344, %v1355
    %v1371 = vadd.f32 %v1345, %v1356
    %v1372 = vadd.f32 %v1346, %v1357
    %v1373 = vadd.f32 %v1347, %v1358
    %v1374 = vadd.f32 %v1348, %v1359
    %v1375 = vadd.f32 %v1349, %v1351
    %v1376 = vadd.f32 %v1350, %v1353
    %v1377 = vld [vmem:[#allocation2 + $0x40] sm:$0xff]
    %v1378 = vld [vmem:[#allocation2 + $0x48] sm:$0xff]
    %v1379 = vld [vmem:[#allocation2 + $0x50] sm:$0xff]
    %v1380 = vld [vmem:[#allocation2 + $0x58] sm:$0xff]
    %v1381 = vperm.slane %v50, 2
    %1392 = vst [vmem:[#allocation1] ss:$9 sm:$0xff] %v1367
    %s1393 = scalar_lea.vmem [#allocation1], 1
    %1394 = vst [vmem:[%s1393] ss:$9 sm:$0xff] %v1368
    %s1395 = scalar_lea.vmem [#allocation1], 2
    %1396 = vst [vmem:[%s1395] ss:$9 sm:$0xff] %v1369
    %s1397 = scalar_lea.vmem [#allocation1], 3
    %1398 = vst [vmem:[%s1397] ss:$9 sm:$0xff] %v1370
    %s1399 = scalar_lea.vmem [#allocation1], 4
    %1400 = vst [vmem:[%s1399] ss:$9 sm:$0xff] %v1371
    %s1401 = scalar_lea.vmem [#allocation1], 5
    %1402 = vst [vmem:[%s1401] ss:$9 sm:$0xff] %v1372
    %s1403 = scalar_lea.vmem [#allocation1], 6
    %1404 = vst [vmem:[%s1403] ss:$9 sm:$0xff] %v1373
    %s1405 = scalar_lea.vmem [#allocation1], 7
    %1406 = vst [vmem:[%s1405] ss:$9 sm:$0xff] %v1374
    %v1407 = vld [vmem:[#allocation1] sm:$0xff]
    %1408 = vst [vmem:[#allocation1] ss:$9 sm:$0xff] %v1375
    %1409 = vst [vmem:[%s1393] ss:$9 sm:$0xff] %v1376
    %v1410 = vld [vmem:[#allocation1] sm:$0xff]
    %v1411 = vsel %vm75, %v1407, 0
    %v1413 = vsel %vm75, %v1410, 0
    %1415 = vmatpush.msra.mxu0 0.0
    %1416 = vmatpush.msra.mxu0 0.0
    %1417 = vmatpush.msra.mxu0 0.0
    %1418 = vmatpush.msra.mxu0 0.0
    %1419 = vmatpush.msra.mxu0 0.0
    %1420 = vmatpush.msra.mxu0 0.0
    %1421 = vmatpush.msra.mxu0 0.0
    %1422 = vmatpush.msra.mxu0 0.0
    %1423 = vmatpush.msra.mxu0 0.0
    %1424 = vmatpush.msra.mxu0 0.0
    %1425 = vmatpush.msra.mxu0 0.0
    %1426 = vmatpush.msra.mxu0 0.0
    %1427 = vmatpush.msra.mxu0 %v1380
    %1428 = vmatpush.msra.mxu0 %v1379
    %1429 = vmatpush.msra.mxu0 %v1378
    %1430 = vmatpush.msra.mxu0 %v1377
    %1431 = vmatmul.f32.gmra.mxu0 %v1411
    %v1432 = vpop.f32.mrf.mxu0
    %v1433 = vadd.f32 %v1381, %v1432
    %1434 = vmatmul.f32.gmra.mxu0 %v1413
    %v1435 = vpop.f32.mrf.mxu0
    %v1436 = vadd.f32 %v1381, %v1435
    %1437 = vdwg.mxu0
    %v1438 = vmax.f32 %v1433, 0.0
    %v1439 = vmax.f32 %v1436, 0.0
    %v1440 = vld [vmem:[#allocation2 + $0x60] sm:$0xff]
    %v1441 = vld [vmem:[#allocation2 + $0x68] sm:$0xff]
    %v1442 = vld [vmem:[#allocation2 + $0x70] sm:$0xff]
    %v1443 = vld [vmem:[#allocation2 + $0x78] sm:$0xff]
    %v1444 = vld [vmem:[#allocation2 + $0x80] sm:$0xff]
    %v1445 = vld [vmem:[#allocation2 + $0x88] sm:$0xff]
    %v1446 = vld [vmem:[#allocation2 + $0x90] sm:$0xff]
    %v1447 = vld [vmem:[#allocation2 + $0x98] sm:$0xff]
    %v1448 = vperm.slane %v50, 3
    %vm1449 = vcmask 523264
    %v1451 = vsel %vm1449, %v1438, 0
    %v1454 = vsel %vm1449, %v1439, 0
    %1456 = vmatpush.msra.mxu0 0.0
    %1457 = vmatpush.msra.mxu0 0.0
    %1458 = vmatpush.msra.mxu0 0.0
    %1459 = vmatpush.msra.mxu0 0.0
    %1460 = vmatpush.msra.mxu0 0.0
    %1461 = vmatpush.msra.mxu0 0.0
    %1462 = vmatpush.msra.mxu0 0.0
    %1463 = vmatpush.msra.mxu0 0.0
    %1464 = vmatpush.msra.mxu0 %v1447
    %1465 = vmatpush.msra.mxu0 %v1446
    %1466 = vmatpush.msra.mxu0 %v1445
    %1467 = vmatpush.msra.mxu0 %v1444
    %1468 = vmatpush.msra.mxu0 %v1443
    %1469 = vmatpush.msra.mxu0 %v1442
    %1470 = vmatpush.msra.mxu0 %v1441
    %1471 = vmatpush.msra.mxu0 %v1440
    %1472 = vmatmul.f32.gmra.mxu0 %v1451
    %v1473 = vpop.f32.mrf.mxu0
    %v1474 = vadd.f32 %v1448, %v1473
    %1475 = vmatmul.f32.gmra.mxu0 %v1454
    %v1476 = vpop.f32.mrf.mxu0
    %v1477 = vadd.f32 %v1448, %v1476
    %1478 = vdwg.mxu0
    %v1481 = vrot.slane %v1474, 1
    %v1482 = vrot.slane %v1474, 2
    %v1483 = vrot.slane %v1474, 3
    %v1484 = vrot.slane %v1474, 4
    %v1485 = vrot.slane %v1474, 5
    %v1486 = vrot.slane %v1474, 6
    %v1487 = vrot.slane %v1474, 7
    %v1488 = vrot.slane %v1477, 1
    %v1497 = vadd.f32 %v1367, %v1474
    %v1498 = vadd.f32 %v1368, %v1481
    %v1499 = vadd.f32 %v1369, %v1482
    %v1500 = vadd.f32 %v1370, %v1483
    %v1501 = vadd.f32 %v1371, %v1484
    %v1502 = vadd.f32 %v1372, %v1485
    %v1503 = vadd.f32 %v1373, %v1486
    %v1504 = vadd.f32 %v1374, %v1487
    %v1505 = vadd.f32 %v1375, %v1477
    %v1506 = vadd.f32 %v1376, %v1488
    %1517 = vst [vmem:[#allocation1] ss:$9 sm:$0xff] %v1497
    %s1518 = scalar_lea.vmem [#allocation1], 1
    %1519 = vst [vmem:[%s1518] ss:$9 sm:$0xff] %v1498
    %s1520 = scalar_lea.vmem [#allocation1], 2
    %1521 = vst [vmem:[%s1520] ss:$9 sm:$0xff] %v1499
    %s1522 = scalar_lea.vmem [#allocation1], 3
    %1523 = vst [vmem:[%s1522] ss:$9 sm:$0xff] %v1500
    %s1524 = scalar_lea.vmem [#allocation1], 4
    %1525 = vst [vmem:[%s1524] ss:$9 sm:$0xff] %v1501
    %s1526 = scalar_lea.vmem [#allocation1], 5
    %1527 = vst [vmem:[%s1526] ss:$9 sm:$0xff] %v1502
    %s1528 = scalar_lea.vmem [#allocation1], 6
    %1529 = vst [vmem:[%s1528] ss:$9 sm:$0xff] %v1503
    %s1530 = scalar_lea.vmem [#allocation1], 7
    %1531 = vst [vmem:[%s1530] ss:$9 sm:$0xff] %v1504
    %v1532 = vld [vmem:[#allocation1] sm:$0xff]
    %1533 = vst [vmem:[#allocation1] ss:$9 sm:$0xff] %v1505
    %1534 = vst [vmem:[%s1518] ss:$9 sm:$0xff] %v1506
    %v1535 = vld [vmem:[#allocation1] sm:$0xff]
    %v1538 = vsel %vm75, %v1532, 0.0
    %1539 = vadd.xlane.f32.xlu0 %v1538
    %v1540 = vpop.xlane.xlu0 %1539
    %v1541 = vsel %vm1177, %v1535, 0.0
    %1542 = vadd.xlane.f32.xlu0 %v1541
    %v1543 = vpop.xlane.xlu0 %1542
    %v1544 = vmul.f32 %v1540, %v1187
    %v1545 = vmul.f32 %v1543, %v1187
    %v1548 = vperm.slane %v1544, 0
    %v1549 = vperm.slane %v1544, 1
    %v1550 = vperm.slane %v1544, 2
    %v1551 = vperm.slane %v1544, 3
    %v1552 = vperm.slane %v1544, 4
    %v1553 = vperm.slane %v1544, 5
    %v1554 = vperm.slane %v1544, 6
    %v1555 = vperm.slane %v1544, 7
    %v1556 = vperm.slane %v1545, 0
    %v1557 = vperm.slane %v1545, 1
    %v1568 = vsub.f32 %v1497, %v1548
    %v1569 = vsub.f32 %v1498, %v1549
    %v1570 = vsub.f32 %v1499, %v1550
    %v1571 = vsub.f32 %v1500, %v1551
    %v1572 = vsub.f32 %v1501, %v1552
    %v1573 = vsub.f32 %v1502, %v1553
    %v1574 = vsub.f32 %v1503, %v1554
    %v1575 = vsub.f32 %v1504, %v1555
    %v1576 = vsub.f32 %v1505, %v1556
    %v1577 = vsub.f32 %v1506, %v1557
    %v1578 = vmul.f32 %v1568, %v1568
    %v1579 = vmul.f32 %v1569, %v1569
    %v1580 = vmul.f32 %v1570, %v1570
    %v1581 = vmul.f32 %v1571, %v1571
    %v1582 = vmul.f32 %v1572, %v1572
    %v1583 = vmul.f32 %v1573, %v1573
    %v1584 = vmul.f32 %v1574, %v1574
    %v1585 = vmul.f32 %v1575, %v1575
    %v1586 = vmul.f32 %v1576, %v1576
    %v1587 = vmul.f32 %v1577, %v1577
    %1598 = vst [vmem:[#allocation1] ss:$9 sm:$0xff] %v1578
    %s1599 = scalar_lea.vmem [#allocation1], 1
    %1600 = vst [vmem:[%s1599] ss:$9 sm:$0xff] %v1579
    %s1601 = scalar_lea.vmem [#allocation1], 2
    %1602 = vst [vmem:[%s1601] ss:$9 sm:$0xff] %v1580
    %s1603 = scalar_lea.vmem [#allocation1], 3
    %1604 = vst [vmem:[%s1603] ss:$9 sm:$0xff] %v1581
    %s1605 = scalar_lea.vmem [#allocation1], 4
    %1606 = vst [vmem:[%s1605] ss:$9 sm:$0xff] %v1582
    %s1607 = scalar_lea.vmem [#allocation1], 5
    %1608 = vst [vmem:[%s1607] ss:$9 sm:$0xff] %v1583
    %s1609 = scalar_lea.vmem [#allocation1], 6
    %1610 = vst [vmem:[%s1609] ss:$9 sm:$0xff] %v1584
    %s1611 = scalar_lea.vmem [#allocation1], 7
    %1612 = vst [vmem:[%s1611] ss:$9 sm:$0xff] %v1585
    %v1613 = vld [vmem:[#allocation1] sm:$0xff]
    %1614 = vst [vmem:[#allocation1] ss:$9 sm:$0xff] %v1586
    %1615 = vst [vmem:[%s1599] ss:$9 sm:$0xff] %v1587
    %v1616 = vld [vmem:[#allocation1] sm:$0xff]
    %v1619 = vsel %vm75, %v1613, 0.0
    %1620 = vadd.xlane.f32.xlu0 %v1619
    %v1621 = vpop.xlane.xlu0 %1620
    %v1622 = vsel %vm1177, %v1616, 0.0
    %1623 = vadd.xlane.f32.xlu0 %v1622
    %v1624 = vpop.xlane.xlu0 %1623
    %v1625 = vmul.f32 %v1621, %v1187
    %v1626 = vmul.f32 %v1624, %v1187
    %v1627 = vadd.f32 %v1625, 1e-05
    %v1628 = vadd.f32 %v1626, 1e-05
    %v1629 = vrsqrt.pop %v1627
    %v1630 = vmul.f32 %v1629, %v1627
    %v1631 = vmul.f32 %v1630, %v1629
    %v1632 = vmul.f32 0.5, %v1631
    %v1633 = vsub.f32 1.5, %v1632
    %v1634 = vmul.f32 %v1629, %v1633
    %vm1635 = vweird.f32 %v1627
    %vm1636 = vweird.f32 %v1629
    %vm1637 = vmor %vm1635, %vm1636
    %v1638 = vsel %vm1637, %v1629, %v1634
    %v1639 = vrsqrt.pop %v1628
    %v1640 = vmul.f32 %v1639, %v1628
    %v1641 = vmul.f32 %v1640, %v1639
    %v1642 = vmul.f32 0.5, %v1641
    %v1643 = vsub.f32 1.5, %v1642
    %v1644 = vmul.f32 %v1639, %v1643
    %vm1645 = vweird.f32 %v1628
    %vm1646 = vweird.f32 %v1639
    %vm1647 = vmor %vm1645, %vm1646
    %v1648 = vsel %vm1647, %v1639, %v1644
    %v1651 = vperm.slane %v1638, 0
    %v1652 = vperm.slane %v1638, 1
    %v1653 = vperm.slane %v1638, 2
    %v1654 = vperm.slane %v1638, 3
    %v1655 = vperm.slane %v1638, 4
    %v1656 = vperm.slane %v1638, 5
    %v1657 = vperm.slane %v1638, 6
    %v1658 = vperm.slane %v1638, 7
    %v1659 = vperm.slane %v1648, 0
    %v1660 = vperm.slane %v1648, 1
    %v1671 = vmul.f32 %v1568, %v1651
    %v1672 = vmul.f32 %v1569, %v1652
    %v1673 = vmul.f32 %v1570, %v1653
    %v1674 = vmul.f32 %v1571, %v1654
    %v1675 = vmul.f32 %v1572, %v1655
    %v1676 = vmul.f32 %v1573, %v1656
    %v1677 = vmul.f32 %v1574, %v1657
    %v1678 = vmul.f32 %v1575, %v1658
    %v1679 = vmul.f32 %v1576, %v1659
    %v1680 = vmul.f32 %v1577, %v1660
    %v1681 = vperm.slane %v50, 6
    %v1683 = vrot.slane %v1681, 1
    %v1684 = vrot.slane %v1681, 2
    %v1685 = vrot.slane %v1681, 3
    %v1686 = vrot.slane %v1681, 4
    %v1687 = vrot.slane %v1681, 5
    %v1688 = vrot.slane %v1681, 6
    %v1689 = vrot.slane %v1681, 7
    %v1697 = vmul.f32 %v1671, %v1681
    %v1698 = vmul.f32 %v1672, %v1683
    %v1699 = vmul.f32 %v1673, %v1684
    %v1700 = vmul.f32 %v1674, %v1685
    %v1701 = vmul.f32 %v1675, %v1686
    %v1702 = vmul.f32 %v1676, %v1687
    %v1703 = vmul.f32 %v1677, %v1688
    %v1704 = vmul.f32 %v1678, %v1689
    %v1705 = vmul.f32 %v1679, %v1681
    %v1706 = vmul.f32 %v1680, %v1683
    %v1707 = vperm.slane %v50, 7
    %v1709 = vrot.slane %v1707, 1
    %v1710 = vrot.slane %v1707, 2
    %v1711 = vrot.slane %v1707, 3
    %v1712 = vrot.slane %v1707, 4
    %v1713 = vrot.slane %v1707, 5
    %v1714 = vrot.slane %v1707, 6
    %v1715 = vrot.slane %v1707, 7
    %v1723 = vadd.f32 %v1697, %v1707
    %v1724 = vadd.f32 %v1698, %v1709
    %v1725 = vadd.f32 %v1699, %v1710
    %v1726 = vadd.f32 %v1700, %v1711
    %v1727 = vadd.f32 %v1701, %v1712
    %v1728 = vadd.f32 %v1702, %v1713
    %v1729 = vadd.f32 %v1703, %v1714
    %v1730 = vadd.f32 %v1704, %v1715
    %v1731 = vadd.f32 %v1705, %v1707
    %v1732 = vadd.f32 %v1706, %v1709
    %v1733 = vld [vmem:[#allocation2 + $0x148] sm:$0xff]
    %v1734 = vld [vmem:[#allocation2 + $0xa8] sm:$0xff]
    %v1735 = vld [vmem:[#allocation2 + $0xb0] sm:$0xff]
    %v1736 = vld [vmem:[#allocation2 + $0xb8] sm:$0xff]
    %v1737 = vld [vmem:[#allocation2 + $0xc0] sm:$0xff]
    %v1738 = vperm.slane %v1733, 0
    %1749 = vst [vmem:[#allocation1] ss:$9 sm:$0xff] %v1723
    %s1750 = scalar_lea.vmem [#allocation1], 1
    %1751 = vst [vmem:[%s1750] ss:$9 sm:$0xff] %v1724
    %s1752 = scalar_lea.vmem [#allocation1], 2
    %1753 = vst [vmem:[%s1752] ss:$9 sm:$0xff] %v1725
    %s1754 = scalar_lea.vmem [#allocation1], 3
    %1755 = vst [vmem:[%s1754] ss:$9 sm:$0xff] %v1726
    %s1756 = scalar_lea.vmem [#allocation1], 4
    %1757 = vst [vmem:[%s1756] ss:$9 sm:$0xff] %v1727
    %s1758 = scalar_lea.vmem [#allocation1], 5
    %1759 = vst [vmem:[%s1758] ss:$9 sm:$0xff] %v1728
    %s1760 = scalar_lea.vmem [#allocation1], 6
    %1761 = vst [vmem:[%s1760] ss:$9 sm:$0xff] %v1729
    %s1762 = scalar_lea.vmem [#allocation1], 7
    %1763 = vst [vmem:[%s1762] ss:$9 sm:$0xff] %v1730
    %v1764 = vld [vmem:[#allocation1] sm:$0xff]
    %1765 = vst [vmem:[#allocation1] ss:$9 sm:$0xff] %v1731
    %1766 = vst [vmem:[%s1750] ss:$9 sm:$0xff] %v1732
    %v1767 = vld [vmem:[#allocation1] sm:$0xff]
    %v1768 = vsel %vm75, %v1764, 0
    %v1770 = vsel %vm75, %v1767, 0
    %1772 = vmatpush.msra.mxu0 0.0
    %1773 = vmatpush.msra.mxu0 0.0
    %1774 = vmatpush.msra.mxu0 0.0
    %1775 = vmatpush.msra.mxu0 0.0
    %1776 = vmatpush.msra.mxu0 0.0
    %1777 = vmatpush.msra.mxu0 0.0
    %1778 = vmatpush.msra.mxu0 0.0
    %1779 = vmatpush.msra.mxu0 0.0
    %1780 = vmatpush.msra.mxu0 0.0
    %1781 = vmatpush.msra.mxu0 0.0
    %1782 = vmatpush.msra.mxu0 0.0
    %1783 = vmatpush.msra.mxu0 0.0
    %1784 = vmatpush.msra.mxu0 %v1737
    %1785 = vmatpush.msra.mxu0 %v1736
    %1786 = vmatpush.msra.mxu0 %v1735
    %1787 = vmatpush.msra.mxu0 %v1734
    %1788 = vmatmul.f32.gmra.mxu0 %v1768
    %v1789 = vpop.f32.mrf.mxu0
    %v1790 = vadd.f32 %v1738, %v1789
    %1791 = vmatmul.f32.gmra.mxu0 %v1770
    %v1792 = vpop.f32.mrf.mxu0
    %v1793 = vadd.f32 %v1738, %v1792
    %1794 = vdwg.mxu0
    %v1797 = vrot.slane %v1790, 1
    %v1798 = vrot.slane %v1790, 2
    %v1799 = vrot.slane %v1790, 3
    %v1800 = vrot.slane %v1790, 4
    %v1801 = vrot.slane %v1790, 5
    %v1802 = vrot.slane %v1790, 6
    %v1803 = vrot.slane %v1790, 7
    %v1804 = vrot.slane %v1793, 1
    %1805 = vrot.lane.b32.xlu0 %v1790, 120
    %v1806 = vpop.permute.xlu0 %1805
    %1807 = vrot.lane.b32.xlu0 %v1797, 120
    %v1808 = vpop.permute.xlu0 %1807
    %1809 = vrot.lane.b32.xlu0 %v1798, 120
    %v1810 = vpop.permute.xlu0 %1809
    %1811 = vrot.lane.b32.xlu0 %v1799, 120
    %v1812 = vpop.permute.xlu0 %1811
    %1813 = vrot.lane.b32.xlu0 %v1800, 120
    %v1814 = vpop.permute.xlu0 %1813
    %1815 = vrot.lane.b32.xlu0 %v1801, 120
    %v1816 = vpop.permute.xlu0 %1815
    %1817 = vrot.lane.b32.xlu0 %v1802, 120
    %v1818 = vpop.permute.xlu0 %1817
    %1819 = vrot.lane.b32.xlu0 %v1803, 120
    %v1820 = vpop.permute.xlu0 %1819
    %1821 = vrot.lane.b32.xlu0 %v1793, 120
    %v1822 = vpop.permute.xlu0 %1821
    %1823 = vrot.lane.b32.xlu0 %v1804, 120
    %v1824 = vpop.permute.xlu0 %1823
    %1825 = vrot.lane.b32.xlu0 %v1790, 112
    %v1826 = vpop.permute.xlu0 %1825
    %1827 = vrot.lane.b32.xlu0 %v1797, 112
    %v1828 = vpop.permute.xlu0 %1827
    %1829 = vrot.lane.b32.xlu0 %v1798, 112
    %v1830 = vpop.permute.xlu0 %1829
    %1831 = vrot.lane.b32.xlu0 %v1799, 112
    %v1832 = vpop.permute.xlu0 %1831
    %1833 = vrot.lane.b32.xlu0 %v1800, 112
    %v1834 = vpop.permute.xlu0 %1833
    %1835 = vrot.lane.b32.xlu0 %v1801, 112
    %v1836 = vpop.permute.xlu0 %1835
    %1837 = vrot.lane.b32.xlu0 %v1802, 112
    %v1838 = vpop.permute.xlu0 %1837
    %1839 = vrot.lane.b32.xlu0 %v1803, 112
    %v1840 = vpop.permute.xlu0 %1839
    %1841 = vrot.lane.b32.xlu0 %v1793, 112
    %v1842 = vpop.permute.xlu0 %1841
    %1843 = vrot.lane.b32.xlu0 %v1804, 112
    %v1844 = vpop.permute.xlu0 %1843
    %1845 = vrot.lane.b32.xlu0 %v1790, 104
    %v1846 = vpop.permute.xlu0 %1845
    %1847 = vrot.lane.b32.xlu0 %v1797, 104
    %v1848 = vpop.permute.xlu0 %1847
    %1849 = vrot.lane.b32.xlu0 %v1798, 104
    %v1850 = vpop.permute.xlu0 %1849
    %1851 = vrot.lane.b32.xlu0 %v1799, 104
    %v1852 = vpop.permute.xlu0 %1851
    %1853 = vrot.lane.b32.xlu0 %v1800, 104
    %v1854 = vpop.permute.xlu0 %1853
    %1855 = vrot.lane.b32.xlu0 %v1801, 104
    %v1856 = vpop.permute.xlu0 %1855
    %1857 = vrot.lane.b32.xlu0 %v1802, 104
    %v1858 = vpop.permute.xlu0 %1857
    %1859 = vrot.lane.b32.xlu0 %v1803, 104
    %v1860 = vpop.permute.xlu0 %1859
    %1861 = vrot.lane.b32.xlu0 %v1793, 104
    %v1862 = vpop.permute.xlu0 %1861
    %1863 = vrot.lane.b32.xlu0 %v1804, 104
    %v1864 = vpop.permute.xlu0 %1863
    %1865 = vst [vmem:[#allocation1] ss:$9 sm:$0xff] %v1790
    %s1866 = scalar_lea.vmem [#allocation1], 1
    %1867 = vst [vmem:[%s1866] ss:$9 sm:$0xff] %v1797
    %s1868 = scalar_lea.vmem [#allocation1], 2
    %1869 = vst [vmem:[%s1868] ss:$9 sm:$0xff] %v1798
    %s1870 = scalar_lea.vmem [#allocation1], 3
    %1871 = vst [vmem:[%s1870] ss:$9 sm:$0xff] %v1799
    %s1872 = scalar_lea.vmem [#allocation1], 4
    %1873 = vst [vmem:[%s1872] ss:$9 sm:$0xff] %v1800
    %v1874 = vld [vmem:[#allocation1] sm:$0xff]
    %1875 = vst [vmem:[#allocation1] ss:$9 sm:$0xff] %v1790
    %s1876 = scalar_lea.vmem [#allocation1], 1
    %1877 = vst [vmem:[%s1876] ss:$9 sm:$0xff] %v1797
    %s1878 = scalar_lea.vmem [#allocation1], 2
    %1879 = vst [vmem:[%s1878] ss:$9 sm:$0xff] %v1798
    %s1880 = scalar_lea.vmem [#allocation1], 3
    %1881 = vst [vmem:[%s1880] ss:$9 sm:$0xff] %v1799
    %s1882 = scalar_lea.vmem [#allocation1], 4
    %1883 = vst [vmem:[%s1882] ss:$9 sm:$0xff] %v1800
    %v1884 = vld [vmem:[#allocation1] sm:$0xff]
    %1885 = vrot.lane.b32.xlu0 %v1884, 96
    %v1886 = vpop.permute.xlu0 %1885
    %v1887 = vsel %vm195, %v1874, 0
    %v1889 = vsel %vm195, %v1886, 0
    %1891 = vmatpush.xpose.msra.mxu0 0.0
    %1892 = vmatpush.xpose.msra.mxu0 0.0
    %1893 = vmatpush.xpose.msra.mxu0 0.0
    %1894 = vmatpush.xpose.msra.mxu0 0.0
    %1895 = vmatpush.xpose.msra.mxu0 0.0
    %1896 = vmatpush.xpose.msra.mxu0 0.0
    %1897 = vmatpush.xpose.msra.mxu0 0.0
    %1898 = vmatpush.xpose.msra.mxu0 0.0
    %1899 = vmatpush.xpose.msra.mxu0 0.0
    %1900 = vmatpush.xpose.msra.mxu0 0.0
    %1901 = vmatpush.xpose.msra.mxu0 0.0
    %1902 = vmatpush.xpose.msra.mxu0 0.0
    %1903 = vmatpush.xpose.msra.mxu0 0.0
    %1904 = vmatpush.xpose.msra.mxu0 0.0
    %1905 = vmatpush.xpose.msra.mxu0 0.0
    %1906 = vmatpush.xpose.msra.mxu0 %v1889
    %1907 = vmatmul.f32.gmra.mxu0 %v1887
    %v1908 = vpop.f32.mrf.mxu0
    %v1909 = vadd.f32 0.0, %v1908
    %1910 = vdwg.mxu0
    %1911 = vst [vmem:[#allocation1] ss:$9 sm:$0xff] %v1801
    %s1912 = scalar_lea.vmem [#allocation1], 1
    %1913 = vst [vmem:[%s1912] ss:$9 sm:$0xff] %v1802
    %s1914 = scalar_lea.vmem [#allocation1], 2
    %1915 = vst [vmem:[%s1914] ss:$9 sm:$0xff] %v1803
    %s1916 = scalar_lea.vmem [#allocation1], 3
    %1917 = vst [vmem:[%s1916] ss:$9 sm:$0xff] %v1793
    %s1918 = scalar_lea.vmem [#allocation1], 4
    %1919 = vst [vmem:[%s1918] ss:$9 sm:$0xff] %v1804
    %v1920 = vld [vmem:[#allocation1] sm:$0xff]
    %1921 = vst [vmem:[#allocation1] ss:$9 sm:$0xff] %v1801
    %s1922 = scalar_lea.vmem [#allocation1], 1
    %1923 = vst [vmem:[%s1922] ss:$9 sm:$0xff] %v1802
    %s1924 = scalar_lea.vmem [#allocation1], 2
    %1925 = vst [vmem:[%s1924] ss:$9 sm:$0xff] %v1803
    %s1926 = scalar_lea.vmem [#allocation1], 3
    %1927 = vst [vmem:[%s1926] ss:$9 sm:$0xff] %v1793
    %s1928 = scalar_lea.vmem [#allocation1], 4
    %1929 = vst [vmem:[%s1928] ss:$9 sm:$0xff] %v1804
    %v1930 = vld [vmem:[#allocation1] sm:$0xff]
    %1931 = vrot.lane.b32.xlu0 %v1930, 96
    %v1932 = vpop.permute.xlu0 %1931
    %v1933 = vsel %vm195, %v1920, 0
    %v1935 = vsel %vm195, %v1932, 0
    %1937 = vmatpush.xpose.msra.mxu0 0.0
    %1938 = vmatpush.xpose.msra.mxu0 0.0
    %1939 = vmatpush.xpose.msra.mxu0 0.0
    %1940 = vmatpush.xpose.msra.mxu0 0.0
    %1941 = vmatpush.xpose.msra.mxu0 0.0
    %1942 = vmatpush.xpose.msra.mxu0 0.0
    %1943 = vmatpush.xpose.msra.mxu0 0.0
    %1944 = vmatpush.xpose.msra.mxu0 0.0
    %1945 = vmatpush.xpose.msra.mxu0 0.0
    %1946 = vmatpush.xpose.msra.mxu0 0.0
    %1947 = vmatpush.xpose.msra.mxu0 0.0
    %1948 = vmatpush.xpose.msra.mxu0 0.0
    %1949 = vmatpush.xpose.msra.mxu0 0.0
    %1950 = vmatpush.xpose.msra.mxu0 0.0
    %1951 = vmatpush.xpose.msra.mxu0 0.0
    %1952 = vmatpush.xpose.msra.mxu0 %v1935
    %1953 = vmatmul.f32.gmra.mxu0 %v1933
    %v1954 = vpop.f32.mrf.mxu0
    %v1955 = vadd.f32 0.0, %v1954
    %1956 = vdwg.mxu0
    %1957 = vst [vmem:[#allocation1] ss:$9 sm:$0xff] %v1806
    %s1958 = scalar_lea.vmem [#allocation1], 1
    %1959 = vst [vmem:[%s1958] ss:$9 sm:$0xff] %v1808
    %s1960 = scalar_lea.vmem [#allocation1], 2
    %1961 = vst [vmem:[%s1960] ss:$9 sm:$0xff] %v1810
    %s1962 = scalar_lea.vmem [#allocation1], 3
    %1963 = vst [vmem:[%s1962] ss:$9 sm:$0xff] %v1812
    %s1964 = scalar_lea.vmem [#allocation1], 4
    %1965 = vst [vmem:[%s1964] ss:$9 sm:$0xff] %v1814
    %v1966 = vld [vmem:[#allocation1] sm:$0xff]
    %1967 = vst [vmem:[#allocation1] ss:$9 sm:$0xff] %v1806
    %s1968 = scalar_lea.vmem [#allocation1], 1
    %1969 = vst [vmem:[%s1968] ss:$9 sm:$0xff] %v1808
    %s1970 = scalar_lea.vmem [#allocation1], 2
    %1971 = vst [vmem:[%s1970] ss:$9 sm:$0xff] %v1810
    %s1972 = scalar_lea.vmem [#allocation1], 3
    %1973 = vst [vmem:[%s1972] ss:$9 sm:$0xff] %v1812
    %s1974 = scalar_lea.vmem [#allocation1], 4
    %1975 = vst [vmem:[%s1974] ss:$9 sm:$0xff] %v1814
    %v1976 = vld [vmem:[#allocation1] sm:$0xff]
    %1977 = vrot.lane.b32.xlu0 %v1976, 96
    %v1978 = vpop.permute.xlu0 %1977
    %v1979 = vsel %vm195, %v1966, 0
    %v1981 = vsel %vm195, %v1978, 0
    %1983 = vmatpush.xpose.msra.mxu0 0.0
    %1984 = vmatpush.xpose.msra.mxu0 0.0
    %1985 = vmatpush.xpose.msra.mxu0 0.0
    %1986 = vmatpush.xpose.msra.mxu0 0.0
    %1987 = vmatpush.xpose.msra.mxu0 0.0
    %1988 = vmatpush.xpose.msra.mxu0 0.0
    %1989 = vmatpush.xpose.msra.mxu0 0.0
    %1990 = vmatpush.xpose.msra.mxu0 0.0
    %1991 = vmatpush.xpose.msra.mxu0 0.0
    %1992 = vmatpush.xpose.msra.mxu0 0.0
    %1993 = vmatpush.xpose.msra.mxu0 0.0
    %1994 = vmatpush.xpose.msra.mxu0 0.0
    %1995 = vmatpush.xpose.msra.mxu0 0.0
    %1996 = vmatpush.xpose.msra.mxu0 0.0
    %1997 = vmatpush.xpose.msra.mxu0 0.0
    %1998 = vmatpush.xpose.msra.mxu0 %v1981
    %1999 = vmatmul.f32.gmra.mxu0 %v1979
    %v2000 = vpop.f32.mrf.mxu0
    %v2001 = vadd.f32 0.0, %v2000
    %2002 = vdwg.mxu0
    %2003 = vst [vmem:[#allocation1] ss:$9 sm:$0xff] %v1816
    %s2004 = scalar_lea.vmem [#allocation1], 1
    %2005 = vst [vmem:[%s2004] ss:$9 sm:$0xff] %v1818
    %s2006 = scalar_lea.vmem [#allocation1], 2
    %2007 = vst [vmem:[%s2006] ss:$9 sm:$0xff] %v1820
    %s2008 = scalar_lea.vmem [#allocation1], 3
    %2009 = vst [vmem:[%s2008] ss:$9 sm:$0xff] %v1822
    %s2010 = scalar_lea.vmem [#allocation1], 4
    %2011 = vst [vmem:[%s2010] ss:$9 sm:$0xff] %v1824
    %v2012 = vld [vmem:[#allocation1] sm:$0xff]
    %2013 = vst [vmem:[#allocation1] ss:$9 sm:$0xff] %v1816
    %s2014 = scalar_lea.vmem [#allocation1], 1
    %2015 = vst [vmem:[%s2014] ss:$9 sm:$0xff] %v1818
    %s2016 = scalar_lea.vmem [#allocation1], 2
    %2017 = vst [vmem:[%s2016] ss:$9 sm:$0xff] %v1820
    %s2018 = scalar_lea.vmem [#allocation1], 3
    %2019 = vst [vmem:[%s2018] ss:$9 sm:$0xff] %v1822
    %s2020 = scalar_lea.vmem [#allocation1], 4
    %2021 = vst [vmem:[%s2020] ss:$9 sm:$0xff] %v1824
    %v2022 = vld [vmem:[#allocation1] sm:$0xff]
    %2023 = vrot.lane.b32.xlu0 %v2022, 96
    %v2024 = vpop.permute.xlu0 %2023
    %v2025 = vsel %vm195, %v2012, 0
    %v2027 = vsel %vm195, %v2024, 0
    %2029 = vmatpush.xpose.msra.mxu0 0.0
    %2030 = vmatpush.xpose.msra.mxu0 0.0
    %2031 = vmatpush.xpose.msra.mxu0 0.0
    %2032 = vmatpush.xpose.msra.mxu0 0.0
    %2033 = vmatpush.xpose.msra.mxu0 0.0
    %2034 = vmatpush.xpose.msra.mxu0 0.0
    %2035 = vmatpush.xpose.msra.mxu0 0.0
    %2036 = vmatpush.xpose.msra.mxu0 0.0
    %2037 = vmatpush.xpose.msra.mxu0 0.0
    %2038 = vmatpush.xpose.msra.mxu0 0.0
    %2039 = vmatpush.xpose.msra.mxu0 0.0
    %2040 = vmatpush.xpose.msra.mxu0 0.0
    %2041 = vmatpush.xpose.msra.mxu0 0.0
    %2042 = vmatpush.xpose.msra.mxu0 0.0
    %2043 = vmatpush.xpose.msra.mxu0 0.0
    %2044 = vmatpush.xpose.msra.mxu0 %v2027
    %2045 = vmatmul.f32.gmra.mxu0 %v2025
    %v2046 = vpop.f32.mrf.mxu0
    %v2047 = vadd.f32 0.0, %v2046
    %2048 = vdwg.mxu0
    %2049 = vst [vmem:[#allocation1] ss:$9 sm:$0xff] %v1826
    %s2050 = scalar_lea.vmem [#allocation1], 1
    %2051 = vst [vmem:[%s2050] ss:$9 sm:$0xff] %v1828
    %s2052 = scalar_lea.vmem [#allocation1], 2
    %2053 = vst [vmem:[%s2052] ss:$9 sm:$0xff] %v1830
    %s2054 = scalar_lea.vmem [#allocation1], 3
    %2055 = vst [vmem:[%s2054] ss:$9 sm:$0xff] %v1832
    %s2056 = scalar_lea.vmem [#allocation1], 4
    %2057 = vst [vmem:[%s2056] ss:$9 sm:$0xff] %v1834
    %v2058 = vld [vmem:[#allocation1] sm:$0xff]
    %2059 = vst [vmem:[#allocation1] ss:$9 sm:$0xff] %v1826
    %s2060 = scalar_lea.vmem [#allocation1], 1
    %2061 = vst [vmem:[%s2060] ss:$9 sm:$0xff] %v1828
    %s2062 = scalar_lea.vmem [#allocation1], 2
    %2063 = vst [vmem:[%s2062] ss:$9 sm:$0xff] %v1830
    %s2064 = scalar_lea.vmem [#allocation1], 3
    %2065 = vst [vmem:[%s2064] ss:$9 sm:$0xff] %v1832
    %s2066 = scalar_lea.vmem [#allocation1], 4
    %2067 = vst [vmem:[%s2066] ss:$9 sm:$0xff] %v1834
    %v2068 = vld [vmem:[#allocation1] sm:$0xff]
    %2069 = vrot.lane.b32.xlu0 %v2068, 96
    %v2070 = vpop.permute.xlu0 %2069
    %v2071 = vsel %vm195, %v2058, 0
    %v2073 = vsel %vm195, %v2070, 0
    %2075 = vmatpush.xpose.msra.mxu0 0.0
    %2076 = vmatpush.xpose.msra.mxu0 0.0
    %2077 = vmatpush.xpose.msra.mxu0 0.0
    %2078 = vmatpush.xpose.msra.mxu0 0.0
    %2079 = vmatpush.xpose.msra.mxu0 0.0
    %2080 = vmatpush.xpose.msra.mxu0 0.0
    %2081 = vmatpush.xpose.msra.mxu0 0.0
    %2082 = vmatpush.xpose.msra.mxu0 0.0
    %2083 = vmatpush.xpose.msra.mxu0 0.0
    %2084 = vmatpush.xpose.msra.mxu0 0.0
    %2085 = vmatpush.xpose.msra.mxu0 0.0
    %2086 = vmatpush.xpose.msra.mxu0 0.0
    %2087 = vmatpush.xpose.msra.mxu0 0.0
    %2088 = vmatpush.xpose.msra.mxu0 0.0
    %2089 = vmatpush.xpose.msra.mxu0 0.0
    %2090 = vmatpush.xpose.msra.mxu0 %v2073
    %2091 = vmatmul.f32.gmra.mxu0 %v2071
    %v2092 = vpop.f32.mrf.mxu0
    %v2093 = vadd.f32 0.0, %v2092
    %2094 = vdwg.mxu0
    %2095 = vst [vmem:[#allocation1] ss:$9 sm:$0xff] %v1836
    %s2096 = scalar_lea.vmem [#allocation1], 1
    %2097 = vst [vmem:[%s2096] ss:$9 sm:$0xff] %v1838
    %s2098 = scalar_lea.vmem [#allocation1], 2
    %2099 = vst [vmem:[%s2098] ss:$9 sm:$0xff] %v1840
    %s2100 = scalar_lea.vmem [#allocation1], 3
    %2101 = vst [vmem:[%s2100] ss:$9 sm:$0xff] %v1842
    %s2102 = scalar_lea.vmem [#allocation1], 4
    %2103 = vst [vmem:[%s2102] ss:$9 sm:$0xff] %v1844
    %v2104 = vld [vmem:[#allocation1] sm:$0xff]
    %2105 = vst [vmem:[#allocation1] ss:$9 sm:$0xff] %v1836
    %s2106 = scalar_lea.vmem [#allocation1], 1
    %2107 = vst [vmem:[%s2106] ss:$9 sm:$0xff] %v1838
    %s2108 = scalar_lea.vmem [#allocation1], 2
    %2109 = vst [vmem:[%s2108] ss:$9 sm:$0xff] %v1840
    %s2110 = scalar_lea.vmem [#allocation1], 3
    %2111 = vst [vmem:[%s2110] ss:$9 sm:$0xff] %v1842
    %s2112 = scalar_lea.vmem [#allocation1], 4
    %2113 = vst [vmem:[%s2112] ss:$9 sm:$0xff] %v1844
    %v2114 = vld [vmem:[#allocation1] sm:$0xff]
    %2115 = vrot.lane.b32.xlu0 %v2114, 96
    %v2116 = vpop.permute.xlu0 %2115
    %v2117 = vsel %vm195, %v2104, 0
    %v2119 = vsel %vm195, %v2116, 0
    %2121 = vmatpush.xpose.msra.mxu0 0.0
    %2122 = vmatpush.xpose.msra.mxu0 0.0
    %2123 = vmatpush.xpose.msra.mxu0 0.0
    %2124 = vmatpush.xpose.msra.mxu0 0.0
    %2125 = vmatpush.xpose.msra.mxu0 0.0
    %2126 = vmatpush.xpose.msra.mxu0 0.0
    %2127 = vmatpush.xpose.msra.mxu0 0.0
    %2128 = vmatpush.xpose.msra.mxu0 0.0
    %2129 = vmatpush.xpose.msra.mxu0 0.0
    %2130 = vmatpush.xpose.msra.mxu0 0.0
    %2131 = vmatpush.xpose.msra.mxu0 0.0
    %2132 = vmatpush.xpose.msra.mxu0 0.0
    %2133 = vmatpush.xpose.msra.mxu0 0.0
    %2134 = vmatpush.xpose.msra.mxu0 0.0
    %2135 = vmatpush.xpose.msra.mxu0 0.0
    %2136 = vmatpush.xpose.msra.mxu0 %v2119
    %2137 = vmatmul.f32.gmra.mxu0 %v2117
    %v2138 = vpop.f32.mrf.mxu0
    %v2139 = vadd.f32 0.0, %v2138
    %2140 = vdwg.mxu0
    %2141 = vst [vmem:[#allocation1] ss:$9 sm:$0xff] %v1846
    %s2142 = scalar_lea.vmem [#allocation1], 1
    %2143 = vst [vmem:[%s2142] ss:$9 sm:$0xff] %v1848
    %s2144 = scalar_lea.vmem [#allocation1], 2
    %2145 = vst [vmem:[%s2144] ss:$9 sm:$0xff] %v1850
    %s2146 = scalar_lea.vmem [#allocation1], 3
    %2147 = vst [vmem:[%s2146] ss:$9 sm:$0xff] %v1852
    %s2148 = scalar_lea.vmem [#allocation1], 4
    %2149 = vst [vmem:[%s2148] ss:$9 sm:$0xff] %v1854
    %v2150 = vld [vmem:[#allocation1] sm:$0xff]
    %2151 = vst [vmem:[#allocation1] ss:$9 sm:$0xff] %v1846
    %s2152 = scalar_lea.vmem [#allocation1], 1
    %2153 = vst [vmem:[%s2152] ss:$9 sm:$0xff] %v1848
    %s2154 = scalar_lea.vmem [#allocation1], 2
    %2155 = vst [vmem:[%s2154] ss:$9 sm:$0xff] %v1850
    %s2156 = scalar_lea.vmem [#allocation1], 3
    %2157 = vst [vmem:[%s2156] ss:$9 sm:$0xff] %v1852
    %s2158 = scalar_lea.vmem [#allocation1], 4
    %2159 = vst [vmem:[%s2158] ss:$9 sm:$0xff] %v1854
    %v2160 = vld [vmem:[#allocation1] sm:$0xff]
    %2161 = vrot.lane.b32.xlu0 %v2160, 96
    %v2162 = vpop.permute.xlu0 %2161
    %v2163 = vsel %vm195, %v2150, 0
    %v2165 = vsel %vm195, %v2162, 0
    %2167 = vmatpush.xpose.msra.mxu0 0.0
    %2168 = vmatpush.xpose.msra.mxu0 0.0
    %2169 = vmatpush.xpose.msra.mxu0 0.0
    %2170 = vmatpush.xpose.msra.mxu0 0.0
    %2171 = vmatpush.xpose.msra.mxu0 0.0
    %2172 = vmatpush.xpose.msra.mxu0 0.0
    %2173 = vmatpush.xpose.msra.mxu0 0.0
    %2174 = vmatpush.xpose.msra.mxu0 0.0
    %2175 = vmatpush.xpose.msra.mxu0 0.0
    %2176 = vmatpush.xpose.msra.mxu0 0.0
    %2177 = vmatpush.xpose.msra.mxu0 0.0
    %2178 = vmatpush.xpose.msra.mxu0 0.0
    %2179 = vmatpush.xpose.msra.mxu0 0.0
    %2180 = vmatpush.xpose.msra.mxu0 0.0
    %2181 = vmatpush.xpose.msra.mxu0 0.0
    %2182 = vmatpush.xpose.msra.mxu0 %v2165
    %2183 = vmatmul.f32.gmra.mxu0 %v2163
    %v2184 = vpop.f32.mrf.mxu0
    %v2185 = vadd.f32 0.0, %v2184
    %2186 = vdwg.mxu0
    %2187 = vst [vmem:[#allocation1] ss:$9 sm:$0xff] %v1856
    %s2188 = scalar_lea.vmem [#allocation1], 1
    %2189 = vst [vmem:[%s2188] ss:$9 sm:$0xff] %v1858
    %s2190 = scalar_lea.vmem [#allocation1], 2
    %2191 = vst [vmem:[%s2190] ss:$9 sm:$0xff] %v1860
    %s2192 = scalar_lea.vmem [#allocation1], 3
    %2193 = vst [vmem:[%s2192] ss:$9 sm:$0xff] %v1862
    %s2194 = scalar_lea.vmem [#allocation1], 4
    %2195 = vst [vmem:[%s2194] ss:$9 sm:$0xff] %v1864
    %v2196 = vld [vmem:[#allocation1] sm:$0xff]
    %2197 = vst [vmem:[#allocation1] ss:$9 sm:$0xff] %v1856
    %s2198 = scalar_lea.vmem [#allocation1], 1
    %2199 = vst [vmem:[%s2198] ss:$9 sm:$0xff] %v1858
    %s2200 = scalar_lea.vmem [#allocation1], 2
    %2201 = vst [vmem:[%s2200] ss:$9 sm:$0xff] %v1860
    %s2202 = scalar_lea.vmem [#allocation1], 3
    %2203 = vst [vmem:[%s2202] ss:$9 sm:$0xff] %v1862
    %s2204 = scalar_lea.vmem [#allocation1], 4
    %2205 = vst [vmem:[%s2204] ss:$9 sm:$0xff] %v1864
    %v2206 = vld [vmem:[#allocation1] sm:$0xff]
    %2207 = vrot.lane.b32.xlu0 %v2206, 96
    %v2208 = vpop.permute.xlu0 %2207
    %v2209 = vsel %vm195, %v2196, 0
    %v2211 = vsel %vm195, %v2208, 0
    %2213 = vmatpush.xpose.msra.mxu0 0.0
    %2214 = vmatpush.xpose.msra.mxu0 0.0
    %2215 = vmatpush.xpose.msra.mxu0 0.0
    %2216 = vmatpush.xpose.msra.mxu0 0.0
    %2217 = vmatpush.xpose.msra.mxu0 0.0
    %2218 = vmatpush.xpose.msra.mxu0 0.0
    %2219 = vmatpush.xpose.msra.mxu0 0.0
    %2220 = vmatpush.xpose.msra.mxu0 0.0
    %2221 = vmatpush.xpose.msra.mxu0 0.0
    %2222 = vmatpush.xpose.msra.mxu0 0.0
    %2223 = vmatpush.xpose.msra.mxu0 0.0
    %2224 = vmatpush.xpose.msra.mxu0 0.0
    %2225 = vmatpush.xpose.msra.mxu0 0.0
    %2226 = vmatpush.xpose.msra.mxu0 0.0
    %2227 = vmatpush.xpose.msra.mxu0 0.0
    %2228 = vmatpush.xpose.msra.mxu0 %v2211
    %2229 = vmatmul.f32.gmra.mxu0 %v2209
    %v2230 = vpop.f32.mrf.mxu0
    %v2231 = vadd.f32 0.0, %v2230
    %2232 = vdwg.mxu0
    %v2233 = vmul.f32 %v1909, 0.35355338
    %v2234 = vmul.f32 %v1955, 0.35355338
    %v2235 = vmul.f32 %v2001, 0.35355338
    %v2236 = vmul.f32 %v2047, 0.35355338
    %v2237 = vmul.f32 %v2093, 0.35355338
    %v2238 = vmul.f32 %v2139, 0.35355338
    %v2239 = vmul.f32 %v2185, 0.35355338
    %v2240 = vmul.f32 %v2231, 0.35355338
    %v2241 = vsel %vm550, %v2233, -inf
    %2242 = vmax.xlane.f32.xlu0 %v2241
    %v2243 = vpop.xlane.xlu0 %2242
    %v2244 = vsel %vm550, %v2234, -inf
    %2245 = vmax.xlane.f32.xlu0 %v2244
    %v2246 = vpop.xlane.xlu0 %2245
    %v2247 = vsel %vm550, %v2235, -inf
    %2248 = vmax.xlane.f32.xlu0 %v2247
    %v2249 = vpop.xlane.xlu0 %2248
    %v2250 = vsel %vm550, %v2236, -inf
    %2251 = vmax.xlane.f32.xlu0 %v2250
    %v2252 = vpop.xlane.xlu0 %2251
    %v2253 = vsel %vm550, %v2237, -inf
    %2254 = vmax.xlane.f32.xlu0 %v2253
    %v2255 = vpop.xlane.xlu0 %2254
    %v2256 = vsel %vm550, %v2238, -inf
    %2257 = vmax.xlane.f32.xlu0 %v2256
    %v2258 = vpop.xlane.xlu0 %2257
    %v2259 = vsel %vm550, %v2239, -inf
    %2260 = vmax.xlane.f32.xlu0 %v2259
    %v2261 = vpop.xlane.xlu0 %2260
    %v2262 = vsel %vm550, %v2240, -inf
    %2263 = vmax.xlane.f32.xlu0 %v2262
    %v2264 = vpop.xlane.xlu0 %2263
    %v2265 = vsub.f32 %v2233, %v2243
    %v2266 = vsub.f32 %v2234, %v2246
    %v2267 = vsub.f32 %v2235, %v2249
    %v2268 = vsub.f32 %v2236, %v2252
    %v2269 = vsub.f32 %v2237, %v2255
    %v2270 = vsub.f32 %v2238, %v2258
    %v2271 = vsub.f32 %v2239, %v2261
    %v2272 = vsub.f32 %v2240, %v2264
    %v2273 = vmul.f32 %v2265, 1.442695
    %v2274 = vpow.pop %v2273
    %v2275 = vmul.f32 %v2266, 1.442695
    %v2276 = vpow.pop %v2275
    %v2277 = vmul.f32 %v2267, 1.442695
    %v2278 = vpow.pop %v2277
    %v2279 = vmul.f32 %v2268, 1.442695
    %v2280 = vpow.pop %v2279
    %v2281 = vmul.f32 %v2269, 1.442695
    %v2282 = vpow.pop %v2281
    %v2283 = vmul.f32 %v2270, 1.442695
    %v2284 = vpow.pop %v2283
    %v2285 = vmul.f32 %v2271, 1.442695
    %v2286 = vpow.pop %v2285
    %v2287 = vmul.f32 %v2272, 1.442695
    %v2288 = vpow.pop %v2287
    %v2289 = vsel %vm550, %v2274, 0.0
    %2290 = vadd.xlane.f32.xlu0 %v2289
    %v2291 = vpop.xlane.xlu0 %2290
    %v2292 = vsel %vm550, %v2276, 0.0
    %2293 = vadd.xlane.f32.xlu0 %v2292
    %v2294 = vpop.xlane.xlu0 %2293
    %v2295 = vsel %vm550, %v2278, 0.0
    %2296 = vadd.xlane.f32.xlu0 %v2295
    %v2297 = vpop.xlane.xlu0 %2296
    %v2298 = vsel %vm550, %v2280, 0.0
    %2299 = vadd.xlane.f32.xlu0 %v2298
    %v2300 = vpop.xlane.xlu0 %2299
    %v2301 = vsel %vm550, %v2282, 0.0
    %2302 = vadd.xlane.f32.xlu0 %v2301
    %v2303 = vpop.xlane.xlu0 %2302
    %v2304 = vsel %vm550, %v2284, 0.0
    %2305 = vadd.xlane.f32.xlu0 %v2304
    %v2306 = vpop.xlane.xlu0 %2305
    %v2307 = vsel %vm550, %v2286, 0.0
    %2308 = vadd.xlane.f32.xlu0 %v2307
    %v2309 = vpop.xlane.xlu0 %2308
    %v2310 = vsel %vm550, %v2288, 0.0
    %2311 = vadd.xlane.f32.xlu0 %v2310
    %v2312 = vpop.xlane.xlu0 %2311
    %2313 = vst [vmem:[#allocation1] ss:$9 sm:$0xff] %v1790
    %s2314 = scalar_lea.vmem [#allocation1], 1
    %2315 = vst [vmem:[%s2314] ss:$9 sm:$0xff] %v1797
    %s2316 = scalar_lea.vmem [#allocation1], 2
    %2317 = vst [vmem:[%s2316] ss:$9 sm:$0xff] %v1798
    %s2318 = scalar_lea.vmem [#allocation1], 3
    %2319 = vst [vmem:[%s2318] ss:$9 sm:$0xff] %v1799
    %s2320 = scalar_lea.vmem [#allocation1], 4
    %2321 = vst [vmem:[%s2320] ss:$9 sm:$0xff] %v1800
    %v2322 = vld [vmem:[#allocation1] sm:$0xff]
    %2323 = vrot.lane.b32.xlu0 %v2322, 64
    %v2324 = vpop.permute.xlu0 %2323
    %v2326 = vsel %vm635, %v2274, 0
    %v2328 = vsel %vm639, %v2324, 0
    %2330 = vmatpush.msra.mxu0 0.0
    %2331 = vmatpush.msra.mxu0 0.0
    %2332 = vmatpush.msra.mxu0 0.0
    %2333 = vmatpush.msra.mxu0 0.0
    %2334 = vmatpush.msra.mxu0 0.0
    %2335 = vmatpush.msra.mxu0 0.0
    %2336 = vmatpush.msra.mxu0 0.0
    %2337 = vmatpush.msra.mxu0 0.0
    %2338 = vmatpush.msra.mxu0 0.0
    %2339 = vmatpush.msra.mxu0 0.0
    %2340 = vmatpush.msra.mxu0 0.0
    %2341 = vmatpush.msra.mxu0 0.0
    %2342 = vmatpush.msra.mxu0 0.0
    %2343 = vmatpush.msra.mxu0 0.0
    %2344 = vmatpush.msra.mxu0 0.0
    %2345 = vmatpush.msra.mxu0 %v2328
    %2346 = vmatmul.f32.gmra.mxu0 %v2326
    %v2347 = vpop.f32.mrf.mxu0
    %v2348 = vadd.f32 0.0, %v2347
    %2349 = vdwg.mxu0
    %2350 = vst [vmem:[#allocation1] ss:$9 sm:$0xff] %v1801
    %s2351 = scalar_lea.vmem [#allocation1], 1
    %2352 = vst [vmem:[%s2351] ss:$9 sm:$0xff] %v1802
    %s2353 = scalar_lea.vmem [#allocation1], 2
    %2354 = vst [vmem:[%s2353] ss:$9 sm:$0xff] %v1803
    %s2355 = scalar_lea.vmem [#allocation1], 3
    %2356 = vst [vmem:[%s2355] ss:$9 sm:$0xff] %v1793
    %s2357 = scalar_lea.vmem [#allocation1], 4
    %2358 = vst [vmem:[%s2357] ss:$9 sm:$0xff] %v1804
    %v2359 = vld [vmem:[#allocation1] sm:$0xff]
    %2360 = vrot.lane.b32.xlu0 %v2359, 64
    %v2361 = vpop.permute.xlu0 %2360
    %v2363 = vsel %vm635, %v2276, 0
    %v2365 = vsel %vm639, %v2361, 0
    %2367 = vmatpush.msra.mxu0 0.0
    %2368 = vmatpush.msra.mxu0 0.0
    %2369 = vmatpush.msra.mxu0 0.0
    %2370 = vmatpush.msra.mxu0 0.0
    %2371 = vmatpush.msra.mxu0 0.0
    %2372 = vmatpush.msra.mxu0 0.0
    %2373 = vmatpush.msra.mxu0 0.0
    %2374 = vmatpush.msra.mxu0 0.0
    %2375 = vmatpush.msra.mxu0 0.0
    %2376 = vmatpush.msra.mxu0 0.0
    %2377 = vmatpush.msra.mxu0 0.0
    %2378 = vmatpush.msra.mxu0 0.0
    %2379 = vmatpush.msra.mxu0 0.0
    %2380 = vmatpush.msra.mxu0 0.0
    %2381 = vmatpush.msra.mxu0 0.0
    %2382 = vmatpush.msra.mxu0 %v2365
    %2383 = vmatmul.f32.gmra.mxu0 %v2363
    %v2384 = vpop.f32.mrf.mxu0
    %v2385 = vadd.f32 0.0, %v2384
    %2386 = vdwg.mxu0
    %2387 = vst [vmem:[#allocation1] ss:$9 sm:$0xff] %v1806
    %s2388 = scalar_lea.vmem [#allocation1], 1
    %2389 = vst [vmem:[%s2388] ss:$9 sm:$0xff] %v1808
    %s2390 = scalar_lea.vmem [#allocation1], 2
    %2391 = vst [vmem:[%s2390] ss:$9 sm:$0xff] %v1810
    %s2392 = scalar_lea.vmem [#allocation1], 3
    %2393 = vst [vmem:[%s2392] ss:$9 sm:$0xff] %v1812
    %s2394 = scalar_lea.vmem [#allocation1], 4
    %2395 = vst [vmem:[%s2394] ss:$9 sm:$0xff] %v1814
    %v2396 = vld [vmem:[#allocation1] sm:$0xff]
    %2397 = vrot.lane.b32.xlu0 %v2396, 64
    %v2398 = vpop.permute.xlu0 %2397
    %v2400 = vsel %vm635, %v2278, 0
    %v2402 = vsel %vm639, %v2398, 0
    %2404 = vmatpush.msra.mxu0 0.0
    %2405 = vmatpush.msra.mxu0 0.0
    %2406 = vmatpush.msra.mxu0 0.0
    %2407 = vmatpush.msra.mxu0 0.0
    %2408 = vmatpush.msra.mxu0 0.0
    %2409 = vmatpush.msra.mxu0 0.0
    %2410 = vmatpush.msra.mxu0 0.0
    %2411 = vmatpush.msra.mxu0 0.0
    %2412 = vmatpush.msra.mxu0 0.0
    %2413 = vmatpush.msra.mxu0 0.0
    %2414 = vmatpush.msra.mxu0 0.0
    %2415 = vmatpush.msra.mxu0 0.0
    %2416 = vmatpush.msra.mxu0 0.0
    %2417 = vmatpush.msra.mxu0 0.0
    %2418 = vmatpush.msra.mxu0 0.0
    %2419 = vmatpush.msra.mxu0 %v2402
    %2420 = vmatmul.f32.gmra.mxu0 %v2400
    %v2421 = vpop.f32.mrf.mxu0
    %v2422 = vadd.f32 0.0, %v2421
    %2423 = vdwg.mxu0
    %2424 = vst [vmem:[#allocation1] ss:$9 sm:$0xff] %v1816
    %s2425 = scalar_lea.vmem [#allocation1], 1
    %2426 = vst [vmem:[%s2425] ss:$9 sm:$0xff] %v1818
    %s2427 = scalar_lea.vmem [#allocation1], 2
    %2428 = vst [vmem:[%s2427] ss:$9 sm:$0xff] %v1820
    %s2429 = scalar_lea.vmem [#allocation1], 3
    %2430 = vst [vmem:[%s2429] ss:$9 sm:$0xff] %v1822
    %s2431 = scalar_lea.vmem [#allocation1], 4
    %2432 = vst [vmem:[%s2431] ss:$9 sm:$0xff] %v1824
    %v2433 = vld [vmem:[#allocation1] sm:$0xff]
    %2434 = vrot.lane.b32.xlu0 %v2433, 64
    %v2435 = vpop.permute.xlu0 %2434
    %v2437 = vsel %vm635, %v2280, 0
    %v2439 = vsel %vm639, %v2435, 0
    %2441 = vmatpush.msra.mxu0 0.0
    %2442 = vmatpush.msra.mxu0 0.0
    %2443 = vmatpush.msra.mxu0 0.0
    %2444 = vmatpush.msra.mxu0 0.0
    %2445 = vmatpush.msra.mxu0 0.0
    %2446 = vmatpush.msra.mxu0 0.0
    %2447 = vmatpush.msra.mxu0 0.0
    %2448 = vmatpush.msra.mxu0 0.0
    %2449 = vmatpush.msra.mxu0 0.0
    %2450 = vmatpush.msra.mxu0 0.0
    %2451 = vmatpush.msra.mxu0 0.0
    %2452 = vmatpush.msra.mxu0 0.0
    %2453 = vmatpush.msra.mxu0 0.0
    %2454 = vmatpush.msra.mxu0 0.0
    %2455 = vmatpush.msra.mxu0 0.0
    %2456 = vmatpush.msra.mxu0 %v2439
    %2457 = vmatmul.f32.gmra.mxu0 %v2437
    %v2458 = vpop.f32.mrf.mxu0
    %v2459 = vadd.f32 0.0, %v2458
    %2460 = vdwg.mxu0
    %2461 = vst [vmem:[#allocation1] ss:$9 sm:$0xff] %v1826
    %s2462 = scalar_lea.vmem [#allocation1], 1
    %2463 = vst [vmem:[%s2462] ss:$9 sm:$0xff] %v1828
    %s2464 = scalar_lea.vmem [#allocation1], 2
    %2465 = vst [vmem:[%s2464] ss:$9 sm:$0xff] %v1830
    %s2466 = scalar_lea.vmem [#allocation1], 3
    %2467 = vst [vmem:[%s2466] ss:$9 sm:$0xff] %v1832
    %s2468 = scalar_lea.vmem [#allocation1], 4
    %2469 = vst [vmem:[%s2468] ss:$9 sm:$0xff] %v1834
    %v2470 = vld [vmem:[#allocation1] sm:$0xff]
    %2471 = vrot.lane.b32.xlu0 %v2470, 64
    %v2472 = vpop.permute.xlu0 %2471
    %v2474 = vsel %vm635, %v2282, 0
    %v2476 = vsel %vm639, %v2472, 0
    %2478 = vmatpush.msra.mxu0 0.0
    %2479 = vmatpush.msra.mxu0 0.0
    %2480 = vmatpush.msra.mxu0 0.0
    %2481 = vmatpush.msra.mxu0 0.0
    %2482 = vmatpush.msra.mxu0 0.0
    %2483 = vmatpush.msra.mxu0 0.0
    %2484 = vmatpush.msra.mxu0 0.0
    %2485 = vmatpush.msra.mxu0 0.0
    %2486 = vmatpush.msra.mxu0 0.0
    %2487 = vmatpush.msra.mxu0 0.0
    %2488 = vmatpush.msra.mxu0 0.0
    %2489 = vmatpush.msra.mxu0 0.0
    %2490 = vmatpush.msra.mxu0 0.0
    %2491 = vmatpush.msra.mxu0 0.0
    %2492 = vmatpush.msra.mxu0 0.0
    %2493 = vmatpush.msra.mxu0 %v2476
    %2494 = vmatmul.f32.gmra.mxu0 %v2474
    %v2495 = vpop.f32.mrf.mxu0
    %v2496 = vadd.f32 0.0, %v2495
    %2497 = vdwg.mxu0
    %2498 = vst [vmem:[#allocation1] ss:$9 sm:$0xff] %v1836
    %s2499 = scalar_lea.vmem [#allocation1], 1
    %2500 = vst [vmem:[%s2499] ss:$9 sm:$0xff] %v1838
    %s2501 = scalar_lea.vmem [#allocation1], 2
    %2502 = vst [vmem:[%s2501] ss:$9 sm:$0xff] %v1840
    %s2503 = scalar_lea.vmem [#allocation1], 3
    %2504 = vst [vmem:[%s2503] ss:$9 sm:$0xff] %v1842
    %s2505 = scalar_lea.vmem [#allocation1], 4
    %2506 = vst [vmem:[%s2505] ss:$9 sm:$0xff] %v1844
    %v2507 = vld [vmem:[#allocation1] sm:$0xff]
    %2508 = vrot.lane.b32.xlu0 %v2507, 64
    %v2509 = vpop.permute.xlu0 %2508
    %v2511 = vsel %vm635, %v2284, 0
    %v2513 = vsel %vm639, %v2509, 0
    %2515 = vmatpush.msra.mxu0 0.0
    %2516 = vmatpush.msra.mxu0 0.0
    %2517 = vmatpush.msra.mxu0 0.0
    %2518 = vmatpush.msra.mxu0 0.0
    %2519 = vmatpush.msra.mxu0 0.0
    %2520 = vmatpush.msra.mxu0 0.0
    %2521 = vmatpush.msra.mxu0 0.0
    %2522 = vmatpush.msra.mxu0 0.0
    %2523 = vmatpush.msra.mxu0 0.0
    %2524 = vmatpush.msra.mxu0 0.0
    %2525 = vmatpush.msra.mxu0 0.0
    %2526 = vmatpush.msra.mxu0 0.0
    %2527 = vmatpush.msra.mxu0 0.0
    %2528 = vmatpush.msra.mxu0 0.0
    %2529 = vmatpush.msra.mxu0 0.0
    %2530 = vmatpush.msra.mxu0 %v2513
    %2531 = vmatmul.f32.gmra.mxu0 %v2511
    %v2532 = vpop.f32.mrf.mxu0
    %v2533 = vadd.f32 0.0, %v2532
    %2534 = vdwg.mxu0
    %2535 = vst [vmem:[#allocation1] ss:$9 sm:$0xff] %v1846
    %s2536 = scalar_lea.vmem [#allocation1], 1
    %2537 = vst [vmem:[%s2536] ss:$9 sm:$0xff] %v1848
    %s2538 = scalar_lea.vmem [#allocation1], 2
    %2539 = vst [vmem:[%s2538] ss:$9 sm:$0xff] %v1850
    %s2540 = scalar_lea.vmem [#allocation1], 3
    %2541 = vst [vmem:[%s2540] ss:$9 sm:$0xff] %v1852
    %s2542 = scalar_lea.vmem [#allocation1], 4
    %2543 = vst [vmem:[%s2542] ss:$9 sm:$0xff] %v1854
    %v2544 = vld [vmem:[#allocation1] sm:$0xff]
    %2545 = vrot.lane.b32.xlu0 %v2544, 64
    %v2546 = vpop.permute.xlu0 %2545
    %v2548 = vsel %vm635, %v2286, 0
    %v2550 = vsel %vm639, %v2546, 0
    %2552 = vmatpush.msra.mxu0 0.0
    %2553 = vmatpush.msra.mxu0 0.0
    %2554 = vmatpush.msra.mxu0 0.0
    %2555 = vmatpush.msra.mxu0 0.0
    %2556 = vmatpush.msra.mxu0 0.0
    %2557 = vmatpush.msra.mxu0 0.0
    %2558 = vmatpush.msra.mxu0 0.0
    %2559 = vmatpush.msra.mxu0 0.0
    %2560 = vmatpush.msra.mxu0 0.0
    %2561 = vmatpush.msra.mxu0 0.0
    %2562 = vmatpush.msra.mxu0 0.0
    %2563 = vmatpush.msra.mxu0 0.0
    %2564 = vmatpush.msra.mxu0 0.0
    %2565 = vmatpush.msra.mxu0 0.0
    %2566 = vmatpush.msra.mxu0 0.0
    %2567 = vmatpush.msra.mxu0 %v2550
    %2568 = vmatmul.f32.gmra.mxu0 %v2548
    %v2569 = vpop.f32.mrf.mxu0
    %v2570 = vadd.f32 0.0, %v2569
    %2571 = vdwg.mxu0
    %2572 = vst [vmem:[#allocation1] ss:$9 sm:$0xff] %v1856
    %s2573 = scalar_lea.vmem [#allocation1], 1
    %2574 = vst [vmem:[%s2573] ss:$9 sm:$0xff] %v1858
    %s2575 = scalar_lea.vmem [#allocation1], 2
    %2576 = vst [vmem:[%s2575] ss:$9 sm:$0xff] %v1860
    %s2577 = scalar_lea.vmem [#allocation1], 3
    %2578 = vst [vmem:[%s2577] ss:$9 sm:$0xff] %v1862
    %s2579 = scalar_lea.vmem [#allocation1], 4
    %2580 = vst [vmem:[%s2579] ss:$9 sm:$0xff] %v1864
    %v2581 = vld [vmem:[#allocation1] sm:$0xff]
    %2582 = vrot.lane.b32.xlu0 %v2581, 64
    %v2583 = vpop.permute.xlu0 %2582
    %v2585 = vsel %vm635, %v2288, 0
    %v2587 = vsel %vm639, %v2583, 0
    %2589 = vmatpush.msra.mxu0 0.0
    %2590 = vmatpush.msra.mxu0 0.0
    %2591 = vmatpush.msra.mxu0 0.0
    %2592 = vmatpush.msra.mxu0 0.0
    %2593 = vmatpush.msra.mxu0 0.0
    %2594 = vmatpush.msra.mxu0 0.0
    %2595 = vmatpush.msra.mxu0 0.0
    %2596 = vmatpush.msra.mxu0 0.0
    %2597 = vmatpush.msra.mxu0 0.0
    %2598 = vmatpush.msra.mxu0 0.0
    %2599 = vmatpush.msra.mxu0 0.0
    %2600 = vmatpush.msra.mxu0 0.0
    %2601 = vmatpush.msra.mxu0 0.0
    %2602 = vmatpush.msra.mxu0 0.0
    %2603 = vmatpush.msra.mxu0 0.0
    %2604 = vmatpush.msra.mxu0 %v2587
    %2605 = vmatmul.f32.gmra.mxu0 %v2585
    %v2606 = vpop.f32.mrf.mxu0
    %v2607 = vadd.f32 0.0, %v2606
    %2608 = vdwg.mxu0
    %v2609 = vrcp.pop %v2291
    %v2610 = vrcp.pop %v2294
    %v2611 = vrcp.pop %v2297
    %v2612 = vrcp.pop %v2300
    %v2613 = vrcp.pop %v2303
    %v2614 = vrcp.pop %v2306
    %v2615 = vrcp.pop %v2309
    %v2616 = vrcp.pop %v2312
    %v2617 = vmul.f32 %v2348, %v2609
    %v2618 = vmul.f32 %v2385, %v2610
    %v2619 = vmul.f32 %v2422, %v2611
    %v2620 = vmul.f32 %v2459, %v2612
    %v2621 = vmul.f32 %v2496, %v2613
    %v2622 = vmul.f32 %v2533, %v2614
    %v2623 = vmul.f32 %v2570, %v2615
    %v2624 = vmul.f32 %v2607, %v2616
    %v2627 = vrot.slane %v2617, 1
    %v2628 = vrot.slane %v2617, 2
    %v2629 = vrot.slane %v2617, 3
    %v2630 = vrot.slane %v2617, 4
    %v2631 = vrot.slane %v2618, 1
    %v2632 = vrot.slane %v2618, 2
    %v2633 = vrot.slane %v2618, 3
    %v2634 = vrot.slane %v2618, 4
    %v2637 = vrot.slane %v2619, 1
    %v2638 = vrot.slane %v2619, 2
    %v2639 = vrot.slane %v2619, 3
    %v2640 = vrot.slane %v2619, 4
    %v2641 = vrot.slane %v2620, 1
    %v2642 = vrot.slane %v2620, 2
    %v2643 = vrot.slane %v2620, 3
    %v2644 = vrot.slane %v2620, 4
    %v2647 = vrot.slane %v2621, 1
    %v2648 = vrot.slane %v2621, 2
    %v2649 = vrot.slane %v2621, 3
    %v2650 = vrot.slane %v2621, 4
    %v2651 = vrot.slane %v2622, 1
    %v2652 = vrot.slane %v2622, 2
    %v2653 = vrot.slane %v2622, 3
    %v2654 = vrot.slane %v2622, 4
    %v2657 = vrot.slane %v2623, 1
    %v2658 = vrot.slane %v2623, 2
    %v2659 = vrot.slane %v2623, 3
    %v2660 = vrot.slane %v2623, 4
    %v2661 = vrot.slane %v2624, 1
    %v2662 = vrot.slane %v2624, 2
    %v2663 = vrot.slane %v2624, 3
    %v2664 = vrot.slane %v2624, 4
    %2665 = vst [vmem:[#allocation1] ss:$9 sm:$0xff] %v2617
    %s2666 = scalar_lea.vmem [#allocation1], 1
    %2667 = vst [vmem:[%s2666] ss:$9 sm:$0xff] %v2627
    %s2668 = scalar_lea.vmem [#allocation1], 2
    %2669 = vst [vmem:[%s2668] ss:$9 sm:$0xff] %v2628
    %s2670 = scalar_lea.vmem [#allocation1], 3
    %2671 = vst [vmem:[%s2670] ss:$9 sm:$0xff] %v2629
    %s2672 = scalar_lea.vmem [#allocation1], 4
    %2673 = vst [vmem:[%s2672] ss:$9 sm:$0xff] %v2630
    %s2674 = scalar_lea.vmem [#allocation1], 5
    %2675 = vst [vmem:[%s2674] ss:$9 sm:$0xff] %v2618
    %s2676 = scalar_lea.vmem [#allocation1], 6
    %2677 = vst [vmem:[%s2676] ss:$9 sm:$0xff] %v2631
    %s2678 = scalar_lea.vmem [#allocation1], 7
    %2679 = vst [vmem:[%s2678] ss:$9 sm:$0xff] %v2632
    %v2680 = vld [vmem:[#allocation1] sm:$0xff]
    %2681 = vst [vmem:[#allocation1] ss:$9 sm:$0xff] %v2633
    %2682 = vst [vmem:[%s2666] ss:$9 sm:$0xff] %v2634
    %v2683 = vld [vmem:[#allocation1] sm:$0xff]
    %2686 = vst [vmem:[#allocation1] ss:$9 sm:$0xff] %v2619
    %s2687 = scalar_lea.vmem [#allocation1], 1
    %2688 = vst [vmem:[%s2687] ss:$9 sm:$0xff] %v2637
    %s2689 = scalar_lea.vmem [#allocation1], 2
    %2690 = vst [vmem:[%s2689] ss:$9 sm:$0xff] %v2638
    %s2691 = scalar_lea.vmem [#allocation1], 3
    %2692 = vst [vmem:[%s2691] ss:$9 sm:$0xff] %v2639
    %s2693 = scalar_lea.vmem [#allocation1], 4
    %2694 = vst [vmem:[%s2693] ss:$9 sm:$0xff] %v2640
    %s2695 = scalar_lea.vmem [#allocation1], 5
    %2696 = vst [vmem:[%s2695] ss:$9 sm:$0xff] %v2620
    %s2697 = scalar_lea.vmem [#allocation1], 6
    %2698 = vst [vmem:[%s2697] ss:$9 sm:$0xff] %v2641
    %s2699 = scalar_lea.vmem [#allocation1], 7
    %2700 = vst [vmem:[%s2699] ss:$9 sm:$0xff] %v2642
    %v2701 = vld [vmem:[#allocation1] sm:$0xff]
    %2702 = vst [vmem:[#allocation1] ss:$9 sm:$0xff] %v2643
    %2703 = vst [vmem:[%s2687] ss:$9 sm:$0xff] %v2644
    %v2704 = vld [vmem:[#allocation1] sm:$0xff]
    %2705 = vrot.lane.b32.xlu0 %v2701, 8
    %v2706 = vpop.permute.xlu0 %2705
    %2707 = vrot.lane.b32.xlu0 %v2704, 8
    %v2708 = vpop.permute.xlu0 %2707
    %2711 = vst [vmem:[#allocation1] ss:$9 sm:$0xff] %v2621
    %s2712 = scalar_lea.vmem [#allocation1], 1
    %2713 = vst [vmem:[%s2712] ss:$9 sm:$0xff] %v2647
    %s2714 = scalar_lea.vmem [#allocation1], 2
    %2715 = vst [vmem:[%s2714] ss:$9 sm:$0xff] %v2648
    %s2716 = scalar_lea.vmem [#allocation1], 3
    %2717 = vst [vmem:[%s2716] ss:$9 sm:$0xff] %v2649
    %s2718 = scalar_lea.vmem [#allocation1], 4
    %2719 = vst [vmem:[%s2718] ss:$9 sm:$0xff] %v2650
    %s2720 = scalar_lea.vmem [#allocation1], 5
    %2721 = vst [vmem:[%s2720] ss:$9 sm:$0xff] %v2622
    %s2722 = scalar_lea.vmem [#allocation1], 6
    %2723 = vst [vmem:[%s2722] ss:$9 sm:$0xff] %v2651
    %s2724 = scalar_lea.vmem [#allocation1], 7
    %2725 = vst [vmem:[%s2724] ss:$9 sm:$0xff] %v2652
    %v2726 = vld [vmem:[#allocation1] sm:$0xff]
    %2727 = vst [vmem:[#allocation1] ss:$9 sm:$0xff] %v2653
    %2728 = vst [vmem:[%s2712] ss:$9 sm:$0xff] %v2654
    %v2729 = vld [vmem:[#allocation1] sm:$0xff]
    %2730 = vrot.lane.b32.xlu0 %v2726, 16
    %v2731 = vpop.permute.xlu0 %2730
    %2732 = vrot.lane.b32.xlu0 %v2729, 16
    %v2733 = vpop.permute.xlu0 %2732
    %2736 = vst [vmem:[#allocation1] ss:$9 sm:$0xff] %v2623
    %s2737 = scalar_lea.vmem [#allocation1], 1
    %2738 = vst [vmem:[%s2737] ss:$9 sm:$0xff] %v2657
    %s2739 = scalar_lea.vmem [#allocation1], 2
    %2740 = vst [vmem:[%s2739] ss:$9 sm:$0xff] %v2658
    %s2741 = scalar_lea.vmem [#allocation1], 3
    %2742 = vst [vmem:[%s2741] ss:$9 sm:$0xff] %v2659
    %s2743 = scalar_lea.vmem [#allocation1], 4
    %2744 = vst [vmem:[%s2743] ss:$9 sm:$0xff] %v2660
    %s2745 = scalar_lea.vmem [#allocation1], 5
    %2746 = vst [vmem:[%s2745] ss:$9 sm:$0xff] %v2624
    %s2747 = scalar_lea.vmem [#allocation1], 6
    %2748 = vst [vmem:[%s2747] ss:$9 sm:$0xff] %v2661
    %s2749 = scalar_lea.vmem [#allocation1], 7
    %2750 = vst [vmem:[%s2749] ss:$9 sm:$0xff] %v2662
    %v2751 = vld [vmem:[#allocation1] sm:$0xff]
    %2752 = vst [vmem:[#allocation1] ss:$9 sm:$0xff] %v2663
    %2753 = vst [vmem:[%s2737] ss:$9 sm:$0xff] %v2664
    %v2754 = vld [vmem:[#allocation1] sm:$0xff]
    %2755 = vrot.lane.b32.xlu0 %v2751, 24
    %v2756 = vpop.permute.xlu0 %2755
    %2757 = vrot.lane.b32.xlu0 %v2754, 24
    %v2758 = vpop.permute.xlu0 %2757
    %v2761 = vsel %vm195, %v2680, %v2706
    %v2762 = vsel %vm195, %v2683, %v2708
    %v2763 = vsel %vm1075, %v2761, %v2731
    %v2764 = vsel %vm1075, %v2762, %v2733
    %v2765 = vsel %vm1078, %v2763, %v2756
    %v2766 = vsel %vm1078, %v2764, %v2758
    %v2767 = vld [vmem:[#allocation2 + $0xc8] sm:$0xff]
    %v2768 = vld [vmem:[#allocation2 + $0xd0] sm:$0xff]
    %v2769 = vld [vmem:[#allocation2 + $0xd8] sm:$0xff]
    %v2770 = vld [vmem:[#allocation2 + $0xe0] sm:$0xff]
    %v2771 = vperm.slane %v1733, 1
    %v2773 = vsel %vm75, %v2765, 0
    %v2776 = vsel %vm75, %v2766, 0
    %2778 = vmatpush.msra.mxu0 0.0
    %2779 = vmatpush.msra.mxu0 0.0
    %2780 = vmatpush.msra.mxu0 0.0
    %2781 = vmatpush.msra.mxu0 0.0
    %2782 = vmatpush.msra.mxu0 0.0
    %2783 = vmatpush.msra.mxu0 0.0
    %2784 = vmatpush.msra.mxu0 0.0
    %2785 = vmatpush.msra.mxu0 0.0
    %2786 = vmatpush.msra.mxu0 0.0
    %2787 = vmatpush.msra.mxu0 0.0
    %2788 = vmatpush.msra.mxu0 0.0
    %2789 = vmatpush.msra.mxu0 0.0
    %2790 = vmatpush.msra.mxu0 %v2770
    %2791 = vmatpush.msra.mxu0 %v2769
    %2792 = vmatpush.msra.mxu0 %v2768
    %2793 = vmatpush.msra.mxu0 %v2767
    %2794 = vmatmul.f32.gmra.mxu0 %v2773
    %v2795 = vpop.f32.mrf.mxu0
    %v2796 = vadd.f32 %v2771, %v2795
    %2797 = vmatmul.f32.gmra.mxu0 %v2776
    %v2798 = vpop.f32.mrf.mxu0
    %v2799 = vadd.f32 %v2771, %v2798
    %2800 = vdwg.mxu0
    %v2803 = vrot.slane %v2796, 1
    %v2804 = vrot.slane %v2796, 2
    %v2805 = vrot.slane %v2796, 3
    %v2806 = vrot.slane %v2796, 4
    %v2807 = vrot.slane %v2796, 5
    %v2808 = vrot.slane %v2796, 6
    %v2809 = vrot.slane %v2796, 7
    %v2810 = vrot.slane %v2799, 1
    %v2819 = vadd.f32 %v1723, %v2796
    %v2820 = vadd.f32 %v1724, %v2803
    %v2821 = vadd.f32 %v1725, %v2804
    %v2822 = vadd.f32 %v1726, %v2805
    %v2823 = vadd.f32 %v1727, %v2806
    %v2824 = vadd.f32 %v1728, %v2807
    %v2825 = vadd.f32 %v1729, %v2808
    %v2826 = vadd.f32 %v1730, %v2809
    %v2827 = vadd.f32 %v1731, %v2799
    %v2828 = vadd.f32 %v1732, %v2810
    %2839 = vst [vmem:[#allocation1] ss:$9 sm:$0xff] %v2819
    %s2840 = scalar_lea.vmem [#allocation1], 1
    %2841 = vst [vmem:[%s2840] ss:$9 sm:$0xff] %v2820
    %s2842 = scalar_lea.vmem [#allocation1], 2
    %2843 = vst [vmem:[%s2842] ss:$9 sm:$0xff] %v2821
    %s2844 = scalar_lea.vmem [#allocation1], 3
    %2845 = vst [vmem:[%s2844] ss:$9 sm:$0xff] %v2822
    %s2846 = scalar_lea.vmem [#allocation1], 4
    %2847 = vst [vmem:[%s2846] ss:$9 sm:$0xff] %v2823
    %s2848 = scalar_lea.vmem [#allocation1], 5
    %2849 = vst [vmem:[%s2848] ss:$9 sm:$0xff] %v2824
    %s2850 = scalar_lea.vmem [#allocation1], 6
    %2851 = vst [vmem:[%s2850] ss:$9 sm:$0xff] %v2825
    %s2852 = scalar_lea.vmem [#allocation1], 7
    %2853 = vst [vmem:[%s2852] ss:$9 sm:$0xff] %v2826
    %v2854 = vld [vmem:[#allocation1] sm:$0xff]
    %2855 = vst [vmem:[#allocation1] ss:$9 sm:$0xff] %v2827
    %2856 = vst [vmem:[%s2840] ss:$9 sm:$0xff] %v2828
    %v2857 = vld [vmem:[#allocation1] sm:$0xff]
    %v2860 = vsel %vm75, %v2854, 0.0
    %2861 = vadd.xlane.f32.xlu0 %v2860
    %v2862 = vpop.xlane.xlu0 %2861
    %v2863 = vsel %vm1177, %v2857, 0.0
    %2864 = vadd.xlane.f32.xlu0 %v2863
    %v2865 = vpop.xlane.xlu0 %2864
    %v2866 = vmul.f32 %v2862, %v1187
    %v2867 = vmul.f32 %v2865, %v1187
    %v2870 = vperm.slane %v2866, 0
    %v2871 = vperm.slane %v2866, 1
    %v2872 = vperm.slane %v2866, 2
    %v2873 = vperm.slane %v2866, 3
    %v2874 = vperm.slane %v2866, 4
    %v2875 = vperm.slane %v2866, 5
    %v2876 = vperm.slane %v2866, 6
    %v2877 = vperm.slane %v2866, 7
    %v2878 = vperm.slane %v2867, 0
    %v2879 = vperm.slane %v2867, 1
    %v2890 = vsub.f32 %v2819, %v2870
    %v2891 = vsub.f32 %v2820, %v2871
    %v2892 = vsub.f32 %v2821, %v2872
    %v2893 = vsub.f32 %v2822, %v2873
    %v2894 = vsub.f32 %v2823, %v2874
    %v2895 = vsub.f32 %v2824, %v2875
    %v2896 = vsub.f32 %v2825, %v2876
    %v2897 = vsub.f32 %v2826, %v2877
    %v2898 = vsub.f32 %v2827, %v2878
    %v2899 = vsub.f32 %v2828, %v2879
    %v2900 = vmul.f32 %v2890, %v2890
    %v2901 = vmul.f32 %v2891, %v2891
    %v2902 = vmul.f32 %v2892, %v2892
    %v2903 = vmul.f32 %v2893, %v2893
    %v2904 = vmul.f32 %v2894, %v2894
    %v2905 = vmul.f32 %v2895, %v2895
    %v2906 = vmul.f32 %v2896, %v2896
    %v2907 = vmul.f32 %v2897, %v2897
    %v2908 = vmul.f32 %v2898, %v2898
    %v2909 = vmul.f32 %v2899, %v2899
    %2920 = vst [vmem:[#allocation1] ss:$9 sm:$0xff] %v2900
    %s2921 = scalar_lea.vmem [#allocation1], 1
    %2922 = vst [vmem:[%s2921] ss:$9 sm:$0xff] %v2901
    %s2923 = scalar_lea.vmem [#allocation1], 2
    %2924 = vst [vmem:[%s2923] ss:$9 sm:$0xff] %v2902
    %s2925 = scalar_lea.vmem [#allocation1], 3
    %2926 = vst [vmem:[%s2925] ss:$9 sm:$0xff] %v2903
    %s2927 = scalar_lea.vmem [#allocation1], 4
    %2928 = vst [vmem:[%s2927] ss:$9 sm:$0xff] %v2904
    %s2929 = scalar_lea.vmem [#allocation1], 5
    %2930 = vst [vmem:[%s2929] ss:$9 sm:$0xff] %v2905
    %s2931 = scalar_lea.vmem [#allocation1], 6
    %2932 = vst [vmem:[%s2931] ss:$9 sm:$0xff] %v2906
    %s2933 = scalar_lea.vmem [#allocation1], 7
    %2934 = vst [vmem:[%s2933] ss:$9 sm:$0xff] %v2907
    %v2935 = vld [vmem:[#allocation1] sm:$0xff]
    %2936 = vst [vmem:[#allocation1] ss:$9 sm:$0xff] %v2908
    %2937 = vst [vmem:[%s2921] ss:$9 sm:$0xff] %v2909
    %v2938 = vld [vmem:[#allocation1] sm:$0xff]
    %v2941 = vsel %vm75, %v2935, 0.0
    %2942 = vadd.xlane.f32.xlu0 %v2941
    %v2943 = vpop.xlane.xlu0 %2942
    %v2944 = vsel %vm1177, %v2938, 0.0
    %2945 = vadd.xlane.f32.xlu0 %v2944
    %v2946 = vpop.xlane.xlu0 %2945
    %v2947 = vmul.f32 %v2943, %v1187
    %v2948 = vmul.f32 %v2946, %v1187
    %v2949 = vadd.f32 %v2947, 1e-05
    %v2950 = vadd.f32 %v2948, 1e-05
    %v2951 = vrsqrt.pop %v2949
    %v2952 = vmul.f32 %v2951, %v2949
    %v2953 = vmul.f32 %v2952, %v2951
    %v2954 = vmul.f32 0.5, %v2953
    %v2955 = vsub.f32 1.5, %v2954
    %v2956 = vmul.f32 %v2951, %v2955
    %vm2957 = vweird.f32 %v2949
    %vm2958 = vweird.f32 %v2951
    %vm2959 = vmor %vm2957, %vm2958
    %v2960 = vsel %vm2959, %v2951, %v2956
    %v2961 = vrsqrt.pop %v2950
    %v2962 = vmul.f32 %v2961, %v2950
    %v2963 = vmul.f32 %v2962, %v2961
    %v2964 = vmul.f32 0.5, %v2963
    %v2965 = vsub.f32 1.5, %v2964
    %v2966 = vmul.f32 %v2961, %v2965
    %vm2967 = vweird.f32 %v2950
    %vm2968 = vweird.f32 %v2961
    %vm2969 = vmor %vm2967, %vm2968
    %v2970 = vsel %vm2969, %v2961, %v2966
    %v2973 = vperm.slane %v2960, 0
    %v2974 = vperm.slane %v2960, 1
    %v2975 = vperm.slane %v2960, 2
    %v2976 = vperm.slane %v2960, 3
    %v2977 = vperm.slane %v2960, 4
    %v2978 = vperm.slane %v2960, 5
    %v2979 = vperm.slane %v2960, 6
    %v2980 = vperm.slane %v2960, 7
    %v2981 = vperm.slane %v2970, 0
    %v2982 = vperm.slane %v2970, 1
    %v2993 = vmul.f32 %v2890, %v2973
    %v2994 = vmul.f32 %v2891, %v2974
    %v2995 = vmul.f32 %v2892, %v2975
    %v2996 = vmul.f32 %v2893, %v2976
    %v2997 = vmul.f32 %v2894, %v2977
    %v2998 = vmul.f32 %v2895, %v2978
    %v2999 = vmul.f32 %v2896, %v2979
    %v3000 = vmul.f32 %v2897, %v2980
    %v3001 = vmul.f32 %v2898, %v2981
    %v3002 = vmul.f32 %v2899, %v2982
    %v3003 = vperm.slane %v1733, 4
    %v3005 = vrot.slane %v3003, 1
    %v3006 = vrot.slane %v3003, 2
    %v3007 = vrot.slane %v3003, 3
    %v3008 = vrot.slane %v3003, 4
    %v3009 = vrot.slane %v3003, 5
    %v3010 = vrot.slane %v3003, 6
    %v3011 = vrot.slane %v3003, 7
    %v3019 = vmul.f32 %v2993, %v3003
    %v3020 = vmul.f32 %v2994, %v3005
    %v3021 = vmul.f32 %v2995, %v3006
    %v3022 = vmul.f32 %v2996, %v3007
    %v3023 = vmul.f32 %v2997, %v3008
    %v3024 = vmul.f32 %v2998, %v3009
    %v3025 = vmul.f32 %v2999, %v3010
    %v3026 = vmul.f32 %v3000, %v3011
    %v3027 = vmul.f32 %v3001, %v3003
    %v3028 = vmul.f32 %v3002, %v3005
    %v3029 = vperm.slane %v1733, 5
    %v3031 = vrot.slane %v3029, 1
    %v3032 = vrot.slane %v3029, 2
    %v3033 = vrot.slane %v3029, 3
    %v3034 = vrot.slane %v3029, 4
    %v3035 = vrot.slane %v3029, 5
    %v3036 = vrot.slane %v3029, 6
    %v3037 = vrot.slane %v3029, 7
    %v3045 = vadd.f32 %v3019, %v3029
    %v3046 = vadd.f32 %v3020, %v3031
    %v3047 = vadd.f32 %v3021, %v3032
    %v3048 = vadd.f32 %v3022, %v3033
    %v3049 = vadd.f32 %v3023, %v3034
    %v3050 = vadd.f32 %v3024, %v3035
    %v3051 = vadd.f32 %v3025, %v3036
    %v3052 = vadd.f32 %v3026, %v3037
    %v3053 = vadd.f32 %v3027, %v3029
    %v3054 = vadd.f32 %v3028, %v3031
    %v3055 = vld [vmem:[#allocation2 + $0xe8] sm:$0xff]
    %v3056 = vld [vmem:[#allocation2 + $0xf0] sm:$0xff]
    %v3057 = vld [vmem:[#allocation2 + $0xf8] sm:$0xff]
    %v3058 = vld [vmem:[#allocation2 + $0x100] sm:$0xff]
    %v3059 = vperm.slane %v1733, 2
    %3070 = vst [vmem:[#allocation1] ss:$9 sm:$0xff] %v3045
    %s3071 = scalar_lea.vmem [#allocation1], 1
    %3072 = vst [vmem:[%s3071] ss:$9 sm:$0xff] %v3046
    %s3073 = scalar_lea.vmem [#allocation1], 2
    %3074 = vst [vmem:[%s3073] ss:$9 sm:$0xff] %v3047
    %s3075 = scalar_lea.vmem [#allocation1], 3
    %3076 = vst [vmem:[%s3075] ss:$9 sm:$0xff] %v3048
    %s3077 = scalar_lea.vmem [#allocation1], 4
    %3078 = vst [vmem:[%s3077] ss:$9 sm:$0xff] %v3049
    %s3079 = scalar_lea.vmem [#allocation1], 5
    %3080 = vst [vmem:[%s3079] ss:$9 sm:$0xff] %v3050
    %s3081 = scalar_lea.vmem [#allocation1], 6
    %3082 = vst [vmem:[%s3081] ss:$9 sm:$0xff] %v3051
    %s3083 = scalar_lea.vmem [#allocation1], 7
    %3084 = vst [vmem:[%s3083] ss:$9 sm:$0xff] %v3052
    %v3085 = vld [vmem:[#allocation1] sm:$0xff]
    %3086 = vst [vmem:[#allocation1] ss:$9 sm:$0xff] %v3053
    %3087 = vst [vmem:[%s3071] ss:$9 sm:$0xff] %v3054
    %v3088 = vld [vmem:[#allocation1] sm:$0xff]
    %v3089 = vsel %vm75, %v3085, 0
    %v3091 = vsel %vm75, %v3088, 0
    %3093 = vmatpush.msra.mxu0 0.0
    %3094 = vmatpush.msra.mxu0 0.0
    %3095 = vmatpush.msra.mxu0 0.0
    %3096 = vmatpush.msra.mxu0 0.0
    %3097 = vmatpush.msra.mxu0 0.0
    %3098 = vmatpush.msra.mxu0 0.0
    %3099 = vmatpush.msra.mxu0 0.0
    %3100 = vmatpush.msra.mxu0 0.0
    %3101 = vmatpush.msra.mxu0 0.0
    %3102 = vmatpush.msra.mxu0 0.0
    %3103 = vmatpush.msra.mxu0 0.0
    %3104 = vmatpush.msra.mxu0 0.0
    %3105 = vmatpush.msra.mxu0 %v3058
    %3106 = vmatpush.msra.mxu0 %v3057
    %3107 = vmatpush.msra.mxu0 %v3056
    %3108 = vmatpush.msra.mxu0 %v3055
    %3109 = vmatmul.f32.gmra.mxu0 %v3089
    %v3110 = vpop.f32.mrf.mxu0
    %v3111 = vadd.f32 %v3059, %v3110
    %3112 = vmatmul.f32.gmra.mxu0 %v3091
    %v3113 = vpop.f32.mrf.mxu0
    %v3114 = vadd.f32 %v3059, %v3113
    %3115 = vdwg.mxu0
    %v3116 = vmax.f32 %v3111, 0.0
    %v3117 = vmax.f32 %v3114, 0.0
    %v3118 = vld [vmem:[#allocation2 + $0x108] sm:$0xff]
    %v3119 = vld [vmem:[#allocation2 + $0x110] sm:$0xff]
    %v3120 = vld [vmem:[#allocation2 + $0x118] sm:$0xff]
    %v3121 = vld [vmem:[#allocation2 + $0x120] sm:$0xff]
    %v3122 = vld [vmem:[#allocation2 + $0x128] sm:$0xff]
    %v3123 = vld [vmem:[#allocation2 + $0x130] sm:$0xff]
    %v3124 = vld [vmem:[#allocation2 + $0x138] sm:$0xff]
    %v3125 = vld [vmem:[#allocation2 + $0x140] sm:$0xff]
    %v3126 = vperm.slane %v1733, 3
    %v3128 = vsel %vm1449, %v3116, 0
    %v3131 = vsel %vm1449, %v3117, 0
    %3133 = vmatpush.msra.mxu0 0.0
    %3134 = vmatpush.msra.mxu0 0.0
    %3135 = vmatpush.msra.mxu0 0.0
    %3136 = vmatpush.msra.mxu0 0.0
    %3137 = vmatpush.msra.mxu0 0.0
    %3138 = vmatpush.msra.mxu0 0.0
    %3139 = vmatpush.msra.mxu0 0.0
    %3140 = vmatpush.msra.mxu0 0.0
    %3141 = vmatpush.msra.mxu0 %v3125
    %3142 = vmatpush.msra.mxu0 %v3124
    %3143 = vmatpush.msra.mxu0 %v3123
    %3144 = vmatpush.msra.mxu0 %v3122
    %3145 = vmatpush.msra.mxu0 %v3121
    %3146 = vmatpush.msra.mxu0 %v3120
    %3147 = vmatpush.msra.mxu0 %v3119
    %3148 = vmatpush.msra.mxu0 %v3118
    %3149 = vmatmul.f32.gmra.mxu0 %v3128
    %v3150 = vpop.f32.mrf.mxu0
    %v3151 = vadd.f32 %v3126, %v3150
    %3152 = vmatmul.f32.gmra.mxu0 %v3131
    %v3153 = vpop.f32.mrf.mxu0
    %v3154 = vadd.f32 %v3126, %v3153
    %3155 = vdwg.mxu0
    %v3158 = vrot.slane %v3151, 1
    %v3159 = vrot.slane %v3151, 2
    %v3160 = vrot.slane %v3151, 3
    %v3161 = vrot.slane %v3151, 4
    %v3162 = vrot.slane %v3151, 5
    %v3163 = vrot.slane %v3151, 6
    %v3164 = vrot.slane %v3151, 7
    %v3165 = vrot.slane %v3154, 1
    %v3174 = vadd.f32 %v3045, %v3151
    %v3175 = vadd.f32 %v3046, %v3158
    %v3176 = vadd.f32 %v3047, %v3159
    %v3177 = vadd.f32 %v3048, %v3160
    %v3178 = vadd.f32 %v3049, %v3161
    %v3179 = vadd.f32 %v3050, %v3162
    %v3180 = vadd.f32 %v3051, %v3163
    %v3181 = vadd.f32 %v3052, %v3164
    %v3182 = vadd.f32 %v3053, %v3154
    %v3183 = vadd.f32 %v3054, %v3165
    %3194 = vst [vmem:[#allocation1] ss:$9 sm:$0xff] %v3174
    %s3195 = scalar_lea.vmem [#allocation1], 1
    %3196 = vst [vmem:[%s3195] ss:$9 sm:$0xff] %v3175
    %s3197 = scalar_lea.vmem [#allocation1], 2
    %3198 = vst [vmem:[%s3197] ss:$9 sm:$0xff] %v3176
    %s3199 = scalar_lea.vmem [#allocation1], 3
    %3200 = vst [vmem:[%s3199] ss:$9 sm:$0xff] %v3177
    %s3201 = scalar_lea.vmem [#allocation1], 4
    %3202 = vst [vmem:[%s3201] ss:$9 sm:$0xff] %v3178
    %s3203 = scalar_lea.vmem [#allocation1], 5
    %3204 = vst [vmem:[%s3203] ss:$9 sm:$0xff] %v3179
    %s3205 = scalar_lea.vmem [#allocation1], 6
    %3206 = vst [vmem:[%s3205] ss:$9 sm:$0xff] %v3180
    %s3207 = scalar_lea.vmem [#allocation1], 7
    %3208 = vst [vmem:[%s3207] ss:$9 sm:$0xff] %v3181
    %v3209 = vld [vmem:[#allocation1] sm:$0xff]
    %3210 = vst [vmem:[#allocation1] ss:$9 sm:$0xff] %v3182
    %3211 = vst [vmem:[%s3195] ss:$9 sm:$0xff] %v3183
    %v3212 = vld [vmem:[#allocation1] sm:$0xff]
    %v3215 = vsel %vm75, %v3209, 0.0
    %3216 = vadd.xlane.f32.xlu0 %v3215
    %v3217 = vpop.xlane.xlu0 %3216
    %v3218 = vsel %vm1177, %v3212, 0.0
    %3219 = vadd.xlane.f32.xlu0 %v3218
    %v3220 = vpop.xlane.xlu0 %3219
    %v3221 = vmul.f32 %v3217, %v1187
    %v3222 = vmul.f32 %v3220, %v1187
    %v3225 = vperm.slane %v3221, 0
    %v3226 = vperm.slane %v3221, 1
    %v3227 = vperm.slane %v3221, 2
    %v3228 = vperm.slane %v3221, 3
    %v3229 = vperm.slane %v3221, 4
    %v3230 = vperm.slane %v3221, 5
    %v3231 = vperm.slane %v3221, 6
    %v3232 = vperm.slane %v3221, 7
    %v3233 = vperm.slane %v3222, 0
    %v3234 = vperm.slane %v3222, 1
    %v3245 = vsub.f32 %v3174, %v3225
    %v3246 = vsub.f32 %v3175, %v3226
    %v3247 = vsub.f32 %v3176, %v3227
    %v3248 = vsub.f32 %v3177, %v3228
    %v3249 = vsub.f32 %v3178, %v3229
    %v3250 = vsub.f32 %v3179, %v3230
    %v3251 = vsub.f32 %v3180, %v3231
    %v3252 = vsub.f32 %v3181, %v3232
    %v3253 = vsub.f32 %v3182, %v3233
    %v3254 = vsub.f32 %v3183, %v3234
    %v3255 = vmul.f32 %v3245, %v3245
    %v3256 = vmul.f32 %v3246, %v3246
    %v3257 = vmul.f32 %v3247, %v3247
    %v3258 = vmul.f32 %v3248, %v3248
    %v3259 = vmul.f32 %v3249, %v3249
    %v3260 = vmul.f32 %v3250, %v3250
    %v3261 = vmul.f32 %v3251, %v3251
    %v3262 = vmul.f32 %v3252, %v3252
    %v3263 = vmul.f32 %v3253, %v3253
    %v3264 = vmul.f32 %v3254, %v3254
    %3275 = vst [vmem:[#allocation1] ss:$9 sm:$0xff] %v3255
    %s3276 = scalar_lea.vmem [#allocation1], 1
    %3277 = vst [vmem:[%s3276] ss:$9 sm:$0xff] %v3256
    %s3278 = scalar_lea.vmem [#allocation1], 2
    %3279 = vst [vmem:[%s3278] ss:$9 sm:$0xff] %v3257
    %s3280 = scalar_lea.vmem [#allocation1], 3
    %3281 = vst [vmem:[%s3280] ss:$9 sm:$0xff] %v3258
    %s3282 = scalar_lea.vmem [#allocation1], 4
    %3283 = vst [vmem:[%s3282] ss:$9 sm:$0xff] %v3259
    %s3284 = scalar_lea.vmem [#allocation1], 5
    %3285 = vst [vmem:[%s3284] ss:$9 sm:$0xff] %v3260
    %s3286 = scalar_lea.vmem [#allocation1], 6
    %3287 = vst [vmem:[%s3286] ss:$9 sm:$0xff] %v3261
    %s3288 = scalar_lea.vmem [#allocation1], 7
    %3289 = vst [vmem:[%s3288] ss:$9 sm:$0xff] %v3262
    %v3290 = vld [vmem:[#allocation1] sm:$0xff]
    %3291 = vst [vmem:[#allocation1] ss:$9 sm:$0xff] %v3263
    %3292 = vst [vmem:[%s3276] ss:$9 sm:$0xff] %v3264
    %v3293 = vld [vmem:[#allocation1] sm:$0xff]
    %v3296 = vsel %vm75, %v3290, 0.0
    %3297 = vadd.xlane.f32.xlu0 %v3296
    %v3298 = vpop.xlane.xlu0 %3297
    %v3299 = vsel %vm1177, %v3293, 0.0
    %3300 = vadd.xlane.f32.xlu0 %v3299
    %v3301 = vpop.xlane.xlu0 %3300
    %v3302 = vmul.f32 %v3298, %v1187
    %v3303 = vmul.f32 %v3301, %v1187
    %v3304 = vadd.f32 %v3302, 1e-05
    %v3305 = vadd.f32 %v3303, 1e-05
    %v3306 = vrsqrt.pop %v3304
    %v3307 = vmul.f32 %v3306, %v3304
    %v3308 = vmul.f32 %v3307, %v3306
    %v3309 = vmul.f32 0.5, %v3308
    %v3310 = vsub.f32 1.5, %v3309
    %v3311 = vmul.f32 %v3306, %v3310
    %vm3312 = vweird.f32 %v3304
    %vm3313 = vweird.f32 %v3306
    %vm3314 = vmor %vm3312, %vm3313
    %v3315 = vsel %vm3314, %v3306, %v3311
    %v3316 = vrsqrt.pop %v3305
    %v3317 = vmul.f32 %v3316, %v3305
    %v3318 = vmul.f32 %v3317, %v3316
    %v3319 = vmul.f32 0.5, %v3318
    %v3320 = vsub.f32 1.5, %v3319
    %v3321 = vmul.f32 %v3316, %v3320
    %vm3322 = vweird.f32 %v3305
    %vm3323 = vweird.f32 %v3316
    %vm3324 = vmor %vm3322, %vm3323
    %v3325 = vsel %vm3324, %v3316, %v3321
    %v3328 = vperm.slane %v3315, 0
    %v3329 = vperm.slane %v3315, 1
    %v3330 = vperm.slane %v3315, 2
    %v3331 = vperm.slane %v3315, 3
    %v3332 = vperm.slane %v3315, 4
    %v3333 = vperm.slane %v3315, 5
    %v3334 = vperm.slane %v3315, 6
    %v3335 = vperm.slane %v3315, 7
    %v3336 = vperm.slane %v3325, 0
    %v3337 = vperm.slane %v3325, 1
    %v3348 = vmul.f32 %v3245, %v3328
    %v3349 = vmul.f32 %v3246, %v3329
    %v3350 = vmul.f32 %v3247, %v3330
    %v3351 = vmul.f32 %v3248, %v3331
    %v3352 = vmul.f32 %v3249, %v3332
    %v3353 = vmul.f32 %v3250, %v3333
    %v3354 = vmul.f32 %v3251, %v3334
    %v3355 = vmul.f32 %v3252, %v3335
    %v3356 = vmul.f32 %v3253, %v3336
    %v3357 = vmul.f32 %v3254, %v3337
    %v3358 = vperm.slane %v1733, 6
    %v3360 = vrot.slane %v3358, 1
    %v3361 = vrot.slane %v3358, 2
    %v3362 = vrot.slane %v3358, 3
    %v3363 = vrot.slane %v3358, 4
    %v3364 = vrot.slane %v3358, 5
    %v3365 = vrot.slane %v3358, 6
    %v3366 = vrot.slane %v3358, 7
    %v3374 = vmul.f32 %v3348, %v3358
    %v3375 = vmul.f32 %v3349, %v3360
    %v3376 = vmul.f32 %v3350, %v3361
    %v3377 = vmul.f32 %v3351, %v3362
    %v3378 = vmul.f32 %v3352, %v3363
    %v3379 = vmul.f32 %v3353, %v3364
    %v3380 = vmul.f32 %v3354, %v3365
    %v3381 = vmul.f32 %v3355, %v3366
    %v3382 = vmul.f32 %v3356, %v3358
    %v3383 = vmul.f32 %v3357, %v3360
    %v3384 = vperm.slane %v1733, 7
    %v3386 = vrot.slane %v3384, 1
    %v3387 = vrot.slane %v3384, 2
    %v3388 = vrot.slane %v3384, 3
    %v3389 = vrot.slane %v3384, 4
    %v3390 = vrot.slane %v3384, 5
    %v3391 = vrot.slane %v3384, 6
    %v3392 = vrot.slane %v3384, 7
    %v3400 = vadd.f32 %v3374, %v3384
    %v3401 = vadd.f32 %v3375, %v3386
    %v3402 = vadd.f32 %v3376, %v3387
    %v3403 = vadd.f32 %v3377, %v3388
    %v3404 = vadd.f32 %v3378, %v3389
    %v3405 = vadd.f32 %v3379, %v3390
    %v3406 = vadd.f32 %v3380, %v3391
    %v3407 = vadd.f32 %v3381, %v3392
    %v3408 = vadd.f32 %v3382, %v3384
    %v3409 = vadd.f32 %v3383, %v3386
    %v3410 = vld [vmem:[#allocation2 + $0x370] sm:$0x3f]
    %3421 = vst [vmem:[#allocation1] ss:$9 sm:$0xff] %v3400
    %s3422 = scalar_lea.vmem [#allocation1], 1
    %3423 = vst [vmem:[%s3422] ss:$9 sm:$0xff] %v3401
    %s3424 = scalar_lea.vmem [#allocation1], 2
    %3425 = vst [vmem:[%s3424] ss:$9 sm:$0xff] %v3402
    %s3426 = scalar_lea.vmem [#allocation1], 3
    %3427 = vst [vmem:[%s3426] ss:$9 sm:$0xff] %v3403
    %s3428 = scalar_lea.vmem [#allocation1], 4
    %3429 = vst [vmem:[%s3428] ss:$9 sm:$0xff] %v3404
    %s3430 = scalar_lea.vmem [#allocation1], 5
    %3431 = vst [vmem:[%s3430] ss:$9 sm:$0xff] %v3405
    %s3432 = scalar_lea.vmem [#allocation1], 6
    %3433 = vst [vmem:[%s3432] ss:$9 sm:$0xff] %v3406
    %s3434 = scalar_lea.vmem [#allocation1], 7
    %3435 = vst [vmem:[%s3434] ss:$9 sm:$0xff] %v3407
    %v3436 = vld [vmem:[#allocation1] sm:$0xff]
    %3437 = vst [vmem:[#allocation1] ss:$9 sm:$0xff] %v3408
    %3438 = vst [vmem:[%s3422] ss:$9 sm:$0xff] %v3409
    %v3439 = vld [vmem:[#allocation1] sm:$0xff]
    %v3442 = vsel %vm75, %v3436, 0.0
    %3443 = vadd.xlane.f32.xlu0 %v3442
    %v3444 = vpop.xlane.xlu0 %3443
    %v3445 = vsel %vm1177, %v3439, 0.0
    %3446 = vadd.xlane.f32.xlu0 %v3445
    %v3447 = vpop.xlane.xlu0 %3446
    %v3448 = vmul.f32 %v3444, %v1187
    %v3449 = vmul.f32 %v3447, %v1187
    %v3452 = vperm.slane %v3448, 0
    %v3453 = vperm.slane %v3448, 1
    %v3454 = vperm.slane %v3448, 2
    %v3455 = vperm.slane %v3448, 3
    %v3456 = vperm.slane %v3448, 4
    %v3457 = vperm.slane %v3448, 5
    %v3458 = vperm.slane %v3448, 6
    %v3459 = vperm.slane %v3448, 7
    %v3460 = vperm.slane %v3449, 0
    %v3461 = vperm.slane %v3449, 1
    %v3472 = vsub.f32 %v3400, %v3452
    %v3473 = vsub.f32 %v3401, %v3453
    %v3474 = vsub.f32 %v3402, %v3454
    %v3475 = vsub.f32 %v3403, %v3455
    %v3476 = vsub.f32 %v3404, %v3456
    %v3477 = vsub.f32 %v3405, %v3457
    %v3478 = vsub.f32 %v3406, %v3458
    %v3479 = vsub.f32 %v3407, %v3459
    %v3480 = vsub.f32 %v3408, %v3460
    %v3481 = vsub.f32 %v3409, %v3461
    %v3482 = vmul.f32 %v3472, %v3472
    %v3483 = vmul.f32 %v3473, %v3473
    %v3484 = vmul.f32 %v3474, %v3474
    %v3485 = vmul.f32 %v3475, %v3475
    %v3486 = vmul.f32 %v3476, %v3476
    %v3487 = vmul.f32 %v3477, %v3477
    %v3488 = vmul.f32 %v3478, %v3478
    %v3489 = vmul.f32 %v3479, %v3479
    %v3490 = vmul.f32 %v3480, %v3480
    %v3491 = vmul.f32 %v3481, %v3481
    %3502 = vst [vmem:[#allocation1] ss:$9 sm:$0xff] %v3482
    %s3503 = scalar_lea.vmem [#allocation1], 1
    %3504 = vst [vmem:[%s3503] ss:$9 sm:$0xff] %v3483
    %s3505 = scalar_lea.vmem [#allocation1], 2
    %3506 = vst [vmem:[%s3505] ss:$9 sm:$0xff] %v3484
    %s3507 = scalar_lea.vmem [#allocation1], 3
    %3508 = vst [vmem:[%s3507] ss:$9 sm:$0xff] %v3485
    %s3509 = scalar_lea.vmem [#allocation1], 4
    %3510 = vst [vmem:[%s3509] ss:$9 sm:$0xff] %v3486
    %s3511 = scalar_lea.vmem [#allocation1], 5
    %3512 = vst [vmem:[%s3511] ss:$9 sm:$0xff] %v3487
    %s3513 = scalar_lea.vmem [#allocation1], 6
    %3514 = vst [vmem:[%s3513] ss:$9 sm:$0xff] %v3488
    %s3515 = scalar_lea.vmem [#allocation1], 7
    %3516 = vst [vmem:[%s3515] ss:$9 sm:$0xff] %v3489
    %v3517 = vld [vmem:[#allocation1] sm:$0xff]
    %3518 = vst [vmem:[#allocation1] ss:$9 sm:$0xff] %v3490
    %3519 = vst [vmem:[%s3503] ss:$9 sm:$0xff] %v3491
    %v3520 = vld [vmem:[#allocation1] sm:$0xff]
    %v3523 = vsel %vm75, %v3517, 0.0
    %3524 = vadd.xlane.f32.xlu0 %v3523
    %v3525 = vpop.xlane.xlu0 %3524
    %v3526 = vsel %vm1177, %v3520, 0.0
    %3527 = vadd.xlane.f32.xlu0 %v3526
    %v3528 = vpop.xlane.xlu0 %3527
    %v3529 = vmul.f32 %v3525, %v1187
    %v3530 = vmul.f32 %v3528, %v1187
    %v3531 = vadd.f32 %v3529, 1e-05
    %v3532 = vadd.f32 %v3530, 1e-05
    %v3533 = vrsqrt.pop %v3531
    %v3534 = vmul.f32 %v3533, %v3531
    %v3535 = vmul.f32 %v3534, %v3533
    %v3536 = vmul.f32 0.5, %v3535
    %v3537 = vsub.f32 1.5, %v3536
    %v3538 = vmul.f32 %v3533, %v3537
    %vm3539 = vweird.f32 %v3531
    %vm3540 = vweird.f32 %v3533
    %vm3541 = vmor %vm3539, %vm3540
    %v3542 = vsel %vm3541, %v3533, %v3538
    %v3543 = vrsqrt.pop %v3532
    %v3544 = vmul.f32 %v3543, %v3532
    %v3545 = vmul.f32 %v3544, %v3543
    %v3546 = vmul.f32 0.5, %v3545
    %v3547 = vsub.f32 1.5, %v3546
    %v3548 = vmul.f32 %v3543, %v3547
    %vm3549 = vweird.f32 %v3532
    %vm3550 = vweird.f32 %v3543
    %vm3551 = vmor %vm3549, %vm3550
    %v3552 = vsel %vm3551, %v3543, %v3548
    %v3555 = vperm.slane %v3542, 0
    %v3556 = vperm.slane %v3542, 1
    %v3557 = vperm.slane %v3542, 2
    %v3558 = vperm.slane %v3542, 3
    %v3559 = vperm.slane %v3542, 4
    %v3560 = vperm.slane %v3542, 5
    %v3561 = vperm.slane %v3542, 6
    %v3562 = vperm.slane %v3542, 7
    %v3563 = vperm.slane %v3552, 0
    %v3564 = vperm.slane %v3552, 1
    %v3575 = vmul.f32 %v3472, %v3555
    %v3576 = vmul.f32 %v3473, %v3556
    %v3577 = vmul.f32 %v3474, %v3557
    %v3578 = vmul.f32 %v3475, %v3558
    %v3579 = vmul.f32 %v3476, %v3559
    %v3580 = vmul.f32 %v3477, %v3560
    %v3581 = vmul.f32 %v3478, %v3561
    %v3582 = vmul.f32 %v3479, %v3562
    %v3583 = vmul.f32 %v3480, %v3563
    %v3584 = vmul.f32 %v3481, %v3564
    %v3585 = vperm.slane %v3410, 0
    %v3587 = vrot.slane %v3585, 1
    %v3588 = vrot.slane %v3585, 2
    %v3589 = vrot.slane %v3585, 3
    %v3590 = vrot.slane %v3585, 4
    %v3591 = vrot.slane %v3585, 5
    %v3592 = vrot.slane %v3585, 6
    %v3593 = vrot.slane %v3585, 7
    %v3601 = vmul.f32 %v3575, %v3585
    %v3602 = vmul.f32 %v3576, %v3587
    %v3603 = vmul.f32 %v3577, %v3588
    %v3604 = vmul.f32 %v3578, %v3589
    %v3605 = vmul.f32 %v3579, %v3590
    %v3606 = vmul.f32 %v3580, %v3591
    %v3607 = vmul.f32 %v3581, %v3592
    %v3608 = vmul.f32 %v3582, %v3593
    %v3609 = vmul.f32 %v3583, %v3585
    %v3610 = vmul.f32 %v3584, %v3587
    %v3611 = vperm.slane %v3410, 1
    %v3613 = vrot.slane %v3611, 1
    %v3614 = vrot.slane %v3611, 2
    %v3615 = vrot.slane %v3611, 3
    %v3616 = vrot.slane %v3611, 4
    %v3617 = vrot.slane %v3611, 5
    %v3618 = vrot.slane %v3611, 6
    %v3619 = vrot.slane %v3611, 7
    %v3627 = vadd.f32 %v3601, %v3611
    %v3628 = vadd.f32 %v3602, %v3613
    %v3629 = vadd.f32 %v3603, %v3614
    %v3630 = vadd.f32 %v3604, %v3615
    %v3631 = vadd.f32 %v3605, %v3616
    %v3632 = vadd.f32 %v3606, %v3617
    %v3633 = vadd.f32 %v3607, %v3618
    %v3634 = vadd.f32 %v3608, %v3619
    %v3635 = vadd.f32 %v3609, %v3611
    %v3636 = vadd.f32 %v3610, %v3613
    %v3637 = vld [vmem:[#allocation2 + $0x330] sm:$0xff]
    %v3638 = vld [vmem:[#allocation2 + $0x338] sm:$0xff]
    %v3639 = vld [vmem:[#allocation2 + $0x340] sm:$0xff]
    %v3640 = vld [vmem:[#allocation2 + $0x348] sm:$0xff]
    %v3641 = vperm.slane %v3410, 4
    %3652 = vst [vmem:[#allocation1] ss:$9 sm:$0xff] %v3627
    %s3653 = scalar_lea.vmem [#allocation1], 1
    %3654 = vst [vmem:[%s3653] ss:$9 sm:$0xff] %v3628
    %s3655 = scalar_lea.vmem [#allocation1], 2
    %3656 = vst [vmem:[%s3655] ss:$9 sm:$0xff] %v3629
    %s3657 = scalar_lea.vmem [#allocation1], 3
    %3658 = vst [vmem:[%s3657] ss:$9 sm:$0xff] %v3630
    %s3659 = scalar_lea.vmem [#allocation1], 4
    %3660 = vst [vmem:[%s3659] ss:$9 sm:$0xff] %v3631
    %s3661 = scalar_lea.vmem [#allocation1], 5
    %3662 = vst [vmem:[%s3661] ss:$9 sm:$0xff] %v3632
    %s3663 = scalar_lea.vmem [#allocation1], 6
    %3664 = vst [vmem:[%s3663] ss:$9 sm:$0xff] %v3633
    %s3665 = scalar_lea.vmem [#allocation1], 7
    %3666 = vst [vmem:[%s3665] ss:$9 sm:$0xff] %v3634
    %v3667 = vld [vmem:[#allocation1] sm:$0xff]
    %3668 = vst [vmem:[#allocation1] ss:$9 sm:$0xff] %v3635
    %3669 = vst [vmem:[%s3653] ss:$9 sm:$0xff] %v3636
    %v3670 = vld [vmem:[#allocation1] sm:$0xff]
    %v3671 = vsel %vm75, %v3667, 0
    %v3673 = vsel %vm75, %v3670, 0
    %3675 = vmatpush.msra.mxu0 0.0
    %3676 = vmatpush.msra.mxu0 0.0
    %3677 = vmatpush.msra.mxu0 0.0
    %3678 = vmatpush.msra.mxu0 0.0
    %3679 = vmatpush.msra.mxu0 0.0
    %3680 = vmatpush.msra.mxu0 0.0
    %3681 = vmatpush.msra.mxu0 0.0
    %3682 = vmatpush.msra.mxu0 0.0
    %3683 = vmatpush.msra.mxu0 0.0
    %3684 = vmatpush.msra.mxu0 0.0
    %3685 = vmatpush.msra.mxu0 0.0
    %3686 = vmatpush.msra.mxu0 0.0
    %3687 = vmatpush.msra.mxu0 %v3640
    %3688 = vmatpush.msra.mxu0 %v3639
    %3689 = vmatpush.msra.mxu0 %v3638
    %3690 = vmatpush.msra.mxu0 %v3637
    %3691 = vmatmul.f32.gmra.mxu0 %v3671
    %v3692 = vpop.f32.mrf.mxu0
    %v3693 = vadd.f32 %v3641, %v3692
    %3694 = vmatmul.f32.gmra.mxu0 %v3673
    %v3695 = vpop.f32.mrf.mxu0
    %v3696 = vadd.f32 %v3641, %v3695
    %3697 = vdwg.mxu0
    %v3698 = vlaneseq
    %v3699 = vshrl.u32 %v3698, 7
    %v3700 = vlaneseq
    %v3701 = vand.u32 %v3700, 127
    %vm3702 = vcmp.le.s32.totalorder %v3701, %v3699
    %v3703 = vsel %vm3702, 0.0, -1e+30
    %v3704 = vld [vmem:[%s1] sm:$0x3f]
    %v3705 = vld [vmem:[%s1 + $0x8] sm:$0x3f]
    %v3708 = vrot.slane %v3704, 2
    %v3709 = vrot.slane %v3704, 4
    %v3710 = vrot.slane %v3705, 2
    %v3711 = vrot.slane %v3705, 4
    %v3716 = vld [vmem:[#allocation2 + $0x230] sm:$0xff]
    %v3717 = vld [vmem:[#allocation2 + $0x238] sm:$0xf]
    %v3718 = vld [vmem:[#allocation2 + $0x150] sm:$0xff]
    %v3719 = vld [vmem:[#allocation2 + $0x158] sm:$0xff]
    %v3720 = vld [vmem:[#allocation2 + $0x160] sm:$0xff]
    %v3721 = vld [vmem:[#allocation2 + $0x168] sm:$0xff]
    %v3722 = vperm.slane %v3716, 0
    %3723 = vst [vmem:[#allocation1] ss:$4 sm:$0xff] %v3704
    %s3724 = scalar_lea.vmem [#allocation1], 1
    %3725 = vst [vmem:[%s3724] ss:$4 sm:$0xff] %v3708
    %s3726 = scalar_lea.vmem [#allocation1], 2
    %3727 = vst [vmem:[%s3726] ss:$4 sm:$0xff] %v3709
    %s3728 = scalar_lea.vmem [#allocation1], 3
    %3729 = vst [vmem:[%s3728] ss:$4 sm:$0xff] %v3705
    %s3730 = scalar_lea.vmem [#allocation1], 32
    %3731 = vst [vmem:[%s3730] ss:$4 sm:$0xff] %v3710
    %s3732 = scalar_lea.vmem [#allocation1], 33
    %3733 = vst [vmem:[%s3732] ss:$4 sm:$0xff] %v3711
    %v3734 = vld.sshfl [vmem:[#allocation1] sm:$0xff pattern:$0x73625140]
    %v3735 = vld.sshfl [vmem:[#allocation1 + $0x20] sm:$0xff pattern:$0x73625140]
    %v3736 = vsel %vm75, %v3734, 0
    %v3738 = vsel %vm75, %v3735, 0
    %3740 = vmatpush.msra.mxu0 0.0
    %3741 = vmatpush.msra.mxu0 0.0
    %3742 = vmatpush.msra.mxu0 0.0
    %3743 = vmatpush.msra.mxu0 0.0
    %3744 = vmatpush.msra.mxu0 0.0
    %3745 = vmatpush.msra.mxu0 0.0
    %3746 = vmatpush.msra.mxu0 0.0
    %3747 = vmatpush.msra.mxu0 0.0
    %3748 = vmatpush.msra.mxu0 0.0
    %3749 = vmatpush.msra.mxu0 0.0
    %3750 = vmatpush.msra.mxu0 0.0
    %3751 = vmatpush.msra.mxu0 0.0
    %3752 = vmatpush.msra.mxu0 %v3721
    %3753 = vmatpush.msra.mxu0 %v3720
    %3754 = vmatpush.msra.mxu0 %v3719
    %3755 = vmatpush.msra.mxu0 %v3718
    %3756 = vmatmul.f32.gmra.mxu0 %v3736
    %v3757 = vpop.f32.mrf.mxu0
    %v3758 = vadd.f32 %v3722, %v3757
    %3759 = vmatmul.f32.gmra.mxu0 %v3738
    %v3760 = vpop.f32.mrf.mxu0
    %v3761 = vadd.f32 %v3722, %v3760
    %3762 = vdwg.mxu0
    %v3765 = vrot.slane %v3758, 2
    %v3766 = vrot.slane %v3758, 4
    %v3767 = vrot.slane %v3758, 6
    %v3768 = vrot.slane %v3761, 2
    %3769 = vrot.lane.b32.xlu0 %v3758, 120
    %v3770 = vpop.permute.xlu0 %3769
    %3771 = vrot.lane.b32.xlu0 %v3765, 120
    %v3772 = vpop.permute.xlu0 %3771
    %3773 = vrot.lane.b32.xlu0 %v3766, 120
    %v3774 = vpop.permute.xlu0 %3773
    %3775 = vrot.lane.b32.xlu0 %v3767, 120
    %v3776 = vpop.permute.xlu0 %3775
    %3777 = vrot.lane.b32.xlu0 %v3761, 120
    %v3778 = vpop.permute.xlu0 %3777
    %3779 = vrot.lane.b32.xlu0 %v3768, 120
    %v3780 = vpop.permute.xlu0 %3779
    %3781 = vrot.lane.b32.xlu0 %v3758, 112
    %v3782 = vpop.permute.xlu0 %3781
    %3783 = vrot.lane.b32.xlu0 %v3765, 112
    %v3784 = vpop.permute.xlu0 %3783
    %3785 = vrot.lane.b32.xlu0 %v3766, 112
    %v3786 = vpop.permute.xlu0 %3785
    %3787 = vrot.lane.b32.xlu0 %v3767, 112
    %v3788 = vpop.permute.xlu0 %3787
    %3789 = vrot.lane.b32.xlu0 %v3761, 112
    %v3790 = vpop.permute.xlu0 %3789
    %3791 = vrot.lane.b32.xlu0 %v3768, 112
    %v3792 = vpop.permute.xlu0 %3791
    %3793 = vrot.lane.b32.xlu0 %v3758, 104
    %v3794 = vpop.permute.xlu0 %3793
    %3795 = vrot.lane.b32.xlu0 %v3765, 104
    %v3796 = vpop.permute.xlu0 %3795
    %3797 = vrot.lane.b32.xlu0 %v3766, 104
    %v3798 = vpop.permute.xlu0 %3797
    %3799 = vrot.lane.b32.xlu0 %v3767, 104
    %v3800 = vpop.permute.xlu0 %3799
    %3801 = vrot.lane.b32.xlu0 %v3761, 104
    %v3802 = vpop.permute.xlu0 %3801
    %3803 = vrot.lane.b32.xlu0 %v3768, 104
    %v3804 = vpop.permute.xlu0 %3803
    %3805 = vst [vmem:[#allocation1] ss:$4 sm:$0xff] %v3758
    %s3806 = scalar_lea.vmem [#allocation1], 1
    %3807 = vst [vmem:[%s3806] ss:$4 sm:$0xff] %v3765
    %s3808 = scalar_lea.vmem [#allocation1], 2
    %3809 = vst [vmem:[%s3808] ss:$4 sm:$0xff] %v3766
    %v3810 = vld.sshfl [vmem:[#allocation1] sm:$0xff pattern:$0x73625140]
    %3811 = vst [vmem:[#allocation1] ss:$4 sm:$0xff] %v3758
    %s3812 = scalar_lea.vmem [#allocation1], 1
    %3813 = vst [vmem:[%s3812] ss:$4 sm:$0xff] %v3765
    %s3814 = scalar_lea.vmem [#allocation1], 2
    %3815 = vst [vmem:[%s3814] ss:$4 sm:$0xff] %v3766
    %v3816 = vld.sshfl [vmem:[#allocation1] sm:$0xff pattern:$0x73625140]
    %3817 = vrot.lane.b32.xlu0 %v3816, 96
    %v3818 = vpop.permute.xlu0 %3817
    %v3819 = vsel %vm195, %v3810, 0
    %v3821 = vsel %vm195, %v3818, 0
    %3823 = vmatpush.xpose.msra.mxu0 0.0
    %3824 = vmatpush.xpose.msra.mxu0 0.0
    %3825 = vmatpush.xpose.msra.mxu0 0.0
    %3826 = vmatpush.xpose.msra.mxu0 0.0
    %3827 = vmatpush.xpose.msra.mxu0 0.0
    %3828 = vmatpush.xpose.msra.mxu0 0.0
    %3829 = vmatpush.xpose.msra.mxu0 0.0
    %3830 = vmatpush.xpose.msra.mxu0 0.0
    %3831 = vmatpush.xpose.msra.mxu0 0.0
    %3832 = vmatpush.xpose.msra.mxu0 0.0
    %3833 = vmatpush.xpose.msra.mxu0 0.0
    %3834 = vmatpush.xpose.msra.mxu0 0.0
    %3835 = vmatpush.xpose.msra.mxu0 0.0
    %3836 = vmatpush.xpose.msra.mxu0 0.0
    %3837 = vmatpush.xpose.msra.mxu0 0.0
    %3838 = vmatpush.xpose.msra.mxu0 %v3821
    %3839 = vmatmul.f32.gmra.mxu0 %v3819
    %v3840 = vpop.f32.mrf.mxu0
    %v3841 = vadd.f32 0.0, %v3840
    %3842 = vdwg.mxu0
    %3843 = vst [vmem:[#allocation1] ss:$4 sm:$0xff] %v3767
    %s3844 = scalar_lea.vmem [#allocation1], 1
    %3845 = vst [vmem:[%s3844] ss:$4 sm:$0xff] %v3761
    %s3846 = scalar_lea.vmem [#allocation1], 2
    %3847 = vst [vmem:[%s3846] ss:$4 sm:$0xff] %v3768
    %v3848 = vld.sshfl [vmem:[#allocation1] sm:$0xff pattern:$0x73625140]
    %3849 = vst [vmem:[#allocation1] ss:$4 sm:$0xff] %v3767
    %s3850 = scalar_lea.vmem [#allocation1], 1
    %3851 = vst [vmem:[%s3850] ss:$4 sm:$0xff] %v3761
    %s3852 = scalar_lea.vmem [#allocation1], 2
    %3853 = vst [vmem:[%s3852] ss:$4 sm:$0xff] %v3768
    %v3854 = vld.sshfl [vmem:[#allocation1] sm:$0xff pattern:$0x73625140]
    %3855 = vrot.lane.b32.xlu0 %v3854, 96
    %v3856 = vpop.permute.xlu0 %3855
    %v3857 = vsel %vm195, %v3848, 0
    %v3859 = vsel %vm195, %v3856, 0
    %3861 = vmatpush.xpose.msra.mxu0 0.0
    %3862 = vmatpush.xpose.msra.mxu0 0.0
    %3863 = vmatpush.xpose.msra.mxu0 0.0
    %3864 = vmatpush.xpose.msra.mxu0 0.0
    %3865 = vmatpush.xpose.msra.mxu0 0.0
    %3866 = vmatpush.xpose.msra.mxu0 0.0
    %3867 = vmatpush.xpose.msra.mxu0 0.0
    %3868 = vmatpush.xpose.msra.mxu0 0.0
    %3869 = vmatpush.xpose.msra.mxu0 0.0
    %3870 = vmatpush.xpose.msra.mxu0 0.0
    %3871 = vmatpush.xpose.msra.mxu0 0.0
    %3872 = vmatpush.xpose.msra.mxu0 0.0
    %3873 = vmatpush.xpose.msra.mxu0 0.0
    %3874 = vmatpush.xpose.msra.mxu0 0.0
    %3875 = vmatpush.xpose.msra.mxu0 0.0
    %3876 = vmatpush.xpose.msra.mxu0 %v3859
    %3877 = vmatmul.f32.gmra.mxu0 %v3857
    %v3878 = vpop.f32.mrf.mxu0
    %v3879 = vadd.f32 0.0, %v3878
    %3880 = vdwg.mxu0
    %3881 = vst [vmem:[#allocation1] ss:$4 sm:$0xff] %v3770
    %s3882 = scalar_lea.vmem [#allocation1], 1
    %3883 = vst [vmem:[%s3882] ss:$4 sm:$0xff] %v3772
    %s3884 = scalar_lea.vmem [#allocation1], 2
    %3885 = vst [vmem:[%s3884] ss:$4 sm:$0xff] %v3774
    %v3886 = vld.sshfl [vmem:[#allocation1] sm:$0xff pattern:$0x73625140]
    %3887 = vst [vmem:[#allocation1] ss:$4 sm:$0xff] %v3770
    %s3888 = scalar_lea.vmem [#allocation1], 1
    %3889 = vst [vmem:[%s3888] ss:$4 sm:$0xff] %v3772
    %s3890 = scalar_lea.vmem [#allocation1], 2
    %3891 = vst [vmem:[%s3890] ss:$4 sm:$0xff] %v3774
    %v3892 = vld.sshfl [vmem:[#allocation1] sm:$0xff pattern:$0x73625140]
    %3893 = vrot.lane.b32.xlu0 %v3892, 96
    %v3894 = vpop.permute.xlu0 %3893
    %v3895 = vsel %vm195, %v3886, 0
    %v3897 = vsel %vm195, %v3894, 0
    %3899 = vmatpush.xpose.msra.mxu0 0.0
    %3900 = vmatpush.xpose.msra.mxu0 0.0
    %3901 = vmatpush.xpose.msra.mxu0 0.0
    %3902 = vmatpush.xpose.msra.mxu0 0.0
    %3903 = vmatpush.xpose.msra.mxu0 0.0
    %3904 = vmatpush.xpose.msra.mxu0 0.0
    %3905 = vmatpush.xpose.msra.mxu0 0.0
    %3906 = vmatpush.xpose.msra.mxu0 0.0
    %3907 = vmatpush.xpose.msra.mxu0 0.0
    %3908 = vmatpush.xpose.msra.mxu0 0.0
    %3909 = vmatpush.xpose.msra.mxu0 0.0
    %3910 = vmatpush.xpose.msra.mxu0 0.0
    %3911 = vmatpush.xpose.msra.mxu0 0.0
    %3912 = vmatpush.xpose.msra.mxu0 0.0
    %3913 = vmatpush.xpose.msra.mxu0 0.0
    %3914 = vmatpush.xpose.msra.mxu0 %v3897
    %3915 = vmatmul.f32.gmra.mxu0 %v3895
    %v3916 = vpop.f32.mrf.mxu0
    %v3917 = vadd.f32 0.0, %v3916
    %3918 = vdwg.mxu0
    %3919 = vst [vmem:[#allocation1] ss:$4 sm:$0xff] %v3776
    %s3920 = scalar_lea.vmem [#allocation1], 1
    %3921 = vst [vmem:[%s3920] ss:$4 sm:$0xff] %v3778
    %s3922 = scalar_lea.vmem [#allocation1], 2
    %3923 = vst [vmem:[%s3922] ss:$4 sm:$0xff] %v3780
    %v3924 = vld.sshfl [vmem:[#allocation1] sm:$0xff pattern:$0x73625140]
    %3925 = vst [vmem:[#allocation1] ss:$4 sm:$0xff] %v3776
    %s3926 = scalar_lea.vmem [#allocation1], 1
    %3927 = vst [vmem:[%s3926] ss:$4 sm:$0xff] %v3778
    %s3928 = scalar_lea.vmem [#allocation1], 2
    %3929 = vst [vmem:[%s3928] ss:$4 sm:$0xff] %v3780
    %v3930 = vld.sshfl [vmem:[#allocation1] sm:$0xff pattern:$0x73625140]
    %3931 = vrot.lane.b32.xlu0 %v3930, 96
    %v3932 = vpop.permute.xlu0 %3931
    %v3933 = vsel %vm195, %v3924, 0
    %v3935 = vsel %vm195, %v3932, 0
    %3937 = vmatpush.xpose.msra.mxu0 0.0
    %3938 = vmatpush.xpose.msra.mxu0 0.0
    %3939 = vmatpush.xpose.msra.mxu0 0.0
    %3940 = vmatpush.xpose.msra.mxu0 0.0
    %3941 = vmatpush.xpose.msra.mxu0 0.0
    %3942 = vmatpush.xpose.msra.mxu0 0.0
    %3943 = vmatpush.xpose.msra.mxu0 0.0
    %3944 = vmatpush.xpose.msra.mxu0 0.0
    %3945 = vmatpush.xpose.msra.mxu0 0.0
    %3946 = vmatpush.xpose.msra.mxu0 0.0
    %3947 = vmatpush.xpose.msra.mxu0 0.0
    %3948 = vmatpush.xpose.msra.mxu0 0.0
    %3949 = vmatpush.xpose.msra.mxu0 0.0
    %3950 = vmatpush.xpose.msra.mxu0 0.0
    %3951 = vmatpush.xpose.msra.mxu0 0.0
    %3952 = vmatpush.xpose.msra.mxu0 %v3935
    %3953 = vmatmul.f32.gmra.mxu0 %v3933
    %v3954 = vpop.f32.mrf.mxu0
    %v3955 = vadd.f32 0.0, %v3954
    %3956 = vdwg.mxu0
    %3957 = vst [vmem:[#allocation1] ss:$4 sm:$0xff] %v3782
    %s3958 = scalar_lea.vmem [#allocation1], 1
    %3959 = vst [vmem:[%s3958] ss:$4 sm:$0xff] %v3784
    %s3960 = scalar_lea.vmem [#allocation1], 2
    %3961 = vst [vmem:[%s3960] ss:$4 sm:$0xff] %v3786
    %v3962 = vld.sshfl [vmem:[#allocation1] sm:$0xff pattern:$0x73625140]
    %3963 = vst [vmem:[#allocation1] ss:$4 sm:$0xff] %v3782
    %s3964 = scalar_lea.vmem [#allocation1], 1
    %3965 = vst [vmem:[%s3964] ss:$4 sm:$0xff] %v3784
    %s3966 = scalar_lea.vmem [#allocation1], 2
    %3967 = vst [vmem:[%s3966] ss:$4 sm:$0xff] %v3786
    %v3968 = vld.sshfl [vmem:[#allocation1] sm:$0xff pattern:$0x73625140]
    %3969 = vrot.lane.b32.xlu0 %v3968, 96
    %v3970 = vpop.permute.xlu0 %3969
    %v3971 = vsel %vm195, %v3962, 0
    %v3973 = vsel %vm195, %v3970, 0
    %3975 = vmatpush.xpose.msra.mxu0 0.0
    %3976 = vmatpush.xpose.msra.mxu0 0.0
    %3977 = vmatpush.xpose.msra.mxu0 0.0
    %3978 = vmatpush.xpose.msra.mxu0 0.0
    %3979 = vmatpush.xpose.msra.mxu0 0.0
    %3980 = vmatpush.xpose.msra.mxu0 0.0
    %3981 = vmatpush.xpose.msra.mxu0 0.0
    %3982 = vmatpush.xpose.msra.mxu0 0.0
    %3983 = vmatpush.xpose.msra.mxu0 0.0
    %3984 = vmatpush.xpose.msra.mxu0 0.0
    %3985 = vmatpush.xpose.msra.mxu0 0.0
    %3986 = vmatpush.xpose.msra.mxu0 0.0
    %3987 = vmatpush.xpose.msra.mxu0 0.0
    %3988 = vmatpush.xpose.msra.mxu0 0.0
    %3989 = vmatpush.xpose.msra.mxu0 0.0
    %3990 = vmatpush.xpose.msra.mxu0 %v3973
    %3991 = vmatmul.f32.gmra.mxu0 %v3971
    %v3992 = vpop.f32.mrf.mxu0
    %v3993 = vadd.f32 0.0, %v3992
    %3994 = vdwg.mxu0
    %3995 = vst [vmem:[#allocation1] ss:$4 sm:$0xff] %v3788
    %s3996 = scalar_lea.vmem [#allocation1], 1
    %3997 = vst [vmem:[%s3996] ss:$4 sm:$0xff] %v3790
    %s3998 = scalar_lea.vmem [#allocation1], 2
    %3999 = vst [vmem:[%s3998] ss:$4 sm:$0xff] %v3792
    %v4000 = vld.sshfl [vmem:[#allocation1] sm:$0xff pattern:$0x73625140]
    %4001 = vst [vmem:[#allocation1] ss:$4 sm:$0xff] %v3788
    %s4002 = scalar_lea.vmem [#allocation1], 1
    %4003 = vst [vmem:[%s4002] ss:$4 sm:$0xff] %v3790
    %s4004 = scalar_lea.vmem [#allocation1], 2
    %4005 = vst [vmem:[%s4004] ss:$4 sm:$0xff] %v3792
    %v4006 = vld.sshfl [vmem:[#allocation1] sm:$0xff pattern:$0x73625140]
    %4007 = vrot.lane.b32.xlu0 %v4006, 96
    %v4008 = vpop.permute.xlu0 %4007
    %v4009 = vsel %vm195, %v4000, 0
    %v4011 = vsel %vm195, %v4008, 0
    %4013 = vmatpush.xpose.msra.mxu0 0.0
    %4014 = vmatpush.xpose.msra.mxu0 0.0
    %4015 = vmatpush.xpose.msra.mxu0 0.0
    %4016 = vmatpush.xpose.msra.mxu0 0.0
    %4017 = vmatpush.xpose.msra.mxu0 0.0
    %4018 = vmatpush.xpose.msra.mxu0 0.0
    %4019 = vmatpush.xpose.msra.mxu0 0.0
    %4020 = vmatpush.xpose.msra.mxu0 0.0
    %4021 = vmatpush.xpose.msra.mxu0 0.0
    %4022 = vmatpush.xpose.msra.mxu0 0.0
    %4023 = vmatpush.xpose.msra.mxu0 0.0
    %4024 = vmatpush.xpose.msra.mxu0 0.0
    %4025 = vmatpush.xpose.msra.mxu0 0.0
    %4026 = vmatpush.xpose.msra.mxu0 0.0
    %4027 = vmatpush.xpose.msra.mxu0 0.0
    %4028 = vmatpush.xpose.msra.mxu0 %v4011
    %4029 = vmatmul.f32.gmra.mxu0 %v4009
    %v4030 = vpop.f32.mrf.mxu0
    %v4031 = vadd.f32 0.0, %v4030
    %4032 = vdwg.mxu0
    %4033 = vst [vmem:[#allocation1] ss:$4 sm:$0xff] %v3794
    %s4034 = scalar_lea.vmem [#allocation1], 1
    %4035 = vst [vmem:[%s4034] ss:$4 sm:$0xff] %v3796
    %s4036 = scalar_lea.vmem [#allocation1], 2
    %4037 = vst [vmem:[%s4036] ss:$4 sm:$0xff] %v3798
    %v4038 = vld.sshfl [vmem:[#allocation1] sm:$0xff pattern:$0x73625140]
    %4039 = vst [vmem:[#allocation1] ss:$4 sm:$0xff] %v3794
    %s4040 = scalar_lea.vmem [#allocation1], 1
    %4041 = vst [vmem:[%s4040] ss:$4 sm:$0xff] %v3796
    %s4042 = scalar_lea.vmem [#allocation1], 2
    %4043 = vst [vmem:[%s4042] ss:$4 sm:$0xff] %v3798
    %v4044 = vld.sshfl [vmem:[#allocation1] sm:$0xff pattern:$0x73625140]
    %4045 = vrot.lane.b32.xlu0 %v4044, 96
    %v4046 = vpop.permute.xlu0 %4045
    %v4047 = vsel %vm195, %v4038, 0
    %v4049 = vsel %vm195, %v4046, 0
    %4051 = vmatpush.xpose.msra.mxu0 0.0
    %4052 = vmatpush.xpose.msra.mxu0 0.0
    %4053 = vmatpush.xpose.msra.mxu0 0.0
    %4054 = vmatpush.xpose.msra.mxu0 0.0
    %4055 = vmatpush.xpose.msra.mxu0 0.0
    %4056 = vmatpush.xpose.msra.mxu0 0.0
    %4057 = vmatpush.xpose.msra.mxu0 0.0
    %4058 = vmatpush.xpose.msra.mxu0 0.0
    %4059 = vmatpush.xpose.msra.mxu0 0.0
    %4060 = vmatpush.xpose.msra.mxu0 0.0
    %4061 = vmatpush.xpose.msra.mxu0 0.0
    %4062 = vmatpush.xpose.msra.mxu0 0.0
    %4063 = vmatpush.xpose.msra.mxu0 0.0
    %4064 = vmatpush.xpose.msra.mxu0 0.0
    %4065 = vmatpush.xpose.msra.mxu0 0.0
    %4066 = vmatpush.xpose.msra.mxu0 %v4049
    %4067 = vmatmul.f32.gmra.mxu0 %v4047
    %v4068 = vpop.f32.mrf.mxu0
    %v4069 = vadd.f32 0.0, %v4068
    %4070 = vdwg.mxu0
    %4071 = vst [vmem:[#allocation1] ss:$4 sm:$0xff] %v3800
    %s4072 = scalar_lea.vmem [#allocation1], 1
    %4073 = vst [vmem:[%s4072] ss:$4 sm:$0xff] %v3802
    %s4074 = scalar_lea.vmem [#allocation1], 2
    %4075 = vst [vmem:[%s4074] ss:$4 sm:$0xff] %v3804
    %v4076 = vld.sshfl [vmem:[#allocation1] sm:$0xff pattern:$0x73625140]
    %4077 = vst [vmem:[#allocation1] ss:$4 sm:$0xff] %v3800
    %s4078 = scalar_lea.vmem [#allocation1], 1
    %4079 = vst [vmem:[%s4078] ss:$4 sm:$0xff] %v3802
    %s4080 = scalar_lea.vmem [#allocation1], 2
    %4081 = vst [vmem:[%s4080] ss:$4 sm:$0xff] %v3804
    %v4082 = vld.sshfl [vmem:[#allocation1] sm:$0xff pattern:$0x73625140]
    %4083 = vrot.lane.b32.xlu0 %v4082, 96
    %v4084 = vpop.permute.xlu0 %4083
    %v4085 = vsel %vm195, %v4076, 0
    %v4087 = vsel %vm195, %v4084, 0
    %4089 = vmatpush.xpose.msra.mxu0 0.0
    %4090 = vmatpush.xpose.msra.mxu0 0.0
    %4091 = vmatpush.xpose.msra.mxu0 0.0
    %4092 = vmatpush.xpose.msra.mxu0 0.0
    %4093 = vmatpush.xpose.msra.mxu0 0.0
    %4094 = vmatpush.xpose.msra.mxu0 0.0
    %4095 = vmatpush.xpose.msra.mxu0 0.0
    %4096 = vmatpush.xpose.msra.mxu0 0.0
    %4097 = vmatpush.xpose.msra.mxu0 0.0
    %4098 = vmatpush.xpose.msra.mxu0 0.0
    %4099 = vmatpush.xpose.msra.mxu0 0.0
    %4100 = vmatpush.xpose.msra.mxu0 0.0
    %4101 = vmatpush.xpose.msra.mxu0 0.0
    %4102 = vmatpush.xpose.msra.mxu0 0.0
    %4103 = vmatpush.xpose.msra.mxu0 0.0
    %4104 = vmatpush.xpose.msra.mxu0 %v4087
    %4105 = vmatmul.f32.gmra.mxu0 %v4085
    %v4106 = vpop.f32.mrf.mxu0
    %v4107 = vadd.f32 0.0, %v4106
    %4108 = vdwg.mxu0
    %v4109 = vmul.f32 %v3841, 0.35355338
    %v4110 = vmul.f32 %v3879, 0.35355338
    %v4111 = vmul.f32 %v3917, 0.35355338
    %v4112 = vmul.f32 %v3955, 0.35355338
    %v4113 = vmul.f32 %v3993, 0.35355338
    %v4114 = vmul.f32 %v4031, 0.35355338
    %v4115 = vmul.f32 %v4069, 0.35355338
    %v4116 = vmul.f32 %v4107, 0.35355338
    %v4117 = vadd.f32 %v4109, %v3703
    %v4118 = vadd.f32 %v4110, %v3703
    %v4119 = vadd.f32 %v4111, %v3703
    %v4120 = vadd.f32 %v4112, %v3703
    %v4121 = vadd.f32 %v4113, %v3703
    %v4122 = vadd.f32 %v4114, %v3703
    %v4123 = vadd.f32 %v4115, %v3703
    %v4124 = vadd.f32 %v4116, %v3703
    %vm4125 = vcmask 46080
    %v4126 = vsel %vm4125, %v4117, -inf
    %4127 = vmax.xlane.f32.xlu0 %v4126
    %v4128 = vpop.xlane.xlu0 %4127
    %v4129 = vsel %vm4125, %v4118, -inf
    %4130 = vmax.xlane.f32.xlu0 %v4129
    %v4131 = vpop.xlane.xlu0 %4130
    %v4132 = vsel %vm4125, %v4119, -inf
    %4133 = vmax.xlane.f32.xlu0 %v4132
    %v4134 = vpop.xlane.xlu0 %4133
    %v4135 = vsel %vm4125, %v4120, -inf
    %4136 = vmax.xlane.f32.xlu0 %v4135
    %v4137 = vpop.xlane.xlu0 %4136
    %v4138 = vsel %vm4125, %v4121, -inf
    %4139 = vmax.xlane.f32.xlu0 %v4138
    %v4140 = vpop.xlane.xlu0 %4139
    %v4141 = vsel %vm4125, %v4122, -inf
    %4142 = vmax.xlane.f32.xlu0 %v4141
    %v4143 = vpop.xlane.xlu0 %4142
    %v4144 = vsel %vm4125, %v4123, -inf
    %4145 = vmax.xlane.f32.xlu0 %v4144
    %v4146 = vpop.xlane.xlu0 %4145
    %v4147 = vsel %vm4125, %v4124, -inf
    %4148 = vmax.xlane.f32.xlu0 %v4147
    %v4149 = vpop.xlane.xlu0 %4148
    %v4150 = vsub.f32 %v4117, %v4128
    %v4151 = vsub.f32 %v4118, %v4131
    %v4152 = vsub.f32 %v4119, %v4134
    %v4153 = vsub.f32 %v4120, %v4137
    %v4154 = vsub.f32 %v4121, %v4140
    %v4155 = vsub.f32 %v4122, %v4143
    %v4156 = vsub.f32 %v4123, %v4146
    %v4157 = vsub.f32 %v4124, %v4149
    %v4158 = vmul.f32 %v4150, 1.442695
    %v4159 = vpow.pop %v4158
    %v4160 = vmul.f32 %v4151, 1.442695
    %v4161 = vpow.pop %v4160
    %v4162 = vmul.f32 %v4152, 1.442695
    %v4163 = vpow.pop %v4162
    %v4164 = vmul.f32 %v4153, 1.442695
    %v4165 = vpow.pop %v4164
    %v4166 = vmul.f32 %v4154, 1.442695
    %v4167 = vpow.pop %v4166
    %v4168 = vmul.f32 %v4155, 1.442695
    %v4169 = vpow.pop %v4168
    %v4170 = vmul.f32 %v4156, 1.442695
    %v4171 = vpow.pop %v4170
    %v4172 = vmul.f32 %v4157, 1.442695
    %v4173 = vpow.pop %v4172
    %v4174 = vsel %vm4125, %v4159, 0.0
    %4175 = vadd.xlane.f32.xlu0 %v4174
    %v4176 = vpop.xlane.xlu0 %4175
    %v4177 = vsel %vm4125, %v4161, 0.0
    %4178 = vadd.xlane.f32.xlu0 %v4177
    %v4179 = vpop.xlane.xlu0 %4178
    %v4180 = vsel %vm4125, %v4163, 0.0
    %4181 = vadd.xlane.f32.xlu0 %v4180
    %v4182 = vpop.xlane.xlu0 %4181
    %v4183 = vsel %vm4125, %v4165, 0.0
    %4184 = vadd.xlane.f32.xlu0 %v4183
    %v4185 = vpop.xlane.xlu0 %4184
    %v4186 = vsel %vm4125, %v4167, 0.0
    %4187 = vadd.xlane.f32.xlu0 %v4186
    %v4188 = vpop.xlane.xlu0 %4187
    %v4189 = vsel %vm4125, %v4169, 0.0
    %4190 = vadd.xlane.f32.xlu0 %v4189
    %v4191 = vpop.xlane.xlu0 %4190
    %v4192 = vsel %vm4125, %v4171, 0.0
    %4193 = vadd.xlane.f32.xlu0 %v4192
    %v4194 = vpop.xlane.xlu0 %4193
    %v4195 = vsel %vm4125, %v4173, 0.0
    %4196 = vadd.xlane.f32.xlu0 %v4195
    %v4197 = vpop.xlane.xlu0 %4196
    %4198 = vst [vmem:[#allocation1] ss:$4 sm:$0xff] %v3758
    %s4199 = scalar_lea.vmem [#allocation1], 1
    %4200 = vst [vmem:[%s4199] ss:$4 sm:$0xff] %v3765
    %s4201 = scalar_lea.vmem [#allocation1], 2
    %4202 = vst [vmem:[%s4201] ss:$4 sm:$0xff] %v3766
    %v4203 = vld.sshfl [vmem:[#allocation1] sm:$0xff pattern:$0x73625140]
    %4204 = vrot.lane.b32.xlu0 %v4203, 64
    %v4205 = vpop.permute.xlu0 %4204
    %vm4206 = vcmask 48128
    %v4208 = vsel %vm4206, %v4159, 0
    %vm4210 = vcmask 1045504
    %v4211 = vsel %vm4210, %v4205, 0
    %4213 = vmatpush.msra.mxu0 0.0
    %4214 = vmatpush.msra.mxu0 0.0
    %4215 = vmatpush.msra.mxu0 0.0
    %4216 = vmatpush.msra.mxu0 0.0
    %4217 = vmatpush.msra.mxu0 0.0
    %4218 = vmatpush.msra.mxu0 0.0
    %4219 = vmatpush.msra.mxu0 0.0
    %4220 = vmatpush.msra.mxu0 0.0
    %4221 = vmatpush.msra.mxu0 0.0
    %4222 = vmatpush.msra.mxu0 0.0
    %4223 = vmatpush.msra.mxu0 0.0
    %4224 = vmatpush.msra.mxu0 0.0
    %4225 = vmatpush.msra.mxu0 0.0
    %4226 = vmatpush.msra.mxu0 0.0
    %4227 = vmatpush.msra.mxu0 0.0
    %4228 = vmatpush.msra.mxu0 %v4211
    %4229 = vmatmul.f32.gmra.mxu0 %v4208
    %v4230 = vpop.f32.mrf.mxu0
    %v4231 = vadd.f32 0.0, %v4230
    %4232 = vdwg.mxu0
    %4233 = vst [vmem:[#allocation1] ss:$4 sm:$0xff] %v3767
    %s4234 = scalar_lea.vmem [#allocation1], 1
    %4235 = vst [vmem:[%s4234] ss:$4 sm:$0xff] %v3761
    %s4236 = scalar_lea.vmem [#allocation1], 2
    %4237 = vst [vmem:[%s4236] ss:$4 sm:$0xff] %v3768
    %v4238 = vld.sshfl [vmem:[#allocation1] sm:$0xff pattern:$0x73625140]
    %4239 = vrot.lane.b32.xlu0 %v4238, 64
    %v4240 = vpop.permute.xlu0 %4239
    %v4242 = vsel %vm4206, %v4161, 0
    %v4244 = vsel %vm4210, %v4240, 0
    %4246 = vmatpush.msra.mxu0 0.0
    %4247 = vmatpush.msra.mxu0 0.0
    %4248 = vmatpush.msra.mxu0 0.0
    %4249 = vmatpush.msra.mxu0 0.0
    %4250 = vmatpush.msra.mxu0 0.0
    %4251 = vmatpush.msra.mxu0 0.0
    %4252 = vmatpush.msra.mxu0 0.0
    %4253 = vmatpush.msra.mxu0 0.0
    %4254 = vmatpush.msra.mxu0 0.0
    %4255 = vmatpush.msra.mxu0 0.0
    %4256 = vmatpush.msra.mxu0 0.0
    %4257 = vmatpush.msra.mxu0 0.0
    %4258 = vmatpush.msra.mxu0 0.0
    %4259 = vmatpush.msra.mxu0 0.0
    %4260 = vmatpush.msra.mxu0 0.0
    %4261 = vmatpush.msra.mxu0 %v4244
    %4262 = vmatmul.f32.gmra.mxu0 %v4242
    %v4263 = vpop.f32.mrf.mxu0
    %v4264 = vadd.f32 0.0, %v4263
    %4265 = vdwg.mxu0
    %4266 = vst [vmem:[#allocation1] ss:$4 sm:$0xff] %v3770
    %s4267 = scalar_lea.vmem [#allocation1], 1
    %4268 = vst [vmem:[%s4267] ss:$4 sm:$0xff] %v3772
    %s4269 = scalar_lea.vmem [#allocation1], 2
    %4270 = vst [vmem:[%s4269] ss:$4 sm:$0xff] %v3774
    %v4271 = vld.sshfl [vmem:[#allocation1] sm:$0xff pattern:$0x73625140]
    %4272 = vrot.lane.b32.xlu0 %v4271, 64
    %v4273 = vpop.permute.xlu0 %4272
    %v4275 = vsel %vm4206, %v4163, 0
    %v4277 = vsel %vm4210, %v4273, 0
    %4279 = vmatpush.msra.mxu0 0.0
    %4280 = vmatpush.msra.mxu0 0.0
    %4281 = vmatpush.msra.mxu0 0.0
    %4282 = vmatpush.msra.mxu0 0.0
    %4283 = vmatpush.msra.mxu0 0.0
    %4284 = vmatpush.msra.mxu0 0.0
    %4285 = vmatpush.msra.mxu0 0.0
    %4286 = vmatpush.msra.mxu0 0.0
    %4287 = vmatpush.msra.mxu0 0.0
    %4288 = vmatpush.msra.mxu0 0.0
    %4289 = vmatpush.msra.mxu0 0.0
    %4290 = vmatpush.msra.mxu0 0.0
    %4291 = vmatpush.msra.mxu0 0.0
    %4292 = vmatpush.msra.mxu0 0.0
    %4293 = vmatpush.msra.mxu0 0.0
    %4294 = vmatpush.msra.mxu0 %v4277
    %4295 = vmatmul.f32.gmra.mxu0 %v4275
    %v4296 = vpop.f32.mrf.mxu0
    %v4297 = vadd.f32 0.0, %v4296
    %4298 = vdwg.mxu0
    %4299 = vst [vmem:[#allocation1] ss:$4 sm:$0xff] %v3776
    %s4300 = scalar_lea.vmem [#allocation1], 1
    %4301 = vst [vmem:[%s4300] ss:$4 sm:$0xff] %v3778
    %s4302 = scalar_lea.vmem [#allocation1], 2
    %4303 = vst [vmem:[%s4302] ss:$4 sm:$0xff] %v3780
    %v4304 = vld.sshfl [vmem:[#allocation1] sm:$0xff pattern:$0x73625140]
    %4305 = vrot.lane.b32.xlu0 %v4304, 64
    %v4306 = vpop.permute.xlu0 %4305
    %v4308 = vsel %vm4206, %v4165, 0
    %v4310 = vsel %vm4210, %v4306, 0
    %4312 = vmatpush.msra.mxu0 0.0
    %4313 = vmatpush.msra.mxu0 0.0
    %4314 = vmatpush.msra.mxu0 0.0
    %4315 = vmatpush.msra.mxu0 0.0
    %4316 = vmatpush.msra.mxu0 0.0
    %4317 = vmatpush.msra.mxu0 0.0
    %4318 = vmatpush.msra.mxu0 0.0
    %4319 = vmatpush.msra.mxu0 0.0
    %4320 = vmatpush.msra.mxu0 0.0
    %4321 = vmatpush.msra.mxu0 0.0
    %4322 = vmatpush.msra.mxu0 0.0
    %4323 = vmatpush.msra.mxu0 0.0
    %4324 = vmatpush.msra.mxu0 0.0
    %4325 = vmatpush.msra.mxu0 0.0
    %4326 = vmatpush.msra.mxu0 0.0
    %4327 = vmatpush.msra.mxu0 %v4310
    %4328 = vmatmul.f32.gmra.mxu0 %v4308
    %v4329 = vpop.f32.mrf.mxu0
    %v4330 = vadd.f32 0.0, %v4329
    %4331 = vdwg.mxu0
    %4332 = vst [vmem:[#allocation1] ss:$4 sm:$0xff] %v3782
    %s4333 = scalar_lea.vmem [#allocation1], 1
    %4334 = vst [vmem:[%s4333] ss:$4 sm:$0xff] %v3784
    %s4335 = scalar_lea.vmem [#allocation1], 2
    %4336 = vst [vmem:[%s4335] ss:$4 sm:$0xff] %v3786
    %v4337 = vld.sshfl [vmem:[#allocation1] sm:$0xff pattern:$0x73625140]
    %4338 = vrot.lane.b32.xlu0 %v4337, 64
    %v4339 = vpop.permute.xlu0 %4338
    %v4341 = vsel %vm4206, %v4167, 0
    %v4343 = vsel %vm4210, %v4339, 0
    %4345 = vmatpush.msra.mxu0 0.0
    %4346 = vmatpush.msra.mxu0 0.0
    %4347 = vmatpush.msra.mxu0 0.0
    %4348 = vmatpush.msra.mxu0 0.0
    %4349 = vmatpush.msra.mxu0 0.0
    %4350 = vmatpush.msra.mxu0 0.0
    %4351 = vmatpush.msra.mxu0 0.0
    %4352 = vmatpush.msra.mxu0 0.0
    %4353 = vmatpush.msra.mxu0 0.0
    %4354 = vmatpush.msra.mxu0 0.0
    %4355 = vmatpush.msra.mxu0 0.0
    %4356 = vmatpush.msra.mxu0 0.0
    %4357 = vmatpush.msra.mxu0 0.0
    %4358 = vmatpush.msra.mxu0 0.0
    %4359 = vmatpush.msra.mxu0 0.0
    %4360 = vmatpush.msra.mxu0 %v4343
    %4361 = vmatmul.f32.gmra.mxu0 %v4341
    %v4362 = vpop.f32.mrf.mxu0
    %v4363 = vadd.f32 0.0, %v4362
    %4364 = vdwg.mxu0
    %4365 = vst [vmem:[#allocation1] ss:$4 sm:$0xff] %v3788
    %s4366 = scalar_lea.vmem [#allocation1], 1
    %4367 = vst [vmem:[%s4366] ss:$4 sm:$0xff] %v3790
    %s4368 = scalar_lea.vmem [#allocation1], 2
    %4369 = vst [vmem:[%s4368] ss:$4 sm:$0xff] %v3792
    %v4370 = vld.sshfl [vmem:[#allocation1] sm:$0xff pattern:$0x73625140]
    %4371 = vrot.lane.b32.xlu0 %v4370, 64
    %v4372 = vpop.permute.xlu0 %4371
    %v4374 = vsel %vm4206, %v4169, 0
    %v4376 = vsel %vm4210, %v4372, 0
    %4378 = vmatpush.msra.mxu0 0.0
    %4379 = vmatpush.msra.mxu0 0.0
    %4380 = vmatpush.msra.mxu0 0.0
    %4381 = vmatpush.msra.mxu0 0.0
    %4382 = vmatpush.msra.mxu0 0.0
    %4383 = vmatpush.msra.mxu0 0.0
    %4384 = vmatpush.msra.mxu0 0.0
    %4385 = vmatpush.msra.mxu0 0.0
    %4386 = vmatpush.msra.mxu0 0.0
    %4387 = vmatpush.msra.mxu0 0.0
    %4388 = vmatpush.msra.mxu0 0.0
    %4389 = vmatpush.msra.mxu0 0.0
    %4390 = vmatpush.msra.mxu0 0.0
    %4391 = vmatpush.msra.mxu0 0.0
    %4392 = vmatpush.msra.mxu0 0.0
    %4393 = vmatpush.msra.mxu0 %v4376
    %4394 = vmatmul.f32.gmra.mxu0 %v4374
    %v4395 = vpop.f32.mrf.mxu0
    %v4396 = vadd.f32 0.0, %v4395
    %4397 = vdwg.mxu0
    %4398 = vst [vmem:[#allocation1] ss:$4 sm:$0xff] %v3794
    %s4399 = scalar_lea.vmem [#allocation1], 1
    %4400 = vst [vmem:[%s4399] ss:$4 sm:$0xff] %v3796
    %s4401 = scalar_lea.vmem [#allocation1], 2
    %4402 = vst [vmem:[%s4401] ss:$4 sm:$0xff] %v3798
    %v4403 = vld.sshfl [vmem:[#allocation1] sm:$0xff pattern:$0x73625140]
    %4404 = vrot.lane.b32.xlu0 %v4403, 64
    %v4405 = vpop.permute.xlu0 %4404
    %v4407 = vsel %vm4206, %v4171, 0
    %v4409 = vsel %vm4210, %v4405, 0
    %4411 = vmatpush.msra.mxu0 0.0
    %4412 = vmatpush.msra.mxu0 0.0
    %4413 = vmatpush.msra.mxu0 0.0
    %4414 = vmatpush.msra.mxu0 0.0
    %4415 = vmatpush.msra.mxu0 0.0
    %4416 = vmatpush.msra.mxu0 0.0
    %4417 = vmatpush.msra.mxu0 0.0
    %4418 = vmatpush.msra.mxu0 0.0
    %4419 = vmatpush.msra.mxu0 0.0
    %4420 = vmatpush.msra.mxu0 0.0
    %4421 = vmatpush.msra.mxu0 0.0
    %4422 = vmatpush.msra.mxu0 0.0
    %4423 = vmatpush.msra.mxu0 0.0
    %4424 = vmatpush.msra.mxu0 0.0
    %4425 = vmatpush.msra.mxu0 0.0
    %4426 = vmatpush.msra.mxu0 %v4409
    %4427 = vmatmul.f32.gmra.mxu0 %v4407
    %v4428 = vpop.f32.mrf.mxu0
    %v4429 = vadd.f32 0.0, %v4428
    %4430 = vdwg.mxu0
    %4431 = vst [vmem:[#allocation1] ss:$4 sm:$0xff] %v3800
    %s4432 = scalar_lea.vmem [#allocation1], 1
    %4433 = vst [vmem:[%s4432] ss:$4 sm:$0xff] %v3802
    %s4434 = scalar_lea.vmem [#allocation1], 2
    %4435 = vst [vmem:[%s4434] ss:$4 sm:$0xff] %v3804
    %v4436 = vld.sshfl [vmem:[#allocation1] sm:$0xff pattern:$0x73625140]
    %4437 = vrot.lane.b32.xlu0 %v4436, 64
    %v4438 = vpop.permute.xlu0 %4437
    %v4440 = vsel %vm4206, %v4173, 0
    %v4442 = vsel %vm4210, %v4438, 0
    %4444 = vmatpush.msra.mxu0 0.0
    %4445 = vmatpush.msra.mxu0 0.0
    %4446 = vmatpush.msra.mxu0 0.0
    %4447 = vmatpush.msra.mxu0 0.0
    %4448 = vmatpush.msra.mxu0 0.0
    %4449 = vmatpush.msra.mxu0 0.0
    %4450 = vmatpush.msra.mxu0 0.0
    %4451 = vmatpush.msra.mxu0 0.0
    %4452 = vmatpush.msra.mxu0 0.0
    %4453 = vmatpush.msra.mxu0 0.0
    %4454 = vmatpush.msra.mxu0 0.0
    %4455 = vmatpush.msra.mxu0 0.0
    %4456 = vmatpush.msra.mxu0 0.0
    %4457 = vmatpush.msra.mxu0 0.0
    %4458 = vmatpush.msra.mxu0 0.0
    %4459 = vmatpush.msra.mxu0 %v4442
    %4460 = vmatmul.f32.gmra.mxu0 %v4440
    %v4461 = vpop.f32.mrf.mxu0
    %v4462 = vadd.f32 0.0, %v4461
    %4463 = vdwg.mxu0
    %v4464 = vrcp.pop %v4176
    %v4465 = vrcp.pop %v4179
    %v4466 = vrcp.pop %v4182
    %v4467 = vrcp.pop %v4185
    %v4468 = vrcp.pop %v4188
    %v4469 = vrcp.pop %v4191
    %v4470 = vrcp.pop %v4194
    %v4471 = vrcp.pop %v4197
    %v4472 = vmul.f32 %v4231, %v4464
    %v4473 = vmul.f32 %v4264, %v4465
    %v4474 = vmul.f32 %v4297, %v4466
    %v4475 = vmul.f32 %v4330, %v4467
    %v4476 = vmul.f32 %v4363, %v4468
    %v4477 = vmul.f32 %v4396, %v4469
    %v4478 = vmul.f32 %v4429, %v4470
    %v4479 = vmul.f32 %v4462, %v4471
    %v4482 = vrot.slane %v4472, 2
    %v4483 = vrot.slane %v4472, 4
    %v4484 = vrot.slane %v4473, 2
    %v4485 = vrot.slane %v4473, 4
    %v4488 = vrot.slane %v4474, 2
    %v4489 = vrot.slane %v4474, 4
    %v4490 = vrot.slane %v4475, 2
    %v4491 = vrot.slane %v4475, 4
    %v4494 = vrot.slane %v4476, 2
    %v4495 = vrot.slane %v4476, 4
    %v4496 = vrot.slane %v4477, 2
    %v4497 = vrot.slane %v4477, 4
    %v4500 = vrot.slane %v4478, 2
    %v4501 = vrot.slane %v4478, 4
    %v4502 = vrot.slane %v4479, 2
    %v4503 = vrot.slane %v4479, 4
    %4504 = vst [vmem:[#allocation1] ss:$4 sm:$0xff] %v4472
    %s4505 = scalar_lea.vmem [#allocation1], 1
    %4506 = vst [vmem:[%s4505] ss:$4 sm:$0xff] %v4482
    %s4507 = scalar_lea.vmem [#allocation1], 2
    %4508 = vst [vmem:[%s4507] ss:$4 sm:$0xff] %v4483
    %s4509 = scalar_lea.vmem [#allocation1], 3
    %4510 = vst [vmem:[%s4509] ss:$4 sm:$0xff] %v4473
    %s4511 = scalar_lea.vmem [#allocation1], 32
    %4512 = vst [vmem:[%s4511] ss:$4 sm:$0xff] %v4484
    %s4513 = scalar_lea.vmem [#allocation1], 33
    %4514 = vst [vmem:[%s4513] ss:$4 sm:$0xff] %v4485
    %v4515 = vld.sshfl [vmem:[#allocation1] sm:$0xff pattern:$0x73625140]
    %v4516 = vld.sshfl [vmem:[#allocation1 + $0x20] sm:$0xff pattern:$0x73625140]
    %4519 = vst [vmem:[#allocation1] ss:$4 sm:$0xff] %v4474
    %s4520 = scalar_lea.vmem [#allocation1], 1
    %4521 = vst [vmem:[%s4520] ss:$4 sm:$0xff] %v4488
    %s4522 = scalar_lea.vmem [#allocation1], 2
    %4523 = vst [vmem:[%s4522] ss:$4 sm:$0xff] %v4489
    %s4524 = scalar_lea.vmem [#allocation1], 3
    %4525 = vst [vmem:[%s4524] ss:$4 sm:$0xff] %v4475
    %s4526 = scalar_lea.vmem [#allocation1], 32
    %4527 = vst [vmem:[%s4526] ss:$4 sm:$0xff] %v4490
    %s4528 = scalar_lea.vmem [#allocation1], 33
    %4529 = vst [vmem:[%s4528] ss:$4 sm:$0xff] %v4491
    %v4530 = vld.sshfl [vmem:[#allocation1] sm:$0xff pattern:$0x73625140]
    %v4531 = vld.sshfl [vmem:[#allocation1 + $0x20] sm:$0xff pattern:$0x73625140]
    %4532 = vrot.lane.b32.xlu0 %v4530, 8
    %v4533 = vpop.permute.xlu0 %4532
    %4534 = vrot.lane.b32.xlu0 %v4531, 8
    %v4535 = vpop.permute.xlu0 %4534
    %4538 = vst [vmem:[#allocation1] ss:$4 sm:$0xff] %v4476
    %s4539 = scalar_lea.vmem [#allocation1], 1
    %4540 = vst [vmem:[%s4539] ss:$4 sm:$0xff] %v4494
    %s4541 = scalar_lea.vmem [#allocation1], 2
    %4542 = vst [vmem:[%s4541] ss:$4 sm:$0xff] %v4495
    %s4543 = scalar_lea.vmem [#allocation1], 3
    %4544 = vst [vmem:[%s4543] ss:$4 sm:$0xff] %v4477
    %s4545 = scalar_lea.vmem [#allocation1], 32
    %4546 = vst [vmem:[%s4545] ss:$4 sm:$0xff] %v4496
    %s4547 = scalar_lea.vmem [#allocation1], 33
    %4548 = vst [vmem:[%s4547] ss:$4 sm:$0xff] %v4497
    %v4549 = vld.sshfl [vmem:[#allocation1] sm:$0xff pattern:$0x73625140]
    %v4550 = vld.sshfl [vmem:[#allocation1 + $0x20] sm:$0xff pattern:$0x73625140]
    %4551 = vrot.lane.b32.xlu0 %v4549, 16
    %v4552 = vpop.permute.xlu0 %4551
    %4553 = vrot.lane.b32.xlu0 %v4550, 16
    %v4554 = vpop.permute.xlu0 %4553
    %4557 = vst [vmem:[#allocation1] ss:$4 sm:$0xff] %v4478
    %s4558 = scalar_lea.vmem [#allocation1], 1
    %4559 = vst [vmem:[%s4558] ss:$4 sm:$0xff] %v4500
    %s4560 = scalar_lea.vmem [#allocation1], 2
    %4561 = vst [vmem:[%s4560] ss:$4 sm:$0xff] %v4501
    %s4562 = scalar_lea.vmem [#allocation1], 3
    %4563 = vst [vmem:[%s4562] ss:$4 sm:$0xff] %v4479
    %s4564 = scalar_lea.vmem [#allocation1], 32
    %4565 = vst [vmem:[%s4564] ss:$4 sm:$0xff] %v4502
    %s4566 = scalar_lea.vmem [#allocation1], 33
    %4567 = vst [vmem:[%s4566] ss:$4 sm:$0xff] %v4503
    %v4568 = vld.sshfl [vmem:[#allocation1] sm:$0xff pattern:$0x73625140]
    %v4569 = vld.sshfl [vmem:[#allocation1 + $0x20] sm:$0xff pattern:$0x73625140]
    %4570 = vrot.lane.b32.xlu0 %v4568, 24
    %v4571 = vpop.permute.xlu0 %4570
    %4572 = vrot.lane.b32.xlu0 %v4569, 24
    %v4573 = vpop.permute.xlu0 %4572
    %v4576 = vsel %vm195, %v4515, %v4533
    %v4577 = vsel %vm195, %v4516, %v4535
    %v4578 = vsel %vm1075, %v4576, %v4552
    %v4579 = vsel %vm1075, %v4577, %v4554
    %v4580 = vsel %vm1078, %v4578, %v4571
    %v4581 = vsel %vm1078, %v4579, %v4573
    %v4582 = vld [vmem:[#allocation2 + $0x170] sm:$0xff]
    %v4583 = vld [vmem:[#allocation2 + $0x178] sm:$0xff]
    %v4584 = vld [vmem:[#allocation2 + $0x180] sm:$0xff]
    %v4585 = vld [vmem:[#allocation2 + $0x188] sm:$0xff]
    %v4586 = vperm.slane %v3716, 1
    %v4588 = vsel %vm75, %v4580, 0
    %v4591 = vsel %vm75, %v4581, 0
    %4593 = vmatpush.msra.mxu0 0.0
    %4594 = vmatpush.msra.mxu0 0.0
    %4595 = vmatpush.msra.mxu0 0.0
    %4596 = vmatpush.msra.mxu0 0.0
    %4597 = vmatpush.msra.mxu0 0.0
    %4598 = vmatpush.msra.mxu0 0.0
    %4599 = vmatpush.msra.mxu0 0.0
    %4600 = vmatpush.msra.mxu0 0.0
    %4601 = vmatpush.msra.mxu0 0.0
    %4602 = vmatpush.msra.mxu0 0.0
    %4603 = vmatpush.msra.mxu0 0.0
    %4604 = vmatpush.msra.mxu0 0.0
    %4605 = vmatpush.msra.mxu0 %v4585
    %4606 = vmatpush.msra.mxu0 %v4584
    %4607 = vmatpush.msra.mxu0 %v4583
    %4608 = vmatpush.msra.mxu0 %v4582
    %4609 = vmatmul.f32.gmra.mxu0 %v4588
    %v4610 = vpop.f32.mrf.mxu0
    %v4611 = vadd.f32 %v4586, %v4610
    %4612 = vmatmul.f32.gmra.mxu0 %v4591
    %v4613 = vpop.f32.mrf.mxu0
    %v4614 = vadd.f32 %v4586, %v4613
    %4615 = vdwg.mxu0
    %v4618 = vrot.slane %v4611, 2
    %v4619 = vrot.slane %v4611, 4
    %v4620 = vrot.slane %v4611, 6
    %v4621 = vrot.slane %v4614, 2
    %v4626 = vadd.f32 %v3704, %v4611
    %v4627 = vadd.f32 %v3708, %v4618
    %v4628 = vadd.f32 %v3709, %v4619
    %v4629 = vadd.f32 %v3705, %v4620
    %v4630 = vadd.f32 %v3710, %v4614
    %v4631 = vadd.f32 %v3711, %v4621
    %4638 = vst [vmem:[#allocation1] ss:$4 sm:$0xff] %v4626
    %s4639 = scalar_lea.vmem [#allocation1], 1
    %4640 = vst [vmem:[%s4639] ss:$4 sm:$0xff] %v4627
    %s4641 = scalar_lea.vmem [#allocation1], 2
    %4642 = vst [vmem:[%s4641] ss:$4 sm:$0xff] %v4628
    %s4643 = scalar_lea.vmem [#allocation1], 3
    %4644 = vst [vmem:[%s4643] ss:$4 sm:$0xff] %v4629
    %s4645 = scalar_lea.vmem [#allocation1], 32
    %4646 = vst [vmem:[%s4645] ss:$4 sm:$0xff] %v4630
    %s4647 = scalar_lea.vmem [#allocation1], 33
    %4648 = vst [vmem:[%s4647] ss:$4 sm:$0xff] %v4631
    %v4649 = vld.sshfl [vmem:[#allocation1] sm:$0xff pattern:$0x73625140]
    %v4650 = vld.sshfl [vmem:[#allocation1 + $0x20] sm:$0xff pattern:$0x73625140]
    %v4653 = vsel %vm75, %v4649, 0.0
    %4654 = vadd.xlane.f32.xlu0 %v4653
    %v4655 = vpop.xlane.xlu0 %4654
    %vm4656 = vcmask 257024
    %v4657 = vsel %vm4656, %v4650, 0.0
    %4658 = vadd.xlane.f32.xlu0 %v4657
    %v4659 = vpop.xlane.xlu0 %4658
    %v4660 = vmul.f32 %v4655, %v1187
    %v4661 = vmul.f32 %v4659, %v1187
    %v4665 = vunpack.c.l.s4 269488144
    %v4666 = vunpack.c.0.s8 %v4665
    %v4667 = vperm.slane %v4660, %v4666
    %v4669 = vunpack.c.l.s4 842150450
    %v4670 = vunpack.c.0.s8 %v4669
    %v4671 = vperm.slane %v4660, %v4670
    %v4673 = vunpack.c.l.s4 1414812756
    %v4674 = vunpack.c.0.s8 %v4673
    %v4675 = vperm.slane %v4660, %v4674
    %v4677 = vunpack.c.l.s4 1987475062
    %v4678 = vunpack.c.0.s8 %v4677
    %v4679 = vperm.slane %v4660, %v4678
    %v4681 = vunpack.c.l.s4 269488144
    %v4682 = vunpack.c.0.s8 %v4681
    %v4683 = vperm.slane %v4661, %v4682
    %v4685 = vunpack.c.l.s4 842150450
    %v4686 = vunpack.c.0.s8 %v4685
    %v4687 = vperm.slane %v4661, %v4686
    %v4694 = vsub.f32 %v4626, %v4667
    %v4695 = vsub.f32 %v4627, %v4671
    %v4696 = vsub.f32 %v4628, %v4675
    %v4697 = vsub.f32 %v4629, %v4679
    %v4698 = vsub.f32 %v4630, %v4683
    %v4699 = vsub.f32 %v4631, %v4687
    %v4700 = vmul.f32 %v4694, %v4694
    %v4701 = vmul.f32 %v4695, %v4695
    %v4702 = vmul.f32 %v4696, %v4696
    %v4703 = vmul.f32 %v4697, %v4697
    %v4704 = vmul.f32 %v4698, %v4698
    %v4705 = vmul.f32 %v4699, %v4699
    %4712 = vst [vmem:[#allocation1] ss:$4 sm:$0xff] %v4700
    %s4713 = scalar_lea.vmem [#allocation1], 1
    %4714 = vst [vmem:[%s4713] ss:$4 sm:$0xff] %v4701
    %s4715 = scalar_lea.vmem [#allocation1], 2
    %4716 = vst [vmem:[%s4715] ss:$4 sm:$0xff] %v4702
    %s4717 = scalar_lea.vmem [#allocation1], 3
    %4718 = vst [vmem:[%s4717] ss:$4 sm:$0xff] %v4703
    %s4719 = scalar_lea.vmem [#allocation1], 32
    %4720 = vst [vmem:[%s4719] ss:$4 sm:$0xff] %v4704
    %s4721 = scalar_lea.vmem [#allocation1], 33
    %4722 = vst [vmem:[%s4721] ss:$4 sm:$0xff] %v4705
    %v4723 = vld.sshfl [vmem:[#allocation1] sm:$0xff pattern:$0x73625140]
    %v4724 = vld.sshfl [vmem:[#allocation1 + $0x20] sm:$0xff pattern:$0x73625140]
    %v4727 = vsel %vm75, %v4723, 0.0
    %4728 = vadd.xlane.f32.xlu0 %v4727
    %v4729 = vpop.xlane.xlu0 %4728
    %v4730 = vsel %vm4656, %v4724, 0.0
    %4731 = vadd.xlane.f32.xlu0 %v4730
    %v4732 = vpop.xlane.xlu0 %4731
    %v4733 = vmul.f32 %v4729, %v1187
    %v4734 = vmul.f32 %v4732, %v1187
    %v4735 = vadd.f32 %v4733, 1e-05
    %v4736 = vadd.f32 %v4734, 1e-05
    %v4737 = vrsqrt.pop %v4735
    %v4738 = vmul.f32 %v4737, %v4735
    %v4739 = vmul.f32 %v4738, %v4737
    %v4740 = vmul.f32 0.5, %v4739
    %v4741 = vsub.f32 1.5, %v4740
    %v4742 = vmul.f32 %v4737, %v4741
    %vm4743 = vweird.f32 %v4735
    %vm4744 = vweird.f32 %v4737
    %vm4745 = vmor %vm4743, %vm4744
    %v4746 = vsel %vm4745, %v4737, %v4742
    %v4747 = vrsqrt.pop %v4736
    %v4748 = vmul.f32 %v4747, %v4736
    %v4749 = vmul.f32 %v4748, %v4747
    %v4750 = vmul.f32 0.5, %v4749
    %v4751 = vsub.f32 1.5, %v4750
    %v4752 = vmul.f32 %v4747, %v4751
    %vm4753 = vweird.f32 %v4736
    %vm4754 = vweird.f32 %v4747
    %vm4755 = vmor %vm4753, %vm4754
    %v4756 = vsel %vm4755, %v4747, %v4752
    %v4760 = vunpack.c.l.s4 269488144
    %v4761 = vunpack.c.0.s8 %v4760
    %v4762 = vperm.slane %v4746, %v4761
    %v4764 = vunpack.c.l.s4 842150450
    %v4765 = vunpack.c.0.s8 %v4764
    %v4766 = vperm.slane %v4746, %v4765
    %v4768 = vunpack.c.l.s4 1414812756
    %v4769 = vunpack.c.0.s8 %v4768
    %v4770 = vperm.slane %v4746, %v4769
    %v4772 = vunpack.c.l.s4 1987475062
    %v4773 = vunpack.c.0.s8 %v4772
    %v4774 = vperm.slane %v4746, %v4773
    %v4776 = vunpack.c.l.s4 269488144
    %v4777 = vunpack.c.0.s8 %v4776
    %v4778 = vperm.slane %v4756, %v4777
    %v4780 = vunpack.c.l.s4 842150450
    %v4781 = vunpack.c.0.s8 %v4780
    %v4782 = vperm.slane %v4756, %v4781
    %v4789 = vmul.f32 %v4694, %v4762
    %v4790 = vmul.f32 %v4695, %v4766
    %v4791 = vmul.f32 %v4696, %v4770
    %v4792 = vmul.f32 %v4697, %v4774
    %v4793 = vmul.f32 %v4698, %v4778
    %v4794 = vmul.f32 %v4699, %v4782
    %v4795 = vperm.slane %v3716, 6
    %v4797 = vrot.slane %v4795, 2
    %v4798 = vrot.slane %v4795, 4
    %v4799 = vrot.slane %v4795, 6
    %v4803 = vmul.f32 %v4789, %v4795
    %v4804 = vmul.f32 %v4790, %v4797
    %v4805 = vmul.f32 %v4791, %v4798
    %v4806 = vmul.f32 %v4792, %v4799
    %v4807 = vmul.f32 %v4793, %v4795
    %v4808 = vmul.f32 %v4794, %v4797
    %v4809 = vperm.slane %v3716, 7
    %v4811 = vrot.slane %v4809, 2
    %v4812 = vrot.slane %v4809, 4
    %v4813 = vrot.slane %v4809, 6
    %v4817 = vadd.f32 %v4803, %v4809
    %v4818 = vadd.f32 %v4804, %v4811
    %v4819 = vadd.f32 %v4805, %v4812
    %v4820 = vadd.f32 %v4806, %v4813
    %v4821 = vadd.f32 %v4807, %v4809
    %v4822 = vadd.f32 %v4808, %v4811
    %v4823 = vld [vmem:[#allocation2 + $0x190] sm:$0xff]
    %v4824 = vld [vmem:[#allocation2 + $0x198] sm:$0xff]
    %v4825 = vld [vmem:[#allocation2 + $0x1a0] sm:$0xff]
    %v4826 = vld [vmem:[#allocation2 + $0x1a8] sm:$0xff]
    %v4827 = vperm.slane %v3716, 2
    %4834 = vst [vmem:[#allocation1] ss:$4 sm:$0xff] %v4817
    %s4835 = scalar_lea.vmem [#allocation1], 1
    %4836 = vst [vmem:[%s4835] ss:$4 sm:$0xff] %v4818
    %s4837 = scalar_lea.vmem [#allocation1], 2
    %4838 = vst [vmem:[%s4837] ss:$4 sm:$0xff] %v4819
    %s4839 = scalar_lea.vmem [#allocation1], 3
    %4840 = vst [vmem:[%s4839] ss:$4 sm:$0xff] %v4820
    %s4841 = scalar_lea.vmem [#allocation1], 32
    %4842 = vst [vmem:[%s4841] ss:$4 sm:$0xff] %v4821
    %s4843 = scalar_lea.vmem [#allocation1], 33
    %4844 = vst [vmem:[%s4843] ss:$4 sm:$0xff] %v4822
    %v4845 = vld.sshfl [vmem:[#allocation1] sm:$0xff pattern:$0x73625140]
    %v4846 = vld.sshfl [vmem:[#allocation1 + $0x20] sm:$0xff pattern:$0x73625140]
    %v4847 = vsel %vm75, %v4845, 0
    %v4849 = vsel %vm75, %v4846, 0
    %4851 = vmatpush.msra.mxu0 0.0
    %4852 = vmatpush.msra.mxu0 0.0
    %4853 = vmatpush.msra.mxu0 0.0
    %4854 = vmatpush.msra.mxu0 0.0
    %4855 = vmatpush.msra.mxu0 0.0
    %4856 = vmatpush.msra.mxu0 0.0
    %4857 = vmatpush.msra.mxu0 0.0
    %4858 = vmatpush.msra.mxu0 0.0
    %4859 = vmatpush.msra.mxu0 0.0
    %4860 = vmatpush.msra.mxu0 0.0
    %4861 = vmatpush.msra.mxu0 0.0
    %4862 = vmatpush.msra.mxu0 0.0
    %4863 = vmatpush.msra.mxu0 %v4826
    %4864 = vmatpush.msra.mxu0 %v4825
    %4865 = vmatpush.msra.mxu0 %v4824
    %4866 = vmatpush.msra.mxu0 %v4823
    %4867 = vmatmul.f32.gmra.mxu0 %v4847
    %v4868 = vpop.f32.mrf.mxu0
    %v4869 = vadd.f32 %v4827, %v4868
    %4870 = vmatmul.f32.gmra.mxu0 %v4849
    %v4871 = vpop.f32.mrf.mxu0
    %v4872 = vadd.f32 %v4827, %v4871
    %4873 = vdwg.mxu0
    %v4876 = vrot.slane %v4869, 2
    %v4877 = vrot.slane %v4869, 4
    %v4878 = vrot.slane %v4869, 6
    %v4879 = vrot.slane %v4872, 2
    %4880 = vrot.lane.b32.xlu0 %v4869, 120
    %v4881 = vpop.permute.xlu0 %4880
    %4882 = vrot.lane.b32.xlu0 %v4876, 120
    %v4883 = vpop.permute.xlu0 %4882
    %4884 = vrot.lane.b32.xlu0 %v4877, 120
    %v4885 = vpop.permute.xlu0 %4884
    %4886 = vrot.lane.b32.xlu0 %v4878, 120
    %v4887 = vpop.permute.xlu0 %4886
    %4888 = vrot.lane.b32.xlu0 %v4872, 120
    %v4889 = vpop.permute.xlu0 %4888
    %4890 = vrot.lane.b32.xlu0 %v4879, 120
    %v4891 = vpop.permute.xlu0 %4890
    %4892 = vrot.lane.b32.xlu0 %v4869, 112
    %v4893 = vpop.permute.xlu0 %4892
    %4894 = vrot.lane.b32.xlu0 %v4876, 112
    %v4895 = vpop.permute.xlu0 %4894
    %4896 = vrot.lane.b32.xlu0 %v4877, 112
    %v4897 = vpop.permute.xlu0 %4896
    %4898 = vrot.lane.b32.xlu0 %v4878, 112
    %v4899 = vpop.permute.xlu0 %4898
    %4900 = vrot.lane.b32.xlu0 %v4872, 112
    %v4901 = vpop.permute.xlu0 %4900
    %4902 = vrot.lane.b32.xlu0 %v4879, 112
    %v4903 = vpop.permute.xlu0 %4902
    %4904 = vrot.lane.b32.xlu0 %v4869, 104
    %v4905 = vpop.permute.xlu0 %4904
    %4906 = vrot.lane.b32.xlu0 %v4876, 104
    %v4907 = vpop.permute.xlu0 %4906
    %4908 = vrot.lane.b32.xlu0 %v4877, 104
    %v4909 = vpop.permute.xlu0 %4908
    %4910 = vrot.lane.b32.xlu0 %v4878, 104
    %v4911 = vpop.permute.xlu0 %4910
    %4912 = vrot.lane.b32.xlu0 %v4872, 104
    %v4913 = vpop.permute.xlu0 %4912
    %4914 = vrot.lane.b32.xlu0 %v4879, 104
    %v4915 = vpop.permute.xlu0 %4914
    %v4918 = vrot.slane %v3693, 1
    %v4919 = vrot.slane %v3693, 2
    %v4920 = vrot.slane %v3693, 3
    %v4921 = vrot.slane %v3693, 4
    %v4922 = vrot.slane %v3693, 5
    %v4923 = vrot.slane %v3693, 6
    %v4924 = vrot.slane %v3693, 7
    %v4925 = vrot.slane %v3696, 1
    %4926 = vrot.lane.b32.xlu0 %v3693, 120
    %v4927 = vpop.permute.xlu0 %4926
    %4928 = vrot.lane.b32.xlu0 %v4918, 120
    %v4929 = vpop.permute.xlu0 %4928
    %4930 = vrot.lane.b32.xlu0 %v4919, 120
    %v4931 = vpop.permute.xlu0 %4930
    %4932 = vrot.lane.b32.xlu0 %v4920, 120
    %v4933 = vpop.permute.xlu0 %4932
    %4934 = vrot.lane.b32.xlu0 %v4921, 120
    %v4935 = vpop.permute.xlu0 %4934
    %4936 = vrot.lane.b32.xlu0 %v4922, 120
    %v4937 = vpop.permute.xlu0 %4936
    %4938 = vrot.lane.b32.xlu0 %v4923, 120
    %v4939 = vpop.permute.xlu0 %4938
    %4940 = vrot.lane.b32.xlu0 %v4924, 120
    %v4941 = vpop.permute.xlu0 %4940
    %4942 = vrot.lane.b32.xlu0 %v3696, 120
    %v4943 = vpop.permute.xlu0 %4942
    %4944 = vrot.lane.b32.xlu0 %v4925, 120
    %v4945 = vpop.permute.xlu0 %4944
    %4946 = vrot.lane.b32.xlu0 %v3693, 112
    %v4947 = vpop.permute.xlu0 %4946
    %4948 = vrot.lane.b32.xlu0 %v4918, 112
    %v4949 = vpop.permute.xlu0 %4948
    %4950 = vrot.lane.b32.xlu0 %v4919, 112
    %v4951 = vpop.permute.xlu0 %4950
    %4952 = vrot.lane.b32.xlu0 %v4920, 112
    %v4953 = vpop.permute.xlu0 %4952
    %4954 = vrot.lane.b32.xlu0 %v4921, 112
    %v4955 = vpop.permute.xlu0 %4954
    %4956 = vrot.lane.b32.xlu0 %v4922, 112
    %v4957 = vpop.permute.xlu0 %4956
    %4958 = vrot.lane.b32.xlu0 %v4923, 112
    %v4959 = vpop.permute.xlu0 %4958
    %4960 = vrot.lane.b32.xlu0 %v4924, 112
    %v4961 = vpop.permute.xlu0 %4960
    %4962 = vrot.lane.b32.xlu0 %v3696, 112
    %v4963 = vpop.permute.xlu0 %4962
    %4964 = vrot.lane.b32.xlu0 %v4925, 112
    %v4965 = vpop.permute.xlu0 %4964
    %4966 = vrot.lane.b32.xlu0 %v3693, 104
    %v4967 = vpop.permute.xlu0 %4966
    %4968 = vrot.lane.b32.xlu0 %v4918, 104
    %v4969 = vpop.permute.xlu0 %4968
    %4970 = vrot.lane.b32.xlu0 %v4919, 104
    %v4971 = vpop.permute.xlu0 %4970
    %4972 = vrot.lane.b32.xlu0 %v4920, 104
    %v4973 = vpop.permute.xlu0 %4972
    %4974 = vrot.lane.b32.xlu0 %v4921, 104
    %v4975 = vpop.permute.xlu0 %4974
    %4976 = vrot.lane.b32.xlu0 %v4922, 104
    %v4977 = vpop.permute.xlu0 %4976
    %4978 = vrot.lane.b32.xlu0 %v4923, 104
    %v4979 = vpop.permute.xlu0 %4978
    %4980 = vrot.lane.b32.xlu0 %v4924, 104
    %v4981 = vpop.permute.xlu0 %4980
    %4982 = vrot.lane.b32.xlu0 %v3696, 104
    %v4983 = vpop.permute.xlu0 %4982
    %4984 = vrot.lane.b32.xlu0 %v4925, 104
    %v4985 = vpop.permute.xlu0 %4984
    %4986 = vst [vmem:[#allocation1] ss:$4 sm:$0xff] %v4869
    %s4987 = scalar_lea.vmem [#allocation1], 1
    %4988 = vst [vmem:[%s4987] ss:$4 sm:$0xff] %v4876
    %s4989 = scalar_lea.vmem [#allocation1], 2
    %4990 = vst [vmem:[%s4989] ss:$4 sm:$0xff] %v4877
    %v4991 = vld.sshfl [vmem:[#allocation1] sm:$0xff pattern:$0x73625140]
    %4992 = vst [vmem:[#allocation1] ss:$9 sm:$0xff] %v3693
    %s4993 = scalar_lea.vmem [#allocation1], 1
    %4994 = vst [vmem:[%s4993] ss:$9 sm:$0xff] %v4918
    %s4995 = scalar_lea.vmem [#allocation1], 2
    %4996 = vst [vmem:[%s4995] ss:$9 sm:$0xff] %v4919
    %s4997 = scalar_lea.vmem [#allocation1], 3
    %4998 = vst [vmem:[%s4997] ss:$9 sm:$0xff] %v4920
    %s4999 = scalar_lea.vmem [#allocation1], 4
    %5000 = vst [vmem:[%s4999] ss:$9 sm:$0xff] %v4921
    %v5001 = vld [vmem:[#allocation1] sm:$0xff]
    %v5002 = vsel %vm195, %v4991, 0
    %v5004 = vsel %vm195, %v5001, 0
    %5006 = vmatpush.xpose.msra.mxu0 0.0
    %5007 = vmatpush.xpose.msra.mxu0 0.0
    %5008 = vmatpush.xpose.msra.mxu0 0.0
    %5009 = vmatpush.xpose.msra.mxu0 0.0
    %5010 = vmatpush.xpose.msra.mxu0 0.0
    %5011 = vmatpush.xpose.msra.mxu0 0.0
    %5012 = vmatpush.xpose.msra.mxu0 0.0
    %5013 = vmatpush.xpose.msra.mxu0 0.0
    %5014 = vmatpush.xpose.msra.mxu0 0.0
    %5015 = vmatpush.xpose.msra.mxu0 0.0
    %5016 = vmatpush.xpose.msra.mxu0 0.0
    %5017 = vmatpush.xpose.msra.mxu0 0.0
    %5018 = vmatpush.xpose.msra.mxu0 0.0
    %5019 = vmatpush.xpose.msra.mxu0 0.0
    %5020 = vmatpush.xpose.msra.mxu0 0.0
    %5021 = vmatpush.xpose.msra.mxu0 %v5004
    %5022 = vmatmul.f32.gmra.mxu0 %v5002
    %v5023 = vpop.f32.mrf.mxu0
    %v5024 = vadd.f32 0.0, %v5023
    %5025 = vdwg.mxu0
    %5026 = vst [vmem:[#allocation1] ss:$4 sm:$0xff] %v4878
    %s5027 = scalar_lea.vmem [#allocation1], 1
    %5028 = vst [vmem:[%s5027] ss:$4 sm:$0xff] %v4872
    %s5029 = scalar_lea.vmem [#allocation1], 2
    %5030 = vst [vmem:[%s5029] ss:$4 sm:$0xff] %v4879
    %v5031 = vld.sshfl [vmem:[#allocation1] sm:$0xff pattern:$0x73625140]
    %5032 = vst [vmem:[#allocation1] ss:$9 sm:$0xff] %v4922
    %s5033 = scalar_lea.vmem [#allocation1], 1
    %5034 = vst [vmem:[%s5033] ss:$9 sm:$0xff] %v4923
    %s5035 = scalar_lea.vmem [#allocation1], 2
    %5036 = vst [vmem:[%s5035] ss:$9 sm:$0xff] %v4924
    %s5037 = scalar_lea.vmem [#allocation1], 3
    %5038 = vst [vmem:[%s5037] ss:$9 sm:$0xff] %v3696
    %s5039 = scalar_lea.vmem [#allocation1], 4
    %5040 = vst [vmem:[%s5039] ss:$9 sm:$0xff] %v4925
    %v5041 = vld [vmem:[#allocation1] sm:$0xff]
    %v5042 = vsel %vm195, %v5031, 0
    %v5044 = vsel %vm195, %v5041, 0
    %5046 = vmatpush.xpose.msra.mxu0 0.0
    %5047 = vmatpush.xpose.msra.mxu0 0.0
    %5048 = vmatpush.xpose.msra.mxu0 0.0
    %5049 = vmatpush.xpose.msra.mxu0 0.0
    %5050 = vmatpush.xpose.msra.mxu0 0.0
    %5051 = vmatpush.xpose.msra.mxu0 0.0
    %5052 = vmatpush.xpose.msra.mxu0 0.0
    %5053 = vmatpush.xpose.msra.mxu0 0.0
    %5054 = vmatpush.xpose.msra.mxu0 0.0
    %5055 = vmatpush.xpose.msra.mxu0 0.0
    %5056 = vmatpush.xpose.msra.mxu0 0.0
    %5057 = vmatpush.xpose.msra.mxu0 0.0
    %5058 = vmatpush.xpose.msra.mxu0 0.0
    %5059 = vmatpush.xpose.msra.mxu0 0.0
    %5060 = vmatpush.xpose.msra.mxu0 0.0
    %5061 = vmatpush.xpose.msra.mxu0 %v5044
    %5062 = vmatmul.f32.gmra.mxu0 %v5042
    %v5063 = vpop.f32.mrf.mxu0
    %v5064 = vadd.f32 0.0, %v5063
    %5065 = vdwg.mxu0
    %5066 = vst [vmem:[#allocation1] ss:$4 sm:$0xff] %v4881
    %s5067 = scalar_lea.vmem [#allocation1], 1
    %5068 = vst [vmem:[%s5067] ss:$4 sm:$0xff] %v4883
    %s5069 = scalar_lea.vmem [#allocation1], 2
    %5070 = vst [vmem:[%s5069] ss:$4 sm:$0xff] %v4885
    %v5071 = vld.sshfl [vmem:[#allocation1] sm:$0xff pattern:$0x73625140]
    %5072 = vst [vmem:[#allocation1] ss:$9 sm:$0xff] %v4927
    %s5073 = scalar_lea.vmem [#allocation1], 1
    %5074 = vst [vmem:[%s5073] ss:$9 sm:$0xff] %v4929
    %s5075 = scalar_lea.vmem [#allocation1], 2
    %5076 = vst [vmem:[%s5075] ss:$9 sm:$0xff] %v4931
    %s5077 = scalar_lea.vmem [#allocation1], 3
    %5078 = vst [vmem:[%s5077] ss:$9 sm:$0xff] %v4933
    %s5079 = scalar_lea.vmem [#allocation1], 4
    %5080 = vst [vmem:[%s5079] ss:$9 sm:$0xff] %v4935
    %v5081 = vld [vmem:[#allocation1] sm:$0xff]
    %v5082 = vsel %vm195, %v5071, 0
    %v5084 = vsel %vm195, %v5081, 0
    %5086 = vmatpush.xpose.msra.mxu0 0.0
    %5087 = vmatpush.xpose.msra.mxu0 0.0
    %5088 = vmatpush.xpose.msra.mxu0 0.0
    %5089 = vmatpush.xpose.msra.mxu0 0.0
    %5090 = vmatpush.xpose.msra.mxu0 0.0
    %5091 = vmatpush.xpose.msra.mxu0 0.0
    %5092 = vmatpush.xpose.msra.mxu0 0.0
    %5093 = vmatpush.xpose.msra.mxu0 0.0
    %5094 = vmatpush.xpose.msra.mxu0 0.0
    %5095 = vmatpush.xpose.msra.mxu0 0.0
    %5096 = vmatpush.xpose.msra.mxu0 0.0
    %5097 = vmatpush.xpose.msra.mxu0 0.0
    %5098 = vmatpush.xpose.msra.mxu0 0.0
    %5099 = vmatpush.xpose.msra.mxu0 0.0
    %5100 = vmatpush.xpose.msra.mxu0 0.0
    %5101 = vmatpush.xpose.msra.mxu0 %v5084
    %5102 = vmatmul.f32.gmra.mxu0 %v5082
    %v5103 = vpop.f32.mrf.mxu0
    %v5104 = vadd.f32 0.0, %v5103
    %5105 = vdwg.mxu0
    %5106 = vst [vmem:[#allocation1] ss:$4 sm:$0xff] %v4887
    %s5107 = scalar_lea.vmem [#allocation1], 1
    %5108 = vst [vmem:[%s5107] ss:$4 sm:$0xff] %v4889
    %s5109 = scalar_lea.vmem [#allocation1], 2
    %5110 = vst [vmem:[%s5109] ss:$4 sm:$0xff] %v4891
    %v5111 = vld.sshfl [vmem:[#allocation1] sm:$0xff pattern:$0x73625140]
    %5112 = vst [vmem:[#allocation1] ss:$9 sm:$0xff] %v4937
    %s5113 = scalar_lea.vmem [#allocation1], 1
    %5114 = vst [vmem:[%s5113] ss:$9 sm:$0xff] %v4939
    %s5115 = scalar_lea.vmem [#allocation1], 2
    %5116 = vst [vmem:[%s5115] ss:$9 sm:$0xff] %v4941
    %s5117 = scalar_lea.vmem [#allocation1], 3
    %5118 = vst [vmem:[%s5117] ss:$9 sm:$0xff] %v4943
    %s5119 = scalar_lea.vmem [#allocation1], 4
    %5120 = vst [vmem:[%s5119] ss:$9 sm:$0xff] %v4945
    %v5121 = vld [vmem:[#allocation1] sm:$0xff]
    %v5122 = vsel %vm195, %v5111, 0
    %v5124 = vsel %vm195, %v5121, 0
    %5126 = vmatpush.xpose.msra.mxu0 0.0
    %5127 = vmatpush.xpose.msra.mxu0 0.0
    %5128 = vmatpush.xpose.msra.mxu0 0.0
    %5129 = vmatpush.xpose.msra.mxu0 0.0
    %5130 = vmatpush.xpose.msra.mxu0 0.0
    %5131 = vmatpush.xpose.msra.mxu0 0.0
    %5132 = vmatpush.xpose.msra.mxu0 0.0
    %5133 = vmatpush.xpose.msra.mxu0 0.0
    %5134 = vmatpush.xpose.msra.mxu0 0.0
    %5135 = vmatpush.xpose.msra.mxu0 0.0
    %5136 = vmatpush.xpose.msra.mxu0 0.0
    %5137 = vmatpush.xpose.msra.mxu0 0.0
    %5138 = vmatpush.xpose.msra.mxu0 0.0
    %5139 = vmatpush.xpose.msra.mxu0 0.0
    %5140 = vmatpush.xpose.msra.mxu0 0.0
    %5141 = vmatpush.xpose.msra.mxu0 %v5124
    %5142 = vmatmul.f32.gmra.mxu0 %v5122
    %v5143 = vpop.f32.mrf.mxu0
    %v5144 = vadd.f32 0.0, %v5143
    %5145 = vdwg.mxu0
    %5146 = vst [vmem:[#allocation1] ss:$4 sm:$0xff] %v4893
    %s5147 = scalar_lea.vmem [#allocation1], 1
    %5148 = vst [vmem:[%s5147] ss:$4 sm:$0xff] %v4895
    %s5149 = scalar_lea.vmem [#allocation1], 2
    %5150 = vst [vmem:[%s5149] ss:$4 sm:$0xff] %v4897
    %v5151 = vld.sshfl [vmem:[#allocation1] sm:$0xff pattern:$0x73625140]
    %5152 = vst [vmem:[#allocation1] ss:$9 sm:$0xff] %v4947
    %s5153 = scalar_lea.vmem [#allocation1], 1
    %5154 = vst [vmem:[%s5153] ss:$9 sm:$0xff] %v4949
    %s5155 = scalar_lea.vmem [#allocation1], 2
    %5156 = vst [vmem:[%s5155] ss:$9 sm:$0xff] %v4951
    %s5157 = scalar_lea.vmem [#allocation1], 3
    %5158 = vst [vmem:[%s5157] ss:$9 sm:$0xff] %v4953
    %s5159 = scalar_lea.vmem [#allocation1], 4
    %5160 = vst [vmem:[%s5159] ss:$9 sm:$0xff] %v4955
    %v5161 = vld [vmem:[#allocation1] sm:$0xff]
    %v5162 = vsel %vm195, %v5151, 0
    %v5164 = vsel %vm195, %v5161, 0
    %5166 = vmatpush.xpose.msra.mxu0 0.0
    %5167 = vmatpush.xpose.msra.mxu0 0.0
    %5168 = vmatpush.xpose.msra.mxu0 0.0
    %5169 = vmatpush.xpose.msra.mxu0 0.0
    %5170 = vmatpush.xpose.msra.mxu0 0.0
    %5171 = vmatpush.xpose.msra.mxu0 0.0
    %5172 = vmatpush.xpose.msra.mxu0 0.0
    %5173 = vmatpush.xpose.msra.mxu0 0.0
    %5174 = vmatpush.xpose.msra.mxu0 0.0
    %5175 = vmatpush.xpose.msra.mxu0 0.0
    %5176 = vmatpush.xpose.msra.mxu0 0.0
    %5177 = vmatpush.xpose.msra.mxu0 0.0
    %5178 = vmatpush.xpose.msra.mxu0 0.0
    %5179 = vmatpush.xpose.msra.mxu0 0.0
    %5180 = vmatpush.xpose.msra.mxu0 0.0
    %5181 = vmatpush.xpose.msra.mxu0 %v5164
    %5182 = vmatmul.f32.gmra.mxu0 %v5162
    %v5183 = vpop.f32.mrf.mxu0
    %v5184 = vadd.f32 0.0, %v5183
    %5185 = vdwg.mxu0
    %5186 = vst [vmem:[#allocation1] ss:$4 sm:$0xff] %v4899
    %s5187 = scalar_lea.vmem [#allocation1], 1
    %5188 = vst [vmem:[%s5187] ss:$4 sm:$0xff] %v4901
    %s5189 = scalar_lea.vmem [#allocation1], 2
    %5190 = vst [vmem:[%s5189] ss:$4 sm:$0xff] %v4903
    %v5191 = vld.sshfl [vmem:[#allocation1] sm:$0xff pattern:$0x73625140]
    %5192 = vst [vmem:[#allocation1] ss:$9 sm:$0xff] %v4957
    %s5193 = scalar_lea.vmem [#allocation1], 1
    %5194 = vst [vmem:[%s5193] ss:$9 sm:$0xff] %v4959
    %s5195 = scalar_lea.vmem [#allocation1], 2
    %5196 = vst [vmem:[%s5195] ss:$9 sm:$0xff] %v4961
    %s5197 = scalar_lea.vmem [#allocation1], 3
    %5198 = vst [vmem:[%s5197] ss:$9 sm:$0xff] %v4963
    %s5199 = scalar_lea.vmem [#allocation1], 4
    %5200 = vst [vmem:[%s5199] ss:$9 sm:$0xff] %v4965
    %v5201 = vld [vmem:[#allocation1] sm:$0xff]
    %v5202 = vsel %vm195, %v5191, 0
    %v5204 = vsel %vm195, %v5201, 0
    %5206 = vmatpush.xpose.msra.mxu0 0.0
    %5207 = vmatpush.xpose.msra.mxu0 0.0
    %5208 = vmatpush.xpose.msra.mxu0 0.0
    %5209 = vmatpush.xpose.msra.mxu0 0.0
    %5210 = vmatpush.xpose.msra.mxu0 0.0
    %5211 = vmatpush.xpose.msra.mxu0 0.0
    %5212 = vmatpush.xpose.msra.mxu0 0.0
    %5213 = vmatpush.xpose.msra.mxu0 0.0
    %5214 = vmatpush.xpose.msra.mxu0 0.0
    %5215 = vmatpush.xpose.msra.mxu0 0.0
    %5216 = vmatpush.xpose.msra.mxu0 0.0
    %5217 = vmatpush.xpose.msra.mxu0 0.0
    %5218 = vmatpush.xpose.msra.mxu0 0.0
    %5219 = vmatpush.xpose.msra.mxu0 0.0
    %5220 = vmatpush.xpose.msra.mxu0 0.0
    %5221 = vmatpush.xpose.msra.mxu0 %v5204
    %5222 = vmatmul.f32.gmra.mxu0 %v5202
    %v5223 = vpop.f32.mrf.mxu0
    %v5224 = vadd.f32 0.0, %v5223
    %5225 = vdwg.mxu0
    %5226 = vst [vmem:[#allocation1] ss:$4 sm:$0xff] %v4905
    %s5227 = scalar_lea.vmem [#allocation1], 1
    %5228 = vst [vmem:[%s5227] ss:$4 sm:$0xff] %v4907
    %s5229 = scalar_lea.vmem [#allocation1], 2
    %5230 = vst [vmem:[%s5229] ss:$4 sm:$0xff] %v4909
    %v5231 = vld.sshfl [vmem:[#allocation1] sm:$0xff pattern:$0x73625140]
    %5232 = vst [vmem:[#allocation1] ss:$9 sm:$0xff] %v4967
    %s5233 = scalar_lea.vmem [#allocation1], 1
    %5234 = vst [vmem:[%s5233] ss:$9 sm:$0xff] %v4969
    %s5235 = scalar_lea.vmem [#allocation1], 2
    %5236 = vst [vmem:[%s5235] ss:$9 sm:$0xff] %v4971
    %s5237 = scalar_lea.vmem [#allocation1], 3
    %5238 = vst [vmem:[%s5237] ss:$9 sm:$0xff] %v4973
    %s5239 = scalar_lea.vmem [#allocation1], 4
    %5240 = vst [vmem:[%s5239] ss:$9 sm:$0xff] %v4975
    %v5241 = vld [vmem:[#allocation1] sm:$0xff]
    %v5242 = vsel %vm195, %v5231, 0
    %v5244 = vsel %vm195, %v5241, 0
    %5246 = vmatpush.xpose.msra.mxu0 0.0
    %5247 = vmatpush.xpose.msra.mxu0 0.0
    %5248 = vmatpush.xpose.msra.mxu0 0.0
    %5249 = vmatpush.xpose.msra.mxu0 0.0
    %5250 = vmatpush.xpose.msra.mxu0 0.0
    %5251 = vmatpush.xpose.msra.mxu0 0.0
    %5252 = vmatpush.xpose.msra.mxu0 0.0
    %5253 = vmatpush.xpose.msra.mxu0 0.0
    %5254 = vmatpush.xpose.msra.mxu0 0.0
    %5255 = vmatpush.xpose.msra.mxu0 0.0
    %5256 = vmatpush.xpose.msra.mxu0 0.0
    %5257 = vmatpush.xpose.msra.mxu0 0.0
    %5258 = vmatpush.xpose.msra.mxu0 0.0
    %5259 = vmatpush.xpose.msra.mxu0 0.0
    %5260 = vmatpush.xpose.msra.mxu0 0.0
    %5261 = vmatpush.xpose.msra.mxu0 %v5244
    %5262 = vmatmul.f32.gmra.mxu0 %v5242
    %v5263 = vpop.f32.mrf.mxu0
    %v5264 = vadd.f32 0.0, %v5263
    %5265 = vdwg.mxu0
    %5266 = vst [vmem:[#allocation1] ss:$4 sm:$0xff] %v4911
    %s5267 = scalar_lea.vmem [#allocation1], 1
    %5268 = vst [vmem:[%s5267] ss:$4 sm:$0xff] %v4913
    %s5269 = scalar_lea.vmem [#allocation1], 2
    %5270 = vst [vmem:[%s5269] ss:$4 sm:$0xff] %v4915
    %v5271 = vld.sshfl [vmem:[#allocation1] sm:$0xff pattern:$0x73625140]
    %5272 = vst [vmem:[#allocation1] ss:$9 sm:$0xff] %v4977
    %s5273 = scalar_lea.vmem [#allocation1], 1
    %5274 = vst [vmem:[%s5273] ss:$9 sm:$0xff] %v4979
    %s5275 = scalar_lea.vmem [#allocation1], 2
    %5276 = vst [vmem:[%s5275] ss:$9 sm:$0xff] %v4981
    %s5277 = scalar_lea.vmem [#allocation1], 3
    %5278 = vst [vmem:[%s5277] ss:$9 sm:$0xff] %v4983
    %s5279 = scalar_lea.vmem [#allocation1], 4
    %5280 = vst [vmem:[%s5279] ss:$9 sm:$0xff] %v4985
    %v5281 = vld [vmem:[#allocation1] sm:$0xff]
    %v5282 = vsel %vm195, %v5271, 0
    %v5284 = vsel %vm195, %v5281, 0
    %5286 = vmatpush.xpose.msra.mxu0 0.0
    %5287 = vmatpush.xpose.msra.mxu0 0.0
    %5288 = vmatpush.xpose.msra.mxu0 0.0
    %5289 = vmatpush.xpose.msra.mxu0 0.0
    %5290 = vmatpush.xpose.msra.mxu0 0.0
    %5291 = vmatpush.xpose.msra.mxu0 0.0
    %5292 = vmatpush.xpose.msra.mxu0 0.0
    %5293 = vmatpush.xpose.msra.mxu0 0.0
    %5294 = vmatpush.xpose.msra.mxu0 0.0
    %5295 = vmatpush.xpose.msra.mxu0 0.0
    %5296 = vmatpush.xpose.msra.mxu0 0.0
    %5297 = vmatpush.xpose.msra.mxu0 0.0
    %5298 = vmatpush.xpose.msra.mxu0 0.0
    %5299 = vmatpush.xpose.msra.mxu0 0.0
    %5300 = vmatpush.xpose.msra.mxu0 0.0
    %5301 = vmatpush.xpose.msra.mxu0 %v5284
    %5302 = vmatmul.f32.gmra.mxu0 %v5282
    %v5303 = vpop.f32.mrf.mxu0
    %v5304 = vadd.f32 0.0, %v5303
    %5305 = vdwg.mxu0
    %v5306 = vmul.f32 %v5024, 0.35355338
    %v5307 = vmul.f32 %v5064, 0.35355338
    %v5308 = vmul.f32 %v5104, 0.35355338
    %v5309 = vmul.f32 %v5144, 0.35355338
    %v5310 = vmul.f32 %v5184, 0.35355338
    %v5311 = vmul.f32 %v5224, 0.35355338
    %v5312 = vmul.f32 %v5264, 0.35355338
    %v5313 = vmul.f32 %v5304, 0.35355338
    %vm5314 = vcmask 37888
    %v5315 = vsel %vm5314, %v5306, -inf
    %5316 = vmax.xlane.f32.xlu0 %v5315
    %v5317 = vpop.xlane.xlu0 %5316
    %v5318 = vsel %vm5314, %v5307, -inf
    %5319 = vmax.xlane.f32.xlu0 %v5318
    %v5320 = vpop.xlane.xlu0 %5319
    %v5321 = vsel %vm5314, %v5308, -inf
    %5322 = vmax.xlane.f32.xlu0 %v5321
    %v5323 = vpop.xlane.xlu0 %5322
    %v5324 = vsel %vm5314, %v5309, -inf
    %5325 = vmax.xlane.f32.xlu0 %v5324
    %v5326 = vpop.xlane.xlu0 %5325
    %v5327 = vsel %vm5314, %v5310, -inf
    %5328 = vmax.xlane.f32.xlu0 %v5327
    %v5329 = vpop.xlane.xlu0 %5328
    %v5330 = vsel %vm5314, %v5311, -inf
    %5331 = vmax.xlane.f32.xlu0 %v5330
    %v5332 = vpop.xlane.xlu0 %5331
    %v5333 = vsel %vm5314, %v5312, -inf
    %5334 = vmax.xlane.f32.xlu0 %v5333
    %v5335 = vpop.xlane.xlu0 %5334
    %v5336 = vsel %vm5314, %v5313, -inf
    %5337 = vmax.xlane.f32.xlu0 %v5336
    %v5338 = vpop.xlane.xlu0 %5337
    %v5339 = vsub.f32 %v5306, %v5317
    %v5340 = vsub.f32 %v5307, %v5320
    %v5341 = vsub.f32 %v5308, %v5323
    %v5342 = vsub.f32 %v5309, %v5326
    %v5343 = vsub.f32 %v5310, %v5329
    %v5344 = vsub.f32 %v5311, %v5332
    %v5345 = vsub.f32 %v5312, %v5335
    %v5346 = vsub.f32 %v5313, %v5338
    %v5347 = vmul.f32 %v5339, 1.442695
    %v5348 = vpow.pop %v5347
    %v5349 = vmul.f32 %v5340, 1.442695
    %v5350 = vpow.pop %v5349
    %v5351 = vmul.f32 %v5341, 1.442695
    %v5352 = vpow.pop %v5351
    %v5353 = vmul.f32 %v5342, 1.442695
    %v5354 = vpow.pop %v5353
    %v5355 = vmul.f32 %v5343, 1.442695
    %v5356 = vpow.pop %v5355
    %v5357 = vmul.f32 %v5344, 1.442695
    %v5358 = vpow.pop %v5357
    %v5359 = vmul.f32 %v5345, 1.442695
    %v5360 = vpow.pop %v5359
    %v5361 = vmul.f32 %v5346, 1.442695
    %v5362 = vpow.pop %v5361
    %v5363 = vsel %vm5314, %v5348, 0.0
    %5364 = vadd.xlane.f32.xlu0 %v5363
    %v5365 = vpop.xlane.xlu0 %5364
    %v5366 = vsel %vm5314, %v5350, 0.0
    %5367 = vadd.xlane.f32.xlu0 %v5366
    %v5368 = vpop.xlane.xlu0 %5367
    %v5369 = vsel %vm5314, %v5352, 0.0
    %5370 = vadd.xlane.f32.xlu0 %v5369
    %v5371 = vpop.xlane.xlu0 %5370
    %v5372 = vsel %vm5314, %v5354, 0.0
    %5373 = vadd.xlane.f32.xlu0 %v5372
    %v5374 = vpop.xlane.xlu0 %5373
    %v5375 = vsel %vm5314, %v5356, 0.0
    %5376 = vadd.xlane.f32.xlu0 %v5375
    %v5377 = vpop.xlane.xlu0 %5376
    %v5378 = vsel %vm5314, %v5358, 0.0
    %5379 = vadd.xlane.f32.xlu0 %v5378
    %v5380 = vpop.xlane.xlu0 %5379
    %v5381 = vsel %vm5314, %v5360, 0.0
    %5382 = vadd.xlane.f32.xlu0 %v5381
    %v5383 = vpop.xlane.xlu0 %5382
    %v5384 = vsel %vm5314, %v5362, 0.0
    %5385 = vadd.xlane.f32.xlu0 %v5384
    %v5386 = vpop.xlane.xlu0 %5385
    %5387 = vst [vmem:[#allocation1] ss:$9 sm:$0xff] %v3693
    %s5388 = scalar_lea.vmem [#allocation1], 1
    %5389 = vst [vmem:[%s5388] ss:$9 sm:$0xff] %v4918
    %s5390 = scalar_lea.vmem [#allocation1], 2
    %5391 = vst [vmem:[%s5390] ss:$9 sm:$0xff] %v4919
    %s5392 = scalar_lea.vmem [#allocation1], 3
    %5393 = vst [vmem:[%s5392] ss:$9 sm:$0xff] %v4920
    %s5394 = scalar_lea.vmem [#allocation1], 4
    %5395 = vst [vmem:[%s5394] ss:$9 sm:$0xff] %v4921
    %v5396 = vld [vmem:[#allocation1] sm:$0xff]
    %5397 = vrot.lane.b32.xlu0 %v5396, 96
    %v5398 = vpop.permute.xlu0 %5397
    %v5400 = vsel %vm635, %v5348, 0
    %v5402 = vsel %vm639, %v5398, 0
    %5404 = vmatpush.msra.mxu0 0.0
    %5405 = vmatpush.msra.mxu0 0.0
    %5406 = vmatpush.msra.mxu0 0.0
    %5407 = vmatpush.msra.mxu0 0.0
    %5408 = vmatpush.msra.mxu0 0.0
    %5409 = vmatpush.msra.mxu0 0.0
    %5410 = vmatpush.msra.mxu0 0.0
    %5411 = vmatpush.msra.mxu0 0.0
    %5412 = vmatpush.msra.mxu0 0.0
    %5413 = vmatpush.msra.mxu0 0.0
    %5414 = vmatpush.msra.mxu0 0.0
    %5415 = vmatpush.msra.mxu0 0.0
    %5416 = vmatpush.msra.mxu0 0.0
    %5417 = vmatpush.msra.mxu0 0.0
    %5418 = vmatpush.msra.mxu0 0.0
    %5419 = vmatpush.msra.mxu0 %v5402
    %5420 = vmatmul.f32.gmra.mxu0 %v5400
    %v5421 = vpop.f32.mrf.mxu0
    %v5422 = vadd.f32 0.0, %v5421
    %5423 = vdwg.mxu0
    %5424 = vst [vmem:[#allocation1] ss:$9 sm:$0xff] %v4922
    %s5425 = scalar_lea.vmem [#allocation1], 1
    %5426 = vst [vmem:[%s5425] ss:$9 sm:$0xff] %v4923
    %s5427 = scalar_lea.vmem [#allocation1], 2
    %5428 = vst [vmem:[%s5427] ss:$9 sm:$0xff] %v4924
    %s5429 = scalar_lea.vmem [#allocation1], 3
    %5430 = vst [vmem:[%s5429] ss:$9 sm:$0xff] %v3696
    %s5431 = scalar_lea.vmem [#allocation1], 4
    %5432 = vst [vmem:[%s5431] ss:$9 sm:$0xff] %v4925
    %v5433 = vld [vmem:[#allocation1] sm:$0xff]
    %5434 = vrot.lane.b32.xlu0 %v5433, 96
    %v5435 = vpop.permute.xlu0 %5434
    %v5437 = vsel %vm635, %v5350, 0
    %v5439 = vsel %vm639, %v5435, 0
    %5441 = vmatpush.msra.mxu0 0.0
    %5442 = vmatpush.msra.mxu0 0.0
    %5443 = vmatpush.msra.mxu0 0.0
    %5444 = vmatpush.msra.mxu0 0.0
    %5445 = vmatpush.msra.mxu0 0.0
    %5446 = vmatpush.msra.mxu0 0.0
    %5447 = vmatpush.msra.mxu0 0.0
    %5448 = vmatpush.msra.mxu0 0.0
    %5449 = vmatpush.msra.mxu0 0.0
    %5450 = vmatpush.msra.mxu0 0.0
    %5451 = vmatpush.msra.mxu0 0.0
    %5452 = vmatpush.msra.mxu0 0.0
    %5453 = vmatpush.msra.mxu0 0.0
    %5454 = vmatpush.msra.mxu0 0.0
    %5455 = vmatpush.msra.mxu0 0.0
    %5456 = vmatpush.msra.mxu0 %v5439
    %5457 = vmatmul.f32.gmra.mxu0 %v5437
    %v5458 = vpop.f32.mrf.mxu0
    %v5459 = vadd.f32 0.0, %v5458
    %5460 = vdwg.mxu0
    %5461 = vst [vmem:[#allocation1] ss:$9 sm:$0xff] %v4927
    %s5462 = scalar_lea.vmem [#allocation1], 1
    %5463 = vst [vmem:[%s5462] ss:$9 sm:$0xff] %v4929
    %s5464 = scalar_lea.vmem [#allocation1], 2
    %5465 = vst [vmem:[%s5464] ss:$9 sm:$0xff] %v4931
    %s5466 = scalar_lea.vmem [#allocation1], 3
    %5467 = vst [vmem:[%s5466] ss:$9 sm:$0xff] %v4933
    %s5468 = scalar_lea.vmem [#allocation1], 4
    %5469 = vst [vmem:[%s5468] ss:$9 sm:$0xff] %v4935
    %v5470 = vld [vmem:[#allocation1] sm:$0xff]
    %5471 = vrot.lane.b32.xlu0 %v5470, 96
    %v5472 = vpop.permute.xlu0 %5471
    %v5474 = vsel %vm635, %v5352, 0
    %v5476 = vsel %vm639, %v5472, 0
    %5478 = vmatpush.msra.mxu0 0.0
    %5479 = vmatpush.msra.mxu0 0.0
    %5480 = vmatpush.msra.mxu0 0.0
    %5481 = vmatpush.msra.mxu0 0.0
    %5482 = vmatpush.msra.mxu0 0.0
    %5483 = vmatpush.msra.mxu0 0.0
    %5484 = vmatpush.msra.mxu0 0.0
    %5485 = vmatpush.msra.mxu0 0.0
    %5486 = vmatpush.msra.mxu0 0.0
    %5487 = vmatpush.msra.mxu0 0.0
    %5488 = vmatpush.msra.mxu0 0.0
    %5489 = vmatpush.msra.mxu0 0.0
    %5490 = vmatpush.msra.mxu0 0.0
    %5491 = vmatpush.msra.mxu0 0.0
    %5492 = vmatpush.msra.mxu0 0.0
    %5493 = vmatpush.msra.mxu0 %v5476
    %5494 = vmatmul.f32.gmra.mxu0 %v5474
    %v5495 = vpop.f32.mrf.mxu0
    %v5496 = vadd.f32 0.0, %v5495
    %5497 = vdwg.mxu0
    %5498 = vst [vmem:[#allocation1] ss:$9 sm:$0xff] %v4937
    %s5499 = scalar_lea.vmem [#allocation1], 1
    %5500 = vst [vmem:[%s5499] ss:$9 sm:$0xff] %v4939
    %s5501 = scalar_lea.vmem [#allocation1], 2
    %5502 = vst [vmem:[%s5501] ss:$9 sm:$0xff] %v4941
    %s5503 = scalar_lea.vmem [#allocation1], 3
    %5504 = vst [vmem:[%s5503] ss:$9 sm:$0xff] %v4943
    %s5505 = scalar_lea.vmem [#allocation1], 4
    %5506 = vst [vmem:[%s5505] ss:$9 sm:$0xff] %v4945
    %v5507 = vld [vmem:[#allocation1] sm:$0xff]
    %5508 = vrot.lane.b32.xlu0 %v5507, 96
    %v5509 = vpop.permute.xlu0 %5508
    %v5511 = vsel %vm635, %v5354, 0
    %v5513 = vsel %vm639, %v5509, 0
    %5515 = vmatpush.msra.mxu0 0.0
    %5516 = vmatpush.msra.mxu0 0.0
    %5517 = vmatpush.msra.mxu0 0.0
    %5518 = vmatpush.msra.mxu0 0.0
    %5519 = vmatpush.msra.mxu0 0.0
    %5520 = vmatpush.msra.mxu0 0.0
    %5521 = vmatpush.msra.mxu0 0.0
    %5522 = vmatpush.msra.mxu0 0.0
    %5523 = vmatpush.msra.mxu0 0.0
    %5524 = vmatpush.msra.mxu0 0.0
    %5525 = vmatpush.msra.mxu0 0.0
    %5526 = vmatpush.msra.mxu0 0.0
    %5527 = vmatpush.msra.mxu0 0.0
    %5528 = vmatpush.msra.mxu0 0.0
    %5529 = vmatpush.msra.mxu0 0.0
    %5530 = vmatpush.msra.mxu0 %v5513
    %5531 = vmatmul.f32.gmra.mxu0 %v5511
    %v5532 = vpop.f32.mrf.mxu0
    %v5533 = vadd.f32 0.0, %v5532
    %5534 = vdwg.mxu0
    %5535 = vst [vmem:[#allocation1] ss:$9 sm:$0xff] %v4947
    %s5536 = scalar_lea.vmem [#allocation1], 1
    %5537 = vst [vmem:[%s5536] ss:$9 sm:$0xff] %v4949
    %s5538 = scalar_lea.vmem [#allocation1], 2
    %5539 = vst [vmem:[%s5538] ss:$9 sm:$0xff] %v4951
    %s5540 = scalar_lea.vmem [#allocation1], 3
    %5541 = vst [vmem:[%s5540] ss:$9 sm:$0xff] %v4953
    %s5542 = scalar_lea.vmem [#allocation1], 4
    %5543 = vst [vmem:[%s5542] ss:$9 sm:$0xff] %v4955
    %v5544 = vld [vmem:[#allocation1] sm:$0xff]
    %5545 = vrot.lane.b32.xlu0 %v5544, 96
    %v5546 = vpop.permute.xlu0 %5545
    %v5548 = vsel %vm635, %v5356, 0
    %v5550 = vsel %vm639, %v5546, 0
    %5552 = vmatpush.msra.mxu0 0.0
    %5553 = vmatpush.msra.mxu0 0.0
    %5554 = vmatpush.msra.mxu0 0.0
    %5555 = vmatpush.msra.mxu0 0.0
    %5556 = vmatpush.msra.mxu0 0.0
    %5557 = vmatpush.msra.mxu0 0.0
    %5558 = vmatpush.msra.mxu0 0.0
    %5559 = vmatpush.msra.mxu0 0.0
    %5560 = vmatpush.msra.mxu0 0.0
    %5561 = vmatpush.msra.mxu0 0.0
    %5562 = vmatpush.msra.mxu0 0.0
    %5563 = vmatpush.msra.mxu0 0.0
    %5564 = vmatpush.msra.mxu0 0.0
    %5565 = vmatpush.msra.mxu0 0.0
    %5566 = vmatpush.msra.mxu0 0.0
    %5567 = vmatpush.msra.mxu0 %v5550
    %5568 = vmatmul.f32.gmra.mxu0 %v5548
    %v5569 = vpop.f32.mrf.mxu0
    %v5570 = vadd.f32 0.0, %v5569
    %5571 = vdwg.mxu0
    %5572 = vst [vmem:[#allocation1] ss:$9 sm:$0xff] %v4957
    %s5573 = scalar_lea.vmem [#allocation1], 1
    %5574 = vst [vmem:[%s5573] ss:$9 sm:$0xff] %v4959
    %s5575 = scalar_lea.vmem [#allocation1], 2
    %5576 = vst [vmem:[%s5575] ss:$9 sm:$0xff] %v4961
    %s5577 = scalar_lea.vmem [#allocation1], 3
    %5578 = vst [vmem:[%s5577] ss:$9 sm:$0xff] %v4963
    %s5579 = scalar_lea.vmem [#allocation1], 4
    %5580 = vst [vmem:[%s5579] ss:$9 sm:$0xff] %v4965
    %v5581 = vld [vmem:[#allocation1] sm:$0xff]
    %5582 = vrot.lane.b32.xlu0 %v5581, 96
    %v5583 = vpop.permute.xlu0 %5582
    %v5585 = vsel %vm635, %v5358, 0
    %v5587 = vsel %vm639, %v5583, 0
    %5589 = vmatpush.msra.mxu0 0.0
    %5590 = vmatpush.msra.mxu0 0.0
    %5591 = vmatpush.msra.mxu0 0.0
    %5592 = vmatpush.msra.mxu0 0.0
    %5593 = vmatpush.msra.mxu0 0.0
    %5594 = vmatpush.msra.mxu0 0.0
    %5595 = vmatpush.msra.mxu0 0.0
    %5596 = vmatpush.msra.mxu0 0.0
    %5597 = vmatpush.msra.mxu0 0.0
    %5598 = vmatpush.msra.mxu0 0.0
    %5599 = vmatpush.msra.mxu0 0.0
    %5600 = vmatpush.msra.mxu0 0.0
    %5601 = vmatpush.msra.mxu0 0.0
    %5602 = vmatpush.msra.mxu0 0.0
    %5603 = vmatpush.msra.mxu0 0.0
    %5604 = vmatpush.msra.mxu0 %v5587
    %5605 = vmatmul.f32.gmra.mxu0 %v5585
    %v5606 = vpop.f32.mrf.mxu0
    %v5607 = vadd.f32 0.0, %v5606
    %5608 = vdwg.mxu0
    %5609 = vst [vmem:[#allocation1] ss:$9 sm:$0xff] %v4967
    %s5610 = scalar_lea.vmem [#allocation1], 1
    %5611 = vst [vmem:[%s5610] ss:$9 sm:$0xff] %v4969
    %s5612 = scalar_lea.vmem [#allocation1], 2
    %5613 = vst [vmem:[%s5612] ss:$9 sm:$0xff] %v4971
    %s5614 = scalar_lea.vmem [#allocation1], 3
    %5615 = vst [vmem:[%s5614] ss:$9 sm:$0xff] %v4973
    %s5616 = scalar_lea.vmem [#allocation1], 4
    %5617 = vst [vmem:[%s5616] ss:$9 sm:$0xff] %v4975
    %v5618 = vld [vmem:[#allocation1] sm:$0xff]
    %5619 = vrot.lane.b32.xlu0 %v5618, 96
    %v5620 = vpop.permute.xlu0 %5619
    %v5622 = vsel %vm635, %v5360, 0
    %v5624 = vsel %vm639, %v5620, 0
    %5626 = vmatpush.msra.mxu0 0.0
    %5627 = vmatpush.msra.mxu0 0.0
    %5628 = vmatpush.msra.mxu0 0.0
    %5629 = vmatpush.msra.mxu0 0.0
    %5630 = vmatpush.msra.mxu0 0.0
    %5631 = vmatpush.msra.mxu0 0.0
    %5632 = vmatpush.msra.mxu0 0.0
    %5633 = vmatpush.msra.mxu0 0.0
    %5634 = vmatpush.msra.mxu0 0.0
    %5635 = vmatpush.msra.mxu0 0.0
    %5636 = vmatpush.msra.mxu0 0.0
    %5637 = vmatpush.msra.mxu0 0.0
    %5638 = vmatpush.msra.mxu0 0.0
    %5639 = vmatpush.msra.mxu0 0.0
    %5640 = vmatpush.msra.mxu0 0.0
    %5641 = vmatpush.msra.mxu0 %v5624
    %5642 = vmatmul.f32.gmra.mxu0 %v5622
    %v5643 = vpop.f32.mrf.mxu0
    %v5644 = vadd.f32 0.0, %v5643
    %5645 = vdwg.mxu0
    %5646 = vst [vmem:[#allocation1] ss:$9 sm:$0xff] %v4977
    %s5647 = scalar_lea.vmem [#allocation1], 1
    %5648 = vst [vmem:[%s5647] ss:$9 sm:$0xff] %v4979
    %s5649 = scalar_lea.vmem [#allocation1], 2
    %5650 = vst [vmem:[%s5649] ss:$9 sm:$0xff] %v4981
    %s5651 = scalar_lea.vmem [#allocation1], 3
    %5652 = vst [vmem:[%s5651] ss:$9 sm:$0xff] %v4983
    %s5653 = scalar_lea.vmem [#allocation1], 4
    %5654 = vst [vmem:[%s5653] ss:$9 sm:$0xff] %v4985
    %v5655 = vld [vmem:[#allocation1] sm:$0xff]
    %5656 = vrot.lane.b32.xlu0 %v5655, 96
    %v5657 = vpop.permute.xlu0 %5656
    %v5659 = vsel %vm635, %v5362, 0
    %v5661 = vsel %vm639, %v5657, 0
    %5663 = vmatpush.msra.mxu0 0.0
    %5664 = vmatpush.msra.mxu0 0.0
    %5665 = vmatpush.msra.mxu0 0.0
    %5666 = vmatpush.msra.mxu0 0.0
    %5667 = vmatpush.msra.mxu0 0.0
    %5668 = vmatpush.msra.mxu0 0.0
    %5669 = vmatpush.msra.mxu0 0.0
    %5670 = vmatpush.msra.mxu0 0.0
    %5671 = vmatpush.msra.mxu0 0.0
    %5672 = vmatpush.msra.mxu0 0.0
    %5673 = vmatpush.msra.mxu0 0.0
    %5674 = vmatpush.msra.mxu0 0.0
    %5675 = vmatpush.msra.mxu0 0.0
    %5676 = vmatpush.msra.mxu0 0.0
    %5677 = vmatpush.msra.mxu0 0.0
    %5678 = vmatpush.msra.mxu0 %v5661
    %5679 = vmatmul.f32.gmra.mxu0 %v5659
    %v5680 = vpop.f32.mrf.mxu0
    %v5681 = vadd.f32 0.0, %v5680
    %5682 = vdwg.mxu0
    %v5683 = vrcp.pop %v5365
    %v5684 = vrcp.pop %v5368
    %v5685 = vrcp.pop %v5371
    %v5686 = vrcp.pop %v5374
    %v5687 = vrcp.pop %v5377
    %v5688 = vrcp.pop %v5380
    %v5689 = vrcp.pop %v5383
    %v5690 = vrcp.pop %v5386
    %v5691 = vmul.f32 %v5422, %v5683
    %v5692 = vmul.f32 %v5459, %v5684
    %v5693 = vmul.f32 %v5496, %v5685
    %v5694 = vmul.f32 %v5533, %v5686
    %v5695 = vmul.f32 %v5570, %v5687
    %v5696 = vmul.f32 %v5607, %v5688
    %v5697 = vmul.f32 %v5644, %v5689
    %v5698 = vmul.f32 %v5681, %v5690
    %v5701 = vrot.slane %v5691, 2
    %v5702 = vrot.slane %v5691, 4
    %v5703 = vrot.slane %v5692, 2
    %v5704 = vrot.slane %v5692, 4
    %v5707 = vrot.slane %v5693, 2
    %v5708 = vrot.slane %v5693, 4
    %v5709 = vrot.slane %v5694, 2
    %v5710 = vrot.slane %v5694, 4
    %v5713 = vrot.slane %v5695, 2
    %v5714 = vrot.slane %v5695, 4
    %v5715 = vrot.slane %v5696, 2
    %v5716 = vrot.slane %v5696, 4
    %v5719 = vrot.slane %v5697, 2
    %v5720 = vrot.slane %v5697, 4
    %v5721 = vrot.slane %v5698, 2
    %v5722 = vrot.slane %v5698, 4
    %5723 = vst [vmem:[#allocation1] ss:$4 sm:$0xff] %v5691
    %s5724 = scalar_lea.vmem [#allocation1], 1
    %5725 = vst [vmem:[%s5724] ss:$4 sm:$0xff] %v5701
    %s5726 = scalar_lea.vmem [#allocation1], 2
    %5727 = vst [vmem:[%s5726] ss:$4 sm:$0xff] %v5702
    %s5728 = scalar_lea.vmem [#allocation1], 3
    %5729 = vst [vmem:[%s5728] ss:$4 sm:$0xff] %v5692
    %s5730 = scalar_lea.vmem [#allocation1], 32
    %5731 = vst [vmem:[%s5730] ss:$4 sm:$0xff] %v5703
    %s5732 = scalar_lea.vmem [#allocation1], 33
    %5733 = vst [vmem:[%s5732] ss:$4 sm:$0xff] %v5704
    %v5734 = vld.sshfl [vmem:[#allocation1] sm:$0xff pattern:$0x73625140]
    %v5735 = vld.sshfl [vmem:[#allocation1 + $0x20] sm:$0xff pattern:$0x73625140]
    %5738 = vst [vmem:[#allocation1] ss:$4 sm:$0xff] %v5693
    %s5739 = scalar_lea.vmem [#allocation1], 1
    %5740 = vst [vmem:[%s5739] ss:$4 sm:$0xff] %v5707
    %s5741 = scalar_lea.vmem [#allocation1], 2
    %5742 = vst [vmem:[%s5741] ss:$4 sm:$0xff] %v5708
    %s5743 = scalar_lea.vmem [#allocation1], 3
    %5744 = vst [vmem:[%s5743] ss:$4 sm:$0xff] %v5694
    %s5745 = scalar_lea.vmem [#allocation1], 32
    %5746 = vst [vmem:[%s5745] ss:$4 sm:$0xff] %v5709
    %s5747 = scalar_lea.vmem [#allocation1], 33
    %5748 = vst [vmem:[%s5747] ss:$4 sm:$0xff] %v5710
    %v5749 = vld.sshfl [vmem:[#allocation1] sm:$0xff pattern:$0x73625140]
    %v5750 = vld.sshfl [vmem:[#allocation1 + $0x20] sm:$0xff pattern:$0x73625140]
    %5751 = vrot.lane.b32.xlu0 %v5749, 8
    %v5752 = vpop.permute.xlu0 %5751
    %5753 = vrot.lane.b32.xlu0 %v5750, 8
    %v5754 = vpop.permute.xlu0 %5753
    %5757 = vst [vmem:[#allocation1] ss:$4 sm:$0xff] %v5695
    %s5758 = scalar_lea.vmem [#allocation1], 1
    %5759 = vst [vmem:[%s5758] ss:$4 sm:$0xff] %v5713
    %s5760 = scalar_lea.vmem [#allocation1], 2
    %5761 = vst [vmem:[%s5760] ss:$4 sm:$0xff] %v5714
    %s5762 = scalar_lea.vmem [#allocation1], 3
    %5763 = vst [vmem:[%s5762] ss:$4 sm:$0xff] %v5696
    %s5764 = scalar_lea.vmem [#allocation1], 32
    %5765 = vst [vmem:[%s5764] ss:$4 sm:$0xff] %v5715
    %s5766 = scalar_lea.vmem [#allocation1], 33
    %5767 = vst [vmem:[%s5766] ss:$4 sm:$0xff] %v5716
    %v5768 = vld.sshfl [vmem:[#allocation1] sm:$0xff pattern:$0x73625140]
    %v5769 = vld.sshfl [vmem:[#allocation1 + $0x20] sm:$0xff pattern:$0x73625140]
    %5770 = vrot.lane.b32.xlu0 %v5768, 16
    %v5771 = vpop.permute.xlu0 %5770
    %5772 = vrot.lane.b32.xlu0 %v5769, 16
    %v5773 = vpop.permute.xlu0 %5772
    %5776 = vst [vmem:[#allocation1] ss:$4 sm:$0xff] %v5697
    %s5777 = scalar_lea.vmem [#allocation1], 1
    %5778 = vst [vmem:[%s5777] ss:$4 sm:$0xff] %v5719
    %s5779 = scalar_lea.vmem [#allocation1], 2
    %5780 = vst [vmem:[%s5779] ss:$4 sm:$0xff] %v5720
    %s5781 = scalar_lea.vmem [#allocation1], 3
    %5782 = vst [vmem:[%s5781] ss:$4 sm:$0xff] %v5698
    %s5783 = scalar_lea.vmem [#allocation1], 32
    %5784 = vst [vmem:[%s5783] ss:$4 sm:$0xff] %v5721
    %s5785 = scalar_lea.vmem [#allocation1], 33
    %5786 = vst [vmem:[%s5785] ss:$4 sm:$0xff] %v5722
    %v5787 = vld.sshfl [vmem:[#allocation1] sm:$0xff pattern:$0x73625140]
    %v5788 = vld.sshfl [vmem:[#allocation1 + $0x20] sm:$0xff pattern:$0x73625140]
    %5789 = vrot.lane.b32.xlu0 %v5787, 24
    %v5790 = vpop.permute.xlu0 %5789
    %5791 = vrot.lane.b32.xlu0 %v5788, 24
    %v5792 = vpop.permute.xlu0 %5791
    %v5795 = vsel %vm195, %v5734, %v5752
    %v5796 = vsel %vm195, %v5735, %v5754
    %v5797 = vsel %vm1075, %v5795, %v5771
    %v5798 = vsel %vm1075, %v5796, %v5773
    %v5799 = vsel %vm1078, %v5797, %v5790
    %v5800 = vsel %vm1078, %v5798, %v5792
    %v5801 = vld [vmem:[#allocation2 + $0x1b0] sm:$0xff]
    %v5802 = vld [vmem:[#allocation2 + $0x1b8] sm:$0xff]
    %v5803 = vld [vmem:[#allocation2 + $0x1c0] sm:$0xff]
    %v5804 = vld [vmem:[#allocation2 + $0x1c8] sm:$0xff]
    %v5805 = vperm.slane %v3716, 3
    %v5807 = vsel %vm75, %v5799, 0
    %v5810 = vsel %vm75, %v5800, 0
    %5812 = vmatpush.msra.mxu0 0.0
    %5813 = vmatpush.msra.mxu0 0.0
    %5814 = vmatpush.msra.mxu0 0.0
    %5815 = vmatpush.msra.mxu0 0.0
    %5816 = vmatpush.msra.mxu0 0.0
    %5817 = vmatpush.msra.mxu0 0.0
    %5818 = vmatpush.msra.mxu0 0.0
    %5819 = vmatpush.msra.mxu0 0.0
    %5820 = vmatpush.msra.mxu0 0.0
    %5821 = vmatpush.msra.mxu0 0.0
    %5822 = vmatpush.msra.mxu0 0.0
    %5823 = vmatpush.msra.mxu0 0.0
    %5824 = vmatpush.msra.mxu0 %v5804
    %5825 = vmatpush.msra.mxu0 %v5803
    %5826 = vmatpush.msra.mxu0 %v5802
    %5827 = vmatpush.msra.mxu0 %v5801
    %5828 = vmatmul.f32.gmra.mxu0 %v5807
    %v5829 = vpop.f32.mrf.mxu0
    %v5830 = vadd.f32 %v5805, %v5829
    %5831 = vmatmul.f32.gmra.mxu0 %v5810
    %v5832 = vpop.f32.mrf.mxu0
    %v5833 = vadd.f32 %v5805, %v5832
    %5834 = vdwg.mxu0
    %v5837 = vrot.slane %v5830, 2
    %v5838 = vrot.slane %v5830, 4
    %v5839 = vrot.slane %v5830, 6
    %v5840 = vrot.slane %v5833, 2
    %v5845 = vadd.f32 %v4817, %v5830
    %v5846 = vadd.f32 %v4818, %v5837
    %v5847 = vadd.f32 %v4819, %v5838
    %v5848 = vadd.f32 %v4820, %v5839
    %v5849 = vadd.f32 %v4821, %v5833
    %v5850 = vadd.f32 %v4822, %v5840
    %5857 = vst [vmem:[#allocation1] ss:$4 sm:$0xff] %v5845
    %s5858 = scalar_lea.vmem [#allocation1], 1
    %5859 = vst [vmem:[%s5858] ss:$4 sm:$0xff] %v5846
    %s5860 = scalar_lea.vmem [#allocation1], 2
    %5861 = vst [vmem:[%s5860] ss:$4 sm:$0xff] %v5847
    %s5862 = scalar_lea.vmem [#allocation1], 3
    %5863 = vst [vmem:[%s5862] ss:$4 sm:$0xff] %v5848
    %s5864 = scalar_lea.vmem [#allocation1], 32
    %5865 = vst [vmem:[%s5864] ss:$4 sm:$0xff] %v5849
    %s5866 = scalar_lea.vmem [#allocation1], 33
    %5867 = vst [vmem:[%s5866] ss:$4 sm:$0xff] %v5850
    %v5868 = vld.sshfl [vmem:[#allocation1] sm:$0xff pattern:$0x73625140]
    %v5869 = vld.sshfl [vmem:[#allocation1 + $0x20] sm:$0xff pattern:$0x73625140]
    %v5872 = vsel %vm75, %v5868, 0.0
    %5873 = vadd.xlane.f32.xlu0 %v5872
    %v5874 = vpop.xlane.xlu0 %5873
    %v5875 = vsel %vm4656, %v5869, 0.0
    %5876 = vadd.xlane.f32.xlu0 %v5875
    %v5877 = vpop.xlane.xlu0 %5876
    %v5878 = vmul.f32 %v5874, %v1187
    %v5879 = vmul.f32 %v5877, %v1187
    %v5883 = vunpack.c.l.s4 269488144
    %v5884 = vunpack.c.0.s8 %v5883
    %v5885 = vperm.slane %v5878, %v5884
    %v5887 = vunpack.c.l.s4 842150450
    %v5888 = vunpack.c.0.s8 %v5887
    %v5889 = vperm.slane %v5878, %v5888
    %v5891 = vunpack.c.l.s4 1414812756
    %v5892 = vunpack.c.0.s8 %v5891
    %v5893 = vperm.slane %v5878, %v5892
    %v5895 = vunpack.c.l.s4 1987475062
    %v5896 = vunpack.c.0.s8 %v5895
    %v5897 = vperm.slane %v5878, %v5896
    %v5899 = vunpack.c.l.s4 269488144
    %v5900 = vunpack.c.0.s8 %v5899
    %v5901 = vperm.slane %v5879, %v5900
    %v5903 = vunpack.c.l.s4 842150450
    %v5904 = vunpack.c.0.s8 %v5903
    %v5905 = vperm.slane %v5879, %v5904
    %v5912 = vsub.f32 %v5845, %v5885
    %v5913 = vsub.f32 %v5846, %v5889
    %v5914 = vsub.f32 %v5847, %v5893
    %v5915 = vsub.f32 %v5848, %v5897
    %v5916 = vsub.f32 %v5849, %v5901
    %v5917 = vsub.f32 %v5850, %v5905
    %v5918 = vmul.f32 %v5912, %v5912
    %v5919 = vmul.f32 %v5913, %v5913
    %v5920 = vmul.f32 %v5914, %v5914
    %v5921 = vmul.f32 %v5915, %v5915
    %v5922 = vmul.f32 %v5916, %v5916
    %v5923 = vmul.f32 %v5917, %v5917
    %5930 = vst [vmem:[#allocation1] ss:$4 sm:$0xff] %v5918
    %s5931 = scalar_lea.vmem [#allocation1], 1
    %5932 = vst [vmem:[%s5931] ss:$4 sm:$0xff] %v5919
    %s5933 = scalar_lea.vmem [#allocation1], 2
    %5934 = vst [vmem:[%s5933] ss:$4 sm:$0xff] %v5920
    %s5935 = scalar_lea.vmem [#allocation1], 3
    %5936 = vst [vmem:[%s5935] ss:$4 sm:$0xff] %v5921
    %s5937 = scalar_lea.vmem [#allocation1], 32
    %5938 = vst [vmem:[%s5937] ss:$4 sm:$0xff] %v5922
    %s5939 = scalar_lea.vmem [#allocation1], 33
    %5940 = vst [vmem:[%s5939] ss:$4 sm:$0xff] %v5923
    %v5941 = vld.sshfl [vmem:[#allocation1] sm:$0xff pattern:$0x73625140]
    %v5942 = vld.sshfl [vmem:[#allocation1 + $0x20] sm:$0xff pattern:$0x73625140]
    %v5945 = vsel %vm75, %v5941, 0.0
    %5946 = vadd.xlane.f32.xlu0 %v5945
    %v5947 = vpop.xlane.xlu0 %5946
    %v5948 = vsel %vm4656, %v5942, 0.0
    %5949 = vadd.xlane.f32.xlu0 %v5948
    %v5950 = vpop.xlane.xlu0 %5949
    %v5951 = vmul.f32 %v5947, %v1187
    %v5952 = vmul.f32 %v5950, %v1187
    %v5953 = vadd.f32 %v5951, 1e-05
    %v5954 = vadd.f32 %v5952, 1e-05
    %v5955 = vrsqrt.pop %v5953
    %v5956 = vmul.f32 %v5955, %v5953
    %v5957 = vmul.f32 %v5956, %v5955
    %v5958 = vmul.f32 0.5, %v5957
    %v5959 = vsub.f32 1.5, %v5958
    %v5960 = vmul.f32 %v5955, %v5959
    %vm5961 = vweird.f32 %v5953
    %vm5962 = vweird.f32 %v5955
    %vm5963 = vmor %vm5961, %vm5962
    %v5964 = vsel %vm5963, %v5955, %v5960
    %v5965 = vrsqrt.pop %v5954
    %v5966 = vmul.f32 %v5965, %v5954
    %v5967 = vmul.f32 %v5966, %v5965
    %v5968 = vmul.f32 0.5, %v5967
    %v5969 = vsub.f32 1.5, %v5968
    %v5970 = vmul.f32 %v5965, %v5969
    %vm5971 = vweird.f32 %v5954
    %vm5972 = vweird.f32 %v5965
    %vm5973 = vmor %vm5971, %vm5972
    %v5974 = vsel %vm5973, %v5965, %v5970
    %v5978 = vunpack.c.l.s4 269488144
    %v5979 = vunpack.c.0.s8 %v5978
    %v5980 = vperm.slane %v5964, %v5979
    %v5982 = vunpack.c.l.s4 842150450
    %v5983 = vunpack.c.0.s8 %v5982
    %v5984 = vperm.slane %v5964, %v5983
    %v5986 = vunpack.c.l.s4 1414812756
    %v5987 = vunpack.c.0.s8 %v5986
    %v5988 = vperm.slane %v5964, %v5987
    %v5990 = vunpack.c.l.s4 1987475062
    %v5991 = vunpack.c.0.s8 %v5990
    %v5992 = vperm.slane %v5964, %v5991
    %v5994 = vunpack.c.l.s4 269488144
    %v5995 = vunpack.c.0.s8 %v5994
    %v5996 = vperm.slane %v5974, %v5995
    %v5998 = vunpack.c.l.s4 842150450
    %v5999 = vunpack.c.0.s8 %v5998
    %v6000 = vperm.slane %v5974, %v5999
    %v6007 = vmul.f32 %v5912, %v5980
    %v6008 = vmul.f32 %v5913, %v5984
    %v6009 = vmul.f32 %v5914, %v5988
    %v6010 = vmul.f32 %v5915, %v5992
    %v6011 = vmul.f32 %v5916, %v5996
    %v6012 = vmul.f32 %v5917, %v6000
    %v6013 = vperm.slane %v3717, 0
    %v6015 = vrot.slane %v6013, 2
    %v6016 = vrot.slane %v6013, 4
    %v6017 = vrot.slane %v6013, 6
    %v6021 = vmul.f32 %v6007, %v6013
    %v6022 = vmul.f32 %v6008, %v6015
    %v6023 = vmul.f32 %v6009, %v6016
    %v6024 = vmul.f32 %v6010, %v6017
    %v6025 = vmul.f32 %v6011, %v6013
    %v6026 = vmul.f32 %v6012, %v6015
    %v6027 = vperm.slane %v3717, 1
    %v6029 = vrot.slane %v6027, 2
    %v6030 = vrot.slane %v6027, 4
    %v6031 = vrot.slane %v6027, 6
    %v6035 = vadd.f32 %v6021, %v6027
    %v6036 = vadd.f32 %v6022, %v6029
    %v6037 = vadd.f32 %v6023, %v6030
    %v6038 = vadd.f32 %v6024, %v6031
    %v6039 = vadd.f32 %v6025, %v6027
    %v6040 = vadd.f32 %v6026, %v6029
    %v6041 = vld [vmem:[#allocation2 + $0x1d0] sm:$0xff]
    %v6042 = vld [vmem:[#allocation2 + $0x1d8] sm:$0xff]
    %v6043 = vld [vmem:[#allocation2 + $0x1e0] sm:$0xff]
    %v6044 = vld [vmem:[#allocation2 + $0x1e8] sm:$0xff]
    %v6045 = vperm.slane %v3716, 4
    %6052 = vst [vmem:[#allocation1] ss:$4 sm:$0xff] %v6035
    %s6053 = scalar_lea.vmem [#allocation1], 1
    %6054 = vst [vmem:[%s6053] ss:$4 sm:$0xff] %v6036
    %s6055 = scalar_lea.vmem [#allocation1], 2
    %6056 = vst [vmem:[%s6055] ss:$4 sm:$0xff] %v6037
    %s6057 = scalar_lea.vmem [#allocation1], 3
    %6058 = vst [vmem:[%s6057] ss:$4 sm:$0xff] %v6038
    %s6059 = scalar_lea.vmem [#allocation1], 32
    %6060 = vst [vmem:[%s6059] ss:$4 sm:$0xff] %v6039
    %s6061 = scalar_lea.vmem [#allocation1], 33
    %6062 = vst [vmem:[%s6061] ss:$4 sm:$0xff] %v6040
    %v6063 = vld.sshfl [vmem:[#allocation1] sm:$0xff pattern:$0x73625140]
    %v6064 = vld.sshfl [vmem:[#allocation1 + $0x20] sm:$0xff pattern:$0x73625140]
    %v6065 = vsel %vm75, %v6063, 0
    %v6067 = vsel %vm75, %v6064, 0
    %6069 = vmatpush.msra.mxu0 0.0
    %6070 = vmatpush.msra.mxu0 0.0
    %6071 = vmatpush.msra.mxu0 0.0
    %6072 = vmatpush.msra.mxu0 0.0
    %6073 = vmatpush.msra.mxu0 0.0
    %6074 = vmatpush.msra.mxu0 0.0
    %6075 = vmatpush.msra.mxu0 0.0
    %6076 = vmatpush.msra.mxu0 0.0
    %6077 = vmatpush.msra.mxu0 0.0
    %6078 = vmatpush.msra.mxu0 0.0
    %6079 = vmatpush.msra.mxu0 0.0
    %6080 = vmatpush.msra.mxu0 0.0
    %6081 = vmatpush.msra.mxu0 %v6044
    %6082 = vmatpush.msra.mxu0 %v6043
    %6083 = vmatpush.msra.mxu0 %v6042
    %6084 = vmatpush.msra.mxu0 %v6041
    %6085 = vmatmul.f32.gmra.mxu0 %v6065
    %v6086 = vpop.f32.mrf.mxu0
    %v6087 = vadd.f32 %v6045, %v6086
    %6088 = vmatmul.f32.gmra.mxu0 %v6067
    %v6089 = vpop.f32.mrf.mxu0
    %v6090 = vadd.f32 %v6045, %v6089
    %6091 = vdwg.mxu0
    %v6092 = vmax.f32 %v6087, 0.0
    %v6093 = vmax.f32 %v6090, 0.0
    %v6094 = vld [vmem:[#allocation2 + $0x1f0] sm:$0xff]
    %v6095 = vld [vmem:[#allocation2 + $0x1f8] sm:$0xff]
    %v6096 = vld [vmem:[#allocation2 + $0x200] sm:$0xff]
    %v6097 = vld [vmem:[#allocation2 + $0x208] sm:$0xff]
    %v6098 = vld [vmem:[#allocation2 + $0x210] sm:$0xff]
    %v6099 = vld [vmem:[#allocation2 + $0x218] sm:$0xff]
    %v6100 = vld [vmem:[#allocation2 + $0x220] sm:$0xff]
    %v6101 = vld [vmem:[#allocation2 + $0x228] sm:$0xff]
    %v6102 = vperm.slane %v3716, 5
    %v6104 = vsel %vm1449, %v6092, 0
    %v6107 = vsel %vm1449, %v6093, 0
    %6109 = vmatpush.msra.mxu0 0.0
    %6110 = vmatpush.msra.mxu0 0.0
    %6111 = vmatpush.msra.mxu0 0.0
    %6112 = vmatpush.msra.mxu0 0.0
    %6113 = vmatpush.msra.mxu0 0.0
    %6114 = vmatpush.msra.mxu0 0.0
    %6115 = vmatpush.msra.mxu0 0.0
    %6116 = vmatpush.msra.mxu0 0.0
    %6117 = vmatpush.msra.mxu0 %v6101
    %6118 = vmatpush.msra.mxu0 %v6100
    %6119 = vmatpush.msra.mxu0 %v6099
    %6120 = vmatpush.msra.mxu0 %v6098
    %6121 = vmatpush.msra.mxu0 %v6097
    %6122 = vmatpush.msra.mxu0 %v6096
    %6123 = vmatpush.msra.mxu0 %v6095
    %6124 = vmatpush.msra.mxu0 %v6094
    %6125 = vmatmul.f32.gmra.mxu0 %v6104
    %v6126 = vpop.f32.mrf.mxu0
    %v6127 = vadd.f32 %v6102, %v6126
    %6128 = vmatmul.f32.gmra.mxu0 %v6107
    %v6129 = vpop.f32.mrf.mxu0
    %v6130 = vadd.f32 %v6102, %v6129
    %6131 = vdwg.mxu0
    %v6134 = vrot.slane %v6127, 2
    %v6135 = vrot.slane %v6127, 4
    %v6136 = vrot.slane %v6127, 6
    %v6137 = vrot.slane %v6130, 2
    %v6142 = vadd.f32 %v6035, %v6127
    %v6143 = vadd.f32 %v6036, %v6134
    %v6144 = vadd.f32 %v6037, %v6135
    %v6145 = vadd.f32 %v6038, %v6136
    %v6146 = vadd.f32 %v6039, %v6130
    %v6147 = vadd.f32 %v6040, %v6137
    %6154 = vst [vmem:[#allocation1] ss:$4 sm:$0xff] %v6142
    %s6155 = scalar_lea.vmem [#allocation1], 1
    %6156 = vst [vmem:[%s6155] ss:$4 sm:$0xff] %v6143
    %s6157 = scalar_lea.vmem [#allocation1], 2
    %6158 = vst [vmem:[%s6157] ss:$4 sm:$0xff] %v6144
    %s6159 = scalar_lea.vmem [#allocation1], 3
    %6160 = vst [vmem:[%s6159] ss:$4 sm:$0xff] %v6145
    %s6161 = scalar_lea.vmem [#allocation1], 32
    %6162 = vst [vmem:[%s6161] ss:$4 sm:$0xff] %v6146
    %s6163 = scalar_lea.vmem [#allocation1], 33
    %6164 = vst [vmem:[%s6163] ss:$4 sm:$0xff] %v6147
    %v6165 = vld.sshfl [vmem:[#allocation1] sm:$0xff pattern:$0x73625140]
    %v6166 = vld.sshfl [vmem:[#allocation1 + $0x20] sm:$0xff pattern:$0x73625140]
    %v6169 = vsel %vm75, %v6165, 0.0
    %6170 = vadd.xlane.f32.xlu0 %v6169
    %v6171 = vpop.xlane.xlu0 %6170
    %v6172 = vsel %vm4656, %v6166, 0.0
    %6173 = vadd.xlane.f32.xlu0 %v6172
    %v6174 = vpop.xlane.xlu0 %6173
    %v6175 = vmul.f32 %v6171, %v1187
    %v6176 = vmul.f32 %v6174, %v1187
    %v6180 = vunpack.c.l.s4 269488144
    %v6181 = vunpack.c.0.s8 %v6180
    %v6182 = vperm.slane %v6175, %v6181
    %v6184 = vunpack.c.l.s4 842150450
    %v6185 = vunpack.c.0.s8 %v6184
    %v6186 = vperm.slane %v6175, %v6185
    %v6188 = vunpack.c.l.s4 1414812756
    %v6189 = vunpack.c.0.s8 %v6188
    %v6190 = vperm.slane %v6175, %v6189
    %v6192 = vunpack.c.l.s4 1987475062
    %v6193 = vunpack.c.0.s8 %v6192
    %v6194 = vperm.slane %v6175, %v6193
    %v6196 = vunpack.c.l.s4 269488144
    %v6197 = vunpack.c.0.s8 %v6196
    %v6198 = vperm.slane %v6176, %v6197
    %v6200 = vunpack.c.l.s4 842150450
    %v6201 = vunpack.c.0.s8 %v6200
    %v6202 = vperm.slane %v6176, %v6201
    %v6209 = vsub.f32 %v6142, %v6182
    %v6210 = vsub.f32 %v6143, %v6186
    %v6211 = vsub.f32 %v6144, %v6190
    %v6212 = vsub.f32 %v6145, %v6194
    %v6213 = vsub.f32 %v6146, %v6198
    %v6214 = vsub.f32 %v6147, %v6202
    %v6215 = vmul.f32 %v6209, %v6209
    %v6216 = vmul.f32 %v6210, %v6210
    %v6217 = vmul.f32 %v6211, %v6211
    %v6218 = vmul.f32 %v6212, %v6212
    %v6219 = vmul.f32 %v6213, %v6213
    %v6220 = vmul.f32 %v6214, %v6214
    %6227 = vst [vmem:[#allocation1] ss:$4 sm:$0xff] %v6215
    %s6228 = scalar_lea.vmem [#allocation1], 1
    %6229 = vst [vmem:[%s6228] ss:$4 sm:$0xff] %v6216
    %s6230 = scalar_lea.vmem [#allocation1], 2
    %6231 = vst [vmem:[%s6230] ss:$4 sm:$0xff] %v6217
    %s6232 = scalar_lea.vmem [#allocation1], 3
    %6233 = vst [vmem:[%s6232] ss:$4 sm:$0xff] %v6218
    %s6234 = scalar_lea.vmem [#allocation1], 32
    %6235 = vst [vmem:[%s6234] ss:$4 sm:$0xff] %v6219
    %s6236 = scalar_lea.vmem [#allocation1], 33
    %6237 = vst [vmem:[%s6236] ss:$4 sm:$0xff] %v6220
    %v6238 = vld.sshfl [vmem:[#allocation1] sm:$0xff pattern:$0x73625140]
    %v6239 = vld.sshfl [vmem:[#allocation1 + $0x20] sm:$0xff pattern:$0x73625140]
    %v6242 = vsel %vm75, %v6238, 0.0
    %6243 = vadd.xlane.f32.xlu0 %v6242
    %v6244 = vpop.xlane.xlu0 %6243
    %v6245 = vsel %vm4656, %v6239, 0.0
    %6246 = vadd.xlane.f32.xlu0 %v6245
    %v6247 = vpop.xlane.xlu0 %6246
    %v6248 = vmul.f32 %v6244, %v1187
    %v6249 = vmul.f32 %v6247, %v1187
    %v6250 = vadd.f32 %v6248, 1e-05
    %v6251 = vadd.f32 %v6249, 1e-05
    %v6252 = vrsqrt.pop %v6250
    %v6253 = vmul.f32 %v6252, %v6250
    %v6254 = vmul.f32 %v6253, %v6252
    %v6255 = vmul.f32 0.5, %v6254
    %v6256 = vsub.f32 1.5, %v6255
    %v6257 = vmul.f32 %v6252, %v6256
    %vm6258 = vweird.f32 %v6250
    %vm6259 = vweird.f32 %v6252
    %vm6260 = vmor %vm6258, %vm6259
    %v6261 = vsel %vm6260, %v6252, %v6257
    %v6262 = vrsqrt.pop %v6251
    %v6263 = vmul.f32 %v6262, %v6251
    %v6264 = vmul.f32 %v6263, %v6262
    %v6265 = vmul.f32 0.5, %v6264
    %v6266 = vsub.f32 1.5, %v6265
    %v6267 = vmul.f32 %v6262, %v6266
    %vm6268 = vweird.f32 %v6251
    %vm6269 = vweird.f32 %v6262
    %vm6270 = vmor %vm6268, %vm6269
    %v6271 = vsel %vm6270, %v6262, %v6267
    %v6275 = vunpack.c.l.s4 269488144
    %v6276 = vunpack.c.0.s8 %v6275
    %v6277 = vperm.slane %v6261, %v6276
    %v6279 = vunpack.c.l.s4 842150450
    %v6280 = vunpack.c.0.s8 %v6279
    %v6281 = vperm.slane %v6261, %v6280
    %v6283 = vunpack.c.l.s4 1414812756
    %v6284 = vunpack.c.0.s8 %v6283
    %v6285 = vperm.slane %v6261, %v6284
    %v6287 = vunpack.c.l.s4 1987475062
    %v6288 = vunpack.c.0.s8 %v6287
    %v6289 = vperm.slane %v6261, %v6288
    %v6291 = vunpack.c.l.s4 269488144
    %v6292 = vunpack.c.0.s8 %v6291
    %v6293 = vperm.slane %v6271, %v6292
    %v6295 = vunpack.c.l.s4 842150450
    %v6296 = vunpack.c.0.s8 %v6295
    %v6297 = vperm.slane %v6271, %v6296
    %v6304 = vmul.f32 %v6209, %v6277
    %v6305 = vmul.f32 %v6210, %v6281
    %v6306 = vmul.f32 %v6211, %v6285
    %v6307 = vmul.f32 %v6212, %v6289
    %v6308 = vmul.f32 %v6213, %v6293
    %v6309 = vmul.f32 %v6214, %v6297
    %v6310 = vperm.slane %v3717, 2
    %v6312 = vrot.slane %v6310, 2
    %v6313 = vrot.slane %v6310, 4
    %v6314 = vrot.slane %v6310, 6
    %v6318 = vmul.f32 %v6304, %v6310
    %v6319 = vmul.f32 %v6305, %v6312
    %v6320 = vmul.f32 %v6306, %v6313
    %v6321 = vmul.f32 %v6307, %v6314
    %v6322 = vmul.f32 %v6308, %v6310
    %v6323 = vmul.f32 %v6309, %v6312
    %v6324 = vperm.slane %v3717, 3
    %v6326 = vrot.slane %v6324, 2
    %v6327 = vrot.slane %v6324, 4
    %v6328 = vrot.slane %v6324, 6
    %v6332 = vadd.f32 %v6318, %v6324
    %v6333 = vadd.f32 %v6319, %v6326
    %v6334 = vadd.f32 %v6320, %v6327
    %v6335 = vadd.f32 %v6321, %v6328
    %v6336 = vadd.f32 %v6322, %v6324
    %v6337 = vadd.f32 %v6323, %v6326
    %v6338 = vld [vmem:[#allocation2 + $0x320] sm:$0xff]
    %v6339 = vld [vmem:[#allocation2 + $0x328] sm:$0xf]
    %v6340 = vld [vmem:[#allocation2 + $0x240] sm:$0xff]
    %v6341 = vld [vmem:[#allocation2 + $0x248] sm:$0xff]
    %v6342 = vld [vmem:[#allocation2 + $0x250] sm:$0xff]
    %v6343 = vld [vmem:[#allocation2 + $0x258] sm:$0xff]
    %v6344 = vperm.slane %v6338, 0
    %6351 = vst [vmem:[#allocation1] ss:$4 sm:$0xff] %v6332
    %s6352 = scalar_lea.vmem [#allocation1], 1
    %6353 = vst [vmem:[%s6352] ss:$4 sm:$0xff] %v6333
    %s6354 = scalar_lea.vmem [#allocation1], 2
    %6355 = vst [vmem:[%s6354] ss:$4 sm:$0xff] %v6334
    %s6356 = scalar_lea.vmem [#allocation1], 3
    %6357 = vst [vmem:[%s6356] ss:$4 sm:$0xff] %v6335
    %s6358 = scalar_lea.vmem [#allocation1], 32
    %6359 = vst [vmem:[%s6358] ss:$4 sm:$0xff] %v6336
    %s6360 = scalar_lea.vmem [#allocation1], 33
    %6361 = vst [vmem:[%s6360] ss:$4 sm:$0xff] %v6337
    %v6362 = vld.sshfl [vmem:[#allocation1] sm:$0xff pattern:$0x73625140]
    %v6363 = vld.sshfl [vmem:[#allocation1 + $0x20] sm:$0xff pattern:$0x73625140]
    %v6364 = vsel %vm75, %v6362, 0
    %v6366 = vsel %vm75, %v6363, 0
    %6368 = vmatpush.msra.mxu0 0.0
    %6369 = vmatpush.msra.mxu0 0.0
    %6370 = vmatpush.msra.mxu0 0.0
    %6371 = vmatpush.msra.mxu0 0.0
    %6372 = vmatpush.msra.mxu0 0.0
    %6373 = vmatpush.msra.mxu0 0.0
    %6374 = vmatpush.msra.mxu0 0.0
    %6375 = vmatpush.msra.mxu0 0.0
    %6376 = vmatpush.msra.mxu0 0.0
    %6377 = vmatpush.msra.mxu0 0.0
    %6378 = vmatpush.msra.mxu0 0.0
    %6379 = vmatpush.msra.mxu0 0.0
    %6380 = vmatpush.msra.mxu0 %v6343
    %6381 = vmatpush.msra.mxu0 %v6342
    %6382 = vmatpush.msra.mxu0 %v6341
    %6383 = vmatpush.msra.mxu0 %v6340
    %6384 = vmatmul.f32.gmra.mxu0 %v6364
    %v6385 = vpop.f32.mrf.mxu0
    %v6386 = vadd.f32 %v6344, %v6385
    %6387 = vmatmul.f32.gmra.mxu0 %v6366
    %v6388 = vpop.f32.mrf.mxu0
    %v6389 = vadd.f32 %v6344, %v6388
    %6390 = vdwg.mxu0
    %v6393 = vrot.slane %v6386, 2
    %v6394 = vrot.slane %v6386, 4
    %v6395 = vrot.slane %v6386, 6
    %v6396 = vrot.slane %v6389, 2
    %6397 = vrot.lane.b32.xlu0 %v6386, 120
    %v6398 = vpop.permute.xlu0 %6397
    %6399 = vrot.lane.b32.xlu0 %v6393, 120
    %v6400 = vpop.permute.xlu0 %6399
    %6401 = vrot.lane.b32.xlu0 %v6394, 120
    %v6402 = vpop.permute.xlu0 %6401
    %6403 = vrot.lane.b32.xlu0 %v6395, 120
    %v6404 = vpop.permute.xlu0 %6403
    %6405 = vrot.lane.b32.xlu0 %v6389, 120
    %v6406 = vpop.permute.xlu0 %6405
    %6407 = vrot.lane.b32.xlu0 %v6396, 120
    %v6408 = vpop.permute.xlu0 %6407
    %6409 = vrot.lane.b32.xlu0 %v6386, 112
    %v6410 = vpop.permute.xlu0 %6409
    %6411 = vrot.lane.b32.xlu0 %v6393, 112
    %v6412 = vpop.permute.xlu0 %6411
    %6413 = vrot.lane.b32.xlu0 %v6394, 112
    %v6414 = vpop.permute.xlu0 %6413
    %6415 = vrot.lane.b32.xlu0 %v6395, 112
    %v6416 = vpop.permute.xlu0 %6415
    %6417 = vrot.lane.b32.xlu0 %v6389, 112
    %v6418 = vpop.permute.xlu0 %6417
    %6419 = vrot.lane.b32.xlu0 %v6396, 112
    %v6420 = vpop.permute.xlu0 %6419
    %6421 = vrot.lane.b32.xlu0 %v6386, 104
    %v6422 = vpop.permute.xlu0 %6421
    %6423 = vrot.lane.b32.xlu0 %v6393, 104
    %v6424 = vpop.permute.xlu0 %6423
    %6425 = vrot.lane.b32.xlu0 %v6394, 104
    %v6426 = vpop.permute.xlu0 %6425
    %6427 = vrot.lane.b32.xlu0 %v6395, 104
    %v6428 = vpop.permute.xlu0 %6427
    %6429 = vrot.lane.b32.xlu0 %v6389, 104
    %v6430 = vpop.permute.xlu0 %6429
    %6431 = vrot.lane.b32.xlu0 %v6396, 104
    %v6432 = vpop.permute.xlu0 %6431
    %6433 = vst [vmem:[#allocation1] ss:$4 sm:$0xff] %v6386
    %s6434 = scalar_lea.vmem [#allocation1], 1
    %6435 = vst [vmem:[%s6434] ss:$4 sm:$0xff] %v6393
    %s6436 = scalar_lea.vmem [#allocation1], 2
    %6437 = vst [vmem:[%s6436] ss:$4 sm:$0xff] %v6394
    %v6438 = vld.sshfl [vmem:[#allocation1] sm:$0xff pattern:$0x73625140]
    %6439 = vst [vmem:[#allocation1] ss:$4 sm:$0xff] %v6386
    %s6440 = scalar_lea.vmem [#allocation1], 1
    %6441 = vst [vmem:[%s6440] ss:$4 sm:$0xff] %v6393
    %s6442 = scalar_lea.vmem [#allocation1], 2
    %6443 = vst [vmem:[%s6442] ss:$4 sm:$0xff] %v6394
    %v6444 = vld.sshfl [vmem:[#allocation1] sm:$0xff pattern:$0x73625140]
    %6445 = vrot.lane.b32.xlu0 %v6444, 96
    %v6446 = vpop.permute.xlu0 %6445
    %v6447 = vsel %vm195, %v6438, 0
    %v6449 = vsel %vm195, %v6446, 0
    %6451 = vmatpush.xpose.msra.mxu0 0.0
    %6452 = vmatpush.xpose.msra.mxu0 0.0
    %6453 = vmatpush.xpose.msra.mxu0 0.0
    %6454 = vmatpush.xpose.msra.mxu0 0.0
    %6455 = vmatpush.xpose.msra.mxu0 0.0
    %6456 = vmatpush.xpose.msra.mxu0 0.0
    %6457 = vmatpush.xpose.msra.mxu0 0.0
    %6458 = vmatpush.xpose.msra.mxu0 0.0
    %6459 = vmatpush.xpose.msra.mxu0 0.0
    %6460 = vmatpush.xpose.msra.mxu0 0.0
    %6461 = vmatpush.xpose.msra.mxu0 0.0
    %6462 = vmatpush.xpose.msra.mxu0 0.0
    %6463 = vmatpush.xpose.msra.mxu0 0.0
    %6464 = vmatpush.xpose.msra.mxu0 0.0
    %6465 = vmatpush.xpose.msra.mxu0 0.0
    %6466 = vmatpush.xpose.msra.mxu0 %v6449
    %6467 = vmatmul.f32.gmra.mxu0 %v6447
    %v6468 = vpop.f32.mrf.mxu0
    %v6469 = vadd.f32 0.0, %v6468
    %6470 = vdwg.mxu0
    %6471 = vst [vmem:[#allocation1] ss:$4 sm:$0xff] %v6395
    %s6472 = scalar_lea.vmem [#allocation1], 1
    %6473 = vst [vmem:[%s6472] ss:$4 sm:$0xff] %v6389
    %s6474 = scalar_lea.vmem [#allocation1], 2
    %6475 = vst [vmem:[%s6474] ss:$4 sm:$0xff] %v6396
    %v6476 = vld.sshfl [vmem:[#allocation1] sm:$0xff pattern:$0x73625140]
    %6477 = vst [vmem:[#allocation1] ss:$4 sm:$0xff] %v6395
    %s6478 = scalar_lea.vmem [#allocation1], 1
    %6479 = vst [vmem:[%s6478] ss:$4 sm:$0xff] %v6389
    %s6480 = scalar_lea.vmem [#allocation1], 2
    %6481 = vst [vmem:[%s6480] ss:$4 sm:$0xff] %v6396
    %v6482 = vld.sshfl [vmem:[#allocation1] sm:$0xff pattern:$0x73625140]
    %6483 = vrot.lane.b32.xlu0 %v6482, 96
    %v6484 = vpop.permute.xlu0 %6483
    %v6485 = vsel %vm195, %v6476, 0
    %v6487 = vsel %vm195, %v6484, 0
    %6489 = vmatpush.xpose.msra.mxu0 0.0
    %6490 = vmatpush.xpose.msra.mxu0 0.0
    %6491 = vmatpush.xpose.msra.mxu0 0.0
    %6492 = vmatpush.xpose.msra.mxu0 0.0
    %6493 = vmatpush.xpose.msra.mxu0 0.0
    %6494 = vmatpush.xpose.msra.mxu0 0.0
    %6495 = vmatpush.xpose.msra.mxu0 0.0
    %6496 = vmatpush.xpose.msra.mxu0 0.0
    %6497 = vmatpush.xpose.msra.mxu0 0.0
    %6498 = vmatpush.xpose.msra.mxu0 0.0
    %6499 = vmatpush.xpose.msra.mxu0 0.0
    %6500 = vmatpush.xpose.msra.mxu0 0.0
    %6501 = vmatpush.xpose.msra.mxu0 0.0
    %6502 = vmatpush.xpose.msra.mxu0 0.0
    %6503 = vmatpush.xpose.msra.mxu0 0.0
    %6504 = vmatpush.xpose.msra.mxu0 %v6487
    %6505 = vmatmul.f32.gmra.mxu0 %v6485
    %v6506 = vpop.f32.mrf.mxu0
    %v6507 = vadd.f32 0.0, %v6506
    %6508 = vdwg.mxu0
    %6509 = vst [vmem:[#allocation1] ss:$4 sm:$0xff] %v6398
    %s6510 = scalar_lea.vmem [#allocation1], 1
    %6511 = vst [vmem:[%s6510] ss:$4 sm:$0xff] %v6400
    %s6512 = scalar_lea.vmem [#allocation1], 2
    %6513 = vst [vmem:[%s6512] ss:$4 sm:$0xff] %v6402
    %v6514 = vld.sshfl [vmem:[#allocation1] sm:$0xff pattern:$0x73625140]
    %6515 = vst [vmem:[#allocation1] ss:$4 sm:$0xff] %v6398
    %s6516 = scalar_lea.vmem [#allocation1], 1
    %6517 = vst [vmem:[%s6516] ss:$4 sm:$0xff] %v6400
    %s6518 = scalar_lea.vmem [#allocation1], 2
    %6519 = vst [vmem:[%s6518] ss:$4 sm:$0xff] %v6402
    %v6520 = vld.sshfl [vmem:[#allocation1] sm:$0xff pattern:$0x73625140]
    %6521 = vrot.lane.b32.xlu0 %v6520, 96
    %v6522 = vpop.permute.xlu0 %6521
    %v6523 = vsel %vm195, %v6514, 0
    %v6525 = vsel %vm195, %v6522, 0
    %6527 = vmatpush.xpose.msra.mxu0 0.0
    %6528 = vmatpush.xpose.msra.mxu0 0.0
    %6529 = vmatpush.xpose.msra.mxu0 0.0
    %6530 = vmatpush.xpose.msra.mxu0 0.0
    %6531 = vmatpush.xpose.msra.mxu0 0.0
    %6532 = vmatpush.xpose.msra.mxu0 0.0
    %6533 = vmatpush.xpose.msra.mxu0 0.0
    %6534 = vmatpush.xpose.msra.mxu0 0.0
    %6535 = vmatpush.xpose.msra.mxu0 0.0
    %6536 = vmatpush.xpose.msra.mxu0 0.0
    %6537 = vmatpush.xpose.msra.mxu0 0.0
    %6538 = vmatpush.xpose.msra.mxu0 0.0
    %6539 = vmatpush.xpose.msra.mxu0 0.0
    %6540 = vmatpush.xpose.msra.mxu0 0.0
    %6541 = vmatpush.xpose.msra.mxu0 0.0
    %6542 = vmatpush.xpose.msra.mxu0 %v6525
    %6543 = vmatmul.f32.gmra.mxu0 %v6523
    %v6544 = vpop.f32.mrf.mxu0
    %v6545 = vadd.f32 0.0, %v6544
    %6546 = vdwg.mxu0
    %6547 = vst [vmem:[#allocation1] ss:$4 sm:$0xff] %v6404
    %s6548 = scalar_lea.vmem [#allocation1], 1
    %6549 = vst [vmem:[%s6548] ss:$4 sm:$0xff] %v6406
    %s6550 = scalar_lea.vmem [#allocation1], 2
    %6551 = vst [vmem:[%s6550] ss:$4 sm:$0xff] %v6408
    %v6552 = vld.sshfl [vmem:[#allocation1] sm:$0xff pattern:$0x73625140]
    %6553 = vst [vmem:[#allocation1] ss:$4 sm:$0xff] %v6404
    %s6554 = scalar_lea.vmem [#allocation1], 1
    %6555 = vst [vmem:[%s6554] ss:$4 sm:$0xff] %v6406
    %s6556 = scalar_lea.vmem [#allocation1], 2
    %6557 = vst [vmem:[%s6556] ss:$4 sm:$0xff] %v6408
    %v6558 = vld.sshfl [vmem:[#allocation1] sm:$0xff pattern:$0x73625140]
    %6559 = vrot.lane.b32.xlu0 %v6558, 96
    %v6560 = vpop.permute.xlu0 %6559
    %v6561 = vsel %vm195, %v6552, 0
    %v6563 = vsel %vm195, %v6560, 0
    %6565 = vmatpush.xpose.msra.mxu0 0.0
    %6566 = vmatpush.xpose.msra.mxu0 0.0
    %6567 = vmatpush.xpose.msra.mxu0 0.0
    %6568 = vmatpush.xpose.msra.mxu0 0.0
    %6569 = vmatpush.xpose.msra.mxu0 0.0
    %6570 = vmatpush.xpose.msra.mxu0 0.0
    %6571 = vmatpush.xpose.msra.mxu0 0.0
    %6572 = vmatpush.xpose.msra.mxu0 0.0
    %6573 = vmatpush.xpose.msra.mxu0 0.0
    %6574 = vmatpush.xpose.msra.mxu0 0.0
    %6575 = vmatpush.xpose.msra.mxu0 0.0
    %6576 = vmatpush.xpose.msra.mxu0 0.0
    %6577 = vmatpush.xpose.msra.mxu0 0.0
    %6578 = vmatpush.xpose.msra.mxu0 0.0
    %6579 = vmatpush.xpose.msra.mxu0 0.0
    %6580 = vmatpush.xpose.msra.mxu0 %v6563
    %6581 = vmatmul.f32.gmra.mxu0 %v6561
    %v6582 = vpop.f32.mrf.mxu0
    %v6583 = vadd.f32 0.0, %v6582
    %6584 = vdwg.mxu0
    %6585 = vst [vmem:[#allocation1] ss:$4 sm:$0xff] %v6410
    %s6586 = scalar_lea.vmem [#allocation1], 1
    %6587 = vst [vmem:[%s6586] ss:$4 sm:$0xff] %v6412
    %s6588 = scalar_lea.vmem [#allocation1], 2
    %6589 = vst [vmem:[%s6588] ss:$4 sm:$0xff] %v6414
    %v6590 = vld.sshfl [vmem:[#allocation1] sm:$0xff pattern:$0x73625140]
    %6591 = vst [vmem:[#allocation1] ss:$4 sm:$0xff] %v6410
    %s6592 = scalar_lea.vmem [#allocation1], 1
    %6593 = vst [vmem:[%s6592] ss:$4 sm:$0xff] %v6412
    %s6594 = scalar_lea.vmem [#allocation1], 2
    %6595 = vst [vmem:[%s6594] ss:$4 sm:$0xff] %v6414
    %v6596 = vld.sshfl [vmem:[#allocation1] sm:$0xff pattern:$0x73625140]
    %6597 = vrot.lane.b32.xlu0 %v6596, 96
    %v6598 = vpop.permute.xlu0 %6597
    %v6599 = vsel %vm195, %v6590, 0
    %v6601 = vsel %vm195, %v6598, 0
    %6603 = vmatpush.xpose.msra.mxu0 0.0
    %6604 = vmatpush.xpose.msra.mxu0 0.0
    %6605 = vmatpush.xpose.msra.mxu0 0.0
    %6606 = vmatpush.xpose.msra.mxu0 0.0
    %6607 = vmatpush.xpose.msra.mxu0 0.0
    %6608 = vmatpush.xpose.msra.mxu0 0.0
    %6609 = vmatpush.xpose.msra.mxu0 0.0
    %6610 = vmatpush.xpose.msra.mxu0 0.0
    %6611 = vmatpush.xpose.msra.mxu0 0.0
    %6612 = vmatpush.xpose.msra.mxu0 0.0
    %6613 = vmatpush.xpose.msra.mxu0 0.0
    %6614 = vmatpush.xpose.msra.mxu0 0.0
    %6615 = vmatpush.xpose.msra.mxu0 0.0
    %6616 = vmatpush.xpose.msra.mxu0 0.0
    %6617 = vmatpush.xpose.msra.mxu0 0.0
    %6618 = vmatpush.xpose.msra.mxu0 %v6601
    %6619 = vmatmul.f32.gmra.mxu0 %v6599
    %v6620 = vpop.f32.mrf.mxu0
    %v6621 = vadd.f32 0.0, %v6620
    %6622 = vdwg.mxu0
    %6623 = vst [vmem:[#allocation1] ss:$4 sm:$0xff] %v6416
    %s6624 = scalar_lea.vmem [#allocation1], 1
    %6625 = vst [vmem:[%s6624] ss:$4 sm:$0xff] %v6418
    %s6626 = scalar_lea.vmem [#allocation1], 2
    %6627 = vst [vmem:[%s6626] ss:$4 sm:$0xff] %v6420
    %v6628 = vld.sshfl [vmem:[#allocation1] sm:$0xff pattern:$0x73625140]
    %6629 = vst [vmem:[#allocation1] ss:$4 sm:$0xff] %v6416
    %s6630 = scalar_lea.vmem [#allocation1], 1
    %6631 = vst [vmem:[%s6630] ss:$4 sm:$0xff] %v6418
    %s6632 = scalar_lea.vmem [#allocation1], 2
    %6633 = vst [vmem:[%s6632] ss:$4 sm:$0xff] %v6420
    %v6634 = vld.sshfl [vmem:[#allocation1] sm:$0xff pattern:$0x73625140]
    %6635 = vrot.lane.b32.xlu0 %v6634, 96
    %v6636 = vpop.permute.xlu0 %6635
    %v6637 = vsel %vm195, %v6628, 0
    %v6639 = vsel %vm195, %v6636, 0
    %6641 = vmatpush.xpose.msra.mxu0 0.0
    %6642 = vmatpush.xpose.msra.mxu0 0.0
    %6643 = vmatpush.xpose.msra.mxu0 0.0
    %6644 = vmatpush.xpose.msra.mxu0 0.0
    %6645 = vmatpush.xpose.msra.mxu0 0.0
    %6646 = vmatpush.xpose.msra.mxu0 0.0
    %6647 = vmatpush.xpose.msra.mxu0 0.0
    %6648 = vmatpush.xpose.msra.mxu0 0.0
    %6649 = vmatpush.xpose.msra.mxu0 0.0
    %6650 = vmatpush.xpose.msra.mxu0 0.0
    %6651 = vmatpush.xpose.msra.mxu0 0.0
    %6652 = vmatpush.xpose.msra.mxu0 0.0
    %6653 = vmatpush.xpose.msra.mxu0 0.0
    %6654 = vmatpush.xpose.msra.mxu0 0.0
    %6655 = vmatpush.xpose.msra.mxu0 0.0
    %6656 = vmatpush.xpose.msra.mxu0 %v6639
    %6657 = vmatmul.f32.gmra.mxu0 %v6637
    %v6658 = vpop.f32.mrf.mxu0
    %v6659 = vadd.f32 0.0, %v6658
    %6660 = vdwg.mxu0
    %6661 = vst [vmem:[#allocation1] ss:$4 sm:$0xff] %v6422
    %s6662 = scalar_lea.vmem [#allocation1], 1
    %6663 = vst [vmem:[%s6662] ss:$4 sm:$0xff] %v6424
    %s6664 = scalar_lea.vmem [#allocation1], 2
    %6665 = vst [vmem:[%s6664] ss:$4 sm:$0xff] %v6426
    %v6666 = vld.sshfl [vmem:[#allocation1] sm:$0xff pattern:$0x73625140]
    %6667 = vst [vmem:[#allocation1] ss:$4 sm:$0xff] %v6422
    %s6668 = scalar_lea.vmem [#allocation1], 1
    %6669 = vst [vmem:[%s6668] ss:$4 sm:$0xff] %v6424
    %s6670 = scalar_lea.vmem [#allocation1], 2
    %6671 = vst [vmem:[%s6670] ss:$4 sm:$0xff] %v6426
    %v6672 = vld.sshfl [vmem:[#allocation1] sm:$0xff pattern:$0x73625140]
    %6673 = vrot.lane.b32.xlu0 %v6672, 96
    %v6674 = vpop.permute.xlu0 %6673
    %v6675 = vsel %vm195, %v6666, 0
    %v6677 = vsel %vm195, %v6674, 0
    %6679 = vmatpush.xpose.msra.mxu0 0.0
    %6680 = vmatpush.xpose.msra.mxu0 0.0
    %6681 = vmatpush.xpose.msra.mxu0 0.0
    %6682 = vmatpush.xpose.msra.mxu0 0.0
    %6683 = vmatpush.xpose.msra.mxu0 0.0
    %6684 = vmatpush.xpose.msra.mxu0 0.0
    %6685 = vmatpush.xpose.msra.mxu0 0.0
    %6686 = vmatpush.xpose.msra.mxu0 0.0
    %6687 = vmatpush.xpose.msra.mxu0 0.0
    %6688 = vmatpush.xpose.msra.mxu0 0.0
    %6689 = vmatpush.xpose.msra.mxu0 0.0
    %6690 = vmatpush.xpose.msra.mxu0 0.0
    %6691 = vmatpush.xpose.msra.mxu0 0.0
    %6692 = vmatpush.xpose.msra.mxu0 0.0
    %6693 = vmatpush.xpose.msra.mxu0 0.0
    %6694 = vmatpush.xpose.msra.mxu0 %v6677
    %6695 = vmatmul.f32.gmra.mxu0 %v6675
    %v6696 = vpop.f32.mrf.mxu0
    %v6697 = vadd.f32 0.0, %v6696
    %6698 = vdwg.mxu0
    %6699 = vst [vmem:[#allocation1] ss:$4 sm:$0xff] %v6428
    %s6700 = scalar_lea.vmem [#allocation1], 1
    %6701 = vst [vmem:[%s6700] ss:$4 sm:$0xff] %v6430
    %s6702 = scalar_lea.vmem [#allocation1], 2
    %6703 = vst [vmem:[%s6702] ss:$4 sm:$0xff] %v6432
    %v6704 = vld.sshfl [vmem:[#allocation1] sm:$0xff pattern:$0x73625140]
    %6705 = vst [vmem:[#allocation1] ss:$4 sm:$0xff] %v6428
    %s6706 = scalar_lea.vmem [#allocation1], 1
    %6707 = vst [vmem:[%s6706] ss:$4 sm:$0xff] %v6430
    %s6708 = scalar_lea.vmem [#allocation1], 2
    %6709 = vst [vmem:[%s6708] ss:$4 sm:$0xff] %v6432
    %v6710 = vld.sshfl [vmem:[#allocation1] sm:$0xff pattern:$0x73625140]
    %6711 = vrot.lane.b32.xlu0 %v6710, 96
    %v6712 = vpop.permute.xlu0 %6711
    %v6713 = vsel %vm195, %v6704, 0
    %v6715 = vsel %vm195, %v6712, 0
    %6717 = vmatpush.xpose.msra.mxu0 0.0
    %6718 = vmatpush.xpose.msra.mxu0 0.0
    %6719 = vmatpush.xpose.msra.mxu0 0.0
    %6720 = vmatpush.xpose.msra.mxu0 0.0
    %6721 = vmatpush.xpose.msra.mxu0 0.0
    %6722 = vmatpush.xpose.msra.mxu0 0.0
    %6723 = vmatpush.xpose.msra.mxu0 0.0
    %6724 = vmatpush.xpose.msra.mxu0 0.0
    %6725 = vmatpush.xpose.msra.mxu0 0.0
    %6726 = vmatpush.xpose.msra.mxu0 0.0
    %6727 = vmatpush.xpose.msra.mxu0 0.0
    %6728 = vmatpush.xpose.msra.mxu0 0.0
    %6729 = vmatpush.xpose.msra.mxu0 0.0
    %6730 = vmatpush.xpose.msra.mxu0 0.0
    %6731 = vmatpush.xpose.msra.mxu0 0.0
    %6732 = vmatpush.xpose.msra.mxu0 %v6715
    %6733 = vmatmul.f32.gmra.mxu0 %v6713
    %v6734 = vpop.f32.mrf.mxu0
    %v6735 = vadd.f32 0.0, %v6734
    %6736 = vdwg.mxu0
    %v6737 = vmul.f32 %v6469, 0.35355338
    %v6738 = vmul.f32 %v6507, 0.35355338
    %v6739 = vmul.f32 %v6545, 0.35355338
    %v6740 = vmul.f32 %v6583, 0.35355338
    %v6741 = vmul.f32 %v6621, 0.35355338
    %v6742 = vmul.f32 %v6659, 0.35355338
    %v6743 = vmul.f32 %v6697, 0.35355338
    %v6744 = vmul.f32 %v6735, 0.35355338
    %v6745 = vadd.f32 %v6737, %v3703
    %v6746 = vadd.f32 %v6738, %v3703
    %v6747 = vadd.f32 %v6739, %v3703
    %v6748 = vadd.f32 %v6740, %v3703
    %v6749 = vadd.f32 %v6741, %v3703
    %v6750 = vadd.f32 %v6742, %v3703
    %v6751 = vadd.f32 %v6743, %v3703
    %v6752 = vadd.f32 %v6744, %v3703
    %v6753 = vsel %vm4125, %v6745, -inf
    %6754 = vmax.xlane.f32.xlu0 %v6753
    %v6755 = vpop.xlane.xlu0 %6754
    %v6756 = vsel %vm4125, %v6746, -inf
    %6757 = vmax.xlane.f32.xlu0 %v6756
    %v6758 = vpop.xlane.xlu0 %6757
    %v6759 = vsel %vm4125, %v6747, -inf
    %6760 = vmax.xlane.f32.xlu0 %v6759
    %v6761 = vpop.xlane.xlu0 %6760
    %v6762 = vsel %vm4125, %v6748, -inf
    %6763 = vmax.xlane.f32.xlu0 %v6762
    %v6764 = vpop.xlane.xlu0 %6763
    %v6765 = vsel %vm4125, %v6749, -inf
    %6766 = vmax.xlane.f32.xlu0 %v6765
    %v6767 = vpop.xlane.xlu0 %6766
    %v6768 = vsel %vm4125, %v6750, -inf
    %6769 = vmax.xlane.f32.xlu0 %v6768
    %v6770 = vpop.xlane.xlu0 %6769
    %v6771 = vsel %vm4125, %v6751, -inf
    %6772 = vmax.xlane.f32.xlu0 %v6771
    %v6773 = vpop.xlane.xlu0 %6772
    %v6774 = vsel %vm4125, %v6752, -inf
    %6775 = vmax.xlane.f32.xlu0 %v6774
    %v6776 = vpop.xlane.xlu0 %6775
    %v6777 = vsub.f32 %v6745, %v6755
    %v6778 = vsub.f32 %v6746, %v6758
    %v6779 = vsub.f32 %v6747, %v6761
    %v6780 = vsub.f32 %v6748, %v6764
    %v6781 = vsub.f32 %v6749, %v6767
    %v6782 = vsub.f32 %v6750, %v6770
    %v6783 = vsub.f32 %v6751, %v6773
    %v6784 = vsub.f32 %v6752, %v6776
    %v6785 = vmul.f32 %v6777, 1.442695
    %v6786 = vpow.pop %v6785
    %v6787 = vmul.f32 %v6778, 1.442695
    %v6788 = vpow.pop %v6787
    %v6789 = vmul.f32 %v6779, 1.442695
    %v6790 = vpow.pop %v6789
    %v6791 = vmul.f32 %v6780, 1.442695
    %v6792 = vpow.pop %v6791
    %v6793 = vmul.f32 %v6781, 1.442695
    %v6794 = vpow.pop %v6793
    %v6795 = vmul.f32 %v6782, 1.442695
    %v6796 = vpow.pop %v6795
    %v6797 = vmul.f32 %v6783, 1.442695
    %v6798 = vpow.pop %v6797
    %v6799 = vmul.f32 %v6784, 1.442695
    %v6800 = vpow.pop %v6799
    %v6801 = vsel %vm4125, %v6786, 0.0
    %6802 = vadd.xlane.f32.xlu0 %v6801
    %v6803 = vpop.xlane.xlu0 %6802
    %v6804 = vsel %vm4125, %v6788, 0.0
    %6805 = vadd.xlane.f32.xlu0 %v6804
    %v6806 = vpop.xlane.xlu0 %6805
    %v6807 = vsel %vm4125, %v6790, 0.0
    %6808 = vadd.xlane.f32.xlu0 %v6807
    %v6809 = vpop.xlane.xlu0 %6808
    %v6810 = vsel %vm4125, %v6792, 0.0
    %6811 = vadd.xlane.f32.xlu0 %v6810
    %v6812 = vpop.xlane.xlu0 %6811
    %v6813 = vsel %vm4125, %v6794, 0.0
    %6814 = vadd.xlane.f32.xlu0 %v6813
    %v6815 = vpop.xlane.xlu0 %6814
    %v6816 = vsel %vm4125, %v6796, 0.0
    %6817 = vadd.xlane.f32.xlu0 %v6816
    %v6818 = vpop.xlane.xlu0 %6817
    %v6819 = vsel %vm4125, %v6798, 0.0
    %6820 = vadd.xlane.f32.xlu0 %v6819
    %v6821 = vpop.xlane.xlu0 %6820
    %v6822 = vsel %vm4125, %v6800, 0.0
    %6823 = vadd.xlane.f32.xlu0 %v6822
    %v6824 = vpop.xlane.xlu0 %6823
    %6825 = vst [vmem:[#allocation1] ss:$4 sm:$0xff] %v6386
    %s6826 = scalar_lea.vmem [#allocation1], 1
    %6827 = vst [vmem:[%s6826] ss:$4 sm:$0xff] %v6393
    %s6828 = scalar_lea.vmem [#allocation1], 2
    %6829 = vst [vmem:[%s6828] ss:$4 sm:$0xff] %v6394
    %v6830 = vld.sshfl [vmem:[#allocation1] sm:$0xff pattern:$0x73625140]
    %6831 = vrot.lane.b32.xlu0 %v6830, 64
    %v6832 = vpop.permute.xlu0 %6831
    %v6834 = vsel %vm4206, %v6786, 0
    %v6836 = vsel %vm4210, %v6832, 0
    %6838 = vmatpush.msra.mxu0 0.0
    %6839 = vmatpush.msra.mxu0 0.0
    %6840 = vmatpush.msra.mxu0 0.0
    %6841 = vmatpush.msra.mxu0 0.0
    %6842 = vmatpush.msra.mxu0 0.0
    %6843 = vmatpush.msra.mxu0 0.0
    %6844 = vmatpush.msra.mxu0 0.0
    %6845 = vmatpush.msra.mxu0 0.0
    %6846 = vmatpush.msra.mxu0 0.0
    %6847 = vmatpush.msra.mxu0 0.0
    %6848 = vmatpush.msra.mxu0 0.0
    %6849 = vmatpush.msra.mxu0 0.0
    %6850 = vmatpush.msra.mxu0 0.0
    %6851 = vmatpush.msra.mxu0 0.0
    %6852 = vmatpush.msra.mxu0 0.0
    %6853 = vmatpush.msra.mxu0 %v6836
    %6854 = vmatmul.f32.gmra.mxu0 %v6834
    %v6855 = vpop.f32.mrf.mxu0
    %v6856 = vadd.f32 0.0, %v6855
    %6857 = vdwg.mxu0
    %6858 = vst [vmem:[#allocation1] ss:$4 sm:$0xff] %v6395
    %s6859 = scalar_lea.vmem [#allocation1], 1
    %6860 = vst [vmem:[%s6859] ss:$4 sm:$0xff] %v6389
    %s6861 = scalar_lea.vmem [#allocation1], 2
    %6862 = vst [vmem:[%s6861] ss:$4 sm:$0xff] %v6396
    %v6863 = vld.sshfl [vmem:[#allocation1] sm:$0xff pattern:$0x73625140]
    %6864 = vrot.lane.b32.xlu0 %v6863, 64
    %v6865 = vpop.permute.xlu0 %6864
    %v6867 = vsel %vm4206, %v6788, 0
    %v6869 = vsel %vm4210, %v6865, 0
    %6871 = vmatpush.msra.mxu0 0.0
    %6872 = vmatpush.msra.mxu0 0.0
    %6873 = vmatpush.msra.mxu0 0.0
    %6874 = vmatpush.msra.mxu0 0.0
    %6875 = vmatpush.msra.mxu0 0.0
    %6876 = vmatpush.msra.mxu0 0.0
    %6877 = vmatpush.msra.mxu0 0.0
    %6878 = vmatpush.msra.mxu0 0.0
    %6879 = vmatpush.msra.mxu0 0.0
    %6880 = vmatpush.msra.mxu0 0.0
    %6881 = vmatpush.msra.mxu0 0.0
    %6882 = vmatpush.msra.mxu0 0.0
    %6883 = vmatpush.msra.mxu0 0.0
    %6884 = vmatpush.msra.mxu0 0.0
    %6885 = vmatpush.msra.mxu0 0.0
    %6886 = vmatpush.msra.mxu0 %v6869
    %6887 = vmatmul.f32.gmra.mxu0 %v6867
    %v6888 = vpop.f32.mrf.mxu0
    %v6889 = vadd.f32 0.0, %v6888
    %6890 = vdwg.mxu0
    %6891 = vst [vmem:[#allocation1] ss:$4 sm:$0xff] %v6398
    %s6892 = scalar_lea.vmem [#allocation1], 1
    %6893 = vst [vmem:[%s6892] ss:$4 sm:$0xff] %v6400
    %s6894 = scalar_lea.vmem [#allocation1], 2
    %6895 = vst [vmem:[%s6894] ss:$4 sm:$0xff] %v6402
    %v6896 = vld.sshfl [vmem:[#allocation1] sm:$0xff pattern:$0x73625140]
    %6897 = vrot.lane.b32.xlu0 %v6896, 64
    %v6898 = vpop.permute.xlu0 %6897
    %v6900 = vsel %vm4206, %v6790, 0
    %v6902 = vsel %vm4210, %v6898, 0
    %6904 = vmatpush.msra.mxu0 0.0
    %6905 = vmatpush.msra.mxu0 0.0
    %6906 = vmatpush.msra.mxu0 0.0
    %6907 = vmatpush.msra.mxu0 0.0
    %6908 = vmatpush.msra.mxu0 0.0
    %6909 = vmatpush.msra.mxu0 0.0
    %6910 = vmatpush.msra.mxu0 0.0
    %6911 = vmatpush.msra.mxu0 0.0
    %6912 = vmatpush.msra.mxu0 0.0
    %6913 = vmatpush.msra.mxu0 0.0
    %6914 = vmatpush.msra.mxu0 0.0
    %6915 = vmatpush.msra.mxu0 0.0
    %6916 = vmatpush.msra.mxu0 0.0
    %6917 = vmatpush.msra.mxu0 0.0
    %6918 = vmatpush.msra.mxu0 0.0
    %6919 = vmatpush.msra.mxu0 %v6902
    %6920 = vmatmul.f32.gmra.mxu0 %v6900
    %v6921 = vpop.f32.mrf.mxu0
    %v6922 = vadd.f32 0.0, %v6921
    %6923 = vdwg.mxu0
    %6924 = vst [vmem:[#allocation1] ss:$4 sm:$0xff] %v6404
    %s6925 = scalar_lea.vmem [#allocation1], 1
    %6926 = vst [vmem:[%s6925] ss:$4 sm:$0xff] %v6406
    %s6927 = scalar_lea.vmem [#allocation1], 2
    %6928 = vst [vmem:[%s6927] ss:$4 sm:$0xff] %v6408
    %v6929 = vld.sshfl [vmem:[#allocation1] sm:$0xff pattern:$0x73625140]
    %6930 = vrot.lane.b32.xlu0 %v6929, 64
    %v6931 = vpop.permute.xlu0 %6930
    %v6933 = vsel %vm4206, %v6792, 0
    %v6935 = vsel %vm4210, %v6931, 0
    %6937 = vmatpush.msra.mxu0 0.0
    %6938 = vmatpush.msra.mxu0 0.0
    %6939 = vmatpush.msra.mxu0 0.0
    %6940 = vmatpush.msra.mxu0 0.0
    %6941 = vmatpush.msra.mxu0 0.0
    %6942 = vmatpush.msra.mxu0 0.0
    %6943 = vmatpush.msra.mxu0 0.0
    %6944 = vmatpush.msra.mxu0 0.0
    %6945 = vmatpush.msra.mxu0 0.0
    %6946 = vmatpush.msra.mxu0 0.0
    %6947 = vmatpush.msra.mxu0 0.0
    %6948 = vmatpush.msra.mxu0 0.0
    %6949 = vmatpush.msra.mxu0 0.0
    %6950 = vmatpush.msra.mxu0 0.0
    %6951 = vmatpush.msra.mxu0 0.0
    %6952 = vmatpush.msra.mxu0 %v6935
    %6953 = vmatmul.f32.gmra.mxu0 %v6933
    %v6954 = vpop.f32.mrf.mxu0
    %v6955 = vadd.f32 0.0, %v6954
    %6956 = vdwg.mxu0
    %6957 = vst [vmem:[#allocation1] ss:$4 sm:$0xff] %v6410
    %s6958 = scalar_lea.vmem [#allocation1], 1
    %6959 = vst [vmem:[%s6958] ss:$4 sm:$0xff] %v6412
    %s6960 = scalar_lea.vmem [#allocation1], 2
    %6961 = vst [vmem:[%s6960] ss:$4 sm:$0xff] %v6414
    %v6962 = vld.sshfl [vmem:[#allocation1] sm:$0xff pattern:$0x73625140]
    %6963 = vrot.lane.b32.xlu0 %v6962, 64
    %v6964 = vpop.permute.xlu0 %6963
    %v6966 = vsel %vm4206, %v6794, 0
    %v6968 = vsel %vm4210, %v6964, 0
    %6970 = vmatpush.msra.mxu0 0.0
    %6971 = vmatpush.msra.mxu0 0.0
    %6972 = vmatpush.msra.mxu0 0.0
    %6973 = vmatpush.msra.mxu0 0.0
    %6974 = vmatpush.msra.mxu0 0.0
    %6975 = vmatpush.msra.mxu0 0.0
    %6976 = vmatpush.msra.mxu0 0.0
    %6977 = vmatpush.msra.mxu0 0.0
    %6978 = vmatpush.msra.mxu0 0.0
    %6979 = vmatpush.msra.mxu0 0.0
    %6980 = vmatpush.msra.mxu0 0.0
    %6981 = vmatpush.msra.mxu0 0.0
    %6982 = vmatpush.msra.mxu0 0.0
    %6983 = vmatpush.msra.mxu0 0.0
    %6984 = vmatpush.msra.mxu0 0.0
    %6985 = vmatpush.msra.mxu0 %v6968
    %6986 = vmatmul.f32.gmra.mxu0 %v6966
    %v6987 = vpop.f32.mrf.mxu0
    %v6988 = vadd.f32 0.0, %v6987
    %6989 = vdwg.mxu0
    %6990 = vst [vmem:[#allocation1] ss:$4 sm:$0xff] %v6416
    %s6991 = scalar_lea.vmem [#allocation1], 1
    %6992 = vst [vmem:[%s6991] ss:$4 sm:$0xff] %v6418
    %s6993 = scalar_lea.vmem [#allocation1], 2
    %6994 = vst [vmem:[%s6993] ss:$4 sm:$0xff] %v6420
    %v6995 = vld.sshfl [vmem:[#allocation1] sm:$0xff pattern:$0x73625140]
    %6996 = vrot.lane.b32.xlu0 %v6995, 64
    %v6997 = vpop.permute.xlu0 %6996
    %v6999 = vsel %vm4206, %v6796, 0
    %v7001 = vsel %vm4210, %v6997, 0
    %7003 = vmatpush.msra.mxu0 0.0
    %7004 = vmatpush.msra.mxu0 0.0
    %7005 = vmatpush.msra.mxu0 0.0
    %7006 = vmatpush.msra.mxu0 0.0
    %7007 = vmatpush.msra.mxu0 0.0
    %7008 = vmatpush.msra.mxu0 0.0
    %7009 = vmatpush.msra.mxu0 0.0
    %7010 = vmatpush.msra.mxu0 0.0
    %7011 = vmatpush.msra.mxu0 0.0
    %7012 = vmatpush.msra.mxu0 0.0
    %7013 = vmatpush.msra.mxu0 0.0
    %7014 = vmatpush.msra.mxu0 0.0
    %7015 = vmatpush.msra.mxu0 0.0
    %7016 = vmatpush.msra.mxu0 0.0
    %7017 = vmatpush.msra.mxu0 0.0
    %7018 = vmatpush.msra.mxu0 %v7001
    %7019 = vmatmul.f32.gmra.mxu0 %v6999
    %v7020 = vpop.f32.mrf.mxu0
    %v7021 = vadd.f32 0.0, %v7020
    %7022 = vdwg.mxu0
    %7023 = vst [vmem:[#allocation1] ss:$4 sm:$0xff] %v6422
    %s7024 = scalar_lea.vmem [#allocation1], 1
    %7025 = vst [vmem:[%s7024] ss:$4 sm:$0xff] %v6424
    %s7026 = scalar_lea.vmem [#allocation1], 2
    %7027 = vst [vmem:[%s7026] ss:$4 sm:$0xff] %v6426
    %v7028 = vld.sshfl [vmem:[#allocation1] sm:$0xff pattern:$0x73625140]
    %7029 = vrot.lane.b32.xlu0 %v7028, 64
    %v7030 = vpop.permute.xlu0 %7029
    %v7032 = vsel %vm4206, %v6798, 0
    %v7034 = vsel %vm4210, %v7030, 0
    %7036 = vmatpush.msra.mxu0 0.0
    %7037 = vmatpush.msra.mxu0 0.0
    %7038 = vmatpush.msra.mxu0 0.0
    %7039 = vmatpush.msra.mxu0 0.0
    %7040 = vmatpush.msra.mxu0 0.0
    %7041 = vmatpush.msra.mxu0 0.0
    %7042 = vmatpush.msra.mxu0 0.0
    %7043 = vmatpush.msra.mxu0 0.0
    %7044 = vmatpush.msra.mxu0 0.0
    %7045 = vmatpush.msra.mxu0 0.0
    %7046 = vmatpush.msra.mxu0 0.0
    %7047 = vmatpush.msra.mxu0 0.0
    %7048 = vmatpush.msra.mxu0 0.0
    %7049 = vmatpush.msra.mxu0 0.0
    %7050 = vmatpush.msra.mxu0 0.0
    %7051 = vmatpush.msra.mxu0 %v7034
    %7052 = vmatmul.f32.gmra.mxu0 %v7032
    %v7053 = vpop.f32.mrf.mxu0
    %v7054 = vadd.f32 0.0, %v7053
    %7055 = vdwg.mxu0
    %7056 = vst [vmem:[#allocation1] ss:$4 sm:$0xff] %v6428
    %s7057 = scalar_lea.vmem [#allocation1], 1
    %7058 = vst [vmem:[%s7057] ss:$4 sm:$0xff] %v6430
    %s7059 = scalar_lea.vmem [#allocation1], 2
    %7060 = vst [vmem:[%s7059] ss:$4 sm:$0xff] %v6432
    %v7061 = vld.sshfl [vmem:[#allocation1] sm:$0xff pattern:$0x73625140]
    %7062 = vrot.lane.b32.xlu0 %v7061, 64
    %v7063 = vpop.permute.xlu0 %7062
    %v7065 = vsel %vm4206, %v6800, 0
    %v7067 = vsel %vm4210, %v7063, 0
    %7069 = vmatpush.msra.mxu0 0.0
    %7070 = vmatpush.msra.mxu0 0.0
    %7071 = vmatpush.msra.mxu0 0.0
    %7072 = vmatpush.msra.mxu0 0.0
    %7073 = vmatpush.msra.mxu0 0.0
    %7074 = vmatpush.msra.mxu0 0.0
    %7075 = vmatpush.msra.mxu0 0.0
    %7076 = vmatpush.msra.mxu0 0.0
    %7077 = vmatpush.msra.mxu0 0.0
    %7078 = vmatpush.msra.mxu0 0.0
    %7079 = vmatpush.msra.mxu0 0.0
    %7080 = vmatpush.msra.mxu0 0.0
    %7081 = vmatpush.msra.mxu0 0.0
    %7082 = vmatpush.msra.mxu0 0.0
    %7083 = vmatpush.msra.mxu0 0.0
    %7084 = vmatpush.msra.mxu0 %v7067
    %7085 = vmatmul.f32.gmra.mxu0 %v7065
    %v7086 = vpop.f32.mrf.mxu0
    %v7087 = vadd.f32 0.0, %v7086
    %7088 = vdwg.mxu0
    %v7089 = vrcp.pop %v6803
    %v7090 = vrcp.pop %v6806
    %v7091 = vrcp.pop %v6809
    %v7092 = vrcp.pop %v6812
    %v7093 = vrcp.pop %v6815
    %v7094 = vrcp.pop %v6818
    %v7095 = vrcp.pop %v6821
    %v7096 = vrcp.pop %v6824
    %v7097 = vmul.f32 %v6856, %v7089
    %v7098 = vmul.f32 %v6889, %v7090
    %v7099 = vmul.f32 %v6922, %v7091
    %v7100 = vmul.f32 %v6955, %v7092
    %v7101 = vmul.f32 %v6988, %v7093
    %v7102 = vmul.f32 %v7021, %v7094
    %v7103 = vmul.f32 %v7054, %v7095
    %v7104 = vmul.f32 %v7087, %v7096
    %v7107 = vrot.slane %v7097, 2
    %v7108 = vrot.slane %v7097, 4
    %v7109 = vrot.slane %v7098, 2
    %v7110 = vrot.slane %v7098, 4
    %v7113 = vrot.slane %v7099, 2
    %v7114 = vrot.slane %v7099, 4
    %v7115 = vrot.slane %v7100, 2
    %v7116 = vrot.slane %v7100, 4
    %v7119 = vrot.slane %v7101, 2
    %v7120 = vrot.slane %v7101, 4
    %v7121 = vrot.slane %v7102, 2
    %v7122 = vrot.slane %v7102, 4
    %v7125 = vrot.slane %v7103, 2
    %v7126 = vrot.slane %v7103, 4
    %v7127 = vrot.slane %v7104, 2
    %v7128 = vrot.slane %v7104, 4
    %7129 = vst [vmem:[#allocation1] ss:$4 sm:$0xff] %v7097
    %s7130 = scalar_lea.vmem [#allocation1], 1
    %7131 = vst [vmem:[%s7130] ss:$4 sm:$0xff] %v7107
    %s7132 = scalar_lea.vmem [#allocation1], 2
    %7133 = vst [vmem:[%s7132] ss:$4 sm:$0xff] %v7108
    %s7134 = scalar_lea.vmem [#allocation1], 3
    %7135 = vst [vmem:[%s7134] ss:$4 sm:$0xff] %v7098
    %s7136 = scalar_lea.vmem [#allocation1], 32
    %7137 = vst [vmem:[%s7136] ss:$4 sm:$0xff] %v7109
    %s7138 = scalar_lea.vmem [#allocation1], 33
    %7139 = vst [vmem:[%s7138] ss:$4 sm:$0xff] %v7110
    %v7140 = vld.sshfl [vmem:[#allocation1] sm:$0xff pattern:$0x73625140]
    %v7141 = vld.sshfl [vmem:[#allocation1 + $0x20] sm:$0xff pattern:$0x73625140]
    %7144 = vst [vmem:[#allocation1] ss:$4 sm:$0xff] %v7099
    %s7145 = scalar_lea.vmem [#allocation1], 1
    %7146 = vst [vmem:[%s7145] ss:$4 sm:$0xff] %v7113
    %s7147 = scalar_lea.vmem [#allocation1], 2
    %7148 = vst [vmem:[%s7147] ss:$4 sm:$0xff] %v7114
    %s7149 = scalar_lea.vmem [#allocation1], 3
    %7150 = vst [vmem:[%s7149] ss:$4 sm:$0xff] %v7100
    %s7151 = scalar_lea.vmem [#allocation1], 32
    %7152 = vst [vmem:[%s7151] ss:$4 sm:$0xff] %v7115
    %s7153 = scalar_lea.vmem [#allocation1], 33
    %7154 = vst [vmem:[%s7153] ss:$4 sm:$0xff] %v7116
    %v7155 = vld.sshfl [vmem:[#allocation1] sm:$0xff pattern:$0x73625140]
    %v7156 = vld.sshfl [vmem:[#allocation1 + $0x20] sm:$0xff pattern:$0x73625140]
    %7157 = vrot.lane.b32.xlu0 %v7155, 8
    %v7158 = vpop.permute.xlu0 %7157
    %7159 = vrot.lane.b32.xlu0 %v7156, 8
    %v7160 = vpop.permute.xlu0 %7159
    %7163 = vst [vmem:[#allocation1] ss:$4 sm:$0xff] %v7101
    %s7164 = scalar_lea.vmem [#allocation1], 1
    %7165 = vst [vmem:[%s7164] ss:$4 sm:$0xff] %v7119
    %s7166 = scalar_lea.vmem [#allocation1], 2
    %7167 = vst [vmem:[%s7166] ss:$4 sm:$0xff] %v7120
    %s7168 = scalar_lea.vmem [#allocation1], 3
    %7169 = vst [vmem:[%s7168] ss:$4 sm:$0xff] %v7102
    %s7170 = scalar_lea.vmem [#allocation1], 32
    %7171 = vst [vmem:[%s7170] ss:$4 sm:$0xff] %v7121
    %s7172 = scalar_lea.vmem [#allocation1], 33
    %7173 = vst [vmem:[%s7172] ss:$4 sm:$0xff] %v7122
    %v7174 = vld.sshfl [vmem:[#allocation1] sm:$0xff pattern:$0x73625140]
    %v7175 = vld.sshfl [vmem:[#allocation1 + $0x20] sm:$0xff pattern:$0x73625140]
    %7176 = vrot.lane.b32.xlu0 %v7174, 16
    %v7177 = vpop.permute.xlu0 %7176
    %7178 = vrot.lane.b32.xlu0 %v7175, 16
    %v7179 = vpop.permute.xlu0 %7178
    %7182 = vst [vmem:[#allocation1] ss:$4 sm:$0xff] %v7103
    %s7183 = scalar_lea.vmem [#allocation1], 1
    %7184 = vst [vmem:[%s7183] ss:$4 sm:$0xff] %v7125
    %s7185 = scalar_lea.vmem [#allocation1], 2
    %7186 = vst [vmem:[%s7185] ss:$4 sm:$0xff] %v7126
    %s7187 = scalar_lea.vmem [#allocation1], 3
    %7188 = vst [vmem:[%s7187] ss:$4 sm:$0xff] %v7104
    %s7189 = scalar_lea.vmem [#allocation1], 32
    %7190 = vst [vmem:[%s7189] ss:$4 sm:$0xff] %v7127
    %s7191 = scalar_lea.vmem [#allocation1], 33
    %7192 = vst [vmem:[%s7191] ss:$4 sm:$0xff] %v7128
    %v7193 = vld.sshfl [vmem:[#allocation1] sm:$0xff pattern:$0x73625140]
    %v7194 = vld.sshfl [vmem:[#allocation1 + $0x20] sm:$0xff pattern:$0x73625140]
    %7195 = vrot.lane.b32.xlu0 %v7193, 24
    %v7196 = vpop.permute.xlu0 %7195
    %7197 = vrot.lane.b32.xlu0 %v7194, 24
    %v7198 = vpop.permute.xlu0 %7197
    %v7201 = vsel %vm195, %v7140, %v7158
    %v7202 = vsel %vm195, %v7141, %v7160
    %v7203 = vsel %vm1075, %v7201, %v7177
    %v7204 = vsel %vm1075, %v7202, %v7179
    %v7205 = vsel %vm1078, %v7203, %v7196
    %v7206 = vsel %vm1078, %v7204, %v7198
    %v7207 = vld [vmem:[#allocation2 + $0x260] sm:$0xff]
    %v7208 = vld [vmem:[#allocation2 + $0x268] sm:$0xff]
    %v7209 = vld [vmem:[#allocation2 + $0x270] sm:$0xff]
    %v7210 = vld [vmem:[#allocation2 + $0x278] sm:$0xff]
    %v7211 = vperm.slane %v6338, 1
    %v7213 = vsel %vm75, %v7205, 0
    %v7216 = vsel %vm75, %v7206, 0
    %7218 = vmatpush.msra.mxu0 0.0
    %7219 = vmatpush.msra.mxu0 0.0
    %7220 = vmatpush.msra.mxu0 0.0
    %7221 = vmatpush.msra.mxu0 0.0
    %7222 = vmatpush.msra.mxu0 0.0
    %7223 = vmatpush.msra.mxu0 0.0
    %7224 = vmatpush.msra.mxu0 0.0
    %7225 = vmatpush.msra.mxu0 0.0
    %7226 = vmatpush.msra.mxu0 0.0
    %7227 = vmatpush.msra.mxu0 0.0
    %7228 = vmatpush.msra.mxu0 0.0
    %7229 = vmatpush.msra.mxu0 0.0
    %7230 = vmatpush.msra.mxu0 %v7210
    %7231 = vmatpush.msra.mxu0 %v7209
    %7232 = vmatpush.msra.mxu0 %v7208
    %7233 = vmatpush.msra.mxu0 %v7207
    %7234 = vmatmul.f32.gmra.mxu0 %v7213
    %v7235 = vpop.f32.mrf.mxu0
    %v7236 = vadd.f32 %v7211, %v7235
    %7237 = vmatmul.f32.gmra.mxu0 %v7216
    %v7238 = vpop.f32.mrf.mxu0
    %v7239 = vadd.f32 %v7211, %v7238
    %7240 = vdwg.mxu0
    %v7243 = vrot.slane %v7236, 2
    %v7244 = vrot.slane %v7236, 4
    %v7245 = vrot.slane %v7236, 6
    %v7246 = vrot.slane %v7239, 2
    %v7251 = vadd.f32 %v6332, %v7236
    %v7252 = vadd.f32 %v6333, %v7243
    %v7253 = vadd.f32 %v6334, %v7244
    %v7254 = vadd.f32 %v6335, %v7245
    %v7255 = vadd.f32 %v6336, %v7239
    %v7256 = vadd.f32 %v6337, %v7246
    %7263 = vst [vmem:[#allocation1] ss:$4 sm:$0xff] %v7251
    %s7264 = scalar_lea.vmem [#allocation1], 1
    %7265 = vst [vmem:[%s7264] ss:$4 sm:$0xff] %v7252
    %s7266 = scalar_lea.vmem [#allocation1], 2
    %7267 = vst [vmem:[%s7266] ss:$4 sm:$0xff] %v7253
    %s7268 = scalar_lea.vmem [#allocation1], 3
    %7269 = vst [vmem:[%s7268] ss:$4 sm:$0xff] %v7254
    %s7270 = scalar_lea.vmem [#allocation1], 32
    %7271 = vst [vmem:[%s7270] ss:$4 sm:$0xff] %v7255
    %s7272 = scalar_lea.vmem [#allocation1], 33
    %7273 = vst [vmem:[%s7272] ss:$4 sm:$0xff] %v7256
    %v7274 = vld.sshfl [vmem:[#allocation1] sm:$0xff pattern:$0x73625140]
    %v7275 = vld.sshfl [vmem:[#allocation1 + $0x20] sm:$0xff pattern:$0x73625140]
    %v7278 = vsel %vm75, %v7274, 0.0
    %7279 = vadd.xlane.f32.xlu0 %v7278
    %v7280 = vpop.xlane.xlu0 %7279
    %v7281 = vsel %vm4656, %v7275, 0.0
    %7282 = vadd.xlane.f32.xlu0 %v7281
    %v7283 = vpop.xlane.xlu0 %7282
    %v7284 = vmul.f32 %v7280, %v1187
    %v7285 = vmul.f32 %v7283, %v1187
    %v7289 = vunpack.c.l.s4 269488144
    %v7290 = vunpack.c.0.s8 %v7289
    %v7291 = vperm.slane %v7284, %v7290
    %v7293 = vunpack.c.l.s4 842150450
    %v7294 = vunpack.c.0.s8 %v7293
    %v7295 = vperm.slane %v7284, %v7294
    %v7297 = vunpack.c.l.s4 1414812756
    %v7298 = vunpack.c.0.s8 %v7297
    %v7299 = vperm.slane %v7284, %v7298
    %v7301 = vunpack.c.l.s4 1987475062
    %v7302 = vunpack.c.0.s8 %v7301
    %v7303 = vperm.slane %v7284, %v7302
    %v7305 = vunpack.c.l.s4 269488144
    %v7306 = vunpack.c.0.s8 %v7305
    %v7307 = vperm.slane %v7285, %v7306
    %v7309 = vunpack.c.l.s4 842150450
    %v7310 = vunpack.c.0.s8 %v7309
    %v7311 = vperm.slane %v7285, %v7310
    %v7318 = vsub.f32 %v7251, %v7291
    %v7319 = vsub.f32 %v7252, %v7295
    %v7320 = vsub.f32 %v7253, %v7299
    %v7321 = vsub.f32 %v7254, %v7303
    %v7322 = vsub.f32 %v7255, %v7307
    %v7323 = vsub.f32 %v7256, %v7311
    %v7324 = vmul.f32 %v7318, %v7318
    %v7325 = vmul.f32 %v7319, %v7319
    %v7326 = vmul.f32 %v7320, %v7320
    %v7327 = vmul.f32 %v7321, %v7321
    %v7328 = vmul.f32 %v7322, %v7322
    %v7329 = vmul.f32 %v7323, %v7323
    %7336 = vst [vmem:[#allocation1] ss:$4 sm:$0xff] %v7324
    %s7337 = scalar_lea.vmem [#allocation1], 1
    %7338 = vst [vmem:[%s7337] ss:$4 sm:$0xff] %v7325
    %s7339 = scalar_lea.vmem [#allocation1], 2
    %7340 = vst [vmem:[%s7339] ss:$4 sm:$0xff] %v7326
    %s7341 = scalar_lea.vmem [#allocation1], 3
    %7342 = vst [vmem:[%s7341] ss:$4 sm:$0xff] %v7327
    %s7343 = scalar_lea.vmem [#allocation1], 32
    %7344 = vst [vmem:[%s7343] ss:$4 sm:$0xff] %v7328
    %s7345 = scalar_lea.vmem [#allocation1], 33
    %7346 = vst [vmem:[%s7345] ss:$4 sm:$0xff] %v7329
    %v7347 = vld.sshfl [vmem:[#allocation1] sm:$0xff pattern:$0x73625140]
    %v7348 = vld.sshfl [vmem:[#allocation1 + $0x20] sm:$0xff pattern:$0x73625140]
    %v7351 = vsel %vm75, %v7347, 0.0
    %7352 = vadd.xlane.f32.xlu0 %v7351
    %v7353 = vpop.xlane.xlu0 %7352
    %v7354 = vsel %vm4656, %v7348, 0.0
    %7355 = vadd.xlane.f32.xlu0 %v7354
    %v7356 = vpop.xlane.xlu0 %7355
    %v7357 = vmul.f32 %v7353, %v1187
    %v7358 = vmul.f32 %v7356, %v1187
    %v7359 = vadd.f32 %v7357, 1e-05
    %v7360 = vadd.f32 %v7358, 1e-05
    %v7361 = vrsqrt.pop %v7359
    %v7362 = vmul.f32 %v7361, %v7359
    %v7363 = vmul.f32 %v7362, %v7361
    %v7364 = vmul.f32 0.5, %v7363
    %v7365 = vsub.f32 1.5, %v7364
    %v7366 = vmul.f32 %v7361, %v7365
    %vm7367 = vweird.f32 %v7359
    %vm7368 = vweird.f32 %v7361
    %vm7369 = vmor %vm7367, %vm7368
    %v7370 = vsel %vm7369, %v7361, %v7366
    %v7371 = vrsqrt.pop %v7360
    %v7372 = vmul.f32 %v7371, %v7360
    %v7373 = vmul.f32 %v7372, %v7371
    %v7374 = vmul.f32 0.5, %v7373
    %v7375 = vsub.f32 1.5, %v7374
    %v7376 = vmul.f32 %v7371, %v7375
    %vm7377 = vweird.f32 %v7360
    %vm7378 = vweird.f32 %v7371
    %vm7379 = vmor %vm7377, %vm7378
    %v7380 = vsel %vm7379, %v7371, %v7376
    %v7384 = vunpack.c.l.s4 269488144
    %v7385 = vunpack.c.0.s8 %v7384
    %v7386 = vperm.slane %v7370, %v7385
    %v7388 = vunpack.c.l.s4 842150450
    %v7389 = vunpack.c.0.s8 %v7388
    %v7390 = vperm.slane %v7370, %v7389
    %v7392 = vunpack.c.l.s4 1414812756
    %v7393 = vunpack.c.0.s8 %v7392
    %v7394 = vperm.slane %v7370, %v7393
    %v7396 = vunpack.c.l.s4 1987475062
    %v7397 = vunpack.c.0.s8 %v7396
    %v7398 = vperm.slane %v7370, %v7397
    %v7400 = vunpack.c.l.s4 269488144
    %v7401 = vunpack.c.0.s8 %v7400
    %v7402 = vperm.slane %v7380, %v7401
    %v7404 = vunpack.c.l.s4 842150450
    %v7405 = vunpack.c.0.s8 %v7404
    %v7406 = vperm.slane %v7380, %v7405
    %v7413 = vmul.f32 %v7318, %v7386
    %v7414 = vmul.f32 %v7319, %v7390
    %v7415 = vmul.f32 %v7320, %v7394
    %v7416 = vmul.f32 %v7321, %v7398
    %v7417 = vmul.f32 %v7322, %v7402
    %v7418 = vmul.f32 %v7323, %v7406
    %v7419 = vperm.slane %v6338, 6
    %v7421 = vrot.slane %v7419, 2
    %v7422 = vrot.slane %v7419, 4
    %v7423 = vrot.slane %v7419, 6
    %v7427 = vmul.f32 %v7413, %v7419
    %v7428 = vmul.f32 %v7414, %v7421
    %v7429 = vmul.f32 %v7415, %v7422
    %v7430 = vmul.f32 %v7416, %v7423
    %v7431 = vmul.f32 %v7417, %v7419
    %v7432 = vmul.f32 %v7418, %v7421
    %v7433 = vperm.slane %v6338, 7
    %v7435 = vrot.slane %v7433, 2
    %v7436 = vrot.slane %v7433, 4
    %v7437 = vrot.slane %v7433, 6
    %v7441 = vadd.f32 %v7427, %v7433
    %v7442 = vadd.f32 %v7428, %v7435
    %v7443 = vadd.f32 %v7429, %v7436
    %v7444 = vadd.f32 %v7430, %v7437
    %v7445 = vadd.f32 %v7431, %v7433
    %v7446 = vadd.f32 %v7432, %v7435
    %v7447 = vld [vmem:[#allocation2 + $0x280] sm:$0xff]
    %v7448 = vld [vmem:[#allocation2 + $0x288] sm:$0xff]
    %v7449 = vld [vmem:[#allocation2 + $0x290] sm:$0xff]
    %v7450 = vld [vmem:[#allocation2 + $0x298] sm:$0xff]
    %v7451 = vperm.slane %v6338, 2
    %7458 = vst [vmem:[#allocation1] ss:$4 sm:$0xff] %v7441
    %s7459 = scalar_lea.vmem [#allocation1], 1
    %7460 = vst [vmem:[%s7459] ss:$4 sm:$0xff] %v7442
    %s7461 = scalar_lea.vmem [#allocation1], 2
    %7462 = vst [vmem:[%s7461] ss:$4 sm:$0xff] %v7443
    %s7463 = scalar_lea.vmem [#allocation1], 3
    %7464 = vst [vmem:[%s7463] ss:$4 sm:$0xff] %v7444
    %s7465 = scalar_lea.vmem [#allocation1], 32
    %7466 = vst [vmem:[%s7465] ss:$4 sm:$0xff] %v7445
    %s7467 = scalar_lea.vmem [#allocation1], 33
    %7468 = vst [vmem:[%s7467] ss:$4 sm:$0xff] %v7446
    %v7469 = vld.sshfl [vmem:[#allocation1] sm:$0xff pattern:$0x73625140]
    %v7470 = vld.sshfl [vmem:[#allocation1 + $0x20] sm:$0xff pattern:$0x73625140]
    %v7471 = vsel %vm75, %v7469, 0
    %v7473 = vsel %vm75, %v7470, 0
    %7475 = vmatpush.msra.mxu0 0.0
    %7476 = vmatpush.msra.mxu0 0.0
    %7477 = vmatpush.msra.mxu0 0.0
    %7478 = vmatpush.msra.mxu0 0.0
    %7479 = vmatpush.msra.mxu0 0.0
    %7480 = vmatpush.msra.mxu0 0.0
    %7481 = vmatpush.msra.mxu0 0.0
    %7482 = vmatpush.msra.mxu0 0.0
    %7483 = vmatpush.msra.mxu0 0.0
    %7484 = vmatpush.msra.mxu0 0.0
    %7485 = vmatpush.msra.mxu0 0.0
    %7486 = vmatpush.msra.mxu0 0.0
    %7487 = vmatpush.msra.mxu0 %v7450
    %7488 = vmatpush.msra.mxu0 %v7449
    %7489 = vmatpush.msra.mxu0 %v7448
    %7490 = vmatpush.msra.mxu0 %v7447
    %7491 = vmatmul.f32.gmra.mxu0 %v7471
    %v7492 = vpop.f32.mrf.mxu0
    %v7493 = vadd.f32 %v7451, %v7492
    %7494 = vmatmul.f32.gmra.mxu0 %v7473
    %v7495 = vpop.f32.mrf.mxu0
    %v7496 = vadd.f32 %v7451, %v7495
    %7497 = vdwg.mxu0
    %v7500 = vrot.slane %v7493, 2
    %v7501 = vrot.slane %v7493, 4
    %v7502 = vrot.slane %v7493, 6
    %v7503 = vrot.slane %v7496, 2
    %7504 = vrot.lane.b32.xlu0 %v7493, 120
    %v7505 = vpop.permute.xlu0 %7504
    %7506 = vrot.lane.b32.xlu0 %v7500, 120
    %v7507 = vpop.permute.xlu0 %7506
    %7508 = vrot.lane.b32.xlu0 %v7501, 120
    %v7509 = vpop.permute.xlu0 %7508
    %7510 = vrot.lane.b32.xlu0 %v7502, 120
    %v7511 = vpop.permute.xlu0 %7510
    %7512 = vrot.lane.b32.xlu0 %v7496, 120
    %v7513 = vpop.permute.xlu0 %7512
    %7514 = vrot.lane.b32.xlu0 %v7503, 120
    %v7515 = vpop.permute.xlu0 %7514
    %7516 = vrot.lane.b32.xlu0 %v7493, 112
    %v7517 = vpop.permute.xlu0 %7516
    %7518 = vrot.lane.b32.xlu0 %v7500, 112
    %v7519 = vpop.permute.xlu0 %7518
    %7520 = vrot.lane.b32.xlu0 %v7501, 112
    %v7521 = vpop.permute.xlu0 %7520
    %7522 = vrot.lane.b32.xlu0 %v7502, 112
    %v7523 = vpop.permute.xlu0 %7522
    %7524 = vrot.lane.b32.xlu0 %v7496, 112
    %v7525 = vpop.permute.xlu0 %7524
    %7526 = vrot.lane.b32.xlu0 %v7503, 112
    %v7527 = vpop.permute.xlu0 %7526
    %7528 = vrot.lane.b32.xlu0 %v7493, 104
    %v7529 = vpop.permute.xlu0 %7528
    %7530 = vrot.lane.b32.xlu0 %v7500, 104
    %v7531 = vpop.permute.xlu0 %7530
    %7532 = vrot.lane.b32.xlu0 %v7501, 104
    %v7533 = vpop.permute.xlu0 %7532
    %7534 = vrot.lane.b32.xlu0 %v7502, 104
    %v7535 = vpop.permute.xlu0 %7534
    %7536 = vrot.lane.b32.xlu0 %v7496, 104
    %v7537 = vpop.permute.xlu0 %7536
    %7538 = vrot.lane.b32.xlu0 %v7503, 104
    %v7539 = vpop.permute.xlu0 %7538
    %7540 = vst [vmem:[#allocation1] ss:$4 sm:$0xff] %v7493
    %s7541 = scalar_lea.vmem [#allocation1], 1
    %7542 = vst [vmem:[%s7541] ss:$4 sm:$0xff] %v7500
    %s7543 = scalar_lea.vmem [#allocation1], 2
    %7544 = vst [vmem:[%s7543] ss:$4 sm:$0xff] %v7501
    %v7545 = vld.sshfl [vmem:[#allocation1] sm:$0xff pattern:$0x73625140]
    %7546 = vst [vmem:[#allocation1] ss:$9 sm:$0xff] %v3693
    %s7547 = scalar_lea.vmem [#allocation1], 1
    %7548 = vst [vmem:[%s7547] ss:$9 sm:$0xff] %v4918
    %s7549 = scalar_lea.vmem [#allocation1], 2
    %7550 = vst [vmem:[%s7549] ss:$9 sm:$0xff] %v4919
    %s7551 = scalar_lea.vmem [#allocation1], 3
    %7552 = vst [vmem:[%s7551] ss:$9 sm:$0xff] %v4920
    %s7553 = scalar_lea.vmem [#allocation1], 4
    %7554 = vst [vmem:[%s7553] ss:$9 sm:$0xff] %v4921
    %v7555 = vld [vmem:[#allocation1] sm:$0xff]
    %7556 = vrot.lane.b32.xlu0 %v7555, 64
    %v7557 = vpop.permute.xlu0 %7556
    %v7558 = vsel %vm195, %v7545, 0
    %v7560 = vsel %vm195, %v7557, 0
    %7562 = vmatpush.xpose.msra.mxu0 0.0
    %7563 = vmatpush.xpose.msra.mxu0 0.0
    %7564 = vmatpush.xpose.msra.mxu0 0.0
    %7565 = vmatpush.xpose.msra.mxu0 0.0
    %7566 = vmatpush.xpose.msra.mxu0 0.0
    %7567 = vmatpush.xpose.msra.mxu0 0.0
    %7568 = vmatpush.xpose.msra.mxu0 0.0
    %7569 = vmatpush.xpose.msra.mxu0 0.0
    %7570 = vmatpush.xpose.msra.mxu0 0.0
    %7571 = vmatpush.xpose.msra.mxu0 0.0
    %7572 = vmatpush.xpose.msra.mxu0 0.0
    %7573 = vmatpush.xpose.msra.mxu0 0.0
    %7574 = vmatpush.xpose.msra.mxu0 0.0
    %7575 = vmatpush.xpose.msra.mxu0 0.0
    %7576 = vmatpush.xpose.msra.mxu0 0.0
    %7577 = vmatpush.xpose.msra.mxu0 %v7560
    %7578 = vmatmul.f32.gmra.mxu0 %v7558
    %v7579 = vpop.f32.mrf.mxu0
    %v7580 = vadd.f32 0.0, %v7579
    %7581 = vdwg.mxu0
    %7582 = vst [vmem:[#allocation1] ss:$4 sm:$0xff] %v7502
    %s7583 = scalar_lea.vmem [#allocation1], 1
    %7584 = vst [vmem:[%s7583] ss:$4 sm:$0xff] %v7496
    %s7585 = scalar_lea.vmem [#allocation1], 2
    %7586 = vst [vmem:[%s7585] ss:$4 sm:$0xff] %v7503
    %v7587 = vld.sshfl [vmem:[#allocation1] sm:$0xff pattern:$0x73625140]
    %7588 = vst [vmem:[#allocation1] ss:$9 sm:$0xff] %v4922
    %s7589 = scalar_lea.vmem [#allocation1], 1
    %7590 = vst [vmem:[%s7589] ss:$9 sm:$0xff] %v4923
    %s7591 = scalar_lea.vmem [#allocation1], 2
    %7592 = vst [vmem:[%s7591] ss:$9 sm:$0xff] %v4924
    %s7593 = scalar_lea.vmem [#allocation1], 3
    %7594 = vst [vmem:[%s7593] ss:$9 sm:$0xff] %v3696
    %s7595 = scalar_lea.vmem [#allocation1], 4
    %7596 = vst [vmem:[%s7595] ss:$9 sm:$0xff] %v4925
    %v7597 = vld [vmem:[#allocation1] sm:$0xff]
    %7598 = vrot.lane.b32.xlu0 %v7597, 64
    %v7599 = vpop.permute.xlu0 %7598
    %v7600 = vsel %vm195, %v7587, 0
    %v7602 = vsel %vm195, %v7599, 0
    %7604 = vmatpush.xpose.msra.mxu0 0.0
    %7605 = vmatpush.xpose.msra.mxu0 0.0
    %7606 = vmatpush.xpose.msra.mxu0 0.0
    %7607 = vmatpush.xpose.msra.mxu0 0.0
    %7608 = vmatpush.xpose.msra.mxu0 0.0
    %7609 = vmatpush.xpose.msra.mxu0 0.0
    %7610 = vmatpush.xpose.msra.mxu0 0.0
    %7611 = vmatpush.xpose.msra.mxu0 0.0
    %7612 = vmatpush.xpose.msra.mxu0 0.0
    %7613 = vmatpush.xpose.msra.mxu0 0.0
    %7614 = vmatpush.xpose.msra.mxu0 0.0
    %7615 = vmatpush.xpose.msra.mxu0 0.0
    %7616 = vmatpush.xpose.msra.mxu0 0.0
    %7617 = vmatpush.xpose.msra.mxu0 0.0
    %7618 = vmatpush.xpose.msra.mxu0 0.0
    %7619 = vmatpush.xpose.msra.mxu0 %v7602
    %7620 = vmatmul.f32.gmra.mxu0 %v7600
    %v7621 = vpop.f32.mrf.mxu0
    %v7622 = vadd.f32 0.0, %v7621
    %7623 = vdwg.mxu0
    %7624 = vst [vmem:[#allocation1] ss:$4 sm:$0xff] %v7505
    %s7625 = scalar_lea.vmem [#allocation1], 1
    %7626 = vst [vmem:[%s7625] ss:$4 sm:$0xff] %v7507
    %s7627 = scalar_lea.vmem [#allocation1], 2
    %7628 = vst [vmem:[%s7627] ss:$4 sm:$0xff] %v7509
    %v7629 = vld.sshfl [vmem:[#allocation1] sm:$0xff pattern:$0x73625140]
    %7630 = vst [vmem:[#allocation1] ss:$9 sm:$0xff] %v4927
    %s7631 = scalar_lea.vmem [#allocation1], 1
    %7632 = vst [vmem:[%s7631] ss:$9 sm:$0xff] %v4929
    %s7633 = scalar_lea.vmem [#allocation1], 2
    %7634 = vst [vmem:[%s7633] ss:$9 sm:$0xff] %v4931
    %s7635 = scalar_lea.vmem [#allocation1], 3
    %7636 = vst [vmem:[%s7635] ss:$9 sm:$0xff] %v4933
    %s7637 = scalar_lea.vmem [#allocation1], 4
    %7638 = vst [vmem:[%s7637] ss:$9 sm:$0xff] %v4935
    %v7639 = vld [vmem:[#allocation1] sm:$0xff]
    %7640 = vrot.lane.b32.xlu0 %v7639, 64
    %v7641 = vpop.permute.xlu0 %7640
    %v7642 = vsel %vm195, %v7629, 0
    %v7644 = vsel %vm195, %v7641, 0
    %7646 = vmatpush.xpose.msra.mxu0 0.0
    %7647 = vmatpush.xpose.msra.mxu0 0.0
    %7648 = vmatpush.xpose.msra.mxu0 0.0
    %7649 = vmatpush.xpose.msra.mxu0 0.0
    %7650 = vmatpush.xpose.msra.mxu0 0.0
    %7651 = vmatpush.xpose.msra.mxu0 0.0
    %7652 = vmatpush.xpose.msra.mxu0 0.0
    %7653 = vmatpush.xpose.msra.mxu0 0.0
    %7654 = vmatpush.xpose.msra.mxu0 0.0
    %7655 = vmatpush.xpose.msra.mxu0 0.0
    %7656 = vmatpush.xpose.msra.mxu0 0.0
    %7657 = vmatpush.xpose.msra.mxu0 0.0
    %7658 = vmatpush.xpose.msra.mxu0 0.0
    %7659 = vmatpush.xpose.msra.mxu0 0.0
    %7660 = vmatpush.xpose.msra.mxu0 0.0
    %7661 = vmatpush.xpose.msra.mxu0 %v7644
    %7662 = vmatmul.f32.gmra.mxu0 %v7642
    %v7663 = vpop.f32.mrf.mxu0
    %v7664 = vadd.f32 0.0, %v7663
    %7665 = vdwg.mxu0
    %7666 = vst [vmem:[#allocation1] ss:$4 sm:$0xff] %v7511
    %s7667 = scalar_lea.vmem [#allocation1], 1
    %7668 = vst [vmem:[%s7667] ss:$4 sm:$0xff] %v7513
    %s7669 = scalar_lea.vmem [#allocation1], 2
    %7670 = vst [vmem:[%s7669] ss:$4 sm:$0xff] %v7515
    %v7671 = vld.sshfl [vmem:[#allocation1] sm:$0xff pattern:$0x73625140]
    %7672 = vst [vmem:[#allocation1] ss:$9 sm:$0xff] %v4937
    %s7673 = scalar_lea.vmem [#allocation1], 1
    %7674 = vst [vmem:[%s7673] ss:$9 sm:$0xff] %v4939
    %s7675 = scalar_lea.vmem [#allocation1], 2
    %7676 = vst [vmem:[%s7675] ss:$9 sm:$0xff] %v4941
    %s7677 = scalar_lea.vmem [#allocation1], 3
    %7678 = vst [vmem:[%s7677] ss:$9 sm:$0xff] %v4943
    %s7679 = scalar_lea.vmem [#allocation1], 4
    %7680 = vst [vmem:[%s7679] ss:$9 sm:$0xff] %v4945
    %v7681 = vld [vmem:[#allocation1] sm:$0xff]
    %7682 = vrot.lane.b32.xlu0 %v7681, 64
    %v7683 = vpop.permute.xlu0 %7682
    %v7684 = vsel %vm195, %v7671, 0
    %v7686 = vsel %vm195, %v7683, 0
    %7688 = vmatpush.xpose.msra.mxu0 0.0
    %7689 = vmatpush.xpose.msra.mxu0 0.0
    %7690 = vmatpush.xpose.msra.mxu0 0.0
    %7691 = vmatpush.xpose.msra.mxu0 0.0
    %7692 = vmatpush.xpose.msra.mxu0 0.0
    %7693 = vmatpush.xpose.msra.mxu0 0.0
    %7694 = vmatpush.xpose.msra.mxu0 0.0
    %7695 = vmatpush.xpose.msra.mxu0 0.0
    %7696 = vmatpush.xpose.msra.mxu0 0.0
    %7697 = vmatpush.xpose.msra.mxu0 0.0
    %7698 = vmatpush.xpose.msra.mxu0 0.0
    %7699 = vmatpush.xpose.msra.mxu0 0.0
    %7700 = vmatpush.xpose.msra.mxu0 0.0
    %7701 = vmatpush.xpose.msra.mxu0 0.0
    %7702 = vmatpush.xpose.msra.mxu0 0.0
    %7703 = vmatpush.xpose.msra.mxu0 %v7686
    %7704 = vmatmul.f32.gmra.mxu0 %v7684
    %v7705 = vpop.f32.mrf.mxu0
    %v7706 = vadd.f32 0.0, %v7705
    %7707 = vdwg.mxu0
    %7708 = vst [vmem:[#allocation1] ss:$4 sm:$0xff] %v7517
    %s7709 = scalar_lea.vmem [#allocation1], 1
    %7710 = vst [vmem:[%s7709] ss:$4 sm:$0xff] %v7519
    %s7711 = scalar_lea.vmem [#allocation1], 2
    %7712 = vst [vmem:[%s7711] ss:$4 sm:$0xff] %v7521
    %v7713 = vld.sshfl [vmem:[#allocation1] sm:$0xff pattern:$0x73625140]
    %7714 = vst [vmem:[#allocation1] ss:$9 sm:$0xff] %v4947
    %s7715 = scalar_lea.vmem [#allocation1], 1
    %7716 = vst [vmem:[%s7715] ss:$9 sm:$0xff] %v4949
    %s7717 = scalar_lea.vmem [#allocation1], 2
    %7718 = vst [vmem:[%s7717] ss:$9 sm:$0xff] %v4951
    %s7719 = scalar_lea.vmem [#allocation1], 3
    %7720 = vst [vmem:[%s7719] ss:$9 sm:$0xff] %v4953
    %s7721 = scalar_lea.vmem [#allocation1], 4
    %7722 = vst [vmem:[%s7721] ss:$9 sm:$0xff] %v4955
    %v7723 = vld [vmem:[#allocation1] sm:$0xff]
    %7724 = vrot.lane.b32.xlu0 %v7723, 64
    %v7725 = vpop.permute.xlu0 %7724
    %v7726 = vsel %vm195, %v7713, 0
    %v7728 = vsel %vm195, %v7725, 0
    %7730 = vmatpush.xpose.msra.mxu0 0.0
    %7731 = vmatpush.xpose.msra.mxu0 0.0
    %7732 = vmatpush.xpose.msra.mxu0 0.0
    %7733 = vmatpush.xpose.msra.mxu0 0.0
    %7734 = vmatpush.xpose.msra.mxu0 0.0
    %7735 = vmatpush.xpose.msra.mxu0 0.0
    %7736 = vmatpush.xpose.msra.mxu0 0.0
    %7737 = vmatpush.xpose.msra.mxu0 0.0
    %7738 = vmatpush.xpose.msra.mxu0 0.0
    %7739 = vmatpush.xpose.msra.mxu0 0.0
    %7740 = vmatpush.xpose.msra.mxu0 0.0
    %7741 = vmatpush.xpose.msra.mxu0 0.0
    %7742 = vmatpush.xpose.msra.mxu0 0.0
    %7743 = vmatpush.xpose.msra.mxu0 0.0
    %7744 = vmatpush.xpose.msra.mxu0 0.0
    %7745 = vmatpush.xpose.msra.mxu0 %v7728
    %7746 = vmatmul.f32.gmra.mxu0 %v7726
    %v7747 = vpop.f32.mrf.mxu0
    %v7748 = vadd.f32 0.0, %v7747
    %7749 = vdwg.mxu0
    %7750 = vst [vmem:[#allocation1] ss:$4 sm:$0xff] %v7523
    %s7751 = scalar_lea.vmem [#allocation1], 1
    %7752 = vst [vmem:[%s7751] ss:$4 sm:$0xff] %v7525
    %s7753 = scalar_lea.vmem [#allocation1], 2
    %7754 = vst [vmem:[%s7753] ss:$4 sm:$0xff] %v7527
    %v7755 = vld.sshfl [vmem:[#allocation1] sm:$0xff pattern:$0x73625140]
    %7756 = vst [vmem:[#allocation1] ss:$9 sm:$0xff] %v4957
    %s7757 = scalar_lea.vmem [#allocation1], 1
    %7758 = vst [vmem:[%s7757] ss:$9 sm:$0xff] %v4959
    %s7759 = scalar_lea.vmem [#allocation1], 2
    %7760 = vst [vmem:[%s7759] ss:$9 sm:$0xff] %v4961
    %s7761 = scalar_lea.vmem [#allocation1], 3
    %7762 = vst [vmem:[%s7761] ss:$9 sm:$0xff] %v4963
    %s7763 = scalar_lea.vmem [#allocation1], 4
    %7764 = vst [vmem:[%s7763] ss:$9 sm:$0xff] %v4965
    %v7765 = vld [vmem:[#allocation1] sm:$0xff]
    %7766 = vrot.lane.b32.xlu0 %v7765, 64
    %v7767 = vpop.permute.xlu0 %7766
    %v7768 = vsel %vm195, %v7755, 0
    %v7770 = vsel %vm195, %v7767, 0
    %7772 = vmatpush.xpose.msra.mxu0 0.0
    %7773 = vmatpush.xpose.msra.mxu0 0.0
    %7774 = vmatpush.xpose.msra.mxu0 0.0
    %7775 = vmatpush.xpose.msra.mxu0 0.0
    %7776 = vmatpush.xpose.msra.mxu0 0.0
    %7777 = vmatpush.xpose.msra.mxu0 0.0
    %7778 = vmatpush.xpose.msra.mxu0 0.0
    %7779 = vmatpush.xpose.msra.mxu0 0.0
    %7780 = vmatpush.xpose.msra.mxu0 0.0
    %7781 = vmatpush.xpose.msra.mxu0 0.0
    %7782 = vmatpush.xpose.msra.mxu0 0.0
    %7783 = vmatpush.xpose.msra.mxu0 0.0
    %7784 = vmatpush.xpose.msra.mxu0 0.0
    %7785 = vmatpush.xpose.msra.mxu0 0.0
    %7786 = vmatpush.xpose.msra.mxu0 0.0
    %7787 = vmatpush.xpose.msra.mxu0 %v7770
    %7788 = vmatmul.f32.gmra.mxu0 %v7768
    %v7789 = vpop.f32.mrf.mxu0
    %v7790 = vadd.f32 0.0, %v7789
    %7791 = vdwg.mxu0
    %7792 = vst [vmem:[#allocation1] ss:$4 sm:$0xff] %v7529
    %s7793 = scalar_lea.vmem [#allocation1], 1
    %7794 = vst [vmem:[%s7793] ss:$4 sm:$0xff] %v7531
    %s7795 = scalar_lea.vmem [#allocation1], 2
    %7796 = vst [vmem:[%s7795] ss:$4 sm:$0xff] %v7533
    %v7797 = vld.sshfl [vmem:[#allocation1] sm:$0xff pattern:$0x73625140]
    %7798 = vst [vmem:[#allocation1] ss:$9 sm:$0xff] %v4967
    %s7799 = scalar_lea.vmem [#allocation1], 1
    %7800 = vst [vmem:[%s7799] ss:$9 sm:$0xff] %v4969
    %s7801 = scalar_lea.vmem [#allocation1], 2
    %7802 = vst [vmem:[%s7801] ss:$9 sm:$0xff] %v4971
    %s7803 = scalar_lea.vmem [#allocation1], 3
    %7804 = vst [vmem:[%s7803] ss:$9 sm:$0xff] %v4973
    %s7805 = scalar_lea.vmem [#allocation1], 4
    %7806 = vst [vmem:[%s7805] ss:$9 sm:$0xff] %v4975
    %v7807 = vld [vmem:[#allocation1] sm:$0xff]
    %7808 = vrot.lane.b32.xlu0 %v7807, 64
    %v7809 = vpop.permute.xlu0 %7808
    %v7810 = vsel %vm195, %v7797, 0
    %v7812 = vsel %vm195, %v7809, 0
    %7814 = vmatpush.xpose.msra.mxu0 0.0
    %7815 = vmatpush.xpose.msra.mxu0 0.0
    %7816 = vmatpush.xpose.msra.mxu0 0.0
    %7817 = vmatpush.xpose.msra.mxu0 0.0
    %7818 = vmatpush.xpose.msra.mxu0 0.0
    %7819 = vmatpush.xpose.msra.mxu0 0.0
    %7820 = vmatpush.xpose.msra.mxu0 0.0
    %7821 = vmatpush.xpose.msra.mxu0 0.0
    %7822 = vmatpush.xpose.msra.mxu0 0.0
    %7823 = vmatpush.xpose.msra.mxu0 0.0
    %7824 = vmatpush.xpose.msra.mxu0 0.0
    %7825 = vmatpush.xpose.msra.mxu0 0.0
    %7826 = vmatpush.xpose.msra.mxu0 0.0
    %7827 = vmatpush.xpose.msra.mxu0 0.0
    %7828 = vmatpush.xpose.msra.mxu0 0.0
    %7829 = vmatpush.xpose.msra.mxu0 %v7812
    %7830 = vmatmul.f32.gmra.mxu0 %v7810
    %v7831 = vpop.f32.mrf.mxu0
    %v7832 = vadd.f32 0.0, %v7831
    %7833 = vdwg.mxu0
    %7834 = vst [vmem:[#allocation1] ss:$4 sm:$0xff] %v7535
    %s7835 = scalar_lea.vmem [#allocation1], 1
    %7836 = vst [vmem:[%s7835] ss:$4 sm:$0xff] %v7537
    %s7837 = scalar_lea.vmem [#allocation1], 2
    %7838 = vst [vmem:[%s7837] ss:$4 sm:$0xff] %v7539
    %v7839 = vld.sshfl [vmem:[#allocation1] sm:$0xff pattern:$0x73625140]
    %7840 = vst [vmem:[#allocation1] ss:$9 sm:$0xff] %v4977
    %s7841 = scalar_lea.vmem [#allocation1], 1
    %7842 = vst [vmem:[%s7841] ss:$9 sm:$0xff] %v4979
    %s7843 = scalar_lea.vmem [#allocation1], 2
    %7844 = vst [vmem:[%s7843] ss:$9 sm:$0xff] %v4981
    %s7845 = scalar_lea.vmem [#allocation1], 3
    %7846 = vst [vmem:[%s7845] ss:$9 sm:$0xff] %v4983
    %s7847 = scalar_lea.vmem [#allocation1], 4
    %7848 = vst [vmem:[%s7847] ss:$9 sm:$0xff] %v4985
    %v7849 = vld [vmem:[#allocation1] sm:$0xff]
    %7850 = vrot.lane.b32.xlu0 %v7849, 64
    %v7851 = vpop.permute.xlu0 %7850
    %v7852 = vsel %vm195, %v7839, 0
    %v7854 = vsel %vm195, %v7851, 0
    %7856 = vmatpush.xpose.msra.mxu0 0.0
    %7857 = vmatpush.xpose.msra.mxu0 0.0
    %7858 = vmatpush.xpose.msra.mxu0 0.0
    %7859 = vmatpush.xpose.msra.mxu0 0.0
    %7860 = vmatpush.xpose.msra.mxu0 0.0
    %7861 = vmatpush.xpose.msra.mxu0 0.0
    %7862 = vmatpush.xpose.msra.mxu0 0.0
    %7863 = vmatpush.xpose.msra.mxu0 0.0
    %7864 = vmatpush.xpose.msra.mxu0 0.0
    %7865 = vmatpush.xpose.msra.mxu0 0.0
    %7866 = vmatpush.xpose.msra.mxu0 0.0
    %7867 = vmatpush.xpose.msra.mxu0 0.0
    %7868 = vmatpush.xpose.msra.mxu0 0.0
    %7869 = vmatpush.xpose.msra.mxu0 0.0
    %7870 = vmatpush.xpose.msra.mxu0 0.0
    %7871 = vmatpush.xpose.msra.mxu0 %v7854
    %7872 = vmatmul.f32.gmra.mxu0 %v7852
    %v7873 = vpop.f32.mrf.mxu0
    %v7874 = vadd.f32 0.0, %v7873
    %7875 = vdwg.mxu0
    %v7876 = vmul.f32 %v7580, 0.35355338
    %v7877 = vmul.f32 %v7622, 0.35355338
    %v7878 = vmul.f32 %v7664, 0.35355338
    %v7879 = vmul.f32 %v7706, 0.35355338
    %v7880 = vmul.f32 %v7748, 0.35355338
    %v7881 = vmul.f32 %v7790, 0.35355338
    %v7882 = vmul.f32 %v7832, 0.35355338
    %v7883 = vmul.f32 %v7874, 0.35355338
    %v7884 = vsel %vm5314, %v7876, -inf
    %7885 = vmax.xlane.f32.xlu0 %v7884
    %v7886 = vpop.xlane.xlu0 %7885
    %v7887 = vsel %vm5314, %v7877, -inf
    %7888 = vmax.xlane.f32.xlu0 %v7887
    %v7889 = vpop.xlane.xlu0 %7888
    %v7890 = vsel %vm5314, %v7878, -inf
    %7891 = vmax.xlane.f32.xlu0 %v7890
    %v7892 = vpop.xlane.xlu0 %7891
    %v7893 = vsel %vm5314, %v7879, -inf
    %7894 = vmax.xlane.f32.xlu0 %v7893
    %v7895 = vpop.xlane.xlu0 %7894
    %v7896 = vsel %vm5314, %v7880, -inf
    %7897 = vmax.xlane.f32.xlu0 %v7896
    %v7898 = vpop.xlane.xlu0 %7897
    %v7899 = vsel %vm5314, %v7881, -inf
    %7900 = vmax.xlane.f32.xlu0 %v7899
    %v7901 = vpop.xlane.xlu0 %7900
    %v7902 = vsel %vm5314, %v7882, -inf
    %7903 = vmax.xlane.f32.xlu0 %v7902
    %v7904 = vpop.xlane.xlu0 %7903
    %v7905 = vsel %vm5314, %v7883, -inf
    %7906 = vmax.xlane.f32.xlu0 %v7905
    %v7907 = vpop.xlane.xlu0 %7906
    %v7908 = vsub.f32 %v7876, %v7886
    %v7909 = vsub.f32 %v7877, %v7889
    %v7910 = vsub.f32 %v7878, %v7892
    %v7911 = vsub.f32 %v7879, %v7895
    %v7912 = vsub.f32 %v7880, %v7898
    %v7913 = vsub.f32 %v7881, %v7901
    %v7914 = vsub.f32 %v7882, %v7904
    %v7915 = vsub.f32 %v7883, %v7907
    %v7916 = vmul.f32 %v7908, 1.442695
    %v7917 = vpow.pop %v7916
    %v7918 = vmul.f32 %v7909, 1.442695
    %v7919 = vpow.pop %v7918
    %v7920 = vmul.f32 %v7910, 1.442695
    %v7921 = vpow.pop %v7920
    %v7922 = vmul.f32 %v7911, 1.442695
    %v7923 = vpow.pop %v7922
    %v7924 = vmul.f32 %v7912, 1.442695
    %v7925 = vpow.pop %v7924
    %v7926 = vmul.f32 %v7913, 1.442695
    %v7927 = vpow.pop %v7926
    %v7928 = vmul.f32 %v7914, 1.442695
    %v7929 = vpow.pop %v7928
    %v7930 = vmul.f32 %v7915, 1.442695
    %v7931 = vpow.pop %v7930
    %v7932 = vsel %vm5314, %v7917, 0.0
    %7933 = vadd.xlane.f32.xlu0 %v7932
    %v7934 = vpop.xlane.xlu0 %7933
    %v7935 = vsel %vm5314, %v7919, 0.0
    %7936 = vadd.xlane.f32.xlu0 %v7935
    %v7937 = vpop.xlane.xlu0 %7936
    %v7938 = vsel %vm5314, %v7921, 0.0
    %7939 = vadd.xlane.f32.xlu0 %v7938
    %v7940 = vpop.xlane.xlu0 %7939
    %v7941 = vsel %vm5314, %v7923, 0.0
    %7942 = vadd.xlane.f32.xlu0 %v7941
    %v7943 = vpop.xlane.xlu0 %7942
    %v7944 = vsel %vm5314, %v7925, 0.0
    %7945 = vadd.xlane.f32.xlu0 %v7944
    %v7946 = vpop.xlane.xlu0 %7945
    %v7947 = vsel %vm5314, %v7927, 0.0
    %7948 = vadd.xlane.f32.xlu0 %v7947
    %v7949 = vpop.xlane.xlu0 %7948
    %v7950 = vsel %vm5314, %v7929, 0.0
    %7951 = vadd.xlane.f32.xlu0 %v7950
    %v7952 = vpop.xlane.xlu0 %7951
    %v7953 = vsel %vm5314, %v7931, 0.0
    %7954 = vadd.xlane.f32.xlu0 %v7953
    %v7955 = vpop.xlane.xlu0 %7954
    %7956 = vst [vmem:[#allocation1] ss:$9 sm:$0xff] %v3693
    %s7957 = scalar_lea.vmem [#allocation1], 1
    %7958 = vst [vmem:[%s7957] ss:$9 sm:$0xff] %v4918
    %s7959 = scalar_lea.vmem [#allocation1], 2
    %7960 = vst [vmem:[%s7959] ss:$9 sm:$0xff] %v4919
    %s7961 = scalar_lea.vmem [#allocation1], 3
    %7962 = vst [vmem:[%s7961] ss:$9 sm:$0xff] %v4920
    %s7963 = scalar_lea.vmem [#allocation1], 4
    %7964 = vst [vmem:[%s7963] ss:$9 sm:$0xff] %v4921
    %v7965 = vld [vmem:[#allocation1] sm:$0xff]
    %7966 = vrot.lane.b32.xlu0 %v7965, 32
    %v7967 = vpop.permute.xlu0 %7966
    %v7969 = vsel %vm635, %v7917, 0
    %v7971 = vsel %vm639, %v7967, 0
    %7973 = vmatpush.msra.mxu0 0.0
    %7974 = vmatpush.msra.mxu0 0.0
    %7975 = vmatpush.msra.mxu0 0.0
    %7976 = vmatpush.msra.mxu0 0.0
    %7977 = vmatpush.msra.mxu0 0.0
    %7978 = vmatpush.msra.mxu0 0.0
    %7979 = vmatpush.msra.mxu0 0.0
    %7980 = vmatpush.msra.mxu0 0.0
    %7981 = vmatpush.msra.mxu0 0.0
    %7982 = vmatpush.msra.mxu0 0.0
    %7983 = vmatpush.msra.mxu0 0.0
    %7984 = vmatpush.msra.mxu0 0.0
    %7985 = vmatpush.msra.mxu0 0.0
    %7986 = vmatpush.msra.mxu0 0.0
    %7987 = vmatpush.msra.mxu0 0.0
    %7988 = vmatpush.msra.mxu0 %v7971
    %7989 = vmatmul.f32.gmra.mxu0 %v7969
    %v7990 = vpop.f32.mrf.mxu0
    %v7991 = vadd.f32 0.0, %v7990
    %7992 = vdwg.mxu0
    %7993 = vst [vmem:[#allocation1] ss:$9 sm:$0xff] %v4922
    %s7994 = scalar_lea.vmem [#allocation1], 1
    %7995 = vst [vmem:[%s7994] ss:$9 sm:$0xff] %v4923
    %s7996 = scalar_lea.vmem [#allocation1], 2
    %7997 = vst [vmem:[%s7996] ss:$9 sm:$0xff] %v4924
    %s7998 = scalar_lea.vmem [#allocation1], 3
    %7999 = vst [vmem:[%s7998] ss:$9 sm:$0xff] %v3696
    %s8000 = scalar_lea.vmem [#allocation1], 4
    %8001 = vst [vmem:[%s8000] ss:$9 sm:$0xff] %v4925
    %v8002 = vld [vmem:[#allocation1] sm:$0xff]
    %8003 = vrot.lane.b32.xlu0 %v8002, 32
    %v8004 = vpop.permute.xlu0 %8003
    %v8006 = vsel %vm635, %v7919, 0
    %v8008 = vsel %vm639, %v8004, 0
    %8010 = vmatpush.msra.mxu0 0.0
    %8011 = vmatpush.msra.mxu0 0.0
    %8012 = vmatpush.msra.mxu0 0.0
    %8013 = vmatpush.msra.mxu0 0.0
    %8014 = vmatpush.msra.mxu0 0.0
    %8015 = vmatpush.msra.mxu0 0.0
    %8016 = vmatpush.msra.mxu0 0.0
    %8017 = vmatpush.msra.mxu0 0.0
    %8018 = vmatpush.msra.mxu0 0.0
    %8019 = vmatpush.msra.mxu0 0.0
    %8020 = vmatpush.msra.mxu0 0.0
    %8021 = vmatpush.msra.mxu0 0.0
    %8022 = vmatpush.msra.mxu0 0.0
    %8023 = vmatpush.msra.mxu0 0.0
    %8024 = vmatpush.msra.mxu0 0.0
    %8025 = vmatpush.msra.mxu0 %v8008
    %8026 = vmatmul.f32.gmra.mxu0 %v8006
    %v8027 = vpop.f32.mrf.mxu0
    %v8028 = vadd.f32 0.0, %v8027
    %8029 = vdwg.mxu0
    %8030 = vst [vmem:[#allocation1] ss:$9 sm:$0xff] %v4927
    %s8031 = scalar_lea.vmem [#allocation1], 1
    %8032 = vst [vmem:[%s8031] ss:$9 sm:$0xff] %v4929
    %s8033 = scalar_lea.vmem [#allocation1], 2
    %8034 = vst [vmem:[%s8033] ss:$9 sm:$0xff] %v4931
    %s8035 = scalar_lea.vmem [#allocation1], 3
    %8036 = vst [vmem:[%s8035] ss:$9 sm:$0xff] %v4933
    %s8037 = scalar_lea.vmem [#allocation1], 4
    %8038 = vst [vmem:[%s8037] ss:$9 sm:$0xff] %v4935
    %v8039 = vld [vmem:[#allocation1] sm:$0xff]
    %8040 = vrot.lane.b32.xlu0 %v8039, 32
    %v8041 = vpop.permute.xlu0 %8040
    %v8043 = vsel %vm635, %v7921, 0
    %v8045 = vsel %vm639, %v8041, 0
    %8047 = vmatpush.msra.mxu0 0.0
    %8048 = vmatpush.msra.mxu0 0.0
    %8049 = vmatpush.msra.mxu0 0.0
    %8050 = vmatpush.msra.mxu0 0.0
    %8051 = vmatpush.msra.mxu0 0.0
    %8052 = vmatpush.msra.mxu0 0.0
    %8053 = vmatpush.msra.mxu0 0.0
    %8054 = vmatpush.msra.mxu0 0.0
    %8055 = vmatpush.msra.mxu0 0.0
    %8056 = vmatpush.msra.mxu0 0.0
    %8057 = vmatpush.msra.mxu0 0.0
    %8058 = vmatpush.msra.mxu0 0.0
    %8059 = vmatpush.msra.mxu0 0.0
    %8060 = vmatpush.msra.mxu0 0.0
    %8061 = vmatpush.msra.mxu0 0.0
    %8062 = vmatpush.msra.mxu0 %v8045
    %8063 = vmatmul.f32.gmra.mxu0 %v8043
    %v8064 = vpop.f32.mrf.mxu0
    %v8065 = vadd.f32 0.0, %v8064
    %8066 = vdwg.mxu0
    %8067 = vst [vmem:[#allocation1] ss:$9 sm:$0xff] %v4937
    %s8068 = scalar_lea.vmem [#allocation1], 1
    %8069 = vst [vmem:[%s8068] ss:$9 sm:$0xff] %v4939
    %s8070 = scalar_lea.vmem [#allocation1], 2
    %8071 = vst [vmem:[%s8070] ss:$9 sm:$0xff] %v4941
    %s8072 = scalar_lea.vmem [#allocation1], 3
    %8073 = vst [vmem:[%s8072] ss:$9 sm:$0xff] %v4943
    %s8074 = scalar_lea.vmem [#allocation1], 4
    %8075 = vst [vmem:[%s8074] ss:$9 sm:$0xff] %v4945
    %v8076 = vld [vmem:[#allocation1] sm:$0xff]
    %8077 = vrot.lane.b32.xlu0 %v8076, 32
    %v8078 = vpop.permute.xlu0 %8077
    %v8080 = vsel %vm635, %v7923, 0
    %v8082 = vsel %vm639, %v8078, 0
    %8084 = vmatpush.msra.mxu0 0.0
    %8085 = vmatpush.msra.mxu0 0.0
    %8086 = vmatpush.msra.mxu0 0.0
    %8087 = vmatpush.msra.mxu0 0.0
    %8088 = vmatpush.msra.mxu0 0.0
    %8089 = vmatpush.msra.mxu0 0.0
    %8090 = vmatpush.msra.mxu0 0.0
    %8091 = vmatpush.msra.mxu0 0.0
    %8092 = vmatpush.msra.mxu0 0.0
    %8093 = vmatpush.msra.mxu0 0.0
    %8094 = vmatpush.msra.mxu0 0.0
    %8095 = vmatpush.msra.mxu0 0.0
    %8096 = vmatpush.msra.mxu0 0.0
    %8097 = vmatpush.msra.mxu0 0.0
    %8098 = vmatpush.msra.mxu0 0.0
    %8099 = vmatpush.msra.mxu0 %v8082
    %8100 = vmatmul.f32.gmra.mxu0 %v8080
    %v8101 = vpop.f32.mrf.mxu0
    %v8102 = vadd.f32 0.0, %v8101
    %8103 = vdwg.mxu0
    %8104 = vst [vmem:[#allocation1] ss:$9 sm:$0xff] %v4947
    %s8105 = scalar_lea.vmem [#allocation1], 1
    %8106 = vst [vmem:[%s8105] ss:$9 sm:$0xff] %v4949
    %s8107 = scalar_lea.vmem [#allocation1], 2
    %8108 = vst [vmem:[%s8107] ss:$9 sm:$0xff] %v4951
    %s8109 = scalar_lea.vmem [#allocation1], 3
    %8110 = vst [vmem:[%s8109] ss:$9 sm:$0xff] %v4953
    %s8111 = scalar_lea.vmem [#allocation1], 4
    %8112 = vst [vmem:[%s8111] ss:$9 sm:$0xff] %v4955
    %v8113 = vld [vmem:[#allocation1] sm:$0xff]
    %8114 = vrot.lane.b32.xlu0 %v8113, 32
    %v8115 = vpop.permute.xlu0 %8114
    %v8117 = vsel %vm635, %v7925, 0
    %v8119 = vsel %vm639, %v8115, 0
    %8121 = vmatpush.msra.mxu0 0.0
    %8122 = vmatpush.msra.mxu0 0.0
    %8123 = vmatpush.msra.mxu0 0.0
    %8124 = vmatpush.msra.mxu0 0.0
    %8125 = vmatpush.msra.mxu0 0.0
    %8126 = vmatpush.msra.mxu0 0.0
    %8127 = vmatpush.msra.mxu0 0.0
    %8128 = vmatpush.msra.mxu0 0.0
    %8129 = vmatpush.msra.mxu0 0.0
    %8130 = vmatpush.msra.mxu0 0.0
    %8131 = vmatpush.msra.mxu0 0.0
    %8132 = vmatpush.msra.mxu0 0.0
    %8133 = vmatpush.msra.mxu0 0.0
    %8134 = vmatpush.msra.mxu0 0.0
    %8135 = vmatpush.msra.mxu0 0.0
    %8136 = vmatpush.msra.mxu0 %v8119
    %8137 = vmatmul.f32.gmra.mxu0 %v8117
    %v8138 = vpop.f32.mrf.mxu0
    %v8139 = vadd.f32 0.0, %v8138
    %8140 = vdwg.mxu0
    %8141 = vst [vmem:[#allocation1] ss:$9 sm:$0xff] %v4957
    %s8142 = scalar_lea.vmem [#allocation1], 1
    %8143 = vst [vmem:[%s8142] ss:$9 sm:$0xff] %v4959
    %s8144 = scalar_lea.vmem [#allocation1], 2
    %8145 = vst [vmem:[%s8144] ss:$9 sm:$0xff] %v4961
    %s8146 = scalar_lea.vmem [#allocation1], 3
    %8147 = vst [vmem:[%s8146] ss:$9 sm:$0xff] %v4963
    %s8148 = scalar_lea.vmem [#allocation1], 4
    %8149 = vst [vmem:[%s8148] ss:$9 sm:$0xff] %v4965
    %v8150 = vld [vmem:[#allocation1] sm:$0xff]
    %8151 = vrot.lane.b32.xlu0 %v8150, 32
    %v8152 = vpop.permute.xlu0 %8151
    %v8154 = vsel %vm635, %v7927, 0
    %v8156 = vsel %vm639, %v8152, 0
    %8158 = vmatpush.msra.mxu0 0.0
    %8159 = vmatpush.msra.mxu0 0.0
    %8160 = vmatpush.msra.mxu0 0.0
    %8161 = vmatpush.msra.mxu0 0.0
    %8162 = vmatpush.msra.mxu0 0.0
    %8163 = vmatpush.msra.mxu0 0.0
    %8164 = vmatpush.msra.mxu0 0.0
    %8165 = vmatpush.msra.mxu0 0.0
    %8166 = vmatpush.msra.mxu0 0.0
    %8167 = vmatpush.msra.mxu0 0.0
    %8168 = vmatpush.msra.mxu0 0.0
    %8169 = vmatpush.msra.mxu0 0.0
    %8170 = vmatpush.msra.mxu0 0.0
    %8171 = vmatpush.msra.mxu0 0.0
    %8172 = vmatpush.msra.mxu0 0.0
    %8173 = vmatpush.msra.mxu0 %v8156
    %8174 = vmatmul.f32.gmra.mxu0 %v8154
    %v8175 = vpop.f32.mrf.mxu0
    %v8176 = vadd.f32 0.0, %v8175
    %8177 = vdwg.mxu0
    %8178 = vst [vmem:[#allocation1] ss:$9 sm:$0xff] %v4967
    %s8179 = scalar_lea.vmem [#allocation1], 1
    %8180 = vst [vmem:[%s8179] ss:$9 sm:$0xff] %v4969
    %s8181 = scalar_lea.vmem [#allocation1], 2
    %8182 = vst [vmem:[%s8181] ss:$9 sm:$0xff] %v4971
    %s8183 = scalar_lea.vmem [#allocation1], 3
    %8184 = vst [vmem:[%s8183] ss:$9 sm:$0xff] %v4973
    %s8185 = scalar_lea.vmem [#allocation1], 4
    %8186 = vst [vmem:[%s8185] ss:$9 sm:$0xff] %v4975
    %v8187 = vld [vmem:[#allocation1] sm:$0xff]
    %8188 = vrot.lane.b32.xlu0 %v8187, 32
    %v8189 = vpop.permute.xlu0 %8188
    %v8191 = vsel %vm635, %v7929, 0
    %v8193 = vsel %vm639, %v8189, 0
    %8195 = vmatpush.msra.mxu0 0.0
    %8196 = vmatpush.msra.mxu0 0.0
    %8197 = vmatpush.msra.mxu0 0.0
    %8198 = vmatpush.msra.mxu0 0.0
    %8199 = vmatpush.msra.mxu0 0.0
    %8200 = vmatpush.msra.mxu0 0.0
    %8201 = vmatpush.msra.mxu0 0.0
    %8202 = vmatpush.msra.mxu0 0.0
    %8203 = vmatpush.msra.mxu0 0.0
    %8204 = vmatpush.msra.mxu0 0.0
    %8205 = vmatpush.msra.mxu0 0.0
    %8206 = vmatpush.msra.mxu0 0.0
    %8207 = vmatpush.msra.mxu0 0.0
    %8208 = vmatpush.msra.mxu0 0.0
    %8209 = vmatpush.msra.mxu0 0.0
    %8210 = vmatpush.msra.mxu0 %v8193
    %8211 = vmatmul.f32.gmra.mxu0 %v8191
    %v8212 = vpop.f32.mrf.mxu0
    %v8213 = vadd.f32 0.0, %v8212
    %8214 = vdwg.mxu0
    %8215 = vst [vmem:[#allocation1] ss:$9 sm:$0xff] %v4977
    %s8216 = scalar_lea.vmem [#allocation1], 1
    %8217 = vst [vmem:[%s8216] ss:$9 sm:$0xff] %v4979
    %s8218 = scalar_lea.vmem [#allocation1], 2
    %8219 = vst [vmem:[%s8218] ss:$9 sm:$0xff] %v4981
    %s8220 = scalar_lea.vmem [#allocation1], 3
    %8221 = vst [vmem:[%s8220] ss:$9 sm:$0xff] %v4983
    %s8222 = scalar_lea.vmem [#allocation1], 4
    %8223 = vst [vmem:[%s8222] ss:$9 sm:$0xff] %v4985
    %v8224 = vld [vmem:[#allocation1] sm:$0xff]
    %8225 = vrot.lane.b32.xlu0 %v8224, 32
    %v8226 = vpop.permute.xlu0 %8225
    %v8228 = vsel %vm635, %v7931, 0
    %v8230 = vsel %vm639, %v8226, 0
    %8232 = vmatpush.msra.mxu0 0.0
    %8233 = vmatpush.msra.mxu0 0.0
    %8234 = vmatpush.msra.mxu0 0.0
    %8235 = vmatpush.msra.mxu0 0.0
    %8236 = vmatpush.msra.mxu0 0.0
    %8237 = vmatpush.msra.mxu0 0.0
    %8238 = vmatpush.msra.mxu0 0.0
    %8239 = vmatpush.msra.mxu0 0.0
    %8240 = vmatpush.msra.mxu0 0.0
    %8241 = vmatpush.msra.mxu0 0.0
    %8242 = vmatpush.msra.mxu0 0.0
    %8243 = vmatpush.msra.mxu0 0.0
    %8244 = vmatpush.msra.mxu0 0.0
    %8245 = vmatpush.msra.mxu0 0.0
    %8246 = vmatpush.msra.mxu0 0.0
    %8247 = vmatpush.msra.mxu0 %v8230
    %8248 = vmatmul.f32.gmra.mxu0 %v8228
    %v8249 = vpop.f32.mrf.mxu0
    %v8250 = vadd.f32 0.0, %v8249
    %8251 = vdwg.mxu0
    %v8252 = vrcp.pop %v7934
    %v8253 = vrcp.pop %v7937
    %v8254 = vrcp.pop %v7940
    %v8255 = vrcp.pop %v7943
    %v8256 = vrcp.pop %v7946
    %v8257 = vrcp.pop %v7949
    %v8258 = vrcp.pop %v7952
    %v8259 = vrcp.pop %v7955
    %v8260 = vmul.f32 %v7991, %v8252
    %v8261 = vmul.f32 %v8028, %v8253
    %v8262 = vmul.f32 %v8065, %v8254
    %v8263 = vmul.f32 %v8102, %v8255
    %v8264 = vmul.f32 %v8139, %v8256
    %v8265 = vmul.f32 %v8176, %v8257
    %v8266 = vmul.f32 %v8213, %v8258
    %v8267 = vmul.f32 %v8250, %v8259
    %v8270 = vrot.slane %v8260, 2
    %v8271 = vrot.slane %v8260, 4
    %v8272 = vrot.slane %v8261, 2
    %v8273 = vrot.slane %v8261, 4
    %v8276 = vrot.slane %v8262, 2
    %v8277 = vrot.slane %v8262, 4
    %v8278 = vrot.slane %v8263, 2
    %v8279 = vrot.slane %v8263, 4
    %v8282 = vrot.slane %v8264, 2
    %v8283 = vrot.slane %v8264, 4
    %v8284 = vrot.slane %v8265, 2
    %v8285 = vrot.slane %v8265, 4
    %v8288 = vrot.slane %v8266, 2
    %v8289 = vrot.slane %v8266, 4
    %v8290 = vrot.slane %v8267, 2
    %v8291 = vrot.slane %v8267, 4
    %8292 = vst [vmem:[#allocation1] ss:$4 sm:$0xff] %v8260
    %s8293 = scalar_lea.vmem [#allocation1], 1
    %8294 = vst [vmem:[%s8293] ss:$4 sm:$0xff] %v8270
    %s8295 = scalar_lea.vmem [#allocation1], 2
    %8296 = vst [vmem:[%s8295] ss:$4 sm:$0xff] %v8271
    %s8297 = scalar_lea.vmem [#allocation1], 3
    %8298 = vst [vmem:[%s8297] ss:$4 sm:$0xff] %v8261
    %s8299 = scalar_lea.vmem [#allocation1], 32
    %8300 = vst [vmem:[%s8299] ss:$4 sm:$0xff] %v8272
    %s8301 = scalar_lea.vmem [#allocation1], 33
    %8302 = vst [vmem:[%s8301] ss:$4 sm:$0xff] %v8273
    %v8303 = vld.sshfl [vmem:[#allocation1] sm:$0xff pattern:$0x73625140]
    %v8304 = vld.sshfl [vmem:[#allocation1 + $0x20] sm:$0xff pattern:$0x73625140]
    %8307 = vst [vmem:[#allocation1] ss:$4 sm:$0xff] %v8262
    %s8308 = scalar_lea.vmem [#allocation1], 1
    %8309 = vst [vmem:[%s8308] ss:$4 sm:$0xff] %v8276
    %s8310 = scalar_lea.vmem [#allocation1], 2
    %8311 = vst [vmem:[%s8310] ss:$4 sm:$0xff] %v8277
    %s8312 = scalar_lea.vmem [#allocation1], 3
    %8313 = vst [vmem:[%s8312] ss:$4 sm:$0xff] %v8263
    %s8314 = scalar_lea.vmem [#allocation1], 32
    %8315 = vst [vmem:[%s8314] ss:$4 sm:$0xff] %v8278
    %s8316 = scalar_lea.vmem [#allocation1], 33
    %8317 = vst [vmem:[%s8316] ss:$4 sm:$0xff] %v8279
    %v8318 = vld.sshfl [vmem:[#allocation1] sm:$0xff pattern:$0x73625140]
    %v8319 = vld.sshfl [vmem:[#allocation1 + $0x20] sm:$0xff pattern:$0x73625140]
    %8320 = vrot.lane.b32.xlu0 %v8318, 8
    %v8321 = vpop.permute.xlu0 %8320
    %8322 = vrot.lane.b32.xlu0 %v8319, 8
    %v8323 = vpop.permute.xlu0 %8322
    %8326 = vst [vmem:[#allocation1] ss:$4 sm:$0xff] %v8264
    %s8327 = scalar_lea.vmem [#allocation1], 1
    %8328 = vst [vmem:[%s8327] ss:$4 sm:$0xff] %v8282
    %s8329 = scalar_lea.vmem [#allocation1], 2
    %8330 = vst [vmem:[%s8329] ss:$4 sm:$0xff] %v8283
    %s8331 = scalar_lea.vmem [#allocation1], 3
    %8332 = vst [vmem:[%s8331] ss:$4 sm:$0xff] %v8265
    %s8333 = scalar_lea.vmem [#allocation1], 32
    %8334 = vst [vmem:[%s8333] ss:$4 sm:$0xff] %v8284
    %s8335 = scalar_lea.vmem [#allocation1], 33
    %8336 = vst [vmem:[%s8335] ss:$4 sm:$0xff] %v8285
    %v8337 = vld.sshfl [vmem:[#allocation1] sm:$0xff pattern:$0x73625140]
    %v8338 = vld.sshfl [vmem:[#allocation1 + $0x20] sm:$0xff pattern:$0x73625140]
    %8339 = vrot.lane.b32.xlu0 %v8337, 16
    %v8340 = vpop.permute.xlu0 %8339
    %8341 = vrot.lane.b32.xlu0 %v8338, 16
    %v8342 = vpop.permute.xlu0 %8341
    %8345 = vst [vmem:[#allocation1] ss:$4 sm:$0xff] %v8266
    %s8346 = scalar_lea.vmem [#allocation1], 1
    %8347 = vst [vmem:[%s8346] ss:$4 sm:$0xff] %v8288
    %s8348 = scalar_lea.vmem [#allocation1], 2
    %8349 = vst [vmem:[%s8348] ss:$4 sm:$0xff] %v8289
    %s8350 = scalar_lea.vmem [#allocation1], 3
    %8351 = vst [vmem:[%s8350] ss:$4 sm:$0xff] %v8267
    %s8352 = scalar_lea.vmem [#allocation1], 32
    %8353 = vst [vmem:[%s8352] ss:$4 sm:$0xff] %v8290
    %s8354 = scalar_lea.vmem [#allocation1], 33
    %8355 = vst [vmem:[%s8354] ss:$4 sm:$0xff] %v8291
    %v8356 = vld.sshfl [vmem:[#allocation1] sm:$0xff pattern:$0x73625140]
    %v8357 = vld.sshfl [vmem:[#allocation1 + $0x20] sm:$0xff pattern:$0x73625140]
    %8358 = vrot.lane.b32.xlu0 %v8356, 24
    %v8359 = vpop.permute.xlu0 %8358
    %8360 = vrot.lane.b32.xlu0 %v8357, 24
    %v8361 = vpop.permute.xlu0 %8360
    %v8364 = vsel %vm195, %v8303, %v8321
    %v8365 = vsel %vm195, %v8304, %v8323
    %v8366 = vsel %vm1075, %v8364, %v8340
    %v8367 = vsel %vm1075, %v8365, %v8342
    %v8368 = vsel %vm1078, %v8366, %v8359
    %v8369 = vsel %vm1078, %v8367, %v8361
    %v8370 = vld [vmem:[#allocation2 + $0x2a0] sm:$0xff]
    %v8371 = vld [vmem:[#allocation2 + $0x2a8] sm:$0xff]
    %v8372 = vld [vmem:[#allocation2 + $0x2b0] sm:$0xff]
    %v8373 = vld [vmem:[#allocation2 + $0x2b8] sm:$0xff]
    %v8374 = vperm.slane %v6338, 3
    %v8376 = vsel %vm75, %v8368, 0
    %v8379 = vsel %vm75, %v8369, 0
    %8381 = vmatpush.msra.mxu0 0.0
    %8382 = vmatpush.msra.mxu0 0.0
    %8383 = vmatpush.msra.mxu0 0.0
    %8384 = vmatpush.msra.mxu0 0.0
    %8385 = vmatpush.msra.mxu0 0.0
    %8386 = vmatpush.msra.mxu0 0.0
    %8387 = vmatpush.msra.mxu0 0.0
    %8388 = vmatpush.msra.mxu0 0.0
    %8389 = vmatpush.msra.mxu0 0.0
    %8390 = vmatpush.msra.mxu0 0.0
    %8391 = vmatpush.msra.mxu0 0.0
    %8392 = vmatpush.msra.mxu0 0.0
    %8393 = vmatpush.msra.mxu0 %v8373
    %8394 = vmatpush.msra.mxu0 %v8372
    %8395 = vmatpush.msra.mxu0 %v8371
    %8396 = vmatpush.msra.mxu0 %v8370
    %8397 = vmatmul.f32.gmra.mxu0 %v8376
    %v8398 = vpop.f32.mrf.mxu0
    %v8399 = vadd.f32 %v8374, %v8398
    %8400 = vmatmul.f32.gmra.mxu0 %v8379
    %v8401 = vpop.f32.mrf.mxu0
    %v8402 = vadd.f32 %v8374, %v8401
    %8403 = vdwg.mxu0
    %v8406 = vrot.slane %v8399, 2
    %v8407 = vrot.slane %v8399, 4
    %v8408 = vrot.slane %v8399, 6
    %v8409 = vrot.slane %v8402, 2
    %v8414 = vadd.f32 %v7441, %v8399
    %v8415 = vadd.f32 %v7442, %v8406
    %v8416 = vadd.f32 %v7443, %v8407
    %v8417 = vadd.f32 %v7444, %v8408
    %v8418 = vadd.f32 %v7445, %v8402
    %v8419 = vadd.f32 %v7446, %v8409
    %8426 = vst [vmem:[#allocation1] ss:$4 sm:$0xff] %v8414
    %s8427 = scalar_lea.vmem [#allocation1], 1
    %8428 = vst [vmem:[%s8427] ss:$4 sm:$0xff] %v8415
    %s8429 = scalar_lea.vmem [#allocation1], 2
    %8430 = vst [vmem:[%s8429] ss:$4 sm:$0xff] %v8416
    %s8431 = scalar_lea.vmem [#allocation1], 3
    %8432 = vst [vmem:[%s8431] ss:$4 sm:$0xff] %v8417
    %s8433 = scalar_lea.vmem [#allocation1], 32
    %8434 = vst [vmem:[%s8433] ss:$4 sm:$0xff] %v8418
    %s8435 = scalar_lea.vmem [#allocation1], 33
    %8436 = vst [vmem:[%s8435] ss:$4 sm:$0xff] %v8419
    %v8437 = vld.sshfl [vmem:[#allocation1] sm:$0xff pattern:$0x73625140]
    %v8438 = vld.sshfl [vmem:[#allocation1 + $0x20] sm:$0xff pattern:$0x73625140]
    %v8441 = vsel %vm75, %v8437, 0.0
    %8442 = vadd.xlane.f32.xlu0 %v8441
    %v8443 = vpop.xlane.xlu0 %8442
    %v8444 = vsel %vm4656, %v8438, 0.0
    %8445 = vadd.xlane.f32.xlu0 %v8444
    %v8446 = vpop.xlane.xlu0 %8445
    %v8447 = vmul.f32 %v8443, %v1187
    %v8448 = vmul.f32 %v8446, %v1187
    %v8452 = vunpack.c.l.s4 269488144
    %v8453 = vunpack.c.0.s8 %v8452
    %v8454 = vperm.slane %v8447, %v8453
    %v8456 = vunpack.c.l.s4 842150450
    %v8457 = vunpack.c.0.s8 %v8456
    %v8458 = vperm.slane %v8447, %v8457
    %v8460 = vunpack.c.l.s4 1414812756
    %v8461 = vunpack.c.0.s8 %v8460
    %v8462 = vperm.slane %v8447, %v8461
    %v8464 = vunpack.c.l.s4 1987475062
    %v8465 = vunpack.c.0.s8 %v8464
    %v8466 = vperm.slane %v8447, %v8465
    %v8468 = vunpack.c.l.s4 269488144
    %v8469 = vunpack.c.0.s8 %v8468
    %v8470 = vperm.slane %v8448, %v8469
    %v8472 = vunpack.c.l.s4 842150450
    %v8473 = vunpack.c.0.s8 %v8472
    %v8474 = vperm.slane %v8448, %v8473
    %v8481 = vsub.f32 %v8414, %v8454
    %v8482 = vsub.f32 %v8415, %v8458
    %v8483 = vsub.f32 %v8416, %v8462
    %v8484 = vsub.f32 %v8417, %v8466
    %v8485 = vsub.f32 %v8418, %v8470
    %v8486 = vsub.f32 %v8419, %v8474
    %v8487 = vmul.f32 %v8481, %v8481
    %v8488 = vmul.f32 %v8482, %v8482
    %v8489 = vmul.f32 %v8483, %v8483
    %v8490 = vmul.f32 %v8484, %v8484
    %v8491 = vmul.f32 %v8485, %v8485
    %v8492 = vmul.f32 %v8486, %v8486
    %8499 = vst [vmem:[#allocation1] ss:$4 sm:$0xff] %v8487
    %s8500 = scalar_lea.vmem [#allocation1], 1
    %8501 = vst [vmem:[%s8500] ss:$4 sm:$0xff] %v8488
    %s8502 = scalar_lea.vmem [#allocation1], 2
    %8503 = vst [vmem:[%s8502] ss:$4 sm:$0xff] %v8489
    %s8504 = scalar_lea.vmem [#allocation1], 3
    %8505 = vst [vmem:[%s8504] ss:$4 sm:$0xff] %v8490
    %s8506 = scalar_lea.vmem [#allocation1], 32
    %8507 = vst [vmem:[%s8506] ss:$4 sm:$0xff] %v8491
    %s8508 = scalar_lea.vmem [#allocation1], 33
    %8509 = vst [vmem:[%s8508] ss:$4 sm:$0xff] %v8492
    %v8510 = vld.sshfl [vmem:[#allocation1] sm:$0xff pattern:$0x73625140]
    %v8511 = vld.sshfl [vmem:[#allocation1 + $0x20] sm:$0xff pattern:$0x73625140]
    %v8514 = vsel %vm75, %v8510, 0.0
    %8515 = vadd.xlane.f32.xlu0 %v8514
    %v8516 = vpop.xlane.xlu0 %8515
    %v8517 = vsel %vm4656, %v8511, 0.0
    %8518 = vadd.xlane.f32.xlu0 %v8517
    %v8519 = vpop.xlane.xlu0 %8518
    %v8520 = vmul.f32 %v8516, %v1187
    %v8521 = vmul.f32 %v8519, %v1187
    %v8522 = vadd.f32 %v8520, 1e-05
    %v8523 = vadd.f32 %v8521, 1e-05
    %v8524 = vrsqrt.pop %v8522
    %v8525 = vmul.f32 %v8524, %v8522
    %v8526 = vmul.f32 %v8525, %v8524
    %v8527 = vmul.f32 0.5, %v8526
    %v8528 = vsub.f32 1.5, %v8527
    %v8529 = vmul.f32 %v8524, %v8528
    %vm8530 = vweird.f32 %v8522
    %vm8531 = vweird.f32 %v8524
    %vm8532 = vmor %vm8530, %vm8531
    %v8533 = vsel %vm8532, %v8524, %v8529
    %v8534 = vrsqrt.pop %v8523
    %v8535 = vmul.f32 %v8534, %v8523
    %v8536 = vmul.f32 %v8535, %v8534
    %v8537 = vmul.f32 0.5, %v8536
    %v8538 = vsub.f32 1.5, %v8537
    %v8539 = vmul.f32 %v8534, %v8538
    %vm8540 = vweird.f32 %v8523
    %vm8541 = vweird.f32 %v8534
    %vm8542 = vmor %vm8540, %vm8541
    %v8543 = vsel %vm8542, %v8534, %v8539
    %v8547 = vunpack.c.l.s4 269488144
    %v8548 = vunpack.c.0.s8 %v8547
    %v8549 = vperm.slane %v8533, %v8548
    %v8551 = vunpack.c.l.s4 842150450
    %v8552 = vunpack.c.0.s8 %v8551
    %v8553 = vperm.slane %v8533, %v8552
    %v8555 = vunpack.c.l.s4 1414812756
    %v8556 = vunpack.c.0.s8 %v8555
    %v8557 = vperm.slane %v8533, %v8556
    %v8559 = vunpack.c.l.s4 1987475062
    %v8560 = vunpack.c.0.s8 %v8559
    %v8561 = vperm.slane %v8533, %v8560
    %v8563 = vunpack.c.l.s4 269488144
    %v8564 = vunpack.c.0.s8 %v8563
    %v8565 = vperm.slane %v8543, %v8564
    %v8567 = vunpack.c.l.s4 842150450
    %v8568 = vunpack.c.0.s8 %v8567
    %v8569 = vperm.slane %v8543, %v8568
    %v8576 = vmul.f32 %v8481, %v8549
    %v8577 = vmul.f32 %v8482, %v8553
    %v8578 = vmul.f32 %v8483, %v8557
    %v8579 = vmul.f32 %v8484, %v8561
    %v8580 = vmul.f32 %v8485, %v8565
    %v8581 = vmul.f32 %v8486, %v8569
    %v8582 = vperm.slane %v6339, 0
    %v8584 = vrot.slane %v8582, 2
    %v8585 = vrot.slane %v8582, 4
    %v8586 = vrot.slane %v8582, 6
    %v8590 = vmul.f32 %v8576, %v8582
    %v8591 = vmul.f32 %v8577, %v8584
    %v8592 = vmul.f32 %v8578, %v8585
    %v8593 = vmul.f32 %v8579, %v8586
    %v8594 = vmul.f32 %v8580, %v8582
    %v8595 = vmul.f32 %v8581, %v8584
    %v8596 = vperm.slane %v6339, 1
    %v8598 = vrot.slane %v8596, 2
    %v8599 = vrot.slane %v8596, 4
    %v8600 = vrot.slane %v8596, 6
    %v8604 = vadd.f32 %v8590, %v8596
    %v8605 = vadd.f32 %v8591, %v8598
    %v8606 = vadd.f32 %v8592, %v8599
    %v8607 = vadd.f32 %v8593, %v8600
    %v8608 = vadd.f32 %v8594, %v8596
    %v8609 = vadd.f32 %v8595, %v8598
    %v8610 = vld [vmem:[#allocation2 + $0x2c0] sm:$0xff]
    %v8611 = vld [vmem:[#allocation2 + $0x2c8] sm:$0xff]
    %v8612 = vld [vmem:[#allocation2 + $0x2d0] sm:$0xff]
    %v8613 = vld [vmem:[#allocation2 + $0x2d8] sm:$0xff]
    %v8614 = vperm.slane %v6338, 4
    %8621 = vst [vmem:[#allocation1] ss:$4 sm:$0xff] %v8604
    %s8622 = scalar_lea.vmem [#allocation1], 1
    %8623 = vst [vmem:[%s8622] ss:$4 sm:$0xff] %v8605
    %s8624 = scalar_lea.vmem [#allocation1], 2
    %8625 = vst [vmem:[%s8624] ss:$4 sm:$0xff] %v8606
    %s8626 = scalar_lea.vmem [#allocation1], 3
    %8627 = vst [vmem:[%s8626] ss:$4 sm:$0xff] %v8607
    %s8628 = scalar_lea.vmem [#allocation1], 32
    %8629 = vst [vmem:[%s8628] ss:$4 sm:$0xff] %v8608
    %s8630 = scalar_lea.vmem [#allocation1], 33
    %8631 = vst [vmem:[%s8630] ss:$4 sm:$0xff] %v8609
    %v8632 = vld.sshfl [vmem:[#allocation1] sm:$0xff pattern:$0x73625140]
    %v8633 = vld.sshfl [vmem:[#allocation1 + $0x20] sm:$0xff pattern:$0x73625140]
    %v8634 = vsel %vm75, %v8632, 0
    %v8636 = vsel %vm75, %v8633, 0
    %8638 = vmatpush.msra.mxu0 0.0
    %8639 = vmatpush.msra.mxu0 0.0
    %8640 = vmatpush.msra.mxu0 0.0
    %8641 = vmatpush.msra.mxu0 0.0
    %8642 = vmatpush.msra.mxu0 0.0
    %8643 = vmatpush.msra.mxu0 0.0
    %8644 = vmatpush.msra.mxu0 0.0
    %8645 = vmatpush.msra.mxu0 0.0
    %8646 = vmatpush.msra.mxu0 0.0
    %8647 = vmatpush.msra.mxu0 0.0
    %8648 = vmatpush.msra.mxu0 0.0
    %8649 = vmatpush.msra.mxu0 0.0
    %8650 = vmatpush.msra.mxu0 %v8613
    %8651 = vmatpush.msra.mxu0 %v8612
    %8652 = vmatpush.msra.mxu0 %v8611
    %8653 = vmatpush.msra.mxu0 %v8610
    %8654 = vmatmul.f32.gmra.mxu0 %v8634
    %v8655 = vpop.f32.mrf.mxu0
    %v8656 = vadd.f32 %v8614, %v8655
    %8657 = vmatmul.f32.gmra.mxu0 %v8636
    %v8658 = vpop.f32.mrf.mxu0
    %v8659 = vadd.f32 %v8614, %v8658
    %8660 = vdwg.mxu0
    %v8661 = vmax.f32 %v8656, 0.0
    %v8662 = vmax.f32 %v8659, 0.0
    %v8663 = vld [vmem:[#allocation2 + $0x2e0] sm:$0xff]
    %v8664 = vld [vmem:[#allocation2 + $0x2e8] sm:$0xff]
    %v8665 = vld [vmem:[#allocation2 + $0x2f0] sm:$0xff]
    %v8666 = vld [vmem:[#allocation2 + $0x2f8] sm:$0xff]
    %v8667 = vld [vmem:[#allocation2 + $0x300] sm:$0xff]
    %v8668 = vld [vmem:[#allocation2 + $0x308] sm:$0xff]
    %v8669 = vld [vmem:[#allocation2 + $0x310] sm:$0xff]
    %v8670 = vld [vmem:[#allocation2 + $0x318] sm:$0xff]
    %v8671 = vperm.slane %v6338, 5
    %v8673 = vsel %vm1449, %v8661, 0
    %v8676 = vsel %vm1449, %v8662, 0
    %8678 = vmatpush.msra.mxu0 0.0
    %8679 = vmatpush.msra.mxu0 0.0
    %8680 = vmatpush.msra.mxu0 0.0
    %8681 = vmatpush.msra.mxu0 0.0
    %8682 = vmatpush.msra.mxu0 0.0
    %8683 = vmatpush.msra.mxu0 0.0
    %8684 = vmatpush.msra.mxu0 0.0
    %8685 = vmatpush.msra.mxu0 0.0
    %8686 = vmatpush.msra.mxu0 %v8670
    %8687 = vmatpush.msra.mxu0 %v8669
    %8688 = vmatpush.msra.mxu0 %v8668
    %8689 = vmatpush.msra.mxu0 %v8667
    %8690 = vmatpush.msra.mxu0 %v8666
    %8691 = vmatpush.msra.mxu0 %v8665
    %8692 = vmatpush.msra.mxu0 %v8664
    %8693 = vmatpush.msra.mxu0 %v8663
    %8694 = vmatmul.f32.gmra.mxu0 %v8673
    %v8695 = vpop.f32.mrf.mxu0
    %v8696 = vadd.f32 %v8671, %v8695
    %8697 = vmatmul.f32.gmra.mxu0 %v8676
    %v8698 = vpop.f32.mrf.mxu0
    %v8699 = vadd.f32 %v8671, %v8698
    %8700 = vdwg.mxu0
    %v8703 = vrot.slane %v8696, 2
    %v8704 = vrot.slane %v8696, 4
    %v8705 = vrot.slane %v8696, 6
    %v8706 = vrot.slane %v8699, 2
    %v8711 = vadd.f32 %v8604, %v8696
    %v8712 = vadd.f32 %v8605, %v8703
    %v8713 = vadd.f32 %v8606, %v8704
    %v8714 = vadd.f32 %v8607, %v8705
    %v8715 = vadd.f32 %v8608, %v8699
    %v8716 = vadd.f32 %v8609, %v8706
    %8723 = vst [vmem:[#allocation1] ss:$4 sm:$0xff] %v8711
    %s8724 = scalar_lea.vmem [#allocation1], 1
    %8725 = vst [vmem:[%s8724] ss:$4 sm:$0xff] %v8712
    %s8726 = scalar_lea.vmem [#allocation1], 2
    %8727 = vst [vmem:[%s8726] ss:$4 sm:$0xff] %v8713
    %s8728 = scalar_lea.vmem [#allocation1], 3
    %8729 = vst [vmem:[%s8728] ss:$4 sm:$0xff] %v8714
    %s8730 = scalar_lea.vmem [#allocation1], 32
    %8731 = vst [vmem:[%s8730] ss:$4 sm:$0xff] %v8715
    %s8732 = scalar_lea.vmem [#allocation1], 33
    %8733 = vst [vmem:[%s8732] ss:$4 sm:$0xff] %v8716
    %v8734 = vld.sshfl [vmem:[#allocation1] sm:$0xff pattern:$0x73625140]
    %v8735 = vld.sshfl [vmem:[#allocation1 + $0x20] sm:$0xff pattern:$0x73625140]
    %v8738 = vsel %vm75, %v8734, 0.0
    %8739 = vadd.xlane.f32.xlu0 %v8738
    %v8740 = vpop.xlane.xlu0 %8739
    %v8741 = vsel %vm4656, %v8735, 0.0
    %8742 = vadd.xlane.f32.xlu0 %v8741
    %v8743 = vpop.xlane.xlu0 %8742
    %v8744 = vmul.f32 %v8740, %v1187
    %v8745 = vmul.f32 %v8743, %v1187
    %v8749 = vunpack.c.l.s4 269488144
    %v8750 = vunpack.c.0.s8 %v8749
    %v8751 = vperm.slane %v8744, %v8750
    %v8753 = vunpack.c.l.s4 842150450
    %v8754 = vunpack.c.0.s8 %v8753
    %v8755 = vperm.slane %v8744, %v8754
    %v8757 = vunpack.c.l.s4 1414812756
    %v8758 = vunpack.c.0.s8 %v8757
    %v8759 = vperm.slane %v8744, %v8758
    %v8761 = vunpack.c.l.s4 1987475062
    %v8762 = vunpack.c.0.s8 %v8761
    %v8763 = vperm.slane %v8744, %v8762
    %v8765 = vunpack.c.l.s4 269488144
    %v8766 = vunpack.c.0.s8 %v8765
    %v8767 = vperm.slane %v8745, %v8766
    %v8769 = vunpack.c.l.s4 842150450
    %v8770 = vunpack.c.0.s8 %v8769
    %v8771 = vperm.slane %v8745, %v8770
    %v8778 = vsub.f32 %v8711, %v8751
    %v8779 = vsub.f32 %v8712, %v8755
    %v8780 = vsub.f32 %v8713, %v8759
    %v8781 = vsub.f32 %v8714, %v8763
    %v8782 = vsub.f32 %v8715, %v8767
    %v8783 = vsub.f32 %v8716, %v8771
    %v8784 = vmul.f32 %v8778, %v8778
    %v8785 = vmul.f32 %v8779, %v8779
    %v8786 = vmul.f32 %v8780, %v8780
    %v8787 = vmul.f32 %v8781, %v8781
    %v8788 = vmul.f32 %v8782, %v8782
    %v8789 = vmul.f32 %v8783, %v8783
    %8796 = vst [vmem:[#allocation1] ss:$4 sm:$0xff] %v8784
    %s8797 = scalar_lea.vmem [#allocation1], 1
    %8798 = vst [vmem:[%s8797] ss:$4 sm:$0xff] %v8785
    %s8799 = scalar_lea.vmem [#allocation1], 2
    %8800 = vst [vmem:[%s8799] ss:$4 sm:$0xff] %v8786
    %s8801 = scalar_lea.vmem [#allocation1], 3
    %8802 = vst [vmem:[%s8801] ss:$4 sm:$0xff] %v8787
    %s8803 = scalar_lea.vmem [#allocation1], 32
    %8804 = vst [vmem:[%s8803] ss:$4 sm:$0xff] %v8788
    %s8805 = scalar_lea.vmem [#allocation1], 33
    %8806 = vst [vmem:[%s8805] ss:$4 sm:$0xff] %v8789
    %v8807 = vld.sshfl [vmem:[#allocation1] sm:$0xff pattern:$0x73625140]
    %v8808 = vld.sshfl [vmem:[#allocation1 + $0x20] sm:$0xff pattern:$0x73625140]
    %v8811 = vsel %vm75, %v8807, 0.0
    %8812 = vadd.xlane.f32.xlu0 %v8811
    %v8813 = vpop.xlane.xlu0 %8812
    %v8814 = vsel %vm4656, %v8808, 0.0
    %8815 = vadd.xlane.f32.xlu0 %v8814
    %v8816 = vpop.xlane.xlu0 %8815
    %v8817 = vmul.f32 %v8813, %v1187
    %v8818 = vmul.f32 %v8816, %v1187
    %v8819 = vadd.f32 %v8817, 1e-05
    %v8820 = vadd.f32 %v8818, 1e-05
    %v8821 = vrsqrt.pop %v8819
    %v8822 = vmul.f32 %v8821, %v8819
    %v8823 = vmul.f32 %v8822, %v8821
    %v8824 = vmul.f32 0.5, %v8823
    %v8825 = vsub.f32 1.5, %v8824
    %v8826 = vmul.f32 %v8821, %v8825
    %vm8827 = vweird.f32 %v8819
    %vm8828 = vweird.f32 %v8821
    %vm8829 = vmor %vm8827, %vm8828
    %v8830 = vsel %vm8829, %v8821, %v8826
    %v8831 = vrsqrt.pop %v8820
    %v8832 = vmul.f32 %v8831, %v8820
    %v8833 = vmul.f32 %v8832, %v8831
    %v8834 = vmul.f32 0.5, %v8833
    %v8835 = vsub.f32 1.5, %v8834
    %v8836 = vmul.f32 %v8831, %v8835
    %vm8837 = vweird.f32 %v8820
    %vm8838 = vweird.f32 %v8831
    %vm8839 = vmor %vm8837, %vm8838
    %v8840 = vsel %vm8839, %v8831, %v8836
    %v8844 = vunpack.c.l.s4 269488144
    %v8845 = vunpack.c.0.s8 %v8844
    %v8846 = vperm.slane %v8830, %v8845
    %v8848 = vunpack.c.l.s4 842150450
    %v8849 = vunpack.c.0.s8 %v8848
    %v8850 = vperm.slane %v8830, %v8849
    %v8852 = vunpack.c.l.s4 1414812756
    %v8853 = vunpack.c.0.s8 %v8852
    %v8854 = vperm.slane %v8830, %v8853
    %v8856 = vunpack.c.l.s4 1987475062
    %v8857 = vunpack.c.0.s8 %v8856
    %v8858 = vperm.slane %v8830, %v8857
    %v8860 = vunpack.c.l.s4 269488144
    %v8861 = vunpack.c.0.s8 %v8860
    %v8862 = vperm.slane %v8840, %v8861
    %v8864 = vunpack.c.l.s4 842150450
    %v8865 = vunpack.c.0.s8 %v8864
    %v8866 = vperm.slane %v8840, %v8865
    %v8873 = vmul.f32 %v8778, %v8846
    %v8874 = vmul.f32 %v8779, %v8850
    %v8875 = vmul.f32 %v8780, %v8854
    %v8876 = vmul.f32 %v8781, %v8858
    %v8877 = vmul.f32 %v8782, %v8862
    %v8878 = vmul.f32 %v8783, %v8866
    %v8879 = vperm.slane %v6339, 2
    %v8881 = vrot.slane %v8879, 2
    %v8882 = vrot.slane %v8879, 4
    %v8883 = vrot.slane %v8879, 6
    %v8887 = vmul.f32 %v8873, %v8879
    %v8888 = vmul.f32 %v8874, %v8881
    %v8889 = vmul.f32 %v8875, %v8882
    %v8890 = vmul.f32 %v8876, %v8883
    %v8891 = vmul.f32 %v8877, %v8879
    %v8892 = vmul.f32 %v8878, %v8881
    %v8893 = vperm.slane %v6339, 3
    %v8895 = vrot.slane %v8893, 2
    %v8896 = vrot.slane %v8893, 4
    %v8897 = vrot.slane %v8893, 6
    %v8901 = vadd.f32 %v8887, %v8893
    %v8902 = vadd.f32 %v8888, %v8895
    %v8903 = vadd.f32 %v8889, %v8896
    %v8904 = vadd.f32 %v8890, %v8897
    %v8905 = vadd.f32 %v8891, %v8893
    %v8906 = vadd.f32 %v8892, %v8895
    %8913 = vst [vmem:[#allocation1] ss:$4 sm:$0xff] %v8901
    %s8914 = scalar_lea.vmem [#allocation1], 1
    %8915 = vst [vmem:[%s8914] ss:$4 sm:$0xff] %v8902
    %s8916 = scalar_lea.vmem [#allocation1], 2
    %8917 = vst [vmem:[%s8916] ss:$4 sm:$0xff] %v8903
    %s8918 = scalar_lea.vmem [#allocation1], 3
    %8919 = vst [vmem:[%s8918] ss:$4 sm:$0xff] %v8904
    %s8920 = scalar_lea.vmem [#allocation1], 32
    %8921 = vst [vmem:[%s8920] ss:$4 sm:$0xff] %v8905
    %s8922 = scalar_lea.vmem [#allocation1], 33
    %8923 = vst [vmem:[%s8922] ss:$4 sm:$0xff] %v8906
    %v8924 = vld.sshfl [vmem:[#allocation1] sm:$0xff pattern:$0x73625140]
    %v8925 = vld.sshfl [vmem:[#allocation1 + $0x20] sm:$0xff pattern:$0x73625140]
    %v8928 = vsel %vm75, %v8924, 0.0
    %8929 = vadd.xlane.f32.xlu0 %v8928
    %v8930 = vpop.xlane.xlu0 %8929
    %v8931 = vsel %vm4656, %v8925, 0.0
    %8932 = vadd.xlane.f32.xlu0 %v8931
    %v8933 = vpop.xlane.xlu0 %8932
    %v8934 = vmul.f32 %v8930, %v1187
    %v8935 = vmul.f32 %v8933, %v1187
    %v8939 = vunpack.c.l.s4 269488144
    %v8940 = vunpack.c.0.s8 %v8939
    %v8941 = vperm.slane %v8934, %v8940
    %v8943 = vunpack.c.l.s4 842150450
    %v8944 = vunpack.c.0.s8 %v8943
    %v8945 = vperm.slane %v8934, %v8944
    %v8947 = vunpack.c.l.s4 1414812756
    %v8948 = vunpack.c.0.s8 %v8947
    %v8949 = vperm.slane %v8934, %v8948
    %v8951 = vunpack.c.l.s4 1987475062
    %v8952 = vunpack.c.0.s8 %v8951
    %v8953 = vperm.slane %v8934, %v8952
    %v8955 = vunpack.c.l.s4 269488144
    %v8956 = vunpack.c.0.s8 %v8955
    %v8957 = vperm.slane %v8935, %v8956
    %v8959 = vunpack.c.l.s4 842150450
    %v8960 = vunpack.c.0.s8 %v8959
    %v8961 = vperm.slane %v8935, %v8960
    %v8968 = vsub.f32 %v8901, %v8941
    %v8969 = vsub.f32 %v8902, %v8945
    %v8970 = vsub.f32 %v8903, %v8949
    %v8971 = vsub.f32 %v8904, %v8953
    %v8972 = vsub.f32 %v8905, %v8957
    %v8973 = vsub.f32 %v8906, %v8961
    %v8974 = vmul.f32 %v8968, %v8968
    %v8975 = vmul.f32 %v8969, %v8969
    %v8976 = vmul.f32 %v8970, %v8970
    %v8977 = vmul.f32 %v8971, %v8971
    %v8978 = vmul.f32 %v8972, %v8972
    %v8979 = vmul.f32 %v8973, %v8973
    %8986 = vst [vmem:[#allocation1] ss:$4 sm:$0xff] %v8974
    %s8987 = scalar_lea.vmem [#allocation1], 1
    %8988 = vst [vmem:[%s8987] ss:$4 sm:$0xff] %v8975
    %s8989 = scalar_lea.vmem [#allocation1], 2
    %8990 = vst [vmem:[%s8989] ss:$4 sm:$0xff] %v8976
    %s8991 = scalar_lea.vmem [#allocation1], 3
    %8992 = vst [vmem:[%s8991] ss:$4 sm:$0xff] %v8977
    %s8993 = scalar_lea.vmem [#allocation1], 32
    %8994 = vst [vmem:[%s8993] ss:$4 sm:$0xff] %v8978
    %s8995 = scalar_lea.vmem [#allocation1], 33
    %8996 = vst [vmem:[%s8995] ss:$4 sm:$0xff] %v8979
    %v8997 = vld.sshfl [vmem:[#allocation1] sm:$0xff pattern:$0x73625140]
    %v8998 = vld.sshfl [vmem:[#allocation1 + $0x20] sm:$0xff pattern:$0x73625140]
    %v9001 = vsel %vm75, %v8997, 0.0
    %9002 = vadd.xlane.f32.xlu0 %v9001
    %v9003 = vpop.xlane.xlu0 %9002
    %v9004 = vsel %vm4656, %v8998, 0.0
    %9005 = vadd.xlane.f32.xlu0 %v9004
    %v9006 = vpop.xlane.xlu0 %9005
    %v9007 = vmul.f32 %v9003, %v1187
    %v9008 = vmul.f32 %v9006, %v1187
    %v9009 = vadd.f32 %v9007, 1e-05
    %v9010 = vadd.f32 %v9008, 1e-05
    %v9011 = vrsqrt.pop %v9009
    %v9012 = vmul.f32 %v9011, %v9009
    %v9013 = vmul.f32 %v9012, %v9011
    %v9014 = vmul.f32 0.5, %v9013
    %v9015 = vsub.f32 1.5, %v9014
    %v9016 = vmul.f32 %v9011, %v9015
    %vm9017 = vweird.f32 %v9009
    %vm9018 = vweird.f32 %v9011
    %vm9019 = vmor %vm9017, %vm9018
    %v9020 = vsel %vm9019, %v9011, %v9016
    %v9021 = vrsqrt.pop %v9010
    %v9022 = vmul.f32 %v9021, %v9010
    %v9023 = vmul.f32 %v9022, %v9021
    %v9024 = vmul.f32 0.5, %v9023
    %v9025 = vsub.f32 1.5, %v9024
    %v9026 = vmul.f32 %v9021, %v9025
    %vm9027 = vweird.f32 %v9010
    %vm9028 = vweird.f32 %v9021
    %vm9029 = vmor %vm9027, %vm9028
    %v9030 = vsel %vm9029, %v9021, %v9026
    %v9034 = vunpack.c.l.s4 269488144
    %v9035 = vunpack.c.0.s8 %v9034
    %v9036 = vperm.slane %v9020, %v9035
    %v9038 = vunpack.c.l.s4 842150450
    %v9039 = vunpack.c.0.s8 %v9038
    %v9040 = vperm.slane %v9020, %v9039
    %v9042 = vunpack.c.l.s4 1414812756
    %v9043 = vunpack.c.0.s8 %v9042
    %v9044 = vperm.slane %v9020, %v9043
    %v9046 = vunpack.c.l.s4 1987475062
    %v9047 = vunpack.c.0.s8 %v9046
    %v9048 = vperm.slane %v9020, %v9047
    %v9050 = vunpack.c.l.s4 269488144
    %v9051 = vunpack.c.0.s8 %v9050
    %v9052 = vperm.slane %v9030, %v9051
    %v9054 = vunpack.c.l.s4 842150450
    %v9055 = vunpack.c.0.s8 %v9054
    %v9056 = vperm.slane %v9030, %v9055
    %v9063 = vmul.f32 %v8968, %v9036
    %v9064 = vmul.f32 %v8969, %v9040
    %v9065 = vmul.f32 %v8970, %v9044
    %v9066 = vmul.f32 %v8971, %v9048
    %v9067 = vmul.f32 %v8972, %v9052
    %v9068 = vmul.f32 %v8973, %v9056
    %v9069 = vperm.slane %v3410, 2
    %v9071 = vrot.slane %v9069, 2
    %v9072 = vrot.slane %v9069, 4
    %v9073 = vrot.slane %v9069, 6
    %v9077 = vmul.f32 %v9063, %v9069
    %v9078 = vmul.f32 %v9064, %v9071
    %v9079 = vmul.f32 %v9065, %v9072
    %v9080 = vmul.f32 %v9066, %v9073
    %v9081 = vmul.f32 %v9067, %v9069
    %v9082 = vmul.f32 %v9068, %v9071
    %v9083 = vperm.slane %v3410, 3
    %v9085 = vrot.slane %v9083, 2
    %v9086 = vrot.slane %v9083, 4
    %v9087 = vrot.slane %v9083, 6
    %v9091 = vadd.f32 %v9077, %v9083
    %v9092 = vadd.f32 %v9078, %v9085
    %v9093 = vadd.f32 %v9079, %v9086
    %v9094 = vadd.f32 %v9080, %v9087
    %v9095 = vadd.f32 %v9081, %v9083
    %v9096 = vadd.f32 %v9082, %v9085
    %v9097 = vld [vmem:[#allocation2 + $0x350] sm:$0xff]
    %v9098 = vld [vmem:[#allocation2 + $0x358] sm:$0xff]
    %v9099 = vld [vmem:[#allocation2 + $0x360] sm:$0xff]
    %v9100 = vld [vmem:[#allocation2 + $0x368] sm:$0xff]
    %v9101 = vperm.slane %v3410, 5
    %9108 = vst [vmem:[#allocation1] ss:$4 sm:$0xff] %v9091
    %s9109 = scalar_lea.vmem [#allocation1], 1
    %9110 = vst [vmem:[%s9109] ss:$4 sm:$0xff] %v9092
    %s9111 = scalar_lea.vmem [#allocation1], 2
    %9112 = vst [vmem:[%s9111] ss:$4 sm:$0xff] %v9093
    %s9113 = scalar_lea.vmem [#allocation1], 3
    %9114 = vst [vmem:[%s9113] ss:$4 sm:$0xff] %v9094
    %s9115 = scalar_lea.vmem [#allocation1], 32
    %9116 = vst [vmem:[%s9115] ss:$4 sm:$0xff] %v9095
    %s9117 = scalar_lea.vmem [#allocation1], 33
    %9118 = vst [vmem:[%s9117] ss:$4 sm:$0xff] %v9096
    %v9119 = vld.sshfl [vmem:[#allocation1] sm:$0xff pattern:$0x73625140]
    %v9120 = vld.sshfl [vmem:[#allocation1 + $0x20] sm:$0xff pattern:$0x73625140]
    %v9121 = vsel %vm75, %v9119, 0
    %v9123 = vsel %vm75, %v9120, 0
    %9125 = vmatpush.msra.mxu0 0.0
    %9126 = vmatpush.msra.mxu0 0.0
    %9127 = vmatpush.msra.mxu0 0.0
    %9128 = vmatpush.msra.mxu0 0.0
    %9129 = vmatpush.msra.mxu0 0.0
    %9130 = vmatpush.msra.mxu0 0.0
    %9131 = vmatpush.msra.mxu0 0.0
    %9132 = vmatpush.msra.mxu0 0.0
    %9133 = vmatpush.msra.mxu0 0.0
    %9134 = vmatpush.msra.mxu0 0.0
    %9135 = vmatpush.msra.mxu0 0.0
    %9136 = vmatpush.msra.mxu0 0.0
    %9137 = vmatpush.msra.mxu0 %v9100
    %9138 = vmatpush.msra.mxu0 %v9099
    %9139 = vmatpush.msra.mxu0 %v9098
    %9140 = vmatpush.msra.mxu0 %v9097
    %9141 = vmatmul.f32.gmra.mxu0 %v9121
    %v9142 = vpop.f32.mrf.mxu0
    %v9143 = vadd.f32 %v9101, %v9142
    %9144 = vmatmul.f32.gmra.mxu0 %v9123
    %v9145 = vpop.f32.mrf.mxu0
    %v9146 = vadd.f32 %v9101, %v9145
    %9147 = vdwg.mxu0
    %9148 = vst [vmem:[%s3] sm:$0xff] %v9143
    %9149 = vst [vmem:[%s3 + $0x8] sm:$0xf] %v9146
    // Predicated region
    $region18: #{fwd.1} parent=1 // pred_check
      _
    $region19: #{fwd.1} parent=1 // pred_check_branch
      %9151 = sbr.rel (0) target = $region21
    $region20: #{fwd.1} parent=1 // pred_region
      _
    $region21: #{fwd.1} parent=1 // pred_fallthru
      _
    // Predicated region
    $region22: #{fwd.1} parent=1 // pred_check
      _
    $region23: #{fwd.1} parent=1 // pred_check_branch
      %9153 = sbr.rel (0) target = $region25
    $region24: #{fwd.1} parent=1 // pred_region
      _
    $region25: #{fwd.1} parent=1 // pred_fallthru
      _
    %9154 = vsyncpa [#allocation3], 1

</llo_original>
